<compile_context>
chip_gen: v5e
topology: v5e:2x2
jax: 0.10.0
libtpu: 0.0.40
codegen_flags: <defaults>
</compile_context>

<pallas_src>
import functools

import numpy as np

import jax
import jax.numpy as jnp
from jax.experimental import pallas as pl
from jax.experimental.pallas import tpu as pltpu

NC = 3
NDF = 8            # small synthetic width (module default is 128; shapes scale)
LRELU_SLOPE = 0.2
BN_EPS = 1e-5

_VMEM = pl.BlockSpec(memory_space=pltpu.MemorySpace.VMEM)


# ---------------------------------------------------------------------------
# In-kernel building blocks
# ---------------------------------------------------------------------------
def _conv_acc(p_ref, wg_ref, deltas, L):
    """Strided 4x4 conv as 4 shift-grouped MXU matmuls.

    p_ref : (4*Cin, L + max_shift) bf16  parity-packed padded input
    wg_ref: (4, Cout, 4*Cin)       bf16  weights grouped by (qh, qw) shift
    Returns f32 (Cout, L) on the padded output domain (pad rows/cols ignored).
    """
    acc = None
    for g, d in enumerate(deltas):
        q = jnp.dot(wg_ref[g], p_ref[:, d:d + L],
                    preferred_element_type=jnp.float32)
        acc = q if acc is None else acc + q
    return acc


def _bn_lrelu(acc, gamma, beta, mask, inv_count):
    """Training-mode BatchNorm2d (biased var over valid columns) + LeakyReLU."""
    mean = jnp.sum(acc * mask, axis=-1, keepdims=True) * inv_count
    sumsq = jnp.sum(acc * acc * mask, axis=-1, keepdims=True) * inv_count
    var = jnp.maximum(sumsq - mean * mean, 0.0)
    scale = gamma * jax.lax.rsqrt(var + BN_EPS)   # fold gamma * rsqrt into one FMA
    shift = beta - mean * scale
    y = acc * scale + shift
    return jnp.maximum(y, LRELU_SLOPE * y)


def _conv_lrelu_kernel(p_ref, wg_ref, o_ref, *, deltas):
    L = o_ref.shape[-1]
    y = _conv_acc(p_ref, wg_ref, deltas, L)
    o_ref[...] = jnp.maximum(y, LRELU_SLOPE * y).astype(o_ref.dtype)


def _conv_bn_lrelu_kernel(p_ref, wg_ref, g_ref, b_ref, m_ref, o_ref,
                          *, deltas, inv_count):
    L = o_ref.shape[-1]
    acc = _conv_acc(p_ref, wg_ref, deltas, L)
    y = _bn_lrelu(acc, g_ref[...], b_ref[...], m_ref[...], inv_count)
    o_ref[...] = y.astype(o_ref.dtype)


def _conv_bn_lrelu_fc_kernel(p_ref, wg_ref, g_ref, b_ref, m_ref, fcw_ref,
                             fcb_ref, o_ref, *, deltas, inv_count, batch):
    L = fcw_ref.shape[-1]
    cols = L // batch
    acc = _conv_acc(p_ref, wg_ref, deltas, L)
    y = _bn_lrelu(acc, g_ref[...], b_ref[...], m_ref[...], inv_count)
    # Fused Linear head: fc weight was pre-permuted to this (Cout, column)
    # layout with zeros on invalid/padded columns -> multiply + reductions.
    rows = jnp.sum(y * fcw_ref[...], axis=0, keepdims=True)       # (1, L)
    for n in range(batch):
        s = jnp.sum(rows[:, n * cols:(n + 1) * cols], axis=-1, keepdims=True)
        o_ref[n:n + 1, :] = s + fcb_ref[...]


# ---------------------------------------------------------------------------
# pallas_call wrappers
# ---------------------------------------------------------------------------
def conv1_lrelu(p1, wg, *, Wh):
    """Layer 1 (no BN): grid over the batch; 'parallel' -> both v7x cores."""
    N, K4, Lp_ext = p1.shape
    Cout = wg.shape[1]
    Lp = Wh * Wh
    deltas = (0, 1, Wh, Wh + 1)
    kernel = functools.partial(_conv_lrelu_kernel, deltas=deltas)
    return pl.pallas_call(
        kernel,
        out_shape=jax.ShapeDtypeStruct((N, Cout, Lp), jnp.bfloat16),
        grid=(N,),
        in_specs=[
            pl.BlockSpec((None, K4, Lp_ext), lambda n: (n, 0, 0)),
            pl.BlockSpec((4, Cout, K4), lambda n: (0, 0, 0)),
        ],
        out_specs=pl.BlockSpec((None, Cout, Lp), lambda n: (n, 0, 0)),
        compiler_params=pltpu.CompilerParams(
            dimension_semantics=("parallel",),
            vmem_limit_bytes=32 * 1024 * 1024,
        ),
    )(p1, wg)


def conv_bn_lrelu(pall, wg, gamma, beta, mask, *, Wh, inv_count):
    Cout = wg.shape[1]
    L = mask.shape[-1]
    deltas = (0, 1, Wh, Wh + 1)
    kernel = functools.partial(_conv_bn_lrelu_kernel, deltas=deltas,
                               inv_count=inv_count)
    return pl.pallas_call(
        kernel,
        out_shape=jax.ShapeDtypeStruct((Cout, L), jnp.bfloat16),
        in_specs=[_VMEM] * 5,
        out_specs=_VMEM,
    )(pall, wg, gamma, beta, mask)


def conv_bn_lrelu_fc(pall, wg, gamma, beta, mask, fcw, fcb, *, Wh, inv_count,
                     batch):
    deltas = (0, 1, Wh, Wh + 1)
    kernel = functools.partial(_conv_bn_lrelu_fc_kernel, deltas=deltas,
                               inv_count=inv_count, batch=batch)
    return pl.pallas_call(
        kernel,
        out_shape=jax.ShapeDtypeStruct((batch, 1), jnp.float32),
        in_specs=[_VMEM] * 7,
        out_specs=_VMEM,
    )(pall, wg, gamma, beta, mask, fcw, fcb)


# ---------------------------------------------------------------------------
# Trace-time glue (cheap XLA ops / numpy constants; no 16x im2col)
# ---------------------------------------------------------------------------
def _parity_pack(x_cnhw):
    """(C, N, H, W) -> (4C, N, H/2+1, W/2+1) parity planes of the padded image."""
    xp = jnp.pad(x_cnhw, ((0, 0), (0, 0), (1, 1), (1, 1)))
    planes = [xp[:, :, ph::2, pw::2] for ph in (0, 1) for pw in (0, 1)]
    return jnp.concatenate(planes, axis=0)


def _weight_groups(w):
    """(Cout, Cin, 4, 4) torch-layout weight -> (4, Cout, 4*Cin) bf16,
    grouped by the (qh, qw) output shift; tap (kh,kw)=(2qh+ph, 2qw+pw)."""
    groups = []
    for qh in (0, 1):
        for qw in (0, 1):
            parts = [w[:, :, 2 * qh + ph, 2 * qw + pw]
                     for ph in (0, 1) for pw in (0, 1)]
            groups.append(jnp.concatenate(parts, axis=1))
    return jnp.stack(groups, axis=0).astype(jnp.bfloat16)


def _valid_mask(n, ho, wo):
    m = np.zeros((n, ho + 1, wo + 1), np.float32)
    m[:, :ho, :wo] = 1.0
    return jnp.asarray(m.reshape(1, -1))


# ---------------------------------------------------------------------------
# Full Critic forward
# ---------------------------------------------------------------------------
def critic_forward(x_nchw, params):
    N, _, H, _ = x_nchw.shape
    chans = [NC, NDF, NDF * 2, NDF * 4, NDF * 8, NDF * 16]

    # ----- layer 1: conv + LeakyReLU, gridded over the batch -----
    Ho = H // 2
    Wh = Ho + 1
    xp = jnp.pad(x_nchw, ((0, 0), (0, 0), (1, 1), (1, 1)))
    planes = [xp[:, :, ph::2, pw::2] for ph in (0, 1) for pw in (0, 1)]
    p1 = jnp.concatenate(planes, axis=1).reshape(N, 4 * chans[0], Wh * Wh)
    p1 = jnp.pad(p1, ((0, 0), (0, 0), (0, Wh + 1))).astype(jnp.bfloat16)
    o1 = conv1_lrelu(p1, _weight_groups(params["w1"]), Wh=Wh)

    # channel-major valid activation (C, N, Ho, Wo)
    act = jnp.transpose(
        o1.reshape(N, chans[1], Wh, Wh)[:, :, :Ho, :Ho], (1, 0, 2, 3))

    # ----- layers 2..4: conv + BN + LeakyReLU (one kernel each, fully in VMEM) -----
    for i in range(2, 5):
        cin, cout = chans[i - 1], chans[i]
        ho = act.shape[-1] // 2
        wh = ho + 1
        pall = _parity_pack(act).reshape(4 * cin, N * wh * wh)
        pall = jnp.pad(pall, ((0, 0), (0, wh + 1))).astype(jnp.bfloat16)
        out = conv_bn_lrelu(
            pall, _weight_groups(params[f"w{i}"]),
            params[f"g{i}"].reshape(cout, 1).astype(jnp.float32),
            params[f"b{i}"].reshape(cout, 1).astype(jnp.float32),
            _valid_mask(N, ho, ho),
            Wh=wh, inv_count=1.0 / float(N * ho * ho))
        act = out.reshape(cout, N, wh, wh)[:, :, :ho, :ho]

    # ----- layer 5 + fused Linear head -----
    cin, cout = chans[4], chans[5]
    ho = act.shape[-1] // 2            # 4
    wh = ho + 1                        # 5
    pall = _parity_pack(act).reshape(4 * cin, N * wh * wh)
    pall = jnp.pad(pall, ((0, 0), (0, wh + 1))).astype(jnp.bfloat16)
    # Fold PyTorch's x.view(-1, C*4*4) flatten order into the fc weight and
    # pad/broadcast it to the kernel's padded (Cout, N*wh*wh) column layout.
    fcw = params["fc_w"].reshape(cout, ho, ho)
    fcw = jnp.pad(fcw, ((0, 0), (0, 1), (0, 1)))
    fcw = jnp.broadcast_to(fcw[:, None], (cout, N, wh, wh))
    fcw = fcw.reshape(cout, N * wh * wh).astype(jnp.float32)
    fcb = params["fc_b"].reshape(1, 1).astype(jnp.float32)
    return conv_bn_lrelu_fc(
        pall, _weight_groups(params["w5"]),
        params["g5"].reshape(cout, 1).astype(jnp.float32),
        params["b5"].reshape(cout, 1).astype(jnp.float32),
        _valid_mask(N, ho, ho), fcw, fcb,
        Wh=wh, inv_count=1.0 / float(N * ho * ho), batch=N)


# ---------------------------------------------------------------------------
# Deterministic parameter init (PyTorch-shaped: conv (Cout,Cin,4,4), fc (1,F))
# ---------------------------------------------------------------------------
def init_params(key, nc, ndf):
    keys = jax.random.split(key, 6)
    chans = [nc, ndf, ndf * 2, ndf * 4, ndf * 8, ndf * 16]
    params = {}
    for i in range(5):
        cin, cout = chans[i], chans[i + 1]
        params[f"w{i + 1}"] = (
            jax.random.normal(keys[i], (cout, cin, 4, 4), jnp.float32) * 0.02)
        params[f"g{i + 1}"] = jnp.ones((cout,), jnp.float32)
        params[f"b{i + 1}"] = jnp.zeros((cout,), jnp.float32)
    feat = ndf * 16 * 4 * 4
    params["fc_w"] = jax.random.normal(keys[5], (1, feat), jnp.float32) * 0.02
    params["fc_b"] = jnp.zeros((1,), jnp.float32)
    return params


if __name__ == "__main__":
    key = jax.random.PRNGKey(0)
    k_x, k_p = jax.random.split(key)

    # 128x128 spatial is required by the architecture (five stride-2 convs ->
    # 4x4 feature map expected by the fc / view in forward()).
    x = jax.random.normal(k_x, (2, NC, 128, 128), jnp.float32)
    params = init_params(k_p, NC, NDF)

    out = jax.jit(critic_forward)(x, params)
    out = jax.block_until_ready(out)
    assert out.shape == (2, 1), out.shape
    assert bool(jnp.all(jnp.isfinite(out)))
    print("KERNEL_OK")
</pallas_src>

<mosaic_0001>
module attributes {stable_mosaic.version = 11 : i64} {
  func.func @_conv_lrelu_kernel(%arg0: i32, %arg1: memref<1x12x4291xbf16, #tpu.memory_space<vmem>>, %arg2: memref<4x8x12xbf16, #tpu.memory_space<vmem>>, %arg3: memref<1x8x4225xbf16, #tpu.memory_space<vmem>>) attributes {dimension_semantics = [#tpu.dimension_semantics<parallel>], iteration_bounds = array<i64: 2>, scalar_prefetch = 0 : i64, scratch_operands = 0 : i64, tpu.core_type = #tpu.core_type<tc>, window_params = [{transform_indices = @transform_0, window_bounds = array<i64: 1, 12, 4291>}, {pipeline_mode = #tpu.pipeline_mode<synchronous>, transform_indices = @transform_1, window_bounds = array<i64: 4, 8, 12>}, {transform_indices = @transform_2, window_bounds = array<i64: 1, 8, 4225>}]} {
    %c0 = arith.constant 0 : index
    %c0_0 = arith.constant 0 : index
    %c0_1 = arith.constant 0 : index
    %0 = vector.load %arg2[%c0, %c0_0, %c0_1] : memref<4x8x12xbf16, #tpu.memory_space<vmem>>, vector<1x8x12xbf16>
    %1 = vector.shape_cast %0 : vector<1x8x12xbf16> to vector<8x12xbf16>
    %c0_2 = arith.constant 0 : index
    %c0_3 = arith.constant 0 : index
    %c0_4 = arith.constant 0 : index
    %2 = vector.load %arg1[%c0_2, %c0_3, %c0_4] : memref<1x12x4291xbf16, #tpu.memory_space<vmem>>, vector<1x12x4225xbf16>
    %3 = vector.shape_cast %2 : vector<1x12x4225xbf16> to vector<12x4225xbf16>
    %cst = arith.constant dense<0.000000e+00> : vector<8x4225xf32>
    %4 = tpu.matmul %1, %3, %cst {dimension_numbers = #tpu.dot_dimension_numbers<[1], [0], [0], [1], [0, 0, 1, 1], [], []>} : vector<8x12xbf16>, vector<12x4225xbf16>, vector<8x4225xf32> -> vector<8x4225xf32>
    %c1 = arith.constant 1 : index
    %c0_5 = arith.constant 0 : index
    %c0_6 = arith.constant 0 : index
    %5 = vector.load %arg2[%c1, %c0_5, %c0_6] : memref<4x8x12xbf16, #tpu.memory_space<vmem>>, vector<1x8x12xbf16>
    %6 = vector.shape_cast %5 : vector<1x8x12xbf16> to vector<8x12xbf16>
    %c0_7 = arith.constant 0 : index
    %c0_8 = arith.constant 0 : index
    %c1_9 = arith.constant 1 : index
    %7 = vector.load %arg1[%c0_7, %c0_8, %c1_9] : memref<1x12x4291xbf16, #tpu.memory_space<vmem>>, vector<1x12x4225xbf16>
    %8 = vector.shape_cast %7 : vector<1x12x4225xbf16> to vector<12x4225xbf16>
    %cst_10 = arith.constant dense<0.000000e+00> : vector<8x4225xf32>
    %9 = tpu.matmul %6, %8, %cst_10 {dimension_numbers = #tpu.dot_dimension_numbers<[1], [0], [0], [1], [0, 0, 1, 1], [], []>} : vector<8x12xbf16>, vector<12x4225xbf16>, vector<8x4225xf32> -> vector<8x4225xf32>
    %10 = arith.addf %4, %9 : vector<8x4225xf32>
    %c2 = arith.constant 2 : index
    %c0_11 = arith.constant 0 : index
    %c0_12 = arith.constant 0 : index
    %11 = vector.load %arg2[%c2, %c0_11, %c0_12] : memref<4x8x12xbf16, #tpu.memory_space<vmem>>, vector<1x8x12xbf16>
    %12 = vector.shape_cast %11 : vector<1x8x12xbf16> to vector<8x12xbf16>
    %c0_13 = arith.constant 0 : index
    %c0_14 = arith.constant 0 : index
    %c65 = arith.constant 65 : index
    %13 = vector.load %arg1[%c0_13, %c0_14, %c65] : memref<1x12x4291xbf16, #tpu.memory_space<vmem>>, vector<1x12x4225xbf16>
    %14 = vector.shape_cast %13 : vector<1x12x4225xbf16> to vector<12x4225xbf16>
    %cst_15 = arith.constant dense<0.000000e+00> : vector<8x4225xf32>
    %15 = tpu.matmul %12, %14, %cst_15 {dimension_numbers = #tpu.dot_dimension_numbers<[1], [0], [0], [1], [0, 0, 1, 1], [], []>} : vector<8x12xbf16>, vector<12x4225xbf16>, vector<8x4225xf32> -> vector<8x4225xf32>
    %16 = arith.addf %10, %15 : vector<8x4225xf32>
    %c3 = arith.constant 3 : index
    %c0_16 = arith.constant 0 : index
    %c0_17 = arith.constant 0 : index
    %17 = vector.load %arg2[%c3, %c0_16, %c0_17] : memref<4x8x12xbf16, #tpu.memory_space<vmem>>, vector<1x8x12xbf16>
    %18 = vector.shape_cast %17 : vector<1x8x12xbf16> to vector<8x12xbf16>
    %c0_18 = arith.constant 0 : index
    %c0_19 = arith.constant 0 : index
    %c66 = arith.constant 66 : index
    %19 = vector.load %arg1[%c0_18, %c0_19, %c66] : memref<1x12x4291xbf16, #tpu.memory_space<vmem>>, vector<1x12x4225xbf16>
    %20 = vector.shape_cast %19 : vector<1x12x4225xbf16> to vector<12x4225xbf16>
    %cst_20 = arith.constant dense<0.000000e+00> : vector<8x4225xf32>
    %21 = tpu.matmul %18, %20, %cst_20 {dimension_numbers = #tpu.dot_dimension_numbers<[1], [0], [0], [1], [0, 0, 1, 1], [], []>} : vector<8x12xbf16>, vector<12x4225xbf16>, vector<8x4225xf32> -> vector<8x4225xf32>
    %22 = arith.addf %16, %21 : vector<8x4225xf32>
    %cst_21 = arith.constant 2.000000e-01 : f32
    %23 = vector.broadcast %cst_21 : f32 to vector<8x4225xf32>
    %24 = arith.mulf %23, %22 : vector<8x4225xf32>
    %25 = arith.maximumf %22, %24 : vector<8x4225xf32>
    %26 = arith.truncf %25 : vector<8x4225xf32> to vector<8x4225xbf16>
    %c0_22 = arith.constant 0 : index
    %c0_23 = arith.constant 0 : index
    %c0_24 = arith.constant 0 : index
    %27 = vector.load %arg3[%c0_22, %c0_23, %c0_24] : memref<1x8x4225xbf16, #tpu.memory_space<vmem>>, vector<1x8x4225xbf16>
    %28 = vector.shape_cast %27 : vector<1x8x4225xbf16> to vector<8x4225xbf16>
    %29 = vector.shape_cast %26 : vector<8x4225xbf16> to vector<1x8x4225xbf16>
    tpu.vector_store %arg3[%c0_22, %c0_23, %c0_24], %29 {strides = array<i32>} : memref<1x8x4225xbf16, #tpu.memory_space<vmem>>, vector<1x8x4225xbf16>,
    return
  }
  func.func @transform_0(%arg0: i32) -> (i32, i32, i32) {
    %c0_i32 = arith.constant 0 : i32
    %c0_i32_0 = arith.constant 0 : i32
    %c0_i32_1 = arith.constant 0 : i32
    return %arg0, %c0_i32, %c0_i32_0 : i32, i32, i32
  }
  func.func @transform_1(%arg0: i32) -> (i32, i32, i32) {
    %c0_i32 = arith.constant 0 : i32
    %c0_i32_0 = arith.constant 0 : i32
    %c0_i32_1 = arith.constant 0 : i32
    %c0_i32_2 = arith.constant 0 : i32
    return %c0_i32, %c0_i32_0, %c0_i32_1 : i32, i32, i32
  }
  func.func @transform_2(%arg0: i32) -> (i32, i32, i32) {
    %c0_i32 = arith.constant 0 : i32
    %c0_i32_0 = arith.constant 0 : i32
    %c0_i32_1 = arith.constant 0 : i32
    return %arg0, %c0_i32, %c0_i32_0 : i32, i32, i32
  }
}

module attributes {stable_mosaic.version = 11 : i64} {
  func.func @_conv_bn_lrelu_kernel(%arg0: memref<32x2212xbf16, #tpu.memory_space<vmem>>, %arg1: memref<4x16x32xbf16, #tpu.memory_space<vmem>>, %arg2: memref<16x1xf32, #tpu.memory_space<vmem>>, %arg3: memref<16x1xf32, #tpu.memory_space<vmem>>, %arg4: memref<1x2178xf32, #tpu.memory_space<vmem>>, %arg5: memref<16x2178xbf16, #tpu.memory_space<vmem>>) attributes {dimension_semantics = [], scalar_prefetch = 0 : i64, scratch_operands = 0 : i64, tpu.core_type = #tpu.core_type<tc>} {
    %c0 = arith.constant 0 : index
    %c0_0 = arith.constant 0 : index
    %c0_1 = arith.constant 0 : index
    %0 = vector.load %arg1[%c0, %c0_0, %c0_1] : memref<4x16x32xbf16, #tpu.memory_space<vmem>>, vector<1x16x32xbf16>
    %1 = vector.shape_cast %0 : vector<1x16x32xbf16> to vector<16x32xbf16>
    %c0_2 = arith.constant 0 : index
    %c0_3 = arith.constant 0 : index
    %2 = vector.load %arg0[%c0_2, %c0_3] : memref<32x2212xbf16, #tpu.memory_space<vmem>>, vector<32x2178xbf16>
    %cst = arith.constant dense<0.000000e+00> : vector<16x2178xf32>
    %3 = tpu.matmul %1, %2, %cst {dimension_numbers = #tpu.dot_dimension_numbers<[1], [0], [0], [1], [0, 0, 1, 1], [], []>} : vector<16x32xbf16>, vector<32x2178xbf16>, vector<16x2178xf32> -> vector<16x2178xf32>
    %c1 = arith.constant 1 : index
    %c0_4 = arith.constant 0 : index
    %c0_5 = arith.constant 0 : index
    %4 = vector.load %arg1[%c1, %c0_4, %c0_5] : memref<4x16x32xbf16, #tpu.memory_space<vmem>>, vector<1x16x32xbf16>
    %5 = vector.shape_cast %4 : vector<1x16x32xbf16> to vector<16x32xbf16>
    %c0_6 = arith.constant 0 : index
    %c1_7 = arith.constant 1 : index
    %6 = vector.load %arg0[%c0_6, %c1_7] : memref<32x2212xbf16, #tpu.memory_space<vmem>>, vector<32x2178xbf16>
    %cst_8 = arith.constant dense<0.000000e+00> : vector<16x2178xf32>
    %7 = tpu.matmul %5, %6, %cst_8 {dimension_numbers = #tpu.dot_dimension_numbers<[1], [0], [0], [1], [0, 0, 1, 1], [], []>} : vector<16x32xbf16>, vector<32x2178xbf16>, vector<16x2178xf32> -> vector<16x2178xf32>
    %8 = arith.addf %3, %7 : vector<16x2178xf32>
    %c2 = arith.constant 2 : index
    %c0_9 = arith.constant 0 : index
    %c0_10 = arith.constant 0 : index
    %9 = vector.load %arg1[%c2, %c0_9, %c0_10] : memref<4x16x32xbf16, #tpu.memory_space<vmem>>, vector<1x16x32xbf16>
    %10 = vector.shape_cast %9 : vector<1x16x32xbf16> to vector<16x32xbf16>
    %c0_11 = arith.constant 0 : index
    %c33 = arith.constant 33 : index
    %11 = vector.load %arg0[%c0_11, %c33] : memref<32x2212xbf16, #tpu.memory_space<vmem>>, vector<32x2178xbf16>
    %cst_12 = arith.constant dense<0.000000e+00> : vector<16x2178xf32>
    %12 = tpu.matmul %10, %11, %cst_12 {dimension_numbers = #tpu.dot_dimension_numbers<[1], [0], [0], [1], [0, 0, 1, 1], [], []>} : vector<16x32xbf16>, vector<32x2178xbf16>, vector<16x2178xf32> -> vector<16x2178xf32>
    %13 = arith.addf %8, %12 : vector<16x2178xf32>
    %c3 = arith.constant 3 : index
    %c0_13 = arith.constant 0 : index
    %c0_14 = arith.constant 0 : index
    %14 = vector.load %arg1[%c3, %c0_13, %c0_14] : memref<4x16x32xbf16, #tpu.memory_space<vmem>>, vector<1x16x32xbf16>
    %15 = vector.shape_cast %14 : vector<1x16x32xbf16> to vector<16x32xbf16>
    %c0_15 = arith.constant 0 : index
    %c34 = arith.constant 34 : index
    %16 = vector.load %arg0[%c0_15, %c34] : memref<32x2212xbf16, #tpu.memory_space<vmem>>, vector<32x2178xbf16>
    %cst_16 = arith.constant dense<0.000000e+00> : vector<16x2178xf32>
    %17 = tpu.matmul %15, %16, %cst_16 {dimension_numbers = #tpu.dot_dimension_numbers<[1], [0], [0], [1], [0, 0, 1, 1], [], []>} : vector<16x32xbf16>, vector<32x2178xbf16>, vector<16x2178xf32> -> vector<16x2178xf32>
    %18 = arith.addf %13, %17 : vector<16x2178xf32>
    %c0_17 = arith.constant 0 : index
    %c0_18 = arith.constant 0 : index
    %19 = vector.load %arg2[%c0_17, %c0_18] : memref<16x1xf32, #tpu.memory_space<vmem>>, vector<16x1xf32>
    %c0_19 = arith.constant 0 : index
    %c0_20 = arith.constant 0 : index
    %20 = vector.load %arg3[%c0_19, %c0_20] : memref<16x1xf32, #tpu.memory_space<vmem>>, vector<16x1xf32>
    %c0_21 = arith.constant 0 : index
    %c0_22 = arith.constant 0 : index
    %21 = vector.load %arg4[%c0_21, %c0_22] : memref<1x2178xf32, #tpu.memory_space<vmem>>, vector<1x2178xf32>
    %22 = vector.broadcast %21 : vector<1x2178xf32> to vector<16x2178xf32>
    %23 = arith.mulf %18, %22 : vector<16x2178xf32>
    %cst_23 = arith.constant dense<0.000000e+00> : vector<16xf32>
    %24 = vector.multi_reduction <add>, %23, %cst_23 [1] : vector<16x2178xf32> to vector<16xf32>
    %25 = vector.shape_cast %24 : vector<16xf32> to vector<16x1xf32>
    %cst_24 = arith.constant 4.8828125E-4 : f32
    %26 = vector.broadcast %cst_24 : f32 to vector<16x1xf32>
    %27 = arith.mulf %25, %26 : vector<16x1xf32>
    %28 = arith.mulf %18, %18 : vector<16x2178xf32>
    %29 = vector.broadcast %21 : vector<1x2178xf32> to vector<16x2178xf32>
    %30 = arith.mulf %28, %29 : vector<16x2178xf32>
    %cst_25 = arith.constant dense<0.000000e+00> : vector<16xf32>
    %31 = vector.multi_reduction <add>, %30, %cst_25 [1] : vector<16x2178xf32> to vector<16xf32>
    %32 = vector.shape_cast %31 : vector<16xf32> to vector<16x1xf32>
    %cst_26 = arith.constant 4.8828125E-4 : f32
    %33 = vector.broadcast %cst_26 : f32 to vector<16x1xf32>
    %34 = arith.mulf %32, %33 : vector<16x1xf32>
    %35 = arith.mulf %27, %27 : vector<16x1xf32>
    %36 = arith.subf %34, %35 : vector<16x1xf32>
    %cst_27 = arith.constant 0.000000e+00 : f32
    %37 = vector.broadcast %cst_27 : f32 to vector<16x1xf32>
    %38 = arith.maximumf %36, %37 : vector<16x1xf32>
    %cst_28 = arith.constant 9.99999974E-6 : f32
    %39 = vector.broadcast %cst_28 : f32 to vector<16x1xf32>
    %40 = arith.addf %38, %39 : vector<16x1xf32>
    %41 = math.rsqrt %40 : vector<16x1xf32>
    %42 = arith.mulf %19, %41 : vector<16x1xf32>
    %43 = arith.mulf %27, %42 : vector<16x1xf32>
    %44 = arith.subf %20, %43 : vector<16x1xf32>
    %45 = vector.broadcast %42 : vector<16x1xf32> to vector<16x2178xf32>
    %46 = arith.mulf %18, %45 : vector<16x2178xf32>
    %47 = vector.broadcast %44 : vector<16x1xf32> to vector<16x2178xf32>
    %48 = arith.addf %46, %47 : vector<16x2178xf32>
    %cst_29 = arith.constant 2.000000e-01 : f32
    %49 = vector.broadcast %cst_29 : f32 to vector<16x2178xf32>
    %50 = arith.mulf %49, %48 : vector<16x2178xf32>
    %51 = arith.maximumf %48, %50 : vector<16x2178xf32>
    %52 = arith.truncf %51 : vector<16x2178xf32> to vector<16x2178xbf16>
    %c0_30 = arith.constant 0 : index
    %c0_31 = arith.constant 0 : index
    %53 = vector.load %arg5[%c0_30, %c0_31] : memref<16x2178xbf16, #tpu.memory_space<vmem>>, vector<16x2178xbf16>
    tpu.vector_store %arg5[%c0_30, %c0_31], %52 {strides = array<i32>} : memref<16x2178xbf16, #tpu.memory_space<vmem>>, vector<16x2178xbf16>,
    return
  }
}

module attributes {stable_mosaic.version = 11 : i64} {
  func.func @_conv_bn_lrelu_kernel(%arg0: memref<64x596xbf16, #tpu.memory_space<vmem>>, %arg1: memref<4x32x64xbf16, #tpu.memory_space<vmem>>, %arg2: memref<32x1xf32, #tpu.memory_space<vmem>>, %arg3: memref<32x1xf32, #tpu.memory_space<vmem>>, %arg4: memref<1x578xf32, #tpu.memory_space<vmem>>, %arg5: memref<32x578xbf16, #tpu.memory_space<vmem>>) attributes {dimension_semantics = [], scalar_prefetch = 0 : i64, scratch_operands = 0 : i64, tpu.core_type = #tpu.core_type<tc>} {
    %c0 = arith.constant 0 : index
    %c0_0 = arith.constant 0 : index
    %c0_1 = arith.constant 0 : index
    %0 = vector.load %arg1[%c0, %c0_0, %c0_1] : memref<4x32x64xbf16, #tpu.memory_space<vmem>>, vector<1x32x64xbf16>
    %1 = vector.shape_cast %0 : vector<1x32x64xbf16> to vector<32x64xbf16>
    %c0_2 = arith.constant 0 : index
    %c0_3 = arith.constant 0 : index
    %2 = vector.load %arg0[%c0_2, %c0_3] : memref<64x596xbf16, #tpu.memory_space<vmem>>, vector<64x578xbf16>
    %cst = arith.constant dense<0.000000e+00> : vector<32x578xf32>
    %3 = tpu.matmul %1, %2, %cst {dimension_numbers = #tpu.dot_dimension_numbers<[1], [0], [0], [1], [0, 0, 1, 1], [], []>} : vector<32x64xbf16>, vector<64x578xbf16>, vector<32x578xf32> -> vector<32x578xf32>
    %c1 = arith.constant 1 : index
    %c0_4 = arith.constant 0 : index
    %c0_5 = arith.constant 0 : index
    %4 = vector.load %arg1[%c1, %c0_4, %c0_5] : memref<4x32x64xbf16, #tpu.memory_space<vmem>>, vector<1x32x64xbf16>
    %5 = vector.shape_cast %4 : vector<1x32x64xbf16> to vector<32x64xbf16>
    %c0_6 = arith.constant 0 : index
    %c1_7 = arith.constant 1 : index
    %6 = vector.load %arg0[%c0_6, %c1_7] : memref<64x596xbf16, #tpu.memory_space<vmem>>, vector<64x578xbf16>
    %cst_8 = arith.constant dense<0.000000e+00> : vector<32x578xf32>
    %7 = tpu.matmul %5, %6, %cst_8 {dimension_numbers = #tpu.dot_dimension_numbers<[1], [0], [0], [1], [0, 0, 1, 1], [], []>} : vector<32x64xbf16>, vector<64x578xbf16>, vector<32x578xf32> -> vector<32x578xf32>
    %8 = arith.addf %3, %7 : vector<32x578xf32>
    %c2 = arith.constant 2 : index
    %c0_9 = arith.constant 0 : index
    %c0_10 = arith.constant 0 : index
    %9 = vector.load %arg1[%c2, %c0_9, %c0_10] : memref<4x32x64xbf16, #tpu.memory_space<vmem>>, vector<1x32x64xbf16>
    %10 = vector.shape_cast %9 : vector<1x32x64xbf16> to vector<32x64xbf16>
    %c0_11 = arith.constant 0 : index
    %c17 = arith.constant 17 : index
    %11 = vector.load %arg0[%c0_11, %c17] : memref<64x596xbf16, #tpu.memory_space<vmem>>, vector<64x578xbf16>
    %cst_12 = arith.constant dense<0.000000e+00> : vector<32x578xf32>
    %12 = tpu.matmul %10, %11, %cst_12 {dimension_numbers = #tpu.dot_dimension_numbers<[1], [0], [0], [1], [0, 0, 1, 1], [], []>} : vector<32x64xbf16>, vector<64x578xbf16>, vector<32x578xf32> -> vector<32x578xf32>
    %13 = arith.addf %8, %12 : vector<32x578xf32>
    %c3 = arith.constant 3 : index
    %c0_13 = arith.constant 0 : index
    %c0_14 = arith.constant 0 : index
    %14 = vector.load %arg1[%c3, %c0_13, %c0_14] : memref<4x32x64xbf16, #tpu.memory_space<vmem>>, vector<1x32x64xbf16>
    %15 = vector.shape_cast %14 : vector<1x32x64xbf16> to vector<32x64xbf16>
    %c0_15 = arith.constant 0 : index
    %c18 = arith.constant 18 : index
    %16 = vector.load %arg0[%c0_15, %c18] : memref<64x596xbf16, #tpu.memory_space<vmem>>, vector<64x578xbf16>
    %cst_16 = arith.constant dense<0.000000e+00> : vector<32x578xf32>
    %17 = tpu.matmul %15, %16, %cst_16 {dimension_numbers = #tpu.dot_dimension_numbers<[1], [0], [0], [1], [0, 0, 1, 1], [], []>} : vector<32x64xbf16>, vector<64x578xbf16>, vector<32x578xf32> -> vector<32x578xf32>
    %18 = arith.addf %13, %17 : vector<32x578xf32>
    %c0_17 = arith.constant 0 : index
    %c0_18 = arith.constant 0 : index
    %19 = vector.load %arg2[%c0_17, %c0_18] : memref<32x1xf32, #tpu.memory_space<vmem>>, vector<32x1xf32>
    %c0_19 = arith.constant 0 : index
    %c0_20 = arith.constant 0 : index
    %20 = vector.load %arg3[%c0_19, %c0_20] : memref<32x1xf32, #tpu.memory_space<vmem>>, vector<32x1xf32>
    %c0_21 = arith.constant 0 : index
    %c0_22 = arith.constant 0 : index
    %21 = vector.load %arg4[%c0_21, %c0_22] : memref<1x578xf32, #tpu.memory_space<vmem>>, vector<1x578xf32>
    %22 = vector.broadcast %21 : vector<1x578xf32> to vector<32x578xf32>
    %23 = arith.mulf %18, %22 : vector<32x578xf32>
    %cst_23 = arith.constant dense<0.000000e+00> : vector<32xf32>
    %24 = vector.multi_reduction <add>, %23, %cst_23 [1] : vector<32x578xf32> to vector<32xf32>
    %25 = vector.shape_cast %24 : vector<32xf32> to vector<32x1xf32>
    %cst_24 = arith.constant 0.001953125 : f32
    %26 = vector.broadcast %cst_24 : f32 to vector<32x1xf32>
    %27 = arith.mulf %25, %26 : vector<32x1xf32>
    %28 = arith.mulf %18, %18 : vector<32x578xf32>
    %29 = vector.broadcast %21 : vector<1x578xf32> to vector<32x578xf32>
    %30 = arith.mulf %28, %29 : vector<32x578xf32>
    %cst_25 = arith.constant dense<0.000000e+00> : vector<32xf32>
    %31 = vector.multi_reduction <add>, %30, %cst_25 [1] : vector<32x578xf32> to vector<32xf32>
    %32 = vector.shape_cast %31 : vector<32xf32> to vector<32x1xf32>
    %cst_26 = arith.constant 0.001953125 : f32
    %33 = vector.broadcast %cst_26 : f32 to vector<32x1xf32>
    %34 = arith.mulf %32, %33 : vector<32x1xf32>
    %35 = arith.mulf %27, %27 : vector<32x1xf32>
    %36 = arith.subf %34, %35 : vector<32x1xf32>
    %cst_27 = arith.constant 0.000000e+00 : f32
    %37 = vector.broadcast %cst_27 : f32 to vector<32x1xf32>
    %38 = arith.maximumf %36, %37 : vector<32x1xf32>
    %cst_28 = arith.constant 9.99999974E-6 : f32
    %39 = vector.broadcast %cst_28 : f32 to vector<32x1xf32>
    %40 = arith.addf %38, %39 : vector<32x1xf32>
    %41 = math.rsqrt %40 : vector<32x1xf32>
    %42 = arith.mulf %19, %41 : vector<32x1xf32>
    %43 = arith.mulf %27, %42 : vector<32x1xf32>
    %44 = arith.subf %20, %43 : vector<32x1xf32>
    %45 = vector.broadcast %42 : vector<32x1xf32> to vector<32x578xf32>
    %46 = arith.mulf %18, %45 : vector<32x578xf32>
    %47 = vector.broadcast %44 : vector<32x1xf32> to vector<32x578xf32>
    %48 = arith.addf %46, %47 : vector<32x578xf32>
    %cst_29 = arith.constant 2.000000e-01 : f32
    %49 = vector.broadcast %cst_29 : f32 to vector<32x578xf32>
    %50 = arith.mulf %49, %48 : vector<32x578xf32>
    %51 = arith.maximumf %48, %50 : vector<32x578xf32>
    %52 = arith.truncf %51 : vector<32x578xf32> to vector<32x578xbf16>
    %c0_30 = arith.constant 0 : index
    %c0_31 = arith.constant 0 : index
    %53 = vector.load %arg5[%c0_30, %c0_31] : memref<32x578xbf16, #tpu.memory_space<vmem>>, vector<32x578xbf16>
    tpu.vector_store %arg5[%c0_30, %c0_31], %52 {strides = array<i32>} : memref<32x578xbf16, #tpu.memory_space<vmem>>, vector<32x578xbf16>,
    return
  }
}

module attributes {stable_mosaic.version = 11 : i64} {
  func.func @_conv_bn_lrelu_kernel(%arg0: memref<128x172xbf16, #tpu.memory_space<vmem>>, %arg1: memref<4x64x128xbf16, #tpu.memory_space<vmem>>, %arg2: memref<64x1xf32, #tpu.memory_space<vmem>>, %arg3: memref<64x1xf32, #tpu.memory_space<vmem>>, %arg4: memref<1x162xf32, #tpu.memory_space<vmem>>, %arg5: memref<64x162xbf16, #tpu.memory_space<vmem>>) attributes {dimension_semantics = [], scalar_prefetch = 0 : i64, scratch_operands = 0 : i64, tpu.core_type = #tpu.core_type<tc>} {
    %c0 = arith.constant 0 : index
    %c0_0 = arith.constant 0 : index
    %c0_1 = arith.constant 0 : index
    %0 = vector.load %arg1[%c0, %c0_0, %c0_1] : memref<4x64x128xbf16, #tpu.memory_space<vmem>>, vector<1x64x128xbf16>
    %1 = vector.shape_cast %0 : vector<1x64x128xbf16> to vector<64x128xbf16>
    %c0_2 = arith.constant 0 : index
    %c0_3 = arith.constant 0 : index
    %2 = vector.load %arg0[%c0_2, %c0_3] : memref<128x172xbf16, #tpu.memory_space<vmem>>, vector<128x162xbf16>
    %cst = arith.constant dense<0.000000e+00> : vector<64x162xf32>
    %3 = tpu.matmul %1, %2, %cst {dimension_numbers = #tpu.dot_dimension_numbers<[1], [0], [0], [1], [0, 0, 1, 1], [], []>} : vector<64x128xbf16>, vector<128x162xbf16>, vector<64x162xf32> -> vector<64x162xf32>
    %c1 = arith.constant 1 : index
    %c0_4 = arith.constant 0 : index
    %c0_5 = arith.constant 0 : index
    %4 = vector.load %arg1[%c1, %c0_4, %c0_5] : memref<4x64x128xbf16, #tpu.memory_space<vmem>>, vector<1x64x128xbf16>
    %5 = vector.shape_cast %4 : vector<1x64x128xbf16> to vector<64x128xbf16>
    %c0_6 = arith.constant 0 : index
    %c1_7 = arith.constant 1 : index
    %6 = vector.load %arg0[%c0_6, %c1_7] : memref<128x172xbf16, #tpu.memory_space<vmem>>, vector<128x162xbf16>
    %cst_8 = arith.constant dense<0.000000e+00> : vector<64x162xf32>
    %7 = tpu.matmul %5, %6, %cst_8 {dimension_numbers = #tpu.dot_dimension_numbers<[1], [0], [0], [1], [0, 0, 1, 1], [], []>} : vector<64x128xbf16>, vector<128x162xbf16>, vector<64x162xf32> -> vector<64x162xf32>
    %8 = arith.addf %3, %7 : vector<64x162xf32>
    %c2 = arith.constant 2 : index
    %c0_9 = arith.constant 0 : index
    %c0_10 = arith.constant 0 : index
    %9 = vector.load %arg1[%c2, %c0_9, %c0_10] : memref<4x64x128xbf16, #tpu.memory_space<vmem>>, vector<1x64x128xbf16>
    %10 = vector.shape_cast %9 : vector<1x64x128xbf16> to vector<64x128xbf16>
    %c0_11 = arith.constant 0 : index
    %c9 = arith.constant 9 : index
    %11 = vector.load %arg0[%c0_11, %c9] : memref<128x172xbf16, #tpu.memory_space<vmem>>, vector<128x162xbf16>
    %cst_12 = arith.constant dense<0.000000e+00> : vector<64x162xf32>
    %12 = tpu.matmul %10, %11, %cst_12 {dimension_numbers = #tpu.dot_dimension_numbers<[1], [0], [0], [1], [0, 0, 1, 1], [], []>} : vector<64x128xbf16>, vector<128x162xbf16>, vector<64x162xf32> -> vector<64x162xf32>
    %13 = arith.addf %8, %12 : vector<64x162xf32>
    %c3 = arith.constant 3 : index
    %c0_13 = arith.constant 0 : index
    %c0_14 = arith.constant 0 : index
    %14 = vector.load %arg1[%c3, %c0_13, %c0_14] : memref<4x64x128xbf16, #tpu.memory_space<vmem>>, vector<1x64x128xbf16>
    %15 = vector.shape_cast %14 : vector<1x64x128xbf16> to vector<64x128xbf16>
    %c0_15 = arith.constant 0 : index
    %c10 = arith.constant 10 : index
    %16 = vector.load %arg0[%c0_15, %c10] : memref<128x172xbf16, #tpu.memory_space<vmem>>, vector<128x162xbf16>
    %cst_16 = arith.constant dense<0.000000e+00> : vector<64x162xf32>
    %17 = tpu.matmul %15, %16, %cst_16 {dimension_numbers = #tpu.dot_dimension_numbers<[1], [0], [0], [1], [0, 0, 1, 1], [], []>} : vector<64x128xbf16>, vector<128x162xbf16>, vector<64x162xf32> -> vector<64x162xf32>
    %18 = arith.addf %13, %17 : vector<64x162xf32>
    %c0_17 = arith.constant 0 : index
    %c0_18 = arith.constant 0 : index
    %19 = vector.load %arg2[%c0_17, %c0_18] : memref<64x1xf32, #tpu.memory_space<vmem>>, vector<64x1xf32>
    %c0_19 = arith.constant 0 : index
    %c0_20 = arith.constant 0 : index
    %20 = vector.load %arg3[%c0_19, %c0_20] : memref<64x1xf32, #tpu.memory_space<vmem>>, vector<64x1xf32>
    %c0_21 = arith.constant 0 : index
    %c0_22 = arith.constant 0 : index
    %21 = vector.load %arg4[%c0_21, %c0_22] : memref<1x162xf32, #tpu.memory_space<vmem>>, vector<1x162xf32>
    %22 = vector.broadcast %21 : vector<1x162xf32> to vector<64x162xf32>
    %23 = arith.mulf %18, %22 : vector<64x162xf32>
    %cst_23 = arith.constant dense<0.000000e+00> : vector<64xf32>
    %24 = vector.multi_reduction <add>, %23, %cst_23 [1] : vector<64x162xf32> to vector<64xf32>
    %25 = vector.shape_cast %24 : vector<64xf32> to vector<64x1xf32>
    %cst_24 = arith.constant 7.812500e-03 : f32
    %26 = vector.broadcast %cst_24 : f32 to vector<64x1xf32>
    %27 = arith.mulf %25, %26 : vector<64x1xf32>
    %28 = arith.mulf %18, %18 : vector<64x162xf32>
    %29 = vector.broadcast %21 : vector<1x162xf32> to vector<64x162xf32>
    %30 = arith.mulf %28, %29 : vector<64x162xf32>
    %cst_25 = arith.constant dense<0.000000e+00> : vector<64xf32>
    %31 = vector.multi_reduction <add>, %30, %cst_25 [1] : vector<64x162xf32> to vector<64xf32>
    %32 = vector.shape_cast %31 : vector<64xf32> to vector<64x1xf32>
    %cst_26 = arith.constant 7.812500e-03 : f32
    %33 = vector.broadcast %cst_26 : f32 to vector<64x1xf32>
    %34 = arith.mulf %32, %33 : vector<64x1xf32>
    %35 = arith.mulf %27, %27 : vector<64x1xf32>
    %36 = arith.subf %34, %35 : vector<64x1xf32>
    %cst_27 = arith.constant 0.000000e+00 : f32
    %37 = vector.broadcast %cst_27 : f32 to vector<64x1xf32>
    %38 = arith.maximumf %36, %37 : vector<64x1xf32>
    %cst_28 = arith.constant 9.99999974E-6 : f32
    %39 = vector.broadcast %cst_28 : f32 to vector<64x1xf32>
    %40 = arith.addf %38, %39 : vector<64x1xf32>
    %41 = math.rsqrt %40 : vector<64x1xf32>
    %42 = arith.mulf %19, %41 : vector<64x1xf32>
    %43 = arith.mulf %27, %42 : vector<64x1xf32>
    %44 = arith.subf %20, %43 : vector<64x1xf32>
    %45 = vector.broadcast %42 : vector<64x1xf32> to vector<64x162xf32>
    %46 = arith.mulf %18, %45 : vector<64x162xf32>
    %47 = vector.broadcast %44 : vector<64x1xf32> to vector<64x162xf32>
    %48 = arith.addf %46, %47 : vector<64x162xf32>
    %cst_29 = arith.constant 2.000000e-01 : f32
    %49 = vector.broadcast %cst_29 : f32 to vector<64x162xf32>
    %50 = arith.mulf %49, %48 : vector<64x162xf32>
    %51 = arith.maximumf %48, %50 : vector<64x162xf32>
    %52 = arith.truncf %51 : vector<64x162xf32> to vector<64x162xbf16>
    %c0_30 = arith.constant 0 : index
    %c0_31 = arith.constant 0 : index
    %53 = vector.load %arg5[%c0_30, %c0_31] : memref<64x162xbf16, #tpu.memory_space<vmem>>, vector<64x162xbf16>
    tpu.vector_store %arg5[%c0_30, %c0_31], %52 {strides = array<i32>} : memref<64x162xbf16, #tpu.memory_space<vmem>>, vector<64x162xbf16>,
    return
  }
}

module attributes {stable_mosaic.version = 11 : i64} {
  func.func @_conv_bn_lrelu_fc_kernel(%arg0: memref<256x56xbf16, #tpu.memory_space<vmem>>, %arg1: memref<4x128x256xbf16, #tpu.memory_space<vmem>>, %arg2: memref<128x1xf32, #tpu.memory_space<vmem>>, %arg3: memref<128x1xf32, #tpu.memory_space<vmem>>, %arg4: memref<1x50xf32, #tpu.memory_space<vmem>>, %arg5: memref<128x50xf32, #tpu.memory_space<vmem>>, %arg6: memref<1x1xf32, #tpu.memory_space<vmem>>, %arg7: memref<2x1xf32, #tpu.memory_space<vmem>>) attributes {dimension_semantics = [], scalar_prefetch = 0 : i64, scratch_operands = 0 : i64, tpu.core_type = #tpu.core_type<tc>} {
    %c0 = arith.constant 0 : index
    %c0_0 = arith.constant 0 : index
    %c0_1 = arith.constant 0 : index
    %0 = vector.load %arg1[%c0, %c0_0, %c0_1] : memref<4x128x256xbf16, #tpu.memory_space<vmem>>, vector<1x128x256xbf16>
    %1 = vector.shape_cast %0 : vector<1x128x256xbf16> to vector<128x256xbf16>
    %c0_2 = arith.constant 0 : index
    %c0_3 = arith.constant 0 : index
    %2 = vector.load %arg0[%c0_2, %c0_3] : memref<256x56xbf16, #tpu.memory_space<vmem>>, vector<256x50xbf16>
    %cst = arith.constant dense<0.000000e+00> : vector<128x50xf32>
    %3 = tpu.matmul %1, %2, %cst {dimension_numbers = #tpu.dot_dimension_numbers<[1], [0], [0], [1], [0, 0, 1, 1], [], []>} : vector<128x256xbf16>, vector<256x50xbf16>, vector<128x50xf32> -> vector<128x50xf32>
    %c1 = arith.constant 1 : index
    %c0_4 = arith.constant 0 : index
    %c0_5 = arith.constant 0 : index
    %4 = vector.load %arg1[%c1, %c0_4, %c0_5] : memref<4x128x256xbf16, #tpu.memory_space<vmem>>, vector<1x128x256xbf16>
    %5 = vector.shape_cast %4 : vector<1x128x256xbf16> to vector<128x256xbf16>
    %c0_6 = arith.constant 0 : index
    %c1_7 = arith.constant 1 : index
    %6 = vector.load %arg0[%c0_6, %c1_7] : memref<256x56xbf16, #tpu.memory_space<vmem>>, vector<256x50xbf16>
    %cst_8 = arith.constant dense<0.000000e+00> : vector<128x50xf32>
    %7 = tpu.matmul %5, %6, %cst_8 {dimension_numbers = #tpu.dot_dimension_numbers<[1], [0], [0], [1], [0, 0, 1, 1], [], []>} : vector<128x256xbf16>, vector<256x50xbf16>, vector<128x50xf32> -> vector<128x50xf32>
    %8 = arith.addf %3, %7 : vector<128x50xf32>
    %c2 = arith.constant 2 : index
    %c0_9 = arith.constant 0 : index
    %c0_10 = arith.constant 0 : index
    %9 = vector.load %arg1[%c2, %c0_9, %c0_10] : memref<4x128x256xbf16, #tpu.memory_space<vmem>>, vector<1x128x256xbf16>
    %10 = vector.shape_cast %9 : vector<1x128x256xbf16> to vector<128x256xbf16>
    %c0_11 = arith.constant 0 : index
    %c5 = arith.constant 5 : index
    %11 = vector.load %arg0[%c0_11, %c5] : memref<256x56xbf16, #tpu.memory_space<vmem>>, vector<256x50xbf16>
    %cst_12 = arith.constant dense<0.000000e+00> : vector<128x50xf32>
    %12 = tpu.matmul %10, %11, %cst_12 {dimension_numbers = #tpu.dot_dimension_numbers<[1], [0], [0], [1], [0, 0, 1, 1], [], []>} : vector<128x256xbf16>, vector<256x50xbf16>, vector<128x50xf32> -> vector<128x50xf32>
    %13 = arith.addf %8, %12 : vector<128x50xf32>
    %c3 = arith.constant 3 : index
    %c0_13 = arith.constant 0 : index
    %c0_14 = arith.constant 0 : index
    %14 = vector.load %arg1[%c3, %c0_13, %c0_14] : memref<4x128x256xbf16, #tpu.memory_space<vmem>>, vector<1x128x256xbf16>
    %15 = vector.shape_cast %14 : vector<1x128x256xbf16> to vector<128x256xbf16>
    %c0_15 = arith.constant 0 : index
    %c6 = arith.constant 6 : index
    %16 = vector.load %arg0[%c0_15, %c6] : memref<256x56xbf16, #tpu.memory_space<vmem>>, vector<256x50xbf16>
    %cst_16 = arith.constant dense<0.000000e+00> : vector<128x50xf32>
    %17 = tpu.matmul %15, %16, %cst_16 {dimension_numbers = #tpu.dot_dimension_numbers<[1], [0], [0], [1], [0, 0, 1, 1], [], []>} : vector<128x256xbf16>, vector<256x50xbf16>, vector<128x50xf32> -> vector<128x50xf32>
    %18 = arith.addf %13, %17 : vector<128x50xf32>
    %c0_17 = arith.constant 0 : index
    %c0_18 = arith.constant 0 : index
    %19 = vector.load %arg2[%c0_17, %c0_18] : memref<128x1xf32, #tpu.memory_space<vmem>>, vector<128x1xf32>
    %c0_19 = arith.constant 0 : index
    %c0_20 = arith.constant 0 : index
    %20 = vector.load %arg3[%c0_19, %c0_20] : memref<128x1xf32, #tpu.memory_space<vmem>>, vector<128x1xf32>
    %c0_21 = arith.constant 0 : index
    %c0_22 = arith.constant 0 : index
    %21 = vector.load %arg4[%c0_21, %c0_22] : memref<1x50xf32, #tpu.memory_space<vmem>>, vector<1x50xf32>
    %22 = vector.broadcast %21 : vector<1x50xf32> to vector<128x50xf32>
    %23 = arith.mulf %18, %22 : vector<128x50xf32>
    %cst_23 = arith.constant dense<0.000000e+00> : vector<128xf32>
    %24 = vector.multi_reduction <add>, %23, %cst_23 [1] : vector<128x50xf32> to vector<128xf32>
    %25 = vector.shape_cast %24 : vector<128xf32> to vector<128x1xf32>
    %cst_24 = arith.constant 3.125000e-02 : f32
    %26 = vector.broadcast %cst_24 : f32 to vector<128x1xf32>
    %27 = arith.mulf %25, %26 : vector<128x1xf32>
    %28 = arith.mulf %18, %18 : vector<128x50xf32>
    %29 = vector.broadcast %21 : vector<1x50xf32> to vector<128x50xf32>
    %30 = arith.mulf %28, %29 : vector<128x50xf32>
    %cst_25 = arith.constant dense<0.000000e+00> : vector<128xf32>
    %31 = vector.multi_reduction <add>, %30, %cst_25 [1] : vector<128x50xf32> to vector<128xf32>
    %32 = vector.shape_cast %31 : vector<128xf32> to vector<128x1xf32>
    %cst_26 = arith.constant 3.125000e-02 : f32
    %33 = vector.broadcast %cst_26 : f32 to vector<128x1xf32>
    %34 = arith.mulf %32, %33 : vector<128x1xf32>
    %35 = arith.mulf %27, %27 : vector<128x1xf32>
    %36 = arith.subf %34, %35 : vector<128x1xf32>
    %cst_27 = arith.constant 0.000000e+00 : f32
    %37 = vector.broadcast %cst_27 : f32 to vector<128x1xf32>
    %38 = arith.maximumf %36, %37 : vector<128x1xf32>
    %cst_28 = arith.constant 9.99999974E-6 : f32
    %39 = vector.broadcast %cst_28 : f32 to vector<128x1xf32>
    %40 = arith.addf %38, %39 : vector<128x1xf32>
    %41 = math.rsqrt %40 : vector<128x1xf32>
    %42 = arith.mulf %19, %41 : vector<128x1xf32>
    %43 = arith.mulf %27, %42 : vector<128x1xf32>
    %44 = arith.subf %20, %43 : vector<128x1xf32>
    %45 = vector.broadcast %42 : vector<128x1xf32> to vector<128x50xf32>
    %46 = arith.mulf %18, %45 : vector<128x50xf32>
    %47 = vector.broadcast %44 : vector<128x1xf32> to vector<128x50xf32>
    %48 = arith.addf %46, %47 : vector<128x50xf32>
    %cst_29 = arith.constant 2.000000e-01 : f32
    %49 = vector.broadcast %cst_29 : f32 to vector<128x50xf32>
    %50 = arith.mulf %49, %48 : vector<128x50xf32>
    %51 = arith.maximumf %48, %50 : vector<128x50xf32>
    %c0_30 = arith.constant 0 : index
    %c0_31 = arith.constant 0 : index
    %52 = vector.load %arg5[%c0_30, %c0_31] : memref<128x50xf32, #tpu.memory_space<vmem>>, vector<128x50xf32>
    %53 = arith.mulf %51, %52 : vector<128x50xf32>
    %cst_32 = arith.constant dense<0.000000e+00> : vector<50xf32>
    %54 = vector.multi_reduction <add>, %53, %cst_32 [0] : vector<128x50xf32> to vector<50xf32>
    %55 = vector.shape_cast %54 : vector<50xf32> to vector<1x50xf32>
    %56 = vector.extract_strided_slice %55 {offsets = [0, 0], sizes = [1, 25], strides = [1, 1]} : vector<1x50xf32> to vector<1x25xf32>
    %cst_33 = arith.constant dense<0.000000e+00> : vector<1xf32>
    %57 = vector.multi_reduction <add>, %56, %cst_33 [1] : vector<1x25xf32> to vector<1xf32>
    %58 = vector.shape_cast %57 : vector<1xf32> to vector<1x1xf32>
    %c0_34 = arith.constant 0 : index
    %c0_35 = arith.constant 0 : index
    %59 = vector.load %arg6[%c0_34, %c0_35] : memref<1x1xf32, #tpu.memory_space<vmem>>, vector<1x1xf32>
    %60 = arith.addf %58, %59 : vector<1x1xf32>
    %c0_36 = arith.constant 0 : index
    %c0_37 = arith.constant 0 : index
    %61 = vector.load %arg7[%c0_36, %c0_37] : memref<2x1xf32, #tpu.memory_space<vmem>>, vector<1x1xf32>
    tpu.vector_store %arg7[%c0_36, %c0_37], %60 {strides = array<i32>} : memref<2x1xf32, #tpu.memory_space<vmem>>, vector<1x1xf32>,
    %62 = vector.extract_strided_slice %55 {offsets = [0, 25], sizes = [1, 25], strides = [1, 1]} : vector<1x50xf32> to vector<1x25xf32>
    %cst_38 = arith.constant dense<0.000000e+00> : vector<1xf32>
    %63 = vector.multi_reduction <add>, %62, %cst_38 [1] : vector<1x25xf32> to vector<1xf32>
    %64 = vector.shape_cast %63 : vector<1xf32> to vector<1x1xf32>
    %c0_39 = arith.constant 0 : index
    %c0_40 = arith.constant 0 : index
    %65 = vector.load %arg6[%c0_39, %c0_40] : memref<1x1xf32, #tpu.memory_space<vmem>>, vector<1x1xf32>
    %66 = arith.addf %64, %65 : vector<1x1xf32>
    %c1_41 = arith.constant 1 : index
    %c0_42 = arith.constant 0 : index
    %67 = vector.load %arg7[%c1_41, %c0_42] : memref<2x1xf32, #tpu.memory_space<vmem>>, vector<1x1xf32>
    tpu.vector_store %arg7[%c1_41, %c0_42], %66 {strides = array<i32>} : memref<2x1xf32, #tpu.memory_space<vmem>>, vector<1x1xf32>,
    return
  }
}

</mosaic_0001>

<llo_original>
// kernel: critic_forward.5
$region0: #{critic_forward.5}
  #allocation0 [shape = 'u32[]', space=smem, size = 0x4, offset = 0x4, fixed_abs, tag = 'smem constant byte address 0x4 - core index']
  #allocation1 [shape = 'u32[72,128]{1,0:T(1,128)}', space=vmem, size = 0x9000, scoped, tag = 'internal scratch']
  %s0 = inlined_call_operand.vmem [shape: bf16[2,12,4291], index: 0, kind: input, shape index: {}]
  %s1 = inlined_call_operand.vmem [shape: bf16[4,8,12], index: 1, kind: input, shape index: {}]
  %s2 = inlined_call_operand.vmem [shape: bf16[2,8,4225], index: 2, kind: output, shape index: {}]
  %s3 = sld [smem:[#allocation0]]
  $region41: #{critic_forward.5} parent=0
    _
  %s5 = ssub.s32 1, %s3
  %s6 = scalar_select 0, %s5, %s3
  loop: start=0, step=1, limit=4
  $region2: #{critic_forward.5} parent=0 // loop_pre_header
    _
  $region3: #{critic_forward.5} parent=0 // loop_header
    %s8 = sphi 0, %s12
    %p9 = scmp.ge.s32.totalorder %s8, 4
    %s18 = sphi 0, %s20
    %s21 = sphi 0, %s18
    %s22 = sphi 0, %s21
    %s38 = sphi 0, %s22
    %s42 = sphi 0, %s42
    %s44 = sphi 0, %s42
    %s45 = sphi 0, %s44
    %s59 = sphi 0, %s45
    %s65 = sphi 0, %s67
    %s68 = sphi 0, %s65
    %s69 = sphi 0, %s68
    %s85 = sphi 0, %s69
  $region4: #{critic_forward.5} parent=0 // loop_header_branch
    %11 = sbr.rel (%p9) target = $region8
  $region5: #{critic_forward.5} parent=0 // loop_body
    %s13 = ssub.s32 %s8, 1
    %s14 = ssub.s32 %s8, 2
    %s15 = sadd.s32 %s8, 1
    %s16 = ssub.s32 %s8, %s15
    %p17 = scmp.eq.s32.totalorder %s16, 0
    %s19 = sadd.s32 %s18, 1
    %s20 = scalar_select %p17, %s18, %s19
    %p23 = pneg %p17
    %p24 = scmp.eq.s32.totalorder %s8, 1
    %p25 = por %p23, %p24
    %p26 = scmp.ne.s32.totalorder %s18, %s21
    %p27 = scmp.eq.s32.totalorder %s8, 0
    %p28 = por %p26, %p27
    %p29 = scmp.ne.s32.totalorder %s18, %s21
    %p30 = scmp.eq.s32.totalorder %s13, 1
    %p31 = por %p29, %p30
    %p32 = scmp.ne.s32.totalorder %s21, %s22
    %p33 = scmp.eq.s32.totalorder %s13, 0
    %p34 = por %p32, %p33
    %p35 = scmp.ne.s32.totalorder %s21, %s22
    %p36 = scmp.eq.s32.totalorder %s14, 1
    %p37 = por %p35, %p36
    %p39 = scmp.ne.s32.totalorder %s22, %s38
    %p40 = scmp.eq.s32.totalorder %s14, 0
    %p41 = por %p39, %p40
    %s43 = sadd.s32 %s42, 1
    %p46 = scmp.eq.s32.totalorder %s8, 1
    %p47 = scmp.ne.s32.totalorder %s42, %s44
    %p48 = scmp.eq.s32.totalorder %s8, 0
    %p49 = por %p47, %p48
    %p50 = scmp.ne.s32.totalorder %s42, %s44
    %p51 = scmp.eq.s32.totalorder %s13, 1
    %p52 = por %p50, %p51
    %p53 = scmp.ne.s32.totalorder %s44, %s45
    %p54 = scmp.eq.s32.totalorder %s13, 0
    %p55 = por %p53, %p54
    %p56 = scmp.ne.s32.totalorder %s44, %s45
    %p57 = scmp.eq.s32.totalorder %s14, 1
    %p58 = por %p56, %p57
    %p60 = scmp.ne.s32.totalorder %s45, %s59
    %p61 = scmp.eq.s32.totalorder %s14, 0
    %p62 = por %p60, %p61
    %s63 = ssub.s32 %s8, %s15
    %p64 = scmp.eq.s32.totalorder %s63, 0
    %s66 = sadd.s32 %s65, 1
    %s67 = scalar_select %p64, %s65, %s66
    %p70 = pneg %p64
    %p71 = scmp.eq.s32.totalorder %s8, 1
    %p72 = por %p70, %p71
    %p73 = scmp.ne.s32.totalorder %s65, %s68
    %p74 = scmp.eq.s32.totalorder %s8, 0
    %p75 = por %p73, %p74
    %p76 = scmp.ne.s32.totalorder %s65, %s68
    %p77 = scmp.eq.s32.totalorder %s13, 1
    %p78 = por %p76, %p77
    %p79 = scmp.ne.s32.totalorder %s68, %s69
    %p80 = scmp.eq.s32.totalorder %s13, 0
    %p81 = por %p79, %p80
    %p82 = scmp.ne.s32.totalorder %s68, %s69
    %p83 = scmp.eq.s32.totalorder %s14, 1
    %p84 = por %p82, %p83
    %p86 = scmp.ne.s32.totalorder %s69, %s85
    %p87 = scmp.eq.s32.totalorder %s14, 0
    %p88 = por %p86, %p87
    %p89 = scmp.le.s32.totalorder 1, %s8
    %p90 = scmp.lt.s32.totalorder %s8, 3
    %p91 = pnand %p89, %p90
    %p92 = pneg %p91
    // Predicated region
    $region9: #{critic_forward.5} parent=5 // pred_check
      _
    $region10: #{critic_forward.5} parent=5 // pred_check_branch
      %94 = sbr.rel (%p91) target = $region12
    $region11: #{critic_forward.5} parent=5 // pred_region
      %s95 = ssub.s32 %s8, 1
      // Predicated region
      $region13: #{critic_forward.5} parent=11 // pred_check
        %p96 = pneg %p55
      $region14: #{critic_forward.5} parent=11 // pred_check_branch
        %98 = sbr.rel (%p96) target = $region16
      $region15: #{critic_forward.5} parent=11 // pred_region
        _
      $region16: #{critic_forward.5} parent=11 // pred_fallthru
        _
    $region12: #{critic_forward.5} parent=5 // pred_fallthru
      _
    %p99 = scmp.lt.s32.totalorder %s8, 2
    // Predicated region
    $region17: #{critic_forward.5} parent=5 // pred_check
      %p100 = pneg %p99
    $region18: #{critic_forward.5} parent=5 // pred_check_branch
      %102 = sbr.rel (%p100) target = $region20
    $region19: #{critic_forward.5} parent=5 // pred_region
      // Predicated region
      $region21: #{critic_forward.5} parent=19 // pred_check
        %p103 = pneg %p28
      $region22: #{critic_forward.5} parent=19 // pred_check_branch
        %105 = sbr.rel (%p103) target = $region24
      $region23: #{critic_forward.5} parent=19 // pred_region
        %p106 = scmp.lt.s32.totalorder %s8, 1
        %s107 = scalar_select %p106, %s8, 1
        %s108 = smul.addr %s107, 68
        %s109 = smul.addr %s108, 4
        %s110 = scalar_lea.vmem %s0, %s109
      $region24: #{critic_forward.5} parent=19 // pred_fallthru
        _
    $region20: #{critic_forward.5} parent=5 // pred_fallthru
      _
    %p111 = scmp.le.s32.totalorder 1, %s8
    %p112 = scmp.lt.s32.totalorder %s8, 3
    %p113 = pnand %p111, %p112
    %p114 = pneg %p113
    // Predicated region
    $region25: #{critic_forward.5} parent=5 // pred_check
      _
    $region26: #{critic_forward.5} parent=5 // pred_check_branch
      %116 = sbr.rel (%p113) target = $region28
    $region27: #{critic_forward.5} parent=5 // pred_region
      %s117 = ssub.s32 %s8, 1
      %p118 = scmp.lt.s32.totalorder %s13, 1
      %s119 = scalar_select %p118, %s13, 1
      %s120 = smul.addr %s119, 68
      %s121 = smul.addr %s120, 4
      %s122 = scalar_lea.vmem %s0, %s121
      %p123 = pneg %p34
      %p124 = pneg %p31
      %p125 = pneg %p55
      %p126 = pneg %p52
      %p127 = pneg %p81
      %p128 = pneg %p78
      %p129 = scmp.lt.s32.totalorder %s13, 1
      %s130 = scalar_select %p129, %s13, 1
      %s131 = smul.addr %s130, 34
      %s132 = smul.addr %s131, 4
      %s133 = scalar_lea.vmem %s2, %s132
      %p134 = scmp.lt.s32.totalorder %s13, 1
      %s135 = scalar_select %p134, %s13, 1
      %s136 = smul.addr %s135, 68
      %s137 = smul.addr %s136, 4
      %s138 = scalar_lea.vmem %s0, %s137
      %p139 = scmp.lt.s32.totalorder %s13, 1
      %s140 = scalar_select %p139, %s13, 1
      %s141 = smul.addr %s140, 34
      %s142 = smul.addr %s141, 4
      %s143 = scalar_lea.vmem %s2, %s142
      %v145 = vld [vmem:[%s1] sm:$0xf]
      %v146 = vld [vmem:[%s138] sm:$0xff]
      %v147 = vld [vmem:[%s138 + $0x8] sm:$0xff]
      %v148 = vld [vmem:[%s138 + $0x10] sm:$0xff]
      %v149 = vld [vmem:[%s138 + $0x18] sm:$0xff]
      %v150 = vld [vmem:[%s138 + $0x20] sm:$0xff]
      %v151 = vld [vmem:[%s138 + $0x28] sm:$0xff]
      %v152 = vld [vmem:[%s138 + $0x30] sm:$0xff]
      %v153 = vld [vmem:[%s138 + $0x38] sm:$0xff]
      %v154 = vld [vmem:[%s138 + $0x40] sm:$0xff]
      %v155 = vld [vmem:[%s138 + $0x48] sm:$0xff]
      %v156 = vld [vmem:[%s138 + $0x50] sm:$0xff]
      %v157 = vld [vmem:[%s138 + $0x58] sm:$0xff]
      %v158 = vld [vmem:[%s138 + $0x60] sm:$0xff]
      %v159 = vld [vmem:[%s138 + $0x68] sm:$0xff]
      %v160 = vld [vmem:[%s138 + $0x70] sm:$0xff]
      %v161 = vld [vmem:[%s138 + $0x78] sm:$0xff]
      %v162 = vld [vmem:[%s138 + $0x80] sm:$0xff]
      %v163 = vld [vmem:[%s138 + $0x88] sm:$0x33]
      %v164 = vld [vmem:[%s138 + $0x90] sm:$0x33]
      %v165 = vld [vmem:[%s138 + $0x98] sm:$0x33]
      %v166 = vld [vmem:[%s138 + $0xa0] sm:$0x33]
      %v167 = vld [vmem:[%s138 + $0xa8] sm:$0x33]
      %v168 = vld [vmem:[%s138 + $0xb0] sm:$0x33]
      %v169 = vld [vmem:[%s138 + $0xb8] sm:$0x33]
      %v170 = vld [vmem:[%s138 + $0xc0] sm:$0x33]
      %v171 = vld [vmem:[%s138 + $0xc8] sm:$0x33]
      %v172 = vld [vmem:[%s138 + $0xd0] sm:$0x33]
      %v173 = vld [vmem:[%s138 + $0xd8] sm:$0x33]
      %v174 = vld [vmem:[%s138 + $0xe0] sm:$0x33]
      %v175 = vld [vmem:[%s138 + $0xe8] sm:$0x33]
      %v176 = vld [vmem:[%s138 + $0xf0] sm:$0x33]
      %v177 = vld [vmem:[%s138 + $0xf8] sm:$0x33]
      %v178 = vld [vmem:[%s138 + $0x100] sm:$0x33]
      %v179 = vld [vmem:[%s138 + $0x108] sm:$0x33]
      %s180 = scalar_lea.vmem %s1, 4
      %v181 = vld [vmem:[%s180] sm:$0xf]
      %v216 = vunpack.c.l.b16 %v146
      %v217 = vunpack.c.h.b16 %v146
      %v218 = vunpack.c.l.b16 %v147
      %v219 = vunpack.c.h.b16 %v147
      %v220 = vunpack.c.l.b16 %v148
      %v221 = vunpack.c.h.b16 %v148
      %v222 = vunpack.c.l.b16 %v149
      %v223 = vunpack.c.h.b16 %v149
      %v224 = vunpack.c.l.b16 %v150
      %v225 = vunpack.c.h.b16 %v150
      %v226 = vunpack.c.l.b16 %v151
      %v227 = vunpack.c.h.b16 %v151
      %v228 = vunpack.c.l.b16 %v152
      %v229 = vunpack.c.h.b16 %v152
      %v230 = vunpack.c.l.b16 %v153
      %v231 = vunpack.c.h.b16 %v153
      %v232 = vunpack.c.l.b16 %v154
      %v233 = vunpack.c.h.b16 %v154
      %v234 = vunpack.c.l.b16 %v155
      %v235 = vunpack.c.h.b16 %v155
      %v236 = vunpack.c.l.b16 %v156
      %v237 = vunpack.c.h.b16 %v156
      %v238 = vunpack.c.l.b16 %v157
      %v239 = vunpack.c.h.b16 %v157
      %v240 = vunpack.c.l.b16 %v158
      %v241 = vunpack.c.h.b16 %v158
      %v242 = vunpack.c.l.b16 %v159
      %v243 = vunpack.c.h.b16 %v159
      %v244 = vunpack.c.l.b16 %v160
      %v245 = vunpack.c.h.b16 %v160
      %v246 = vunpack.c.l.b16 %v161
      %v247 = vunpack.c.h.b16 %v161
      %v248 = vunpack.c.l.b16 %v162
      %v249 = vunpack.c.h.b16 %v162
      %v250 = vunpack.c.l.b16 %v163
      %v251 = vunpack.c.h.b16 %v163
      %v252 = vunpack.c.l.b16 %v164
      %v253 = vunpack.c.h.b16 %v164
      %v254 = vunpack.c.l.b16 %v165
      %v255 = vunpack.c.h.b16 %v165
      %v256 = vunpack.c.l.b16 %v166
      %v257 = vunpack.c.h.b16 %v166
      %v258 = vunpack.c.l.b16 %v167
      %v259 = vunpack.c.h.b16 %v167
      %v260 = vunpack.c.l.b16 %v168
      %v261 = vunpack.c.h.b16 %v168
      %v262 = vunpack.c.l.b16 %v169
      %v263 = vunpack.c.h.b16 %v169
      %v264 = vunpack.c.l.b16 %v170
      %v265 = vunpack.c.h.b16 %v170
      %v266 = vunpack.c.l.b16 %v171
      %v267 = vunpack.c.h.b16 %v171
      %v268 = vunpack.c.l.b16 %v172
      %v269 = vunpack.c.h.b16 %v172
      %v270 = vunpack.c.l.b16 %v173
      %v271 = vunpack.c.h.b16 %v173
      %v272 = vunpack.c.l.b16 %v174
      %v273 = vunpack.c.h.b16 %v174
      %v274 = vunpack.c.l.b16 %v175
      %v275 = vunpack.c.h.b16 %v175
      %v276 = vunpack.c.l.b16 %v176
      %v277 = vunpack.c.h.b16 %v176
      %v278 = vunpack.c.l.b16 %v177
      %v279 = vunpack.c.h.b16 %v177
      %v280 = vunpack.c.l.b16 %v178
      %v281 = vunpack.c.h.b16 %v178
      %v282 = vunpack.c.l.b16 %v179
      %v283 = vunpack.c.h.b16 %v179
      %v284 = vpack.c.b16 %v250, %v216
      %v285 = vpack.c.b16 %v251, %v217
      %v286 = vpack.c.b16 %v252, %v218
      %v287 = vpack.c.b16 %v253, %v219
      %v288 = vpack.c.b16 %v254, %v220
      %v289 = vpack.c.b16 %v255, %v221
      %v290 = vpack.c.b16 %v256, %v222
      %v291 = vpack.c.b16 %v257, %v223
      %v292 = vpack.c.b16 %v258, %v224
      %v293 = vpack.c.b16 %v259, %v225
      %v294 = vpack.c.b16 %v260, %v226
      %v295 = vpack.c.b16 %v261, %v227
      %v296 = vpack.c.b16 %v262, %v228
      %v297 = vpack.c.b16 %v263, %v229
      %v298 = vpack.c.b16 %v264, %v230
      %v299 = vpack.c.b16 %v265, %v231
      %v300 = vpack.c.b16 %v266, %v232
      %v301 = vpack.c.b16 %v267, %v233
      %v302 = vpack.c.b16 %v268, %v234
      %v303 = vpack.c.b16 %v269, %v235
      %v304 = vpack.c.b16 %v270, %v236
      %v305 = vpack.c.b16 %v271, %v237
      %v306 = vpack.c.b16 %v272, %v238
      %v307 = vpack.c.b16 %v273, %v239
      %v308 = vpack.c.b16 %v274, %v240
      %v309 = vpack.c.b16 %v275, %v241
      %v310 = vpack.c.b16 %v276, %v242
      %v311 = vpack.c.b16 %v277, %v243
      %v312 = vpack.c.b16 %v278, %v244
      %v313 = vpack.c.b16 %v279, %v245
      %v314 = vpack.c.b16 %v280, %v246
      %v315 = vpack.c.b16 %v281, %v247
      %v316 = vpack.c.b16 %v282, %v248
      %v317 = vpack.c.b16 %v283, %v249
      %318 = vrot.lane.b32.xlu0 %v284, 127
      %v319 = vpop.permute.xlu0 %318
      %320 = vrot.lane.b32.xlu0 %v285, 127
      %v321 = vpop.permute.xlu0 %320
      %322 = vrot.lane.b32.xlu0 %v286, 127
      %v323 = vpop.permute.xlu0 %322
      %324 = vrot.lane.b32.xlu0 %v287, 127
      %v325 = vpop.permute.xlu0 %324
      %326 = vrot.lane.b32.xlu0 %v288, 127
      %v327 = vpop.permute.xlu0 %326
      %328 = vrot.lane.b32.xlu0 %v289, 127
      %v329 = vpop.permute.xlu0 %328
      %330 = vrot.lane.b32.xlu0 %v290, 127
      %v331 = vpop.permute.xlu0 %330
      %332 = vrot.lane.b32.xlu0 %v291, 127
      %v333 = vpop.permute.xlu0 %332
      %334 = vrot.lane.b32.xlu0 %v292, 127
      %v335 = vpop.permute.xlu0 %334
      %336 = vrot.lane.b32.xlu0 %v293, 127
      %v337 = vpop.permute.xlu0 %336
      %338 = vrot.lane.b32.xlu0 %v294, 127
      %v339 = vpop.permute.xlu0 %338
      %340 = vrot.lane.b32.xlu0 %v295, 127
      %v341 = vpop.permute.xlu0 %340
      %342 = vrot.lane.b32.xlu0 %v296, 127
      %v343 = vpop.permute.xlu0 %342
      %344 = vrot.lane.b32.xlu0 %v297, 127
      %v345 = vpop.permute.xlu0 %344
      %346 = vrot.lane.b32.xlu0 %v298, 127
      %v347 = vpop.permute.xlu0 %346
      %348 = vrot.lane.b32.xlu0 %v299, 127
      %v349 = vpop.permute.xlu0 %348
      %350 = vrot.lane.b32.xlu0 %v300, 127
      %v351 = vpop.permute.xlu0 %350
      %352 = vrot.lane.b32.xlu0 %v301, 127
      %v353 = vpop.permute.xlu0 %352
      %354 = vrot.lane.b32.xlu0 %v302, 127
      %v355 = vpop.permute.xlu0 %354
      %356 = vrot.lane.b32.xlu0 %v303, 127
      %v357 = vpop.permute.xlu0 %356
      %358 = vrot.lane.b32.xlu0 %v304, 127
      %v359 = vpop.permute.xlu0 %358
      %360 = vrot.lane.b32.xlu0 %v305, 127
      %v361 = vpop.permute.xlu0 %360
      %362 = vrot.lane.b32.xlu0 %v306, 127
      %v363 = vpop.permute.xlu0 %362
      %364 = vrot.lane.b32.xlu0 %v307, 127
      %v365 = vpop.permute.xlu0 %364
      %366 = vrot.lane.b32.xlu0 %v308, 127
      %v367 = vpop.permute.xlu0 %366
      %368 = vrot.lane.b32.xlu0 %v309, 127
      %v369 = vpop.permute.xlu0 %368
      %370 = vrot.lane.b32.xlu0 %v310, 127
      %v371 = vpop.permute.xlu0 %370
      %372 = vrot.lane.b32.xlu0 %v311, 127
      %v373 = vpop.permute.xlu0 %372
      %374 = vrot.lane.b32.xlu0 %v312, 127
      %v375 = vpop.permute.xlu0 %374
      %376 = vrot.lane.b32.xlu0 %v313, 127
      %v377 = vpop.permute.xlu0 %376
      %378 = vrot.lane.b32.xlu0 %v314, 127
      %v379 = vpop.permute.xlu0 %378
      %380 = vrot.lane.b32.xlu0 %v315, 127
      %v381 = vpop.permute.xlu0 %380
      %382 = vrot.lane.b32.xlu0 %v316, 127
      %v383 = vpop.permute.xlu0 %382
      %384 = vrot.lane.b32.xlu0 %v317, 127
      %v385 = vpop.permute.xlu0 %384
      %vm386 = vcmask 1039360
      %v387 = vsel %vm386, %v319, %v321
      %v388 = vsel %vm386, %v321, %v323
      %v389 = vsel %vm386, %v323, %v325
      %v390 = vsel %vm386, %v325, %v327
      %v391 = vsel %vm386, %v327, %v329
      %v392 = vsel %vm386, %v329, %v331
      %v393 = vsel %vm386, %v331, %v333
      %v394 = vsel %vm386, %v333, %v335
      %v395 = vsel %vm386, %v335, %v337
      %v396 = vsel %vm386, %v337, %v339
      %v397 = vsel %vm386, %v339, %v341
      %v398 = vsel %vm386, %v341, %v343
      %v399 = vsel %vm386, %v343, %v345
      %v400 = vsel %vm386, %v345, %v347
      %v401 = vsel %vm386, %v347, %v349
      %v402 = vsel %vm386, %v349, %v351
      %v403 = vsel %vm386, %v351, %v353
      %v404 = vsel %vm386, %v353, %v355
      %v405 = vsel %vm386, %v355, %v357
      %v406 = vsel %vm386, %v357, %v359
      %v407 = vsel %vm386, %v359, %v361
      %v408 = vsel %vm386, %v361, %v363
      %v409 = vsel %vm386, %v363, %v365
      %v410 = vsel %vm386, %v365, %v367
      %v411 = vsel %vm386, %v367, %v369
      %v412 = vsel %vm386, %v369, %v371
      %v413 = vsel %vm386, %v371, %v373
      %v414 = vsel %vm386, %v373, %v375
      %v415 = vsel %vm386, %v375, %v377
      %v416 = vsel %vm386, %v377, %v379
      %v417 = vsel %vm386, %v379, %v381
      %v418 = vsel %vm386, %v381, %v383
      %v419 = vsel %vm386, %v383, %v385
      %vm420 = vcmask 97280
      %v422 = vsel %vm420, %v181, 0
      %vm424 = vcmask 1045504
      %v426 = vsel %vm424, %v387, 0
      %v429 = vsel %vm424, %v388, 0
      %v432 = vsel %vm424, %v389, 0
      %v435 = vsel %vm424, %v390, 0
      %v438 = vsel %vm424, %v391, 0
      %v441 = vsel %vm424, %v392, 0
      %v444 = vsel %vm424, %v393, 0
      %v447 = vsel %vm424, %v394, 0
      %v450 = vsel %vm424, %v395, 0
      %v453 = vsel %vm424, %v396, 0
      %v456 = vsel %vm424, %v397, 0
      %v459 = vsel %vm424, %v398, 0
      %v462 = vsel %vm424, %v399, 0
      %v465 = vsel %vm424, %v400, 0
      %v468 = vsel %vm424, %v401, 0
      %v471 = vsel %vm424, %v402, 0
      %v474 = vsel %vm424, %v403, 0
      %v477 = vsel %vm424, %v404, 0
      %v480 = vsel %vm424, %v405, 0
      %v483 = vsel %vm424, %v406, 0
      %v486 = vsel %vm424, %v407, 0
      %v489 = vsel %vm424, %v408, 0
      %v492 = vsel %vm424, %v409, 0
      %v495 = vsel %vm424, %v410, 0
      %v498 = vsel %vm424, %v411, 0
      %v501 = vsel %vm424, %v412, 0
      %v504 = vsel %vm424, %v413, 0
      %v507 = vsel %vm424, %v414, 0
      %v510 = vsel %vm424, %v415, 0
      %v513 = vsel %vm424, %v416, 0
      %v516 = vsel %vm424, %v417, 0
      %v519 = vsel %vm424, %v418, 0
      %v522 = vsel %vm424, %v419, 0
      %v525 = vsel %vm424, %v385, 0
      %527 = vmatpush.bf16.msra.mxu0 0
      %528 = vmatpush.bf16.msra.mxu0 0
      %529 = vmatpush.bf16.msra.mxu0 0
      %530 = vmatpush.bf16.msra.mxu0 0
      %531 = vmatpush.bf16.msra.mxu0 0
      %532 = vmatpush.bf16.msra.mxu0 0
      %533 = vmatpush.bf16.msra.mxu0 0
      %534 = vmatpush.bf16.msra.mxu0 %v426
      %535 = vmatmul.bf16.gmra.mxu0 %v422
      %v536 = vpop.f32.mrf.mxu0
      %v537 = vadd.f32 0.0, %v536
      %v538 = vpop.f32.mrf.mxu0
      %539 = vdwg.mxu0
      %540 = vmatpush.bf16.msra.mxu0 0
      %541 = vmatpush.bf16.msra.mxu0 0
      %542 = vmatpush.bf16.msra.mxu0 0
      %543 = vmatpush.bf16.msra.mxu0 0
      %544 = vmatpush.bf16.msra.mxu0 0
      %545 = vmatpush.bf16.msra.mxu0 0
      %546 = vmatpush.bf16.msra.mxu0 0
      %547 = vmatpush.bf16.msra.mxu0 %v429
      %548 = vmatmul.bf16.gmra.mxu0 %v422
      %v549 = vpop.f32.mrf.mxu0
      %v550 = vadd.f32 0.0, %v549
      %v551 = vpop.f32.mrf.mxu0
      %552 = vdwg.mxu0
      %553 = vmatpush.bf16.msra.mxu0 0
      %554 = vmatpush.bf16.msra.mxu0 0
      %555 = vmatpush.bf16.msra.mxu0 0
      %556 = vmatpush.bf16.msra.mxu0 0
      %557 = vmatpush.bf16.msra.mxu0 0
      %558 = vmatpush.bf16.msra.mxu0 0
      %559 = vmatpush.bf16.msra.mxu0 0
      %560 = vmatpush.bf16.msra.mxu0 %v432
      %561 = vmatmul.bf16.gmra.mxu0 %v422
      %v562 = vpop.f32.mrf.mxu0
      %v563 = vadd.f32 0.0, %v562
      %v564 = vpop.f32.mrf.mxu0
      %565 = vdwg.mxu0
      %566 = vmatpush.bf16.msra.mxu0 0
      %567 = vmatpush.bf16.msra.mxu0 0
      %568 = vmatpush.bf16.msra.mxu0 0
      %569 = vmatpush.bf16.msra.mxu0 0
      %570 = vmatpush.bf16.msra.mxu0 0
      %571 = vmatpush.bf16.msra.mxu0 0
      %572 = vmatpush.bf16.msra.mxu0 0
      %573 = vmatpush.bf16.msra.mxu0 %v435
      %574 = vmatmul.bf16.gmra.mxu0 %v422
      %v575 = vpop.f32.mrf.mxu0
      %v576 = vadd.f32 0.0, %v575
      %v577 = vpop.f32.mrf.mxu0
      %578 = vdwg.mxu0
      %579 = vmatpush.bf16.msra.mxu0 0
      %580 = vmatpush.bf16.msra.mxu0 0
      %581 = vmatpush.bf16.msra.mxu0 0
      %582 = vmatpush.bf16.msra.mxu0 0
      %583 = vmatpush.bf16.msra.mxu0 0
      %584 = vmatpush.bf16.msra.mxu0 0
      %585 = vmatpush.bf16.msra.mxu0 0
      %586 = vmatpush.bf16.msra.mxu0 %v438
      %587 = vmatmul.bf16.gmra.mxu0 %v422
      %v588 = vpop.f32.mrf.mxu0
      %v589 = vadd.f32 0.0, %v588
      %v590 = vpop.f32.mrf.mxu0
      %591 = vdwg.mxu0
      %592 = vmatpush.bf16.msra.mxu0 0
      %593 = vmatpush.bf16.msra.mxu0 0
      %594 = vmatpush.bf16.msra.mxu0 0
      %595 = vmatpush.bf16.msra.mxu0 0
      %596 = vmatpush.bf16.msra.mxu0 0
      %597 = vmatpush.bf16.msra.mxu0 0
      %598 = vmatpush.bf16.msra.mxu0 0
      %599 = vmatpush.bf16.msra.mxu0 %v441
      %600 = vmatmul.bf16.gmra.mxu0 %v422
      %v601 = vpop.f32.mrf.mxu0
      %v602 = vadd.f32 0.0, %v601
      %v603 = vpop.f32.mrf.mxu0
      %604 = vdwg.mxu0
      %605 = vmatpush.bf16.msra.mxu0 0
      %606 = vmatpush.bf16.msra.mxu0 0
      %607 = vmatpush.bf16.msra.mxu0 0
      %608 = vmatpush.bf16.msra.mxu0 0
      %609 = vmatpush.bf16.msra.mxu0 0
      %610 = vmatpush.bf16.msra.mxu0 0
      %611 = vmatpush.bf16.msra.mxu0 0
      %612 = vmatpush.bf16.msra.mxu0 %v444
      %613 = vmatmul.bf16.gmra.mxu0 %v422
      %v614 = vpop.f32.mrf.mxu0
      %v615 = vadd.f32 0.0, %v614
      %v616 = vpop.f32.mrf.mxu0
      %617 = vdwg.mxu0
      %618 = vmatpush.bf16.msra.mxu0 0
      %619 = vmatpush.bf16.msra.mxu0 0
      %620 = vmatpush.bf16.msra.mxu0 0
      %621 = vmatpush.bf16.msra.mxu0 0
      %622 = vmatpush.bf16.msra.mxu0 0
      %623 = vmatpush.bf16.msra.mxu0 0
      %624 = vmatpush.bf16.msra.mxu0 0
      %625 = vmatpush.bf16.msra.mxu0 %v447
      %626 = vmatmul.bf16.gmra.mxu0 %v422
      %v627 = vpop.f32.mrf.mxu0
      %v628 = vadd.f32 0.0, %v627
      %v629 = vpop.f32.mrf.mxu0
      %630 = vdwg.mxu0
      %631 = vmatpush.bf16.msra.mxu0 0
      %632 = vmatpush.bf16.msra.mxu0 0
      %633 = vmatpush.bf16.msra.mxu0 0
      %634 = vmatpush.bf16.msra.mxu0 0
      %635 = vmatpush.bf16.msra.mxu0 0
      %636 = vmatpush.bf16.msra.mxu0 0
      %637 = vmatpush.bf16.msra.mxu0 0
      %638 = vmatpush.bf16.msra.mxu0 %v450
      %639 = vmatmul.bf16.gmra.mxu0 %v422
      %v640 = vpop.f32.mrf.mxu0
      %v641 = vadd.f32 0.0, %v640
      %v642 = vpop.f32.mrf.mxu0
      %643 = vdwg.mxu0
      %644 = vmatpush.bf16.msra.mxu0 0
      %645 = vmatpush.bf16.msra.mxu0 0
      %646 = vmatpush.bf16.msra.mxu0 0
      %647 = vmatpush.bf16.msra.mxu0 0
      %648 = vmatpush.bf16.msra.mxu0 0
      %649 = vmatpush.bf16.msra.mxu0 0
      %650 = vmatpush.bf16.msra.mxu0 0
      %651 = vmatpush.bf16.msra.mxu0 %v453
      %652 = vmatmul.bf16.gmra.mxu0 %v422
      %v653 = vpop.f32.mrf.mxu0
      %v654 = vadd.f32 0.0, %v653
      %v655 = vpop.f32.mrf.mxu0
      %656 = vdwg.mxu0
      %657 = vmatpush.bf16.msra.mxu0 0
      %658 = vmatpush.bf16.msra.mxu0 0
      %659 = vmatpush.bf16.msra.mxu0 0
      %660 = vmatpush.bf16.msra.mxu0 0
      %661 = vmatpush.bf16.msra.mxu0 0
      %662 = vmatpush.bf16.msra.mxu0 0
      %663 = vmatpush.bf16.msra.mxu0 0
      %664 = vmatpush.bf16.msra.mxu0 %v456
      %665 = vmatmul.bf16.gmra.mxu0 %v422
      %v666 = vpop.f32.mrf.mxu0
      %v667 = vadd.f32 0.0, %v666
      %v668 = vpop.f32.mrf.mxu0
      %669 = vdwg.mxu0
      %670 = vmatpush.bf16.msra.mxu0 0
      %671 = vmatpush.bf16.msra.mxu0 0
      %672 = vmatpush.bf16.msra.mxu0 0
      %673 = vmatpush.bf16.msra.mxu0 0
      %674 = vmatpush.bf16.msra.mxu0 0
      %675 = vmatpush.bf16.msra.mxu0 0
      %676 = vmatpush.bf16.msra.mxu0 0
      %677 = vmatpush.bf16.msra.mxu0 %v459
      %678 = vmatmul.bf16.gmra.mxu0 %v422
      %v679 = vpop.f32.mrf.mxu0
      %v680 = vadd.f32 0.0, %v679
      %v681 = vpop.f32.mrf.mxu0
      %682 = vdwg.mxu0
      %683 = vmatpush.bf16.msra.mxu0 0
      %684 = vmatpush.bf16.msra.mxu0 0
      %685 = vmatpush.bf16.msra.mxu0 0
      %686 = vmatpush.bf16.msra.mxu0 0
      %687 = vmatpush.bf16.msra.mxu0 0
      %688 = vmatpush.bf16.msra.mxu0 0
      %689 = vmatpush.bf16.msra.mxu0 0
      %690 = vmatpush.bf16.msra.mxu0 %v462
      %691 = vmatmul.bf16.gmra.mxu0 %v422
      %v692 = vpop.f32.mrf.mxu0
      %v693 = vadd.f32 0.0, %v692
      %v694 = vpop.f32.mrf.mxu0
      %695 = vdwg.mxu0
      %696 = vmatpush.bf16.msra.mxu0 0
      %697 = vmatpush.bf16.msra.mxu0 0
      %698 = vmatpush.bf16.msra.mxu0 0
      %699 = vmatpush.bf16.msra.mxu0 0
      %700 = vmatpush.bf16.msra.mxu0 0
      %701 = vmatpush.bf16.msra.mxu0 0
      %702 = vmatpush.bf16.msra.mxu0 0
      %703 = vmatpush.bf16.msra.mxu0 %v465
      %704 = vmatmul.bf16.gmra.mxu0 %v422
      %v705 = vpop.f32.mrf.mxu0
      %v706 = vadd.f32 0.0, %v705
      %v707 = vpop.f32.mrf.mxu0
      %708 = vdwg.mxu0
      %709 = vmatpush.bf16.msra.mxu0 0
      %710 = vmatpush.bf16.msra.mxu0 0
      %711 = vmatpush.bf16.msra.mxu0 0
      %712 = vmatpush.bf16.msra.mxu0 0
      %713 = vmatpush.bf16.msra.mxu0 0
      %714 = vmatpush.bf16.msra.mxu0 0
      %715 = vmatpush.bf16.msra.mxu0 0
      %716 = vmatpush.bf16.msra.mxu0 %v468
      %717 = vmatmul.bf16.gmra.mxu0 %v422
      %v718 = vpop.f32.mrf.mxu0
      %v719 = vadd.f32 0.0, %v718
      %v720 = vpop.f32.mrf.mxu0
      %721 = vdwg.mxu0
      %722 = vmatpush.bf16.msra.mxu0 0
      %723 = vmatpush.bf16.msra.mxu0 0
      %724 = vmatpush.bf16.msra.mxu0 0
      %725 = vmatpush.bf16.msra.mxu0 0
      %726 = vmatpush.bf16.msra.mxu0 0
      %727 = vmatpush.bf16.msra.mxu0 0
      %728 = vmatpush.bf16.msra.mxu0 0
      %729 = vmatpush.bf16.msra.mxu0 %v471
      %730 = vmatmul.bf16.gmra.mxu0 %v422
      %v731 = vpop.f32.mrf.mxu0
      %v732 = vadd.f32 0.0, %v731
      %v733 = vpop.f32.mrf.mxu0
      %734 = vdwg.mxu0
      %735 = vmatpush.bf16.msra.mxu0 0
      %736 = vmatpush.bf16.msra.mxu0 0
      %737 = vmatpush.bf16.msra.mxu0 0
      %738 = vmatpush.bf16.msra.mxu0 0
      %739 = vmatpush.bf16.msra.mxu0 0
      %740 = vmatpush.bf16.msra.mxu0 0
      %741 = vmatpush.bf16.msra.mxu0 0
      %742 = vmatpush.bf16.msra.mxu0 %v474
      %743 = vmatmul.bf16.gmra.mxu0 %v422
      %v744 = vpop.f32.mrf.mxu0
      %v745 = vadd.f32 0.0, %v744
      %v746 = vpop.f32.mrf.mxu0
      %747 = vdwg.mxu0
      %748 = vmatpush.bf16.msra.mxu0 0
      %749 = vmatpush.bf16.msra.mxu0 0
      %750 = vmatpush.bf16.msra.mxu0 0
      %751 = vmatpush.bf16.msra.mxu0 0
      %752 = vmatpush.bf16.msra.mxu0 0
      %753 = vmatpush.bf16.msra.mxu0 0
      %754 = vmatpush.bf16.msra.mxu0 0
      %755 = vmatpush.bf16.msra.mxu0 %v477
      %756 = vmatmul.bf16.gmra.mxu0 %v422
      %v757 = vpop.f32.mrf.mxu0
      %v758 = vadd.f32 0.0, %v757
      %v759 = vpop.f32.mrf.mxu0
      %760 = vdwg.mxu0
      %761 = vmatpush.bf16.msra.mxu0 0
      %762 = vmatpush.bf16.msra.mxu0 0
      %763 = vmatpush.bf16.msra.mxu0 0
      %764 = vmatpush.bf16.msra.mxu0 0
      %765 = vmatpush.bf16.msra.mxu0 0
      %766 = vmatpush.bf16.msra.mxu0 0
      %767 = vmatpush.bf16.msra.mxu0 0
      %768 = vmatpush.bf16.msra.mxu0 %v480
      %769 = vmatmul.bf16.gmra.mxu0 %v422
      %v770 = vpop.f32.mrf.mxu0
      %v771 = vadd.f32 0.0, %v770
      %v772 = vpop.f32.mrf.mxu0
      %773 = vdwg.mxu0
      %774 = vmatpush.bf16.msra.mxu0 0
      %775 = vmatpush.bf16.msra.mxu0 0
      %776 = vmatpush.bf16.msra.mxu0 0
      %777 = vmatpush.bf16.msra.mxu0 0
      %778 = vmatpush.bf16.msra.mxu0 0
      %779 = vmatpush.bf16.msra.mxu0 0
      %780 = vmatpush.bf16.msra.mxu0 0
      %781 = vmatpush.bf16.msra.mxu0 %v483
      %782 = vmatmul.bf16.gmra.mxu0 %v422
      %v783 = vpop.f32.mrf.mxu0
      %v784 = vadd.f32 0.0, %v783
      %v785 = vpop.f32.mrf.mxu0
      %786 = vdwg.mxu0
      %787 = vmatpush.bf16.msra.mxu0 0
      %788 = vmatpush.bf16.msra.mxu0 0
      %789 = vmatpush.bf16.msra.mxu0 0
      %790 = vmatpush.bf16.msra.mxu0 0
      %791 = vmatpush.bf16.msra.mxu0 0
      %792 = vmatpush.bf16.msra.mxu0 0
      %793 = vmatpush.bf16.msra.mxu0 0
      %794 = vmatpush.bf16.msra.mxu0 %v486
      %795 = vmatmul.bf16.gmra.mxu0 %v422
      %v796 = vpop.f32.mrf.mxu0
      %v797 = vadd.f32 0.0, %v796
      %v798 = vpop.f32.mrf.mxu0
      %799 = vdwg.mxu0
      %800 = vmatpush.bf16.msra.mxu0 0
      %801 = vmatpush.bf16.msra.mxu0 0
      %802 = vmatpush.bf16.msra.mxu0 0
      %803 = vmatpush.bf16.msra.mxu0 0
      %804 = vmatpush.bf16.msra.mxu0 0
      %805 = vmatpush.bf16.msra.mxu0 0
      %806 = vmatpush.bf16.msra.mxu0 0
      %807 = vmatpush.bf16.msra.mxu0 %v489
      %808 = vmatmul.bf16.gmra.mxu0 %v422
      %v809 = vpop.f32.mrf.mxu0
      %v810 = vadd.f32 0.0, %v809
      %v811 = vpop.f32.mrf.mxu0
      %812 = vdwg.mxu0
      %813 = vmatpush.bf16.msra.mxu0 0
      %814 = vmatpush.bf16.msra.mxu0 0
      %815 = vmatpush.bf16.msra.mxu0 0
      %816 = vmatpush.bf16.msra.mxu0 0
      %817 = vmatpush.bf16.msra.mxu0 0
      %818 = vmatpush.bf16.msra.mxu0 0
      %819 = vmatpush.bf16.msra.mxu0 0
      %820 = vmatpush.bf16.msra.mxu0 %v492
      %821 = vmatmul.bf16.gmra.mxu0 %v422
      %v822 = vpop.f32.mrf.mxu0
      %v823 = vadd.f32 0.0, %v822
      %v824 = vpop.f32.mrf.mxu0
      %825 = vdwg.mxu0
      %826 = vmatpush.bf16.msra.mxu0 0
      %827 = vmatpush.bf16.msra.mxu0 0
      %828 = vmatpush.bf16.msra.mxu0 0
      %829 = vmatpush.bf16.msra.mxu0 0
      %830 = vmatpush.bf16.msra.mxu0 0
      %831 = vmatpush.bf16.msra.mxu0 0
      %832 = vmatpush.bf16.msra.mxu0 0
      %833 = vmatpush.bf16.msra.mxu0 %v495
      %834 = vmatmul.bf16.gmra.mxu0 %v422
      %v835 = vpop.f32.mrf.mxu0
      %v836 = vadd.f32 0.0, %v835
      %v837 = vpop.f32.mrf.mxu0
      %838 = vdwg.mxu0
      %839 = vmatpush.bf16.msra.mxu0 0
      %840 = vmatpush.bf16.msra.mxu0 0
      %841 = vmatpush.bf16.msra.mxu0 0
      %842 = vmatpush.bf16.msra.mxu0 0
      %843 = vmatpush.bf16.msra.mxu0 0
      %844 = vmatpush.bf16.msra.mxu0 0
      %845 = vmatpush.bf16.msra.mxu0 0
      %846 = vmatpush.bf16.msra.mxu0 %v498
      %847 = vmatmul.bf16.gmra.mxu0 %v422
      %v848 = vpop.f32.mrf.mxu0
      %v849 = vadd.f32 0.0, %v848
      %v850 = vpop.f32.mrf.mxu0
      %851 = vdwg.mxu0
      %852 = vmatpush.bf16.msra.mxu0 0
      %853 = vmatpush.bf16.msra.mxu0 0
      %854 = vmatpush.bf16.msra.mxu0 0
      %855 = vmatpush.bf16.msra.mxu0 0
      %856 = vmatpush.bf16.msra.mxu0 0
      %857 = vmatpush.bf16.msra.mxu0 0
      %858 = vmatpush.bf16.msra.mxu0 0
      %859 = vmatpush.bf16.msra.mxu0 %v501
      %860 = vmatmul.bf16.gmra.mxu0 %v422
      %v861 = vpop.f32.mrf.mxu0
      %v862 = vadd.f32 0.0, %v861
      %v863 = vpop.f32.mrf.mxu0
      %864 = vdwg.mxu0
      %865 = vmatpush.bf16.msra.mxu0 0
      %866 = vmatpush.bf16.msra.mxu0 0
      %867 = vmatpush.bf16.msra.mxu0 0
      %868 = vmatpush.bf16.msra.mxu0 0
      %869 = vmatpush.bf16.msra.mxu0 0
      %870 = vmatpush.bf16.msra.mxu0 0
      %871 = vmatpush.bf16.msra.mxu0 0
      %872 = vmatpush.bf16.msra.mxu0 %v504
      %873 = vmatmul.bf16.gmra.mxu0 %v422
      %v874 = vpop.f32.mrf.mxu0
      %v875 = vadd.f32 0.0, %v874
      %v876 = vpop.f32.mrf.mxu0
      %877 = vdwg.mxu0
      %878 = vmatpush.bf16.msra.mxu0 0
      %879 = vmatpush.bf16.msra.mxu0 0
      %880 = vmatpush.bf16.msra.mxu0 0
      %881 = vmatpush.bf16.msra.mxu0 0
      %882 = vmatpush.bf16.msra.mxu0 0
      %883 = vmatpush.bf16.msra.mxu0 0
      %884 = vmatpush.bf16.msra.mxu0 0
      %885 = vmatpush.bf16.msra.mxu0 %v507
      %886 = vmatmul.bf16.gmra.mxu0 %v422
      %v887 = vpop.f32.mrf.mxu0
      %v888 = vadd.f32 0.0, %v887
      %v889 = vpop.f32.mrf.mxu0
      %890 = vdwg.mxu0
      %891 = vmatpush.bf16.msra.mxu0 0
      %892 = vmatpush.bf16.msra.mxu0 0
      %893 = vmatpush.bf16.msra.mxu0 0
      %894 = vmatpush.bf16.msra.mxu0 0
      %895 = vmatpush.bf16.msra.mxu0 0
      %896 = vmatpush.bf16.msra.mxu0 0
      %897 = vmatpush.bf16.msra.mxu0 0
      %898 = vmatpush.bf16.msra.mxu0 %v510
      %899 = vmatmul.bf16.gmra.mxu0 %v422
      %v900 = vpop.f32.mrf.mxu0
      %v901 = vadd.f32 0.0, %v900
      %v902 = vpop.f32.mrf.mxu0
      %903 = vdwg.mxu0
      %904 = vmatpush.bf16.msra.mxu0 0
      %905 = vmatpush.bf16.msra.mxu0 0
      %906 = vmatpush.bf16.msra.mxu0 0
      %907 = vmatpush.bf16.msra.mxu0 0
      %908 = vmatpush.bf16.msra.mxu0 0
      %909 = vmatpush.bf16.msra.mxu0 0
      %910 = vmatpush.bf16.msra.mxu0 0
      %911 = vmatpush.bf16.msra.mxu0 %v513
      %912 = vmatmul.bf16.gmra.mxu0 %v422
      %v913 = vpop.f32.mrf.mxu0
      %v914 = vadd.f32 0.0, %v913
      %v915 = vpop.f32.mrf.mxu0
      %916 = vdwg.mxu0
      %917 = vmatpush.bf16.msra.mxu0 0
      %918 = vmatpush.bf16.msra.mxu0 0
      %919 = vmatpush.bf16.msra.mxu0 0
      %920 = vmatpush.bf16.msra.mxu0 0
      %921 = vmatpush.bf16.msra.mxu0 0
      %922 = vmatpush.bf16.msra.mxu0 0
      %923 = vmatpush.bf16.msra.mxu0 0
      %924 = vmatpush.bf16.msra.mxu0 %v516
      %925 = vmatmul.bf16.gmra.mxu0 %v422
      %v926 = vpop.f32.mrf.mxu0
      %v927 = vadd.f32 0.0, %v926
      %v928 = vpop.f32.mrf.mxu0
      %929 = vdwg.mxu0
      %930 = vmatpush.bf16.msra.mxu0 0
      %931 = vmatpush.bf16.msra.mxu0 0
      %932 = vmatpush.bf16.msra.mxu0 0
      %933 = vmatpush.bf16.msra.mxu0 0
      %934 = vmatpush.bf16.msra.mxu0 0
      %935 = vmatpush.bf16.msra.mxu0 0
      %936 = vmatpush.bf16.msra.mxu0 0
      %937 = vmatpush.bf16.msra.mxu0 %v519
      %938 = vmatmul.bf16.gmra.mxu0 %v422
      %v939 = vpop.f32.mrf.mxu0
      %v940 = vadd.f32 0.0, %v939
      %v941 = vpop.f32.mrf.mxu0
      %942 = vdwg.mxu0
      %943 = vmatpush.bf16.msra.mxu0 0
      %944 = vmatpush.bf16.msra.mxu0 0
      %945 = vmatpush.bf16.msra.mxu0 0
      %946 = vmatpush.bf16.msra.mxu0 0
      %947 = vmatpush.bf16.msra.mxu0 0
      %948 = vmatpush.bf16.msra.mxu0 0
      %949 = vmatpush.bf16.msra.mxu0 0
      %950 = vmatpush.bf16.msra.mxu0 %v522
      %951 = vmatmul.bf16.gmra.mxu0 %v422
      %v952 = vpop.f32.mrf.mxu0
      %v953 = vadd.f32 0.0, %v952
      %v954 = vpop.f32.mrf.mxu0
      %955 = vdwg.mxu0
      %956 = vmatpush.bf16.msra.mxu0 0
      %957 = vmatpush.bf16.msra.mxu0 0
      %958 = vmatpush.bf16.msra.mxu0 0
      %959 = vmatpush.bf16.msra.mxu0 0
      %960 = vmatpush.bf16.msra.mxu0 0
      %961 = vmatpush.bf16.msra.mxu0 0
      %962 = vmatpush.bf16.msra.mxu0 0
      %963 = vmatpush.bf16.msra.mxu0 %v525
      %964 = vmatmul.bf16.gmra.mxu0 %v422
      %v965 = vpop.f32.mrf.mxu0
      %v966 = vadd.f32 0.0, %v965
      %v967 = vpop.f32.mrf.mxu0
      %968 = vdwg.mxu0
      %v970 = vsel %vm420, %v145, 0
      %v973 = vsel %vm424, %v284, 0
      %v976 = vsel %vm424, %v285, 0
      %v979 = vsel %vm424, %v286, 0
      %v982 = vsel %vm424, %v287, 0
      %v985 = vsel %vm424, %v288, 0
      %v988 = vsel %vm424, %v289, 0
      %v991 = vsel %vm424, %v290, 0
      %v994 = vsel %vm424, %v291, 0
      %v997 = vsel %vm424, %v292, 0
      %v1000 = vsel %vm424, %v293, 0
      %v1003 = vsel %vm424, %v294, 0
      %v1006 = vsel %vm424, %v295, 0
      %v1009 = vsel %vm424, %v296, 0
      %v1012 = vsel %vm424, %v297, 0
      %v1015 = vsel %vm424, %v298, 0
      %v1018 = vsel %vm424, %v299, 0
      %v1021 = vsel %vm424, %v300, 0
      %v1024 = vsel %vm424, %v301, 0
      %v1027 = vsel %vm424, %v302, 0
      %v1030 = vsel %vm424, %v303, 0
      %v1033 = vsel %vm424, %v304, 0
      %v1036 = vsel %vm424, %v305, 0
      %v1039 = vsel %vm424, %v306, 0
      %v1042 = vsel %vm424, %v307, 0
      %v1045 = vsel %vm424, %v308, 0
      %v1048 = vsel %vm424, %v309, 0
      %v1051 = vsel %vm424, %v310, 0
      %v1054 = vsel %vm424, %v311, 0
      %v1057 = vsel %vm424, %v312, 0
      %v1060 = vsel %vm424, %v313, 0
      %v1063 = vsel %vm424, %v314, 0
      %v1066 = vsel %vm424, %v315, 0
      %v1069 = vsel %vm424, %v316, 0
      %v1072 = vsel %vm424, %v317, 0
      %1074 = vmatpush.bf16.msra.mxu0 0
      %1075 = vmatpush.bf16.msra.mxu0 0
      %1076 = vmatpush.bf16.msra.mxu0 0
      %1077 = vmatpush.bf16.msra.mxu0 0
      %1078 = vmatpush.bf16.msra.mxu0 0
      %1079 = vmatpush.bf16.msra.mxu0 0
      %1080 = vmatpush.bf16.msra.mxu0 0
      %1081 = vmatpush.bf16.msra.mxu0 %v973
      %1082 = vmatmul.bf16.gmra.mxu0 %v970
      %v1083 = vpop.f32.mrf.mxu0
      %v1084 = vadd.f32 %v537, %v1083
      %v1085 = vpop.f32.mrf.mxu0
      %1086 = vdwg.mxu0
      %1087 = vmatpush.bf16.msra.mxu0 0
      %1088 = vmatpush.bf16.msra.mxu0 0
      %1089 = vmatpush.bf16.msra.mxu0 0
      %1090 = vmatpush.bf16.msra.mxu0 0
      %1091 = vmatpush.bf16.msra.mxu0 0
      %1092 = vmatpush.bf16.msra.mxu0 0
      %1093 = vmatpush.bf16.msra.mxu0 0
      %1094 = vmatpush.bf16.msra.mxu0 %v976
      %1095 = vmatmul.bf16.gmra.mxu0 %v970
      %v1096 = vpop.f32.mrf.mxu0
      %v1097 = vadd.f32 %v550, %v1096
      %v1098 = vpop.f32.mrf.mxu0
      %1099 = vdwg.mxu0
      %1100 = vmatpush.bf16.msra.mxu0 0
      %1101 = vmatpush.bf16.msra.mxu0 0
      %1102 = vmatpush.bf16.msra.mxu0 0
      %1103 = vmatpush.bf16.msra.mxu0 0
      %1104 = vmatpush.bf16.msra.mxu0 0
      %1105 = vmatpush.bf16.msra.mxu0 0
      %1106 = vmatpush.bf16.msra.mxu0 0
      %1107 = vmatpush.bf16.msra.mxu0 %v979
      %1108 = vmatmul.bf16.gmra.mxu0 %v970
      %v1109 = vpop.f32.mrf.mxu0
      %v1110 = vadd.f32 %v563, %v1109
      %v1111 = vpop.f32.mrf.mxu0
      %1112 = vdwg.mxu0
      %1113 = vmatpush.bf16.msra.mxu0 0
      %1114 = vmatpush.bf16.msra.mxu0 0
      %1115 = vmatpush.bf16.msra.mxu0 0
      %1116 = vmatpush.bf16.msra.mxu0 0
      %1117 = vmatpush.bf16.msra.mxu0 0
      %1118 = vmatpush.bf16.msra.mxu0 0
      %1119 = vmatpush.bf16.msra.mxu0 0
      %1120 = vmatpush.bf16.msra.mxu0 %v982
      %1121 = vmatmul.bf16.gmra.mxu0 %v970
      %v1122 = vpop.f32.mrf.mxu0
      %v1123 = vadd.f32 %v576, %v1122
      %v1124 = vpop.f32.mrf.mxu0
      %1125 = vdwg.mxu0
      %1126 = vmatpush.bf16.msra.mxu0 0
      %1127 = vmatpush.bf16.msra.mxu0 0
      %1128 = vmatpush.bf16.msra.mxu0 0
      %1129 = vmatpush.bf16.msra.mxu0 0
      %1130 = vmatpush.bf16.msra.mxu0 0
      %1131 = vmatpush.bf16.msra.mxu0 0
      %1132 = vmatpush.bf16.msra.mxu0 0
      %1133 = vmatpush.bf16.msra.mxu0 %v985
      %1134 = vmatmul.bf16.gmra.mxu0 %v970
      %v1135 = vpop.f32.mrf.mxu0
      %v1136 = vadd.f32 %v589, %v1135
      %v1137 = vpop.f32.mrf.mxu0
      %1138 = vdwg.mxu0
      %1139 = vmatpush.bf16.msra.mxu0 0
      %1140 = vmatpush.bf16.msra.mxu0 0
      %1141 = vmatpush.bf16.msra.mxu0 0
      %1142 = vmatpush.bf16.msra.mxu0 0
      %1143 = vmatpush.bf16.msra.mxu0 0
      %1144 = vmatpush.bf16.msra.mxu0 0
      %1145 = vmatpush.bf16.msra.mxu0 0
      %1146 = vmatpush.bf16.msra.mxu0 %v988
      %1147 = vmatmul.bf16.gmra.mxu0 %v970
      %v1148 = vpop.f32.mrf.mxu0
      %v1149 = vadd.f32 %v602, %v1148
      %v1150 = vpop.f32.mrf.mxu0
      %1151 = vdwg.mxu0
      %1152 = vmatpush.bf16.msra.mxu0 0
      %1153 = vmatpush.bf16.msra.mxu0 0
      %1154 = vmatpush.bf16.msra.mxu0 0
      %1155 = vmatpush.bf16.msra.mxu0 0
      %1156 = vmatpush.bf16.msra.mxu0 0
      %1157 = vmatpush.bf16.msra.mxu0 0
      %1158 = vmatpush.bf16.msra.mxu0 0
      %1159 = vmatpush.bf16.msra.mxu0 %v991
      %1160 = vmatmul.bf16.gmra.mxu0 %v970
      %v1161 = vpop.f32.mrf.mxu0
      %v1162 = vadd.f32 %v615, %v1161
      %v1163 = vpop.f32.mrf.mxu0
      %1164 = vdwg.mxu0
      %1165 = vmatpush.bf16.msra.mxu0 0
      %1166 = vmatpush.bf16.msra.mxu0 0
      %1167 = vmatpush.bf16.msra.mxu0 0
      %1168 = vmatpush.bf16.msra.mxu0 0
      %1169 = vmatpush.bf16.msra.mxu0 0
      %1170 = vmatpush.bf16.msra.mxu0 0
      %1171 = vmatpush.bf16.msra.mxu0 0
      %1172 = vmatpush.bf16.msra.mxu0 %v994
      %1173 = vmatmul.bf16.gmra.mxu0 %v970
      %v1174 = vpop.f32.mrf.mxu0
      %v1175 = vadd.f32 %v628, %v1174
      %v1176 = vpop.f32.mrf.mxu0
      %1177 = vdwg.mxu0
      %1178 = vmatpush.bf16.msra.mxu0 0
      %1179 = vmatpush.bf16.msra.mxu0 0
      %1180 = vmatpush.bf16.msra.mxu0 0
      %1181 = vmatpush.bf16.msra.mxu0 0
      %1182 = vmatpush.bf16.msra.mxu0 0
      %1183 = vmatpush.bf16.msra.mxu0 0
      %1184 = vmatpush.bf16.msra.mxu0 0
      %1185 = vmatpush.bf16.msra.mxu0 %v997
      %1186 = vmatmul.bf16.gmra.mxu0 %v970
      %v1187 = vpop.f32.mrf.mxu0
      %v1188 = vadd.f32 %v641, %v1187
      %v1189 = vpop.f32.mrf.mxu0
      %1190 = vdwg.mxu0
      %1191 = vmatpush.bf16.msra.mxu0 0
      %1192 = vmatpush.bf16.msra.mxu0 0
      %1193 = vmatpush.bf16.msra.mxu0 0
      %1194 = vmatpush.bf16.msra.mxu0 0
      %1195 = vmatpush.bf16.msra.mxu0 0
      %1196 = vmatpush.bf16.msra.mxu0 0
      %1197 = vmatpush.bf16.msra.mxu0 0
      %1198 = vmatpush.bf16.msra.mxu0 %v1000
      %1199 = vmatmul.bf16.gmra.mxu0 %v970
      %v1200 = vpop.f32.mrf.mxu0
      %v1201 = vadd.f32 %v654, %v1200
      %v1202 = vpop.f32.mrf.mxu0
      %1203 = vdwg.mxu0
      %1204 = vmatpush.bf16.msra.mxu0 0
      %1205 = vmatpush.bf16.msra.mxu0 0
      %1206 = vmatpush.bf16.msra.mxu0 0
      %1207 = vmatpush.bf16.msra.mxu0 0
      %1208 = vmatpush.bf16.msra.mxu0 0
      %1209 = vmatpush.bf16.msra.mxu0 0
      %1210 = vmatpush.bf16.msra.mxu0 0
      %1211 = vmatpush.bf16.msra.mxu0 %v1003
      %1212 = vmatmul.bf16.gmra.mxu0 %v970
      %v1213 = vpop.f32.mrf.mxu0
      %v1214 = vadd.f32 %v667, %v1213
      %v1215 = vpop.f32.mrf.mxu0
      %1216 = vdwg.mxu0
      %1217 = vmatpush.bf16.msra.mxu0 0
      %1218 = vmatpush.bf16.msra.mxu0 0
      %1219 = vmatpush.bf16.msra.mxu0 0
      %1220 = vmatpush.bf16.msra.mxu0 0
      %1221 = vmatpush.bf16.msra.mxu0 0
      %1222 = vmatpush.bf16.msra.mxu0 0
      %1223 = vmatpush.bf16.msra.mxu0 0
      %1224 = vmatpush.bf16.msra.mxu0 %v1006
      %1225 = vmatmul.bf16.gmra.mxu0 %v970
      %v1226 = vpop.f32.mrf.mxu0
      %v1227 = vadd.f32 %v680, %v1226
      %v1228 = vpop.f32.mrf.mxu0
      %1229 = vdwg.mxu0
      %1230 = vmatpush.bf16.msra.mxu0 0
      %1231 = vmatpush.bf16.msra.mxu0 0
      %1232 = vmatpush.bf16.msra.mxu0 0
      %1233 = vmatpush.bf16.msra.mxu0 0
      %1234 = vmatpush.bf16.msra.mxu0 0
      %1235 = vmatpush.bf16.msra.mxu0 0
      %1236 = vmatpush.bf16.msra.mxu0 0
      %1237 = vmatpush.bf16.msra.mxu0 %v1009
      %1238 = vmatmul.bf16.gmra.mxu0 %v970
      %v1239 = vpop.f32.mrf.mxu0
      %v1240 = vadd.f32 %v693, %v1239
      %v1241 = vpop.f32.mrf.mxu0
      %1242 = vdwg.mxu0
      %1243 = vmatpush.bf16.msra.mxu0 0
      %1244 = vmatpush.bf16.msra.mxu0 0
      %1245 = vmatpush.bf16.msra.mxu0 0
      %1246 = vmatpush.bf16.msra.mxu0 0
      %1247 = vmatpush.bf16.msra.mxu0 0
      %1248 = vmatpush.bf16.msra.mxu0 0
      %1249 = vmatpush.bf16.msra.mxu0 0
      %1250 = vmatpush.bf16.msra.mxu0 %v1012
      %1251 = vmatmul.bf16.gmra.mxu0 %v970
      %v1252 = vpop.f32.mrf.mxu0
      %v1253 = vadd.f32 %v706, %v1252
      %v1254 = vpop.f32.mrf.mxu0
      %1255 = vdwg.mxu0
      %1256 = vmatpush.bf16.msra.mxu0 0
      %1257 = vmatpush.bf16.msra.mxu0 0
      %1258 = vmatpush.bf16.msra.mxu0 0
      %1259 = vmatpush.bf16.msra.mxu0 0
      %1260 = vmatpush.bf16.msra.mxu0 0
      %1261 = vmatpush.bf16.msra.mxu0 0
      %1262 = vmatpush.bf16.msra.mxu0 0
      %1263 = vmatpush.bf16.msra.mxu0 %v1015
      %1264 = vmatmul.bf16.gmra.mxu0 %v970
      %v1265 = vpop.f32.mrf.mxu0
      %v1266 = vadd.f32 %v719, %v1265
      %v1267 = vpop.f32.mrf.mxu0
      %1268 = vdwg.mxu0
      %1269 = vmatpush.bf16.msra.mxu0 0
      %1270 = vmatpush.bf16.msra.mxu0 0
      %1271 = vmatpush.bf16.msra.mxu0 0
      %1272 = vmatpush.bf16.msra.mxu0 0
      %1273 = vmatpush.bf16.msra.mxu0 0
      %1274 = vmatpush.bf16.msra.mxu0 0
      %1275 = vmatpush.bf16.msra.mxu0 0
      %1276 = vmatpush.bf16.msra.mxu0 %v1018
      %1277 = vmatmul.bf16.gmra.mxu0 %v970
      %v1278 = vpop.f32.mrf.mxu0
      %v1279 = vadd.f32 %v732, %v1278
      %v1280 = vpop.f32.mrf.mxu0
      %1281 = vdwg.mxu0
      %1282 = vmatpush.bf16.msra.mxu0 0
      %1283 = vmatpush.bf16.msra.mxu0 0
      %1284 = vmatpush.bf16.msra.mxu0 0
      %1285 = vmatpush.bf16.msra.mxu0 0
      %1286 = vmatpush.bf16.msra.mxu0 0
      %1287 = vmatpush.bf16.msra.mxu0 0
      %1288 = vmatpush.bf16.msra.mxu0 0
      %1289 = vmatpush.bf16.msra.mxu0 %v1021
      %1290 = vmatmul.bf16.gmra.mxu0 %v970
      %v1291 = vpop.f32.mrf.mxu0
      %v1292 = vadd.f32 %v745, %v1291
      %v1293 = vpop.f32.mrf.mxu0
      %1294 = vdwg.mxu0
      %1295 = vmatpush.bf16.msra.mxu0 0
      %1296 = vmatpush.bf16.msra.mxu0 0
      %1297 = vmatpush.bf16.msra.mxu0 0
      %1298 = vmatpush.bf16.msra.mxu0 0
      %1299 = vmatpush.bf16.msra.mxu0 0
      %1300 = vmatpush.bf16.msra.mxu0 0
      %1301 = vmatpush.bf16.msra.mxu0 0
      %1302 = vmatpush.bf16.msra.mxu0 %v1024
      %1303 = vmatmul.bf16.gmra.mxu0 %v970
      %v1304 = vpop.f32.mrf.mxu0
      %v1305 = vadd.f32 %v758, %v1304
      %v1306 = vpop.f32.mrf.mxu0
      %1307 = vdwg.mxu0
      %1308 = vmatpush.bf16.msra.mxu0 0
      %1309 = vmatpush.bf16.msra.mxu0 0
      %1310 = vmatpush.bf16.msra.mxu0 0
      %1311 = vmatpush.bf16.msra.mxu0 0
      %1312 = vmatpush.bf16.msra.mxu0 0
      %1313 = vmatpush.bf16.msra.mxu0 0
      %1314 = vmatpush.bf16.msra.mxu0 0
      %1315 = vmatpush.bf16.msra.mxu0 %v1027
      %1316 = vmatmul.bf16.gmra.mxu0 %v970
      %v1317 = vpop.f32.mrf.mxu0
      %v1318 = vadd.f32 %v771, %v1317
      %v1319 = vpop.f32.mrf.mxu0
      %1320 = vdwg.mxu0
      %1321 = vmatpush.bf16.msra.mxu0 0
      %1322 = vmatpush.bf16.msra.mxu0 0
      %1323 = vmatpush.bf16.msra.mxu0 0
      %1324 = vmatpush.bf16.msra.mxu0 0
      %1325 = vmatpush.bf16.msra.mxu0 0
      %1326 = vmatpush.bf16.msra.mxu0 0
      %1327 = vmatpush.bf16.msra.mxu0 0
      %1328 = vmatpush.bf16.msra.mxu0 %v1030
      %1329 = vmatmul.bf16.gmra.mxu0 %v970
      %v1330 = vpop.f32.mrf.mxu0
      %v1331 = vadd.f32 %v784, %v1330
      %v1332 = vpop.f32.mrf.mxu0
      %1333 = vdwg.mxu0
      %1334 = vmatpush.bf16.msra.mxu0 0
      %1335 = vmatpush.bf16.msra.mxu0 0
      %1336 = vmatpush.bf16.msra.mxu0 0
      %1337 = vmatpush.bf16.msra.mxu0 0
      %1338 = vmatpush.bf16.msra.mxu0 0
      %1339 = vmatpush.bf16.msra.mxu0 0
      %1340 = vmatpush.bf16.msra.mxu0 0
      %1341 = vmatpush.bf16.msra.mxu0 %v1033
      %1342 = vmatmul.bf16.gmra.mxu0 %v970
      %v1343 = vpop.f32.mrf.mxu0
      %v1344 = vadd.f32 %v797, %v1343
      %v1345 = vpop.f32.mrf.mxu0
      %1346 = vdwg.mxu0
      %1347 = vmatpush.bf16.msra.mxu0 0
      %1348 = vmatpush.bf16.msra.mxu0 0
      %1349 = vmatpush.bf16.msra.mxu0 0
      %1350 = vmatpush.bf16.msra.mxu0 0
      %1351 = vmatpush.bf16.msra.mxu0 0
      %1352 = vmatpush.bf16.msra.mxu0 0
      %1353 = vmatpush.bf16.msra.mxu0 0
      %1354 = vmatpush.bf16.msra.mxu0 %v1036
      %1355 = vmatmul.bf16.gmra.mxu0 %v970
      %v1356 = vpop.f32.mrf.mxu0
      %v1357 = vadd.f32 %v810, %v1356
      %v1358 = vpop.f32.mrf.mxu0
      %1359 = vdwg.mxu0
      %1360 = vmatpush.bf16.msra.mxu0 0
      %1361 = vmatpush.bf16.msra.mxu0 0
      %1362 = vmatpush.bf16.msra.mxu0 0
      %1363 = vmatpush.bf16.msra.mxu0 0
      %1364 = vmatpush.bf16.msra.mxu0 0
      %1365 = vmatpush.bf16.msra.mxu0 0
      %1366 = vmatpush.bf16.msra.mxu0 0
      %1367 = vmatpush.bf16.msra.mxu0 %v1039
      %1368 = vmatmul.bf16.gmra.mxu0 %v970
      %v1369 = vpop.f32.mrf.mxu0
      %v1370 = vadd.f32 %v823, %v1369
      %v1371 = vpop.f32.mrf.mxu0
      %1372 = vdwg.mxu0
      %1373 = vmatpush.bf16.msra.mxu0 0
      %1374 = vmatpush.bf16.msra.mxu0 0
      %1375 = vmatpush.bf16.msra.mxu0 0
      %1376 = vmatpush.bf16.msra.mxu0 0
      %1377 = vmatpush.bf16.msra.mxu0 0
      %1378 = vmatpush.bf16.msra.mxu0 0
      %1379 = vmatpush.bf16.msra.mxu0 0
      %1380 = vmatpush.bf16.msra.mxu0 %v1042
      %1381 = vmatmul.bf16.gmra.mxu0 %v970
      %v1382 = vpop.f32.mrf.mxu0
      %v1383 = vadd.f32 %v836, %v1382
      %v1384 = vpop.f32.mrf.mxu0
      %1385 = vdwg.mxu0
      %1386 = vmatpush.bf16.msra.mxu0 0
      %1387 = vmatpush.bf16.msra.mxu0 0
      %1388 = vmatpush.bf16.msra.mxu0 0
      %1389 = vmatpush.bf16.msra.mxu0 0
      %1390 = vmatpush.bf16.msra.mxu0 0
      %1391 = vmatpush.bf16.msra.mxu0 0
      %1392 = vmatpush.bf16.msra.mxu0 0
      %1393 = vmatpush.bf16.msra.mxu0 %v1045
      %1394 = vmatmul.bf16.gmra.mxu0 %v970
      %v1395 = vpop.f32.mrf.mxu0
      %v1396 = vadd.f32 %v849, %v1395
      %v1397 = vpop.f32.mrf.mxu0
      %1398 = vdwg.mxu0
      %1399 = vmatpush.bf16.msra.mxu0 0
      %1400 = vmatpush.bf16.msra.mxu0 0
      %1401 = vmatpush.bf16.msra.mxu0 0
      %1402 = vmatpush.bf16.msra.mxu0 0
      %1403 = vmatpush.bf16.msra.mxu0 0
      %1404 = vmatpush.bf16.msra.mxu0 0
      %1405 = vmatpush.bf16.msra.mxu0 0
      %1406 = vmatpush.bf16.msra.mxu0 %v1048
      %1407 = vmatmul.bf16.gmra.mxu0 %v970
      %v1408 = vpop.f32.mrf.mxu0
      %v1409 = vadd.f32 %v862, %v1408
      %v1410 = vpop.f32.mrf.mxu0
      %1411 = vdwg.mxu0
      %1412 = vmatpush.bf16.msra.mxu0 0
      %1413 = vmatpush.bf16.msra.mxu0 0
      %1414 = vmatpush.bf16.msra.mxu0 0
      %1415 = vmatpush.bf16.msra.mxu0 0
      %1416 = vmatpush.bf16.msra.mxu0 0
      %1417 = vmatpush.bf16.msra.mxu0 0
      %1418 = vmatpush.bf16.msra.mxu0 0
      %1419 = vmatpush.bf16.msra.mxu0 %v1051
      %1420 = vmatmul.bf16.gmra.mxu0 %v970
      %v1421 = vpop.f32.mrf.mxu0
      %v1422 = vadd.f32 %v875, %v1421
      %v1423 = vpop.f32.mrf.mxu0
      %1424 = vdwg.mxu0
      %1425 = vmatpush.bf16.msra.mxu0 0
      %1426 = vmatpush.bf16.msra.mxu0 0
      %1427 = vmatpush.bf16.msra.mxu0 0
      %1428 = vmatpush.bf16.msra.mxu0 0
      %1429 = vmatpush.bf16.msra.mxu0 0
      %1430 = vmatpush.bf16.msra.mxu0 0
      %1431 = vmatpush.bf16.msra.mxu0 0
      %1432 = vmatpush.bf16.msra.mxu0 %v1054
      %1433 = vmatmul.bf16.gmra.mxu0 %v970
      %v1434 = vpop.f32.mrf.mxu0
      %v1435 = vadd.f32 %v888, %v1434
      %v1436 = vpop.f32.mrf.mxu0
      %1437 = vdwg.mxu0
      %1438 = vmatpush.bf16.msra.mxu0 0
      %1439 = vmatpush.bf16.msra.mxu0 0
      %1440 = vmatpush.bf16.msra.mxu0 0
      %1441 = vmatpush.bf16.msra.mxu0 0
      %1442 = vmatpush.bf16.msra.mxu0 0
      %1443 = vmatpush.bf16.msra.mxu0 0
      %1444 = vmatpush.bf16.msra.mxu0 0
      %1445 = vmatpush.bf16.msra.mxu0 %v1057
      %1446 = vmatmul.bf16.gmra.mxu0 %v970
      %v1447 = vpop.f32.mrf.mxu0
      %v1448 = vadd.f32 %v901, %v1447
      %v1449 = vpop.f32.mrf.mxu0
      %1450 = vdwg.mxu0
      %1451 = vmatpush.bf16.msra.mxu0 0
      %1452 = vmatpush.bf16.msra.mxu0 0
      %1453 = vmatpush.bf16.msra.mxu0 0
      %1454 = vmatpush.bf16.msra.mxu0 0
      %1455 = vmatpush.bf16.msra.mxu0 0
      %1456 = vmatpush.bf16.msra.mxu0 0
      %1457 = vmatpush.bf16.msra.mxu0 0
      %1458 = vmatpush.bf16.msra.mxu0 %v1060
      %1459 = vmatmul.bf16.gmra.mxu0 %v970
      %v1460 = vpop.f32.mrf.mxu0
      %v1461 = vadd.f32 %v914, %v1460
      %v1462 = vpop.f32.mrf.mxu0
      %1463 = vdwg.mxu0
      %1464 = vmatpush.bf16.msra.mxu0 0
      %1465 = vmatpush.bf16.msra.mxu0 0
      %1466 = vmatpush.bf16.msra.mxu0 0
      %1467 = vmatpush.bf16.msra.mxu0 0
      %1468 = vmatpush.bf16.msra.mxu0 0
      %1469 = vmatpush.bf16.msra.mxu0 0
      %1470 = vmatpush.bf16.msra.mxu0 0
      %1471 = vmatpush.bf16.msra.mxu0 %v1063
      %1472 = vmatmul.bf16.gmra.mxu0 %v970
      %v1473 = vpop.f32.mrf.mxu0
      %v1474 = vadd.f32 %v927, %v1473
      %v1475 = vpop.f32.mrf.mxu0
      %1476 = vdwg.mxu0
      %1477 = vmatpush.bf16.msra.mxu0 0
      %1478 = vmatpush.bf16.msra.mxu0 0
      %1479 = vmatpush.bf16.msra.mxu0 0
      %1480 = vmatpush.bf16.msra.mxu0 0
      %1481 = vmatpush.bf16.msra.mxu0 0
      %1482 = vmatpush.bf16.msra.mxu0 0
      %1483 = vmatpush.bf16.msra.mxu0 0
      %1484 = vmatpush.bf16.msra.mxu0 %v1066
      %1485 = vmatmul.bf16.gmra.mxu0 %v970
      %v1486 = vpop.f32.mrf.mxu0
      %v1487 = vadd.f32 %v940, %v1486
      %v1488 = vpop.f32.mrf.mxu0
      %1489 = vdwg.mxu0
      %1490 = vmatpush.bf16.msra.mxu0 0
      %1491 = vmatpush.bf16.msra.mxu0 0
      %1492 = vmatpush.bf16.msra.mxu0 0
      %1493 = vmatpush.bf16.msra.mxu0 0
      %1494 = vmatpush.bf16.msra.mxu0 0
      %1495 = vmatpush.bf16.msra.mxu0 0
      %1496 = vmatpush.bf16.msra.mxu0 0
      %1497 = vmatpush.bf16.msra.mxu0 %v1069
      %1498 = vmatmul.bf16.gmra.mxu0 %v970
      %v1499 = vpop.f32.mrf.mxu0
      %v1500 = vadd.f32 %v953, %v1499
      %v1501 = vpop.f32.mrf.mxu0
      %1502 = vdwg.mxu0
      %1503 = vmatpush.bf16.msra.mxu0 0
      %1504 = vmatpush.bf16.msra.mxu0 0
      %1505 = vmatpush.bf16.msra.mxu0 0
      %1506 = vmatpush.bf16.msra.mxu0 0
      %1507 = vmatpush.bf16.msra.mxu0 0
      %1508 = vmatpush.bf16.msra.mxu0 0
      %1509 = vmatpush.bf16.msra.mxu0 0
      %1510 = vmatpush.bf16.msra.mxu0 %v1072
      %1511 = vmatmul.bf16.gmra.mxu0 %v970
      %v1512 = vpop.f32.mrf.mxu0
      %v1513 = vadd.f32 %v966, %v1512
      %v1514 = vpop.f32.mrf.mxu0
      %1515 = vdwg.mxu0
      %s1516 = scalar_lea.vmem %s1, 8
      %v1517 = vld [vmem:[%s1516] sm:$0xf]
      %1518 = vrot.lane.b32.xlu0 %v284, 63
      %v1519 = vpop.permute.xlu0 %1518
      %1520 = vrot.lane.b32.xlu0 %v285, 63
      %v1521 = vpop.permute.xlu0 %1520
      %1522 = vrot.lane.b32.xlu0 %v286, 63
      %v1523 = vpop.permute.xlu0 %1522
      %1524 = vrot.lane.b32.xlu0 %v287, 63
      %v1525 = vpop.permute.xlu0 %1524
      %1526 = vrot.lane.b32.xlu0 %v288, 63
      %v1527 = vpop.permute.xlu0 %1526
      %1528 = vrot.lane.b32.xlu0 %v289, 63
      %v1529 = vpop.permute.xlu0 %1528
      %1530 = vrot.lane.b32.xlu0 %v290, 63
      %v1531 = vpop.permute.xlu0 %1530
      %1532 = vrot.lane.b32.xlu0 %v291, 63
      %v1533 = vpop.permute.xlu0 %1532
      %1534 = vrot.lane.b32.xlu0 %v292, 63
      %v1535 = vpop.permute.xlu0 %1534
      %1536 = vrot.lane.b32.xlu0 %v293, 63
      %v1537 = vpop.permute.xlu0 %1536
      %1538 = vrot.lane.b32.xlu0 %v294, 63
      %v1539 = vpop.permute.xlu0 %1538
      %1540 = vrot.lane.b32.xlu0 %v295, 63
      %v1541 = vpop.permute.xlu0 %1540
      %1542 = vrot.lane.b32.xlu0 %v296, 63
      %v1543 = vpop.permute.xlu0 %1542
      %1544 = vrot.lane.b32.xlu0 %v297, 63
      %v1545 = vpop.permute.xlu0 %1544
      %1546 = vrot.lane.b32.xlu0 %v298, 63
      %v1547 = vpop.permute.xlu0 %1546
      %1548 = vrot.lane.b32.xlu0 %v299, 63
      %v1549 = vpop.permute.xlu0 %1548
      %1550 = vrot.lane.b32.xlu0 %v300, 63
      %v1551 = vpop.permute.xlu0 %1550
      %1552 = vrot.lane.b32.xlu0 %v301, 63
      %v1553 = vpop.permute.xlu0 %1552
      %1554 = vrot.lane.b32.xlu0 %v302, 63
      %v1555 = vpop.permute.xlu0 %1554
      %1556 = vrot.lane.b32.xlu0 %v303, 63
      %v1557 = vpop.permute.xlu0 %1556
      %1558 = vrot.lane.b32.xlu0 %v304, 63
      %v1559 = vpop.permute.xlu0 %1558
      %1560 = vrot.lane.b32.xlu0 %v305, 63
      %v1561 = vpop.permute.xlu0 %1560
      %1562 = vrot.lane.b32.xlu0 %v306, 63
      %v1563 = vpop.permute.xlu0 %1562
      %1564 = vrot.lane.b32.xlu0 %v307, 63
      %v1565 = vpop.permute.xlu0 %1564
      %1566 = vrot.lane.b32.xlu0 %v308, 63
      %v1567 = vpop.permute.xlu0 %1566
      %1568 = vrot.lane.b32.xlu0 %v309, 63
      %v1569 = vpop.permute.xlu0 %1568
      %1570 = vrot.lane.b32.xlu0 %v310, 63
      %v1571 = vpop.permute.xlu0 %1570
      %1572 = vrot.lane.b32.xlu0 %v311, 63
      %v1573 = vpop.permute.xlu0 %1572
      %1574 = vrot.lane.b32.xlu0 %v312, 63
      %v1575 = vpop.permute.xlu0 %1574
      %1576 = vrot.lane.b32.xlu0 %v313, 63
      %v1577 = vpop.permute.xlu0 %1576
      %1578 = vrot.lane.b32.xlu0 %v314, 63
      %v1579 = vpop.permute.xlu0 %1578
      %1580 = vrot.lane.b32.xlu0 %v315, 63
      %v1581 = vpop.permute.xlu0 %1580
      %1582 = vrot.lane.b32.xlu0 %v316, 63
      %v1583 = vpop.permute.xlu0 %1582
      %1584 = vrot.lane.b32.xlu0 %v317, 63
      %v1585 = vpop.permute.xlu0 %1584
      %vm1586 = vcmask 515072
      %v1587 = vsel %vm1586, %v1519, %v1521
      %v1588 = vsel %vm1586, %v1521, %v1523
      %v1589 = vsel %vm1586, %v1523, %v1525
      %v1590 = vsel %vm1586, %v1525, %v1527
      %v1591 = vsel %vm1586, %v1527, %v1529
      %v1592 = vsel %vm1586, %v1529, %v1531
      %v1593 = vsel %vm1586, %v1531, %v1533
      %v1594 = vsel %vm1586, %v1533, %v1535
      %v1595 = vsel %vm1586, %v1535, %v1537
      %v1596 = vsel %vm1586, %v1537, %v1539
      %v1597 = vsel %vm1586, %v1539, %v1541
      %v1598 = vsel %vm1586, %v1541, %v1543
      %v1599 = vsel %vm1586, %v1543, %v1545
      %v1600 = vsel %vm1586, %v1545, %v1547
      %v1601 = vsel %vm1586, %v1547, %v1549
      %v1602 = vsel %vm1586, %v1549, %v1551
      %v1603 = vsel %vm1586, %v1551, %v1553
      %v1604 = vsel %vm1586, %v1553, %v1555
      %v1605 = vsel %vm1586, %v1555, %v1557
      %v1606 = vsel %vm1586, %v1557, %v1559
      %v1607 = vsel %vm1586, %v1559, %v1561
      %v1608 = vsel %vm1586, %v1561, %v1563
      %v1609 = vsel %vm1586, %v1563, %v1565
      %v1610 = vsel %vm1586, %v1565, %v1567
      %v1611 = vsel %vm1586, %v1567, %v1569
      %v1612 = vsel %vm1586, %v1569, %v1571
      %v1613 = vsel %vm1586, %v1571, %v1573
      %v1614 = vsel %vm1586, %v1573, %v1575
      %v1615 = vsel %vm1586, %v1575, %v1577
      %v1616 = vsel %vm1586, %v1577, %v1579
      %v1617 = vsel %vm1586, %v1579, %v1581
      %v1618 = vsel %vm1586, %v1581, %v1583
      %v1619 = vsel %vm1586, %v1583, %v1585
      %v1621 = vsel %vm420, %v1517, 0
      %v1624 = vsel %vm424, %v1587, 0
      %v1627 = vsel %vm424, %v1588, 0
      %v1630 = vsel %vm424, %v1589, 0
      %v1633 = vsel %vm424, %v1590, 0
      %v1636 = vsel %vm424, %v1591, 0
      %v1639 = vsel %vm424, %v1592, 0
      %v1642 = vsel %vm424, %v1593, 0
      %v1645 = vsel %vm424, %v1594, 0
      %v1648 = vsel %vm424, %v1595, 0
      %v1651 = vsel %vm424, %v1596, 0
      %v1654 = vsel %vm424, %v1597, 0
      %v1657 = vsel %vm424, %v1598, 0
      %v1660 = vsel %vm424, %v1599, 0
      %v1663 = vsel %vm424, %v1600, 0
      %v1666 = vsel %vm424, %v1601, 0
      %v1669 = vsel %vm424, %v1602, 0
      %v1672 = vsel %vm424, %v1603, 0
      %v1675 = vsel %vm424, %v1604, 0
      %v1678 = vsel %vm424, %v1605, 0
      %v1681 = vsel %vm424, %v1606, 0
      %v1684 = vsel %vm424, %v1607, 0
      %v1687 = vsel %vm424, %v1608, 0
      %v1690 = vsel %vm424, %v1609, 0
      %v1693 = vsel %vm424, %v1610, 0
      %v1696 = vsel %vm424, %v1611, 0
      %v1699 = vsel %vm424, %v1612, 0
      %v1702 = vsel %vm424, %v1613, 0
      %v1705 = vsel %vm424, %v1614, 0
      %v1708 = vsel %vm424, %v1615, 0
      %v1711 = vsel %vm424, %v1616, 0
      %v1714 = vsel %vm424, %v1617, 0
      %v1717 = vsel %vm424, %v1618, 0
      %v1720 = vsel %vm424, %v1619, 0
      %v1723 = vsel %vm424, %v1585, 0
      %1725 = vmatpush.bf16.msra.mxu0 0
      %1726 = vmatpush.bf16.msra.mxu0 0
      %1727 = vmatpush.bf16.msra.mxu0 0
      %1728 = vmatpush.bf16.msra.mxu0 0
      %1729 = vmatpush.bf16.msra.mxu0 0
      %1730 = vmatpush.bf16.msra.mxu0 0
      %1731 = vmatpush.bf16.msra.mxu0 0
      %1732 = vmatpush.bf16.msra.mxu0 %v1624
      %1733 = vmatmul.bf16.gmra.mxu0 %v1621
      %v1734 = vpop.f32.mrf.mxu0
      %v1735 = vadd.f32 0.0, %v1734
      %v1736 = vpop.f32.mrf.mxu0
      %1737 = vdwg.mxu0
      %1738 = vmatpush.bf16.msra.mxu0 0
      %1739 = vmatpush.bf16.msra.mxu0 0
      %1740 = vmatpush.bf16.msra.mxu0 0
      %1741 = vmatpush.bf16.msra.mxu0 0
      %1742 = vmatpush.bf16.msra.mxu0 0
      %1743 = vmatpush.bf16.msra.mxu0 0
      %1744 = vmatpush.bf16.msra.mxu0 0
      %1745 = vmatpush.bf16.msra.mxu0 %v1627
      %1746 = vmatmul.bf16.gmra.mxu0 %v1621
      %v1747 = vpop.f32.mrf.mxu0
      %v1748 = vadd.f32 0.0, %v1747
      %v1749 = vpop.f32.mrf.mxu0
      %1750 = vdwg.mxu0
      %1751 = vmatpush.bf16.msra.mxu0 0
      %1752 = vmatpush.bf16.msra.mxu0 0
      %1753 = vmatpush.bf16.msra.mxu0 0
      %1754 = vmatpush.bf16.msra.mxu0 0
      %1755 = vmatpush.bf16.msra.mxu0 0
      %1756 = vmatpush.bf16.msra.mxu0 0
      %1757 = vmatpush.bf16.msra.mxu0 0
      %1758 = vmatpush.bf16.msra.mxu0 %v1630
      %1759 = vmatmul.bf16.gmra.mxu0 %v1621
      %v1760 = vpop.f32.mrf.mxu0
      %v1761 = vadd.f32 0.0, %v1760
      %v1762 = vpop.f32.mrf.mxu0
      %1763 = vdwg.mxu0
      %1764 = vmatpush.bf16.msra.mxu0 0
      %1765 = vmatpush.bf16.msra.mxu0 0
      %1766 = vmatpush.bf16.msra.mxu0 0
      %1767 = vmatpush.bf16.msra.mxu0 0
      %1768 = vmatpush.bf16.msra.mxu0 0
      %1769 = vmatpush.bf16.msra.mxu0 0
      %1770 = vmatpush.bf16.msra.mxu0 0
      %1771 = vmatpush.bf16.msra.mxu0 %v1633
      %1772 = vmatmul.bf16.gmra.mxu0 %v1621
      %v1773 = vpop.f32.mrf.mxu0
      %v1774 = vadd.f32 0.0, %v1773
      %v1775 = vpop.f32.mrf.mxu0
      %1776 = vdwg.mxu0
      %1777 = vmatpush.bf16.msra.mxu0 0
      %1778 = vmatpush.bf16.msra.mxu0 0
      %1779 = vmatpush.bf16.msra.mxu0 0
      %1780 = vmatpush.bf16.msra.mxu0 0
      %1781 = vmatpush.bf16.msra.mxu0 0
      %1782 = vmatpush.bf16.msra.mxu0 0
      %1783 = vmatpush.bf16.msra.mxu0 0
      %1784 = vmatpush.bf16.msra.mxu0 %v1636
      %1785 = vmatmul.bf16.gmra.mxu0 %v1621
      %v1786 = vpop.f32.mrf.mxu0
      %v1787 = vadd.f32 0.0, %v1786
      %v1788 = vpop.f32.mrf.mxu0
      %1789 = vdwg.mxu0
      %1790 = vmatpush.bf16.msra.mxu0 0
      %1791 = vmatpush.bf16.msra.mxu0 0
      %1792 = vmatpush.bf16.msra.mxu0 0
      %1793 = vmatpush.bf16.msra.mxu0 0
      %1794 = vmatpush.bf16.msra.mxu0 0
      %1795 = vmatpush.bf16.msra.mxu0 0
      %1796 = vmatpush.bf16.msra.mxu0 0
      %1797 = vmatpush.bf16.msra.mxu0 %v1639
      %1798 = vmatmul.bf16.gmra.mxu0 %v1621
      %v1799 = vpop.f32.mrf.mxu0
      %v1800 = vadd.f32 0.0, %v1799
      %v1801 = vpop.f32.mrf.mxu0
      %1802 = vdwg.mxu0
      %1803 = vmatpush.bf16.msra.mxu0 0
      %1804 = vmatpush.bf16.msra.mxu0 0
      %1805 = vmatpush.bf16.msra.mxu0 0
      %1806 = vmatpush.bf16.msra.mxu0 0
      %1807 = vmatpush.bf16.msra.mxu0 0
      %1808 = vmatpush.bf16.msra.mxu0 0
      %1809 = vmatpush.bf16.msra.mxu0 0
      %1810 = vmatpush.bf16.msra.mxu0 %v1642
      %1811 = vmatmul.bf16.gmra.mxu0 %v1621
      %v1812 = vpop.f32.mrf.mxu0
      %v1813 = vadd.f32 0.0, %v1812
      %v1814 = vpop.f32.mrf.mxu0
      %1815 = vdwg.mxu0
      %1816 = vmatpush.bf16.msra.mxu0 0
      %1817 = vmatpush.bf16.msra.mxu0 0
      %1818 = vmatpush.bf16.msra.mxu0 0
      %1819 = vmatpush.bf16.msra.mxu0 0
      %1820 = vmatpush.bf16.msra.mxu0 0
      %1821 = vmatpush.bf16.msra.mxu0 0
      %1822 = vmatpush.bf16.msra.mxu0 0
      %1823 = vmatpush.bf16.msra.mxu0 %v1645
      %1824 = vmatmul.bf16.gmra.mxu0 %v1621
      %v1825 = vpop.f32.mrf.mxu0
      %v1826 = vadd.f32 0.0, %v1825
      %v1827 = vpop.f32.mrf.mxu0
      %1828 = vdwg.mxu0
      %1829 = vmatpush.bf16.msra.mxu0 0
      %1830 = vmatpush.bf16.msra.mxu0 0
      %1831 = vmatpush.bf16.msra.mxu0 0
      %1832 = vmatpush.bf16.msra.mxu0 0
      %1833 = vmatpush.bf16.msra.mxu0 0
      %1834 = vmatpush.bf16.msra.mxu0 0
      %1835 = vmatpush.bf16.msra.mxu0 0
      %1836 = vmatpush.bf16.msra.mxu0 %v1648
      %1837 = vmatmul.bf16.gmra.mxu0 %v1621
      %v1838 = vpop.f32.mrf.mxu0
      %v1839 = vadd.f32 0.0, %v1838
      %v1840 = vpop.f32.mrf.mxu0
      %1841 = vdwg.mxu0
      %1842 = vmatpush.bf16.msra.mxu0 0
      %1843 = vmatpush.bf16.msra.mxu0 0
      %1844 = vmatpush.bf16.msra.mxu0 0
      %1845 = vmatpush.bf16.msra.mxu0 0
      %1846 = vmatpush.bf16.msra.mxu0 0
      %1847 = vmatpush.bf16.msra.mxu0 0
      %1848 = vmatpush.bf16.msra.mxu0 0
      %1849 = vmatpush.bf16.msra.mxu0 %v1651
      %1850 = vmatmul.bf16.gmra.mxu0 %v1621
      %v1851 = vpop.f32.mrf.mxu0
      %v1852 = vadd.f32 0.0, %v1851
      %v1853 = vpop.f32.mrf.mxu0
      %1854 = vdwg.mxu0
      %1855 = vmatpush.bf16.msra.mxu0 0
      %1856 = vmatpush.bf16.msra.mxu0 0
      %1857 = vmatpush.bf16.msra.mxu0 0
      %1858 = vmatpush.bf16.msra.mxu0 0
      %1859 = vmatpush.bf16.msra.mxu0 0
      %1860 = vmatpush.bf16.msra.mxu0 0
      %1861 = vmatpush.bf16.msra.mxu0 0
      %1862 = vmatpush.bf16.msra.mxu0 %v1654
      %1863 = vmatmul.bf16.gmra.mxu0 %v1621
      %v1864 = vpop.f32.mrf.mxu0
      %v1865 = vadd.f32 0.0, %v1864
      %v1866 = vpop.f32.mrf.mxu0
      %1867 = vdwg.mxu0
      %1868 = vmatpush.bf16.msra.mxu0 0
      %1869 = vmatpush.bf16.msra.mxu0 0
      %1870 = vmatpush.bf16.msra.mxu0 0
      %1871 = vmatpush.bf16.msra.mxu0 0
      %1872 = vmatpush.bf16.msra.mxu0 0
      %1873 = vmatpush.bf16.msra.mxu0 0
      %1874 = vmatpush.bf16.msra.mxu0 0
      %1875 = vmatpush.bf16.msra.mxu0 %v1657
      %1876 = vmatmul.bf16.gmra.mxu0 %v1621
      %v1877 = vpop.f32.mrf.mxu0
      %v1878 = vadd.f32 0.0, %v1877
      %v1879 = vpop.f32.mrf.mxu0
      %1880 = vdwg.mxu0
      %1881 = vmatpush.bf16.msra.mxu0 0
      %1882 = vmatpush.bf16.msra.mxu0 0
      %1883 = vmatpush.bf16.msra.mxu0 0
      %1884 = vmatpush.bf16.msra.mxu0 0
      %1885 = vmatpush.bf16.msra.mxu0 0
      %1886 = vmatpush.bf16.msra.mxu0 0
      %1887 = vmatpush.bf16.msra.mxu0 0
      %1888 = vmatpush.bf16.msra.mxu0 %v1660
      %1889 = vmatmul.bf16.gmra.mxu0 %v1621
      %v1890 = vpop.f32.mrf.mxu0
      %v1891 = vadd.f32 0.0, %v1890
      %v1892 = vpop.f32.mrf.mxu0
      %1893 = vdwg.mxu0
      %1894 = vmatpush.bf16.msra.mxu0 0
      %1895 = vmatpush.bf16.msra.mxu0 0
      %1896 = vmatpush.bf16.msra.mxu0 0
      %1897 = vmatpush.bf16.msra.mxu0 0
      %1898 = vmatpush.bf16.msra.mxu0 0
      %1899 = vmatpush.bf16.msra.mxu0 0
      %1900 = vmatpush.bf16.msra.mxu0 0
      %1901 = vmatpush.bf16.msra.mxu0 %v1663
      %1902 = vmatmul.bf16.gmra.mxu0 %v1621
      %v1903 = vpop.f32.mrf.mxu0
      %v1904 = vadd.f32 0.0, %v1903
      %v1905 = vpop.f32.mrf.mxu0
      %1906 = vdwg.mxu0
      %1907 = vmatpush.bf16.msra.mxu0 0
      %1908 = vmatpush.bf16.msra.mxu0 0
      %1909 = vmatpush.bf16.msra.mxu0 0
      %1910 = vmatpush.bf16.msra.mxu0 0
      %1911 = vmatpush.bf16.msra.mxu0 0
      %1912 = vmatpush.bf16.msra.mxu0 0
      %1913 = vmatpush.bf16.msra.mxu0 0
      %1914 = vmatpush.bf16.msra.mxu0 %v1666
      %1915 = vmatmul.bf16.gmra.mxu0 %v1621
      %v1916 = vpop.f32.mrf.mxu0
      %v1917 = vadd.f32 0.0, %v1916
      %v1918 = vpop.f32.mrf.mxu0
      %1919 = vdwg.mxu0
      %1920 = vmatpush.bf16.msra.mxu0 0
      %1921 = vmatpush.bf16.msra.mxu0 0
      %1922 = vmatpush.bf16.msra.mxu0 0
      %1923 = vmatpush.bf16.msra.mxu0 0
      %1924 = vmatpush.bf16.msra.mxu0 0
      %1925 = vmatpush.bf16.msra.mxu0 0
      %1926 = vmatpush.bf16.msra.mxu0 0
      %1927 = vmatpush.bf16.msra.mxu0 %v1669
      %1928 = vmatmul.bf16.gmra.mxu0 %v1621
      %v1929 = vpop.f32.mrf.mxu0
      %v1930 = vadd.f32 0.0, %v1929
      %v1931 = vpop.f32.mrf.mxu0
      %1932 = vdwg.mxu0
      %1933 = vmatpush.bf16.msra.mxu0 0
      %1934 = vmatpush.bf16.msra.mxu0 0
      %1935 = vmatpush.bf16.msra.mxu0 0
      %1936 = vmatpush.bf16.msra.mxu0 0
      %1937 = vmatpush.bf16.msra.mxu0 0
      %1938 = vmatpush.bf16.msra.mxu0 0
      %1939 = vmatpush.bf16.msra.mxu0 0
      %1940 = vmatpush.bf16.msra.mxu0 %v1672
      %1941 = vmatmul.bf16.gmra.mxu0 %v1621
      %v1942 = vpop.f32.mrf.mxu0
      %v1943 = vadd.f32 0.0, %v1942
      %v1944 = vpop.f32.mrf.mxu0
      %1945 = vdwg.mxu0
      %1946 = vmatpush.bf16.msra.mxu0 0
      %1947 = vmatpush.bf16.msra.mxu0 0
      %1948 = vmatpush.bf16.msra.mxu0 0
      %1949 = vmatpush.bf16.msra.mxu0 0
      %1950 = vmatpush.bf16.msra.mxu0 0
      %1951 = vmatpush.bf16.msra.mxu0 0
      %1952 = vmatpush.bf16.msra.mxu0 0
      %1953 = vmatpush.bf16.msra.mxu0 %v1675
      %1954 = vmatmul.bf16.gmra.mxu0 %v1621
      %v1955 = vpop.f32.mrf.mxu0
      %v1956 = vadd.f32 0.0, %v1955
      %v1957 = vpop.f32.mrf.mxu0
      %1958 = vdwg.mxu0
      %1959 = vmatpush.bf16.msra.mxu0 0
      %1960 = vmatpush.bf16.msra.mxu0 0
      %1961 = vmatpush.bf16.msra.mxu0 0
      %1962 = vmatpush.bf16.msra.mxu0 0
      %1963 = vmatpush.bf16.msra.mxu0 0
      %1964 = vmatpush.bf16.msra.mxu0 0
      %1965 = vmatpush.bf16.msra.mxu0 0
      %1966 = vmatpush.bf16.msra.mxu0 %v1678
      %1967 = vmatmul.bf16.gmra.mxu0 %v1621
      %v1968 = vpop.f32.mrf.mxu0
      %v1969 = vadd.f32 0.0, %v1968
      %v1970 = vpop.f32.mrf.mxu0
      %1971 = vdwg.mxu0
      %1972 = vmatpush.bf16.msra.mxu0 0
      %1973 = vmatpush.bf16.msra.mxu0 0
      %1974 = vmatpush.bf16.msra.mxu0 0
      %1975 = vmatpush.bf16.msra.mxu0 0
      %1976 = vmatpush.bf16.msra.mxu0 0
      %1977 = vmatpush.bf16.msra.mxu0 0
      %1978 = vmatpush.bf16.msra.mxu0 0
      %1979 = vmatpush.bf16.msra.mxu0 %v1681
      %1980 = vmatmul.bf16.gmra.mxu0 %v1621
      %v1981 = vpop.f32.mrf.mxu0
      %v1982 = vadd.f32 0.0, %v1981
      %v1983 = vpop.f32.mrf.mxu0
      %1984 = vdwg.mxu0
      %1985 = vmatpush.bf16.msra.mxu0 0
      %1986 = vmatpush.bf16.msra.mxu0 0
      %1987 = vmatpush.bf16.msra.mxu0 0
      %1988 = vmatpush.bf16.msra.mxu0 0
      %1989 = vmatpush.bf16.msra.mxu0 0
      %1990 = vmatpush.bf16.msra.mxu0 0
      %1991 = vmatpush.bf16.msra.mxu0 0
      %1992 = vmatpush.bf16.msra.mxu0 %v1684
      %1993 = vmatmul.bf16.gmra.mxu0 %v1621
      %v1994 = vpop.f32.mrf.mxu0
      %v1995 = vadd.f32 0.0, %v1994
      %v1996 = vpop.f32.mrf.mxu0
      %1997 = vdwg.mxu0
      %1998 = vmatpush.bf16.msra.mxu0 0
      %1999 = vmatpush.bf16.msra.mxu0 0
      %2000 = vmatpush.bf16.msra.mxu0 0
      %2001 = vmatpush.bf16.msra.mxu0 0
      %2002 = vmatpush.bf16.msra.mxu0 0
      %2003 = vmatpush.bf16.msra.mxu0 0
      %2004 = vmatpush.bf16.msra.mxu0 0
      %2005 = vmatpush.bf16.msra.mxu0 %v1687
      %2006 = vmatmul.bf16.gmra.mxu0 %v1621
      %v2007 = vpop.f32.mrf.mxu0
      %v2008 = vadd.f32 0.0, %v2007
      %v2009 = vpop.f32.mrf.mxu0
      %2010 = vdwg.mxu0
      %2011 = vmatpush.bf16.msra.mxu0 0
      %2012 = vmatpush.bf16.msra.mxu0 0
      %2013 = vmatpush.bf16.msra.mxu0 0
      %2014 = vmatpush.bf16.msra.mxu0 0
      %2015 = vmatpush.bf16.msra.mxu0 0
      %2016 = vmatpush.bf16.msra.mxu0 0
      %2017 = vmatpush.bf16.msra.mxu0 0
      %2018 = vmatpush.bf16.msra.mxu0 %v1690
      %2019 = vmatmul.bf16.gmra.mxu0 %v1621
      %v2020 = vpop.f32.mrf.mxu0
      %v2021 = vadd.f32 0.0, %v2020
      %v2022 = vpop.f32.mrf.mxu0
      %2023 = vdwg.mxu0
      %2024 = vmatpush.bf16.msra.mxu0 0
      %2025 = vmatpush.bf16.msra.mxu0 0
      %2026 = vmatpush.bf16.msra.mxu0 0
      %2027 = vmatpush.bf16.msra.mxu0 0
      %2028 = vmatpush.bf16.msra.mxu0 0
      %2029 = vmatpush.bf16.msra.mxu0 0
      %2030 = vmatpush.bf16.msra.mxu0 0
      %2031 = vmatpush.bf16.msra.mxu0 %v1693
      %2032 = vmatmul.bf16.gmra.mxu0 %v1621
      %v2033 = vpop.f32.mrf.mxu0
      %v2034 = vadd.f32 0.0, %v2033
      %v2035 = vpop.f32.mrf.mxu0
      %2036 = vdwg.mxu0
      %2037 = vmatpush.bf16.msra.mxu0 0
      %2038 = vmatpush.bf16.msra.mxu0 0
      %2039 = vmatpush.bf16.msra.mxu0 0
      %2040 = vmatpush.bf16.msra.mxu0 0
      %2041 = vmatpush.bf16.msra.mxu0 0
      %2042 = vmatpush.bf16.msra.mxu0 0
      %2043 = vmatpush.bf16.msra.mxu0 0
      %2044 = vmatpush.bf16.msra.mxu0 %v1696
      %2045 = vmatmul.bf16.gmra.mxu0 %v1621
      %v2046 = vpop.f32.mrf.mxu0
      %v2047 = vadd.f32 0.0, %v2046
      %v2048 = vpop.f32.mrf.mxu0
      %2049 = vdwg.mxu0
      %2050 = vmatpush.bf16.msra.mxu0 0
      %2051 = vmatpush.bf16.msra.mxu0 0
      %2052 = vmatpush.bf16.msra.mxu0 0
      %2053 = vmatpush.bf16.msra.mxu0 0
      %2054 = vmatpush.bf16.msra.mxu0 0
      %2055 = vmatpush.bf16.msra.mxu0 0
      %2056 = vmatpush.bf16.msra.mxu0 0
      %2057 = vmatpush.bf16.msra.mxu0 %v1699
      %2058 = vmatmul.bf16.gmra.mxu0 %v1621
      %v2059 = vpop.f32.mrf.mxu0
      %v2060 = vadd.f32 0.0, %v2059
      %v2061 = vpop.f32.mrf.mxu0
      %2062 = vdwg.mxu0
      %2063 = vmatpush.bf16.msra.mxu0 0
      %2064 = vmatpush.bf16.msra.mxu0 0
      %2065 = vmatpush.bf16.msra.mxu0 0
      %2066 = vmatpush.bf16.msra.mxu0 0
      %2067 = vmatpush.bf16.msra.mxu0 0
      %2068 = vmatpush.bf16.msra.mxu0 0
      %2069 = vmatpush.bf16.msra.mxu0 0
      %2070 = vmatpush.bf16.msra.mxu0 %v1702
      %2071 = vmatmul.bf16.gmra.mxu0 %v1621
      %v2072 = vpop.f32.mrf.mxu0
      %v2073 = vadd.f32 0.0, %v2072
      %v2074 = vpop.f32.mrf.mxu0
      %2075 = vdwg.mxu0
      %2076 = vmatpush.bf16.msra.mxu0 0
      %2077 = vmatpush.bf16.msra.mxu0 0
      %2078 = vmatpush.bf16.msra.mxu0 0
      %2079 = vmatpush.bf16.msra.mxu0 0
      %2080 = vmatpush.bf16.msra.mxu0 0
      %2081 = vmatpush.bf16.msra.mxu0 0
      %2082 = vmatpush.bf16.msra.mxu0 0
      %2083 = vmatpush.bf16.msra.mxu0 %v1705
      %2084 = vmatmul.bf16.gmra.mxu0 %v1621
      %v2085 = vpop.f32.mrf.mxu0
      %v2086 = vadd.f32 0.0, %v2085
      %v2087 = vpop.f32.mrf.mxu0
      %2088 = vdwg.mxu0
      %2089 = vmatpush.bf16.msra.mxu0 0
      %2090 = vmatpush.bf16.msra.mxu0 0
      %2091 = vmatpush.bf16.msra.mxu0 0
      %2092 = vmatpush.bf16.msra.mxu0 0
      %2093 = vmatpush.bf16.msra.mxu0 0
      %2094 = vmatpush.bf16.msra.mxu0 0
      %2095 = vmatpush.bf16.msra.mxu0 0
      %2096 = vmatpush.bf16.msra.mxu0 %v1708
      %2097 = vmatmul.bf16.gmra.mxu0 %v1621
      %v2098 = vpop.f32.mrf.mxu0
      %v2099 = vadd.f32 0.0, %v2098
      %v2100 = vpop.f32.mrf.mxu0
      %2101 = vdwg.mxu0
      %2102 = vmatpush.bf16.msra.mxu0 0
      %2103 = vmatpush.bf16.msra.mxu0 0
      %2104 = vmatpush.bf16.msra.mxu0 0
      %2105 = vmatpush.bf16.msra.mxu0 0
      %2106 = vmatpush.bf16.msra.mxu0 0
      %2107 = vmatpush.bf16.msra.mxu0 0
      %2108 = vmatpush.bf16.msra.mxu0 0
      %2109 = vmatpush.bf16.msra.mxu0 %v1711
      %2110 = vmatmul.bf16.gmra.mxu0 %v1621
      %v2111 = vpop.f32.mrf.mxu0
      %v2112 = vadd.f32 0.0, %v2111
      %v2113 = vpop.f32.mrf.mxu0
      %2114 = vdwg.mxu0
      %2115 = vmatpush.bf16.msra.mxu0 0
      %2116 = vmatpush.bf16.msra.mxu0 0
      %2117 = vmatpush.bf16.msra.mxu0 0
      %2118 = vmatpush.bf16.msra.mxu0 0
      %2119 = vmatpush.bf16.msra.mxu0 0
      %2120 = vmatpush.bf16.msra.mxu0 0
      %2121 = vmatpush.bf16.msra.mxu0 0
      %2122 = vmatpush.bf16.msra.mxu0 %v1714
      %2123 = vmatmul.bf16.gmra.mxu0 %v1621
      %v2124 = vpop.f32.mrf.mxu0
      %v2125 = vadd.f32 0.0, %v2124
      %v2126 = vpop.f32.mrf.mxu0
      %2127 = vdwg.mxu0
      %2128 = vmatpush.bf16.msra.mxu0 0
      %2129 = vmatpush.bf16.msra.mxu0 0
      %2130 = vmatpush.bf16.msra.mxu0 0
      %2131 = vmatpush.bf16.msra.mxu0 0
      %2132 = vmatpush.bf16.msra.mxu0 0
      %2133 = vmatpush.bf16.msra.mxu0 0
      %2134 = vmatpush.bf16.msra.mxu0 0
      %2135 = vmatpush.bf16.msra.mxu0 %v1717
      %2136 = vmatmul.bf16.gmra.mxu0 %v1621
      %v2137 = vpop.f32.mrf.mxu0
      %v2138 = vadd.f32 0.0, %v2137
      %v2139 = vpop.f32.mrf.mxu0
      %2140 = vdwg.mxu0
      %2141 = vmatpush.bf16.msra.mxu0 0
      %2142 = vmatpush.bf16.msra.mxu0 0
      %2143 = vmatpush.bf16.msra.mxu0 0
      %2144 = vmatpush.bf16.msra.mxu0 0
      %2145 = vmatpush.bf16.msra.mxu0 0
      %2146 = vmatpush.bf16.msra.mxu0 0
      %2147 = vmatpush.bf16.msra.mxu0 0
      %2148 = vmatpush.bf16.msra.mxu0 %v1720
      %2149 = vmatmul.bf16.gmra.mxu0 %v1621
      %v2150 = vpop.f32.mrf.mxu0
      %v2151 = vadd.f32 0.0, %v2150
      %v2152 = vpop.f32.mrf.mxu0
      %2153 = vdwg.mxu0
      %2154 = vmatpush.bf16.msra.mxu0 0
      %2155 = vmatpush.bf16.msra.mxu0 0
      %2156 = vmatpush.bf16.msra.mxu0 0
      %2157 = vmatpush.bf16.msra.mxu0 0
      %2158 = vmatpush.bf16.msra.mxu0 0
      %2159 = vmatpush.bf16.msra.mxu0 0
      %2160 = vmatpush.bf16.msra.mxu0 0
      %2161 = vmatpush.bf16.msra.mxu0 %v1723
      %2162 = vmatmul.bf16.gmra.mxu0 %v1621
      %v2163 = vpop.f32.mrf.mxu0
      %v2164 = vadd.f32 0.0, %v2163
      %v2165 = vpop.f32.mrf.mxu0
      %2166 = vdwg.mxu0
      %v2167 = vadd.f32 %v1084, %v1735
      %v2168 = vadd.f32 %v1097, %v1748
      %v2169 = vadd.f32 %v1110, %v1761
      %v2170 = vadd.f32 %v1123, %v1774
      %v2171 = vadd.f32 %v1136, %v1787
      %v2172 = vadd.f32 %v1149, %v1800
      %v2173 = vadd.f32 %v1162, %v1813
      %v2174 = vadd.f32 %v1175, %v1826
      %v2175 = vadd.f32 %v1188, %v1839
      %v2176 = vadd.f32 %v1201, %v1852
      %v2177 = vadd.f32 %v1214, %v1865
      %v2178 = vadd.f32 %v1227, %v1878
      %v2179 = vadd.f32 %v1240, %v1891
      %v2180 = vadd.f32 %v1253, %v1904
      %v2181 = vadd.f32 %v1266, %v1917
      %v2182 = vadd.f32 %v1279, %v1930
      %v2183 = vadd.f32 %v1292, %v1943
      %v2184 = vadd.f32 %v1305, %v1956
      %v2185 = vadd.f32 %v1318, %v1969
      %v2186 = vadd.f32 %v1331, %v1982
      %v2187 = vadd.f32 %v1344, %v1995
      %v2188 = vadd.f32 %v1357, %v2008
      %v2189 = vadd.f32 %v1370, %v2021
      %v2190 = vadd.f32 %v1383, %v2034
      %v2191 = vadd.f32 %v1396, %v2047
      %v2192 = vadd.f32 %v1409, %v2060
      %v2193 = vadd.f32 %v1422, %v2073
      %v2194 = vadd.f32 %v1435, %v2086
      %v2195 = vadd.f32 %v1448, %v2099
      %v2196 = vadd.f32 %v1461, %v2112
      %v2197 = vadd.f32 %v1474, %v2125
      %v2198 = vadd.f32 %v1487, %v2138
      %v2199 = vadd.f32 %v1500, %v2151
      %v2200 = vadd.f32 %v1513, %v2164
      %s2201 = scalar_lea.vmem %s1, 12
      %v2202 = vld [vmem:[%s2201] sm:$0xf]
      %2203 = vrot.lane.b32.xlu0 %v284, 62
      %v2204 = vpop.permute.xlu0 %2203
      %2205 = vrot.lane.b32.xlu0 %v285, 62
      %v2206 = vpop.permute.xlu0 %2205
      %2207 = vrot.lane.b32.xlu0 %v286, 62
      %v2208 = vpop.permute.xlu0 %2207
      %2209 = vrot.lane.b32.xlu0 %v287, 62
      %v2210 = vpop.permute.xlu0 %2209
      %2211 = vrot.lane.b32.xlu0 %v288, 62
      %v2212 = vpop.permute.xlu0 %2211
      %2213 = vrot.lane.b32.xlu0 %v289, 62
      %v2214 = vpop.permute.xlu0 %2213
      %2215 = vrot.lane.b32.xlu0 %v290, 62
      %v2216 = vpop.permute.xlu0 %2215
      %2217 = vrot.lane.b32.xlu0 %v291, 62
      %v2218 = vpop.permute.xlu0 %2217
      %2219 = vrot.lane.b32.xlu0 %v292, 62
      %v2220 = vpop.permute.xlu0 %2219
      %2221 = vrot.lane.b32.xlu0 %v293, 62
      %v2222 = vpop.permute.xlu0 %2221
      %2223 = vrot.lane.b32.xlu0 %v294, 62
      %v2224 = vpop.permute.xlu0 %2223
      %2225 = vrot.lane.b32.xlu0 %v295, 62
      %v2226 = vpop.permute.xlu0 %2225
      %2227 = vrot.lane.b32.xlu0 %v296, 62
      %v2228 = vpop.permute.xlu0 %2227
      %2229 = vrot.lane.b32.xlu0 %v297, 62
      %v2230 = vpop.permute.xlu0 %2229
      %2231 = vrot.lane.b32.xlu0 %v298, 62
      %v2232 = vpop.permute.xlu0 %2231
      %2233 = vrot.lane.b32.xlu0 %v299, 62
      %v2234 = vpop.permute.xlu0 %2233
      %2235 = vrot.lane.b32.xlu0 %v300, 62
      %v2236 = vpop.permute.xlu0 %2235
      %2237 = vrot.lane.b32.xlu0 %v301, 62
      %v2238 = vpop.permute.xlu0 %2237
      %2239 = vrot.lane.b32.xlu0 %v302, 62
      %v2240 = vpop.permute.xlu0 %2239
      %2241 = vrot.lane.b32.xlu0 %v303, 62
      %v2242 = vpop.permute.xlu0 %2241
      %2243 = vrot.lane.b32.xlu0 %v304, 62
      %v2244 = vpop.permute.xlu0 %2243
      %2245 = vrot.lane.b32.xlu0 %v305, 62
      %v2246 = vpop.permute.xlu0 %2245
      %2247 = vrot.lane.b32.xlu0 %v306, 62
      %v2248 = vpop.permute.xlu0 %2247
      %2249 = vrot.lane.b32.xlu0 %v307, 62
      %v2250 = vpop.permute.xlu0 %2249
      %2251 = vrot.lane.b32.xlu0 %v308, 62
      %v2252 = vpop.permute.xlu0 %2251
      %2253 = vrot.lane.b32.xlu0 %v309, 62
      %v2254 = vpop.permute.xlu0 %2253
      %2255 = vrot.lane.b32.xlu0 %v310, 62
      %v2256 = vpop.permute.xlu0 %2255
      %2257 = vrot.lane.b32.xlu0 %v311, 62
      %v2258 = vpop.permute.xlu0 %2257
      %2259 = vrot.lane.b32.xlu0 %v312, 62
      %v2260 = vpop.permute.xlu0 %2259
      %2261 = vrot.lane.b32.xlu0 %v313, 62
      %v2262 = vpop.permute.xlu0 %2261
      %2263 = vrot.lane.b32.xlu0 %v314, 62
      %v2264 = vpop.permute.xlu0 %2263
      %2265 = vrot.lane.b32.xlu0 %v315, 62
      %v2266 = vpop.permute.xlu0 %2265
      %2267 = vrot.lane.b32.xlu0 %v316, 62
      %v2268 = vpop.permute.xlu0 %2267
      %2269 = vrot.lane.b32.xlu0 %v317, 62
      %v2270 = vpop.permute.xlu0 %2269
      %vm2271 = vcmask 506880
      %v2272 = vsel %vm2271, %v2204, %v2206
      %v2273 = vsel %vm2271, %v2206, %v2208
      %v2274 = vsel %vm2271, %v2208, %v2210
      %v2275 = vsel %vm2271, %v2210, %v2212
      %v2276 = vsel %vm2271, %v2212, %v2214
      %v2277 = vsel %vm2271, %v2214, %v2216
      %v2278 = vsel %vm2271, %v2216, %v2218
      %v2279 = vsel %vm2271, %v2218, %v2220
      %v2280 = vsel %vm2271, %v2220, %v2222
      %v2281 = vsel %vm2271, %v2222, %v2224
      %v2282 = vsel %vm2271, %v2224, %v2226
      %v2283 = vsel %vm2271, %v2226, %v2228
      %v2284 = vsel %vm2271, %v2228, %v2230
      %v2285 = vsel %vm2271, %v2230, %v2232
      %v2286 = vsel %vm2271, %v2232, %v2234
      %v2287 = vsel %vm2271, %v2234, %v2236
      %v2288 = vsel %vm2271, %v2236, %v2238
      %v2289 = vsel %vm2271, %v2238, %v2240
      %v2290 = vsel %vm2271, %v2240, %v2242
      %v2291 = vsel %vm2271, %v2242, %v2244
      %v2292 = vsel %vm2271, %v2244, %v2246
      %v2293 = vsel %vm2271, %v2246, %v2248
      %v2294 = vsel %vm2271, %v2248, %v2250
      %v2295 = vsel %vm2271, %v2250, %v2252
      %v2296 = vsel %vm2271, %v2252, %v2254
      %v2297 = vsel %vm2271, %v2254, %v2256
      %v2298 = vsel %vm2271, %v2256, %v2258
      %v2299 = vsel %vm2271, %v2258, %v2260
      %v2300 = vsel %vm2271, %v2260, %v2262
      %v2301 = vsel %vm2271, %v2262, %v2264
      %v2302 = vsel %vm2271, %v2264, %v2266
      %v2303 = vsel %vm2271, %v2266, %v2268
      %v2304 = vsel %vm2271, %v2268, %v2270
      %v2306 = vsel %vm420, %v2202, 0
      %v2309 = vsel %vm424, %v2272, 0
      %v2312 = vsel %vm424, %v2273, 0
      %v2315 = vsel %vm424, %v2274, 0
      %v2318 = vsel %vm424, %v2275, 0
      %v2321 = vsel %vm424, %v2276, 0
      %v2324 = vsel %vm424, %v2277, 0
      %v2327 = vsel %vm424, %v2278, 0
      %v2330 = vsel %vm424, %v2279, 0
      %v2333 = vsel %vm424, %v2280, 0
      %v2336 = vsel %vm424, %v2281, 0
      %v2339 = vsel %vm424, %v2282, 0
      %v2342 = vsel %vm424, %v2283, 0
      %v2345 = vsel %vm424, %v2284, 0
      %v2348 = vsel %vm424, %v2285, 0
      %v2351 = vsel %vm424, %v2286, 0
      %v2354 = vsel %vm424, %v2287, 0
      %v2357 = vsel %vm424, %v2288, 0
      %v2360 = vsel %vm424, %v2289, 0
      %v2363 = vsel %vm424, %v2290, 0
      %v2366 = vsel %vm424, %v2291, 0
      %v2369 = vsel %vm424, %v2292, 0
      %v2372 = vsel %vm424, %v2293, 0
      %v2375 = vsel %vm424, %v2294, 0
      %v2378 = vsel %vm424, %v2295, 0
      %v2381 = vsel %vm424, %v2296, 0
      %v2384 = vsel %vm424, %v2297, 0
      %v2387 = vsel %vm424, %v2298, 0
      %v2390 = vsel %vm424, %v2299, 0
      %v2393 = vsel %vm424, %v2300, 0
      %v2396 = vsel %vm424, %v2301, 0
      %v2399 = vsel %vm424, %v2302, 0
      %v2402 = vsel %vm424, %v2303, 0
      %v2405 = vsel %vm424, %v2304, 0
      %v2408 = vsel %vm424, %v2270, 0
      %2410 = vmatpush.bf16.msra.mxu0 0
      %2411 = vmatpush.bf16.msra.mxu0 0
      %2412 = vmatpush.bf16.msra.mxu0 0
      %2413 = vmatpush.bf16.msra.mxu0 0
      %2414 = vmatpush.bf16.msra.mxu0 0
      %2415 = vmatpush.bf16.msra.mxu0 0
      %2416 = vmatpush.bf16.msra.mxu0 0
      %2417 = vmatpush.bf16.msra.mxu0 %v2309
      %2418 = vmatmul.bf16.gmra.mxu0 %v2306
      %v2419 = vpop.f32.mrf.mxu0
      %v2420 = vadd.f32 0.0, %v2419
      %v2421 = vpop.f32.mrf.mxu0
      %2422 = vdwg.mxu0
      %2423 = vmatpush.bf16.msra.mxu0 0
      %2424 = vmatpush.bf16.msra.mxu0 0
      %2425 = vmatpush.bf16.msra.mxu0 0
      %2426 = vmatpush.bf16.msra.mxu0 0
      %2427 = vmatpush.bf16.msra.mxu0 0
      %2428 = vmatpush.bf16.msra.mxu0 0
      %2429 = vmatpush.bf16.msra.mxu0 0
      %2430 = vmatpush.bf16.msra.mxu0 %v2312
      %2431 = vmatmul.bf16.gmra.mxu0 %v2306
      %v2432 = vpop.f32.mrf.mxu0
      %v2433 = vadd.f32 0.0, %v2432
      %v2434 = vpop.f32.mrf.mxu0
      %2435 = vdwg.mxu0
      %2436 = vmatpush.bf16.msra.mxu0 0
      %2437 = vmatpush.bf16.msra.mxu0 0
      %2438 = vmatpush.bf16.msra.mxu0 0
      %2439 = vmatpush.bf16.msra.mxu0 0
      %2440 = vmatpush.bf16.msra.mxu0 0
      %2441 = vmatpush.bf16.msra.mxu0 0
      %2442 = vmatpush.bf16.msra.mxu0 0
      %2443 = vmatpush.bf16.msra.mxu0 %v2315
      %2444 = vmatmul.bf16.gmra.mxu0 %v2306
      %v2445 = vpop.f32.mrf.mxu0
      %v2446 = vadd.f32 0.0, %v2445
      %v2447 = vpop.f32.mrf.mxu0
      %2448 = vdwg.mxu0
      %2449 = vmatpush.bf16.msra.mxu0 0
      %2450 = vmatpush.bf16.msra.mxu0 0
      %2451 = vmatpush.bf16.msra.mxu0 0
      %2452 = vmatpush.bf16.msra.mxu0 0
      %2453 = vmatpush.bf16.msra.mxu0 0
      %2454 = vmatpush.bf16.msra.mxu0 0
      %2455 = vmatpush.bf16.msra.mxu0 0
      %2456 = vmatpush.bf16.msra.mxu0 %v2318
      %2457 = vmatmul.bf16.gmra.mxu0 %v2306
      %v2458 = vpop.f32.mrf.mxu0
      %v2459 = vadd.f32 0.0, %v2458
      %v2460 = vpop.f32.mrf.mxu0
      %2461 = vdwg.mxu0
      %2462 = vmatpush.bf16.msra.mxu0 0
      %2463 = vmatpush.bf16.msra.mxu0 0
      %2464 = vmatpush.bf16.msra.mxu0 0
      %2465 = vmatpush.bf16.msra.mxu0 0
      %2466 = vmatpush.bf16.msra.mxu0 0
      %2467 = vmatpush.bf16.msra.mxu0 0
      %2468 = vmatpush.bf16.msra.mxu0 0
      %2469 = vmatpush.bf16.msra.mxu0 %v2321
      %2470 = vmatmul.bf16.gmra.mxu0 %v2306
      %v2471 = vpop.f32.mrf.mxu0
      %v2472 = vadd.f32 0.0, %v2471
      %v2473 = vpop.f32.mrf.mxu0
      %2474 = vdwg.mxu0
      %2475 = vmatpush.bf16.msra.mxu0 0
      %2476 = vmatpush.bf16.msra.mxu0 0
      %2477 = vmatpush.bf16.msra.mxu0 0
      %2478 = vmatpush.bf16.msra.mxu0 0
      %2479 = vmatpush.bf16.msra.mxu0 0
      %2480 = vmatpush.bf16.msra.mxu0 0
      %2481 = vmatpush.bf16.msra.mxu0 0
      %2482 = vmatpush.bf16.msra.mxu0 %v2324
      %2483 = vmatmul.bf16.gmra.mxu0 %v2306
      %v2484 = vpop.f32.mrf.mxu0
      %v2485 = vadd.f32 0.0, %v2484
      %v2486 = vpop.f32.mrf.mxu0
      %2487 = vdwg.mxu0
      %2488 = vmatpush.bf16.msra.mxu0 0
      %2489 = vmatpush.bf16.msra.mxu0 0
      %2490 = vmatpush.bf16.msra.mxu0 0
      %2491 = vmatpush.bf16.msra.mxu0 0
      %2492 = vmatpush.bf16.msra.mxu0 0
      %2493 = vmatpush.bf16.msra.mxu0 0
      %2494 = vmatpush.bf16.msra.mxu0 0
      %2495 = vmatpush.bf16.msra.mxu0 %v2327
      %2496 = vmatmul.bf16.gmra.mxu0 %v2306
      %v2497 = vpop.f32.mrf.mxu0
      %v2498 = vadd.f32 0.0, %v2497
      %v2499 = vpop.f32.mrf.mxu0
      %2500 = vdwg.mxu0
      %2501 = vmatpush.bf16.msra.mxu0 0
      %2502 = vmatpush.bf16.msra.mxu0 0
      %2503 = vmatpush.bf16.msra.mxu0 0
      %2504 = vmatpush.bf16.msra.mxu0 0
      %2505 = vmatpush.bf16.msra.mxu0 0
      %2506 = vmatpush.bf16.msra.mxu0 0
      %2507 = vmatpush.bf16.msra.mxu0 0
      %2508 = vmatpush.bf16.msra.mxu0 %v2330
      %2509 = vmatmul.bf16.gmra.mxu0 %v2306
      %v2510 = vpop.f32.mrf.mxu0
      %v2511 = vadd.f32 0.0, %v2510
      %v2512 = vpop.f32.mrf.mxu0
      %2513 = vdwg.mxu0
      %2514 = vmatpush.bf16.msra.mxu0 0
      %2515 = vmatpush.bf16.msra.mxu0 0
      %2516 = vmatpush.bf16.msra.mxu0 0
      %2517 = vmatpush.bf16.msra.mxu0 0
      %2518 = vmatpush.bf16.msra.mxu0 0
      %2519 = vmatpush.bf16.msra.mxu0 0
      %2520 = vmatpush.bf16.msra.mxu0 0
      %2521 = vmatpush.bf16.msra.mxu0 %v2333
      %2522 = vmatmul.bf16.gmra.mxu0 %v2306
      %v2523 = vpop.f32.mrf.mxu0
      %v2524 = vadd.f32 0.0, %v2523
      %v2525 = vpop.f32.mrf.mxu0
      %2526 = vdwg.mxu0
      %2527 = vmatpush.bf16.msra.mxu0 0
      %2528 = vmatpush.bf16.msra.mxu0 0
      %2529 = vmatpush.bf16.msra.mxu0 0
      %2530 = vmatpush.bf16.msra.mxu0 0
      %2531 = vmatpush.bf16.msra.mxu0 0
      %2532 = vmatpush.bf16.msra.mxu0 0
      %2533 = vmatpush.bf16.msra.mxu0 0
      %2534 = vmatpush.bf16.msra.mxu0 %v2336
      %2535 = vmatmul.bf16.gmra.mxu0 %v2306
      %v2536 = vpop.f32.mrf.mxu0
      %v2537 = vadd.f32 0.0, %v2536
      %v2538 = vpop.f32.mrf.mxu0
      %2539 = vdwg.mxu0
      %2540 = vmatpush.bf16.msra.mxu0 0
      %2541 = vmatpush.bf16.msra.mxu0 0
      %2542 = vmatpush.bf16.msra.mxu0 0
      %2543 = vmatpush.bf16.msra.mxu0 0
      %2544 = vmatpush.bf16.msra.mxu0 0
      %2545 = vmatpush.bf16.msra.mxu0 0
      %2546 = vmatpush.bf16.msra.mxu0 0
      %2547 = vmatpush.bf16.msra.mxu0 %v2339
      %2548 = vmatmul.bf16.gmra.mxu0 %v2306
      %v2549 = vpop.f32.mrf.mxu0
      %v2550 = vadd.f32 0.0, %v2549
      %v2551 = vpop.f32.mrf.mxu0
      %2552 = vdwg.mxu0
      %2553 = vmatpush.bf16.msra.mxu0 0
      %2554 = vmatpush.bf16.msra.mxu0 0
      %2555 = vmatpush.bf16.msra.mxu0 0
      %2556 = vmatpush.bf16.msra.mxu0 0
      %2557 = vmatpush.bf16.msra.mxu0 0
      %2558 = vmatpush.bf16.msra.mxu0 0
      %2559 = vmatpush.bf16.msra.mxu0 0
      %2560 = vmatpush.bf16.msra.mxu0 %v2342
      %2561 = vmatmul.bf16.gmra.mxu0 %v2306
      %v2562 = vpop.f32.mrf.mxu0
      %v2563 = vadd.f32 0.0, %v2562
      %v2564 = vpop.f32.mrf.mxu0
      %2565 = vdwg.mxu0
      %2566 = vmatpush.bf16.msra.mxu0 0
      %2567 = vmatpush.bf16.msra.mxu0 0
      %2568 = vmatpush.bf16.msra.mxu0 0
      %2569 = vmatpush.bf16.msra.mxu0 0
      %2570 = vmatpush.bf16.msra.mxu0 0
      %2571 = vmatpush.bf16.msra.mxu0 0
      %2572 = vmatpush.bf16.msra.mxu0 0
      %2573 = vmatpush.bf16.msra.mxu0 %v2345
      %2574 = vmatmul.bf16.gmra.mxu0 %v2306
      %v2575 = vpop.f32.mrf.mxu0
      %v2576 = vadd.f32 0.0, %v2575
      %v2577 = vpop.f32.mrf.mxu0
      %2578 = vdwg.mxu0
      %2579 = vmatpush.bf16.msra.mxu0 0
      %2580 = vmatpush.bf16.msra.mxu0 0
      %2581 = vmatpush.bf16.msra.mxu0 0
      %2582 = vmatpush.bf16.msra.mxu0 0
      %2583 = vmatpush.bf16.msra.mxu0 0
      %2584 = vmatpush.bf16.msra.mxu0 0
      %2585 = vmatpush.bf16.msra.mxu0 0
      %2586 = vmatpush.bf16.msra.mxu0 %v2348
      %2587 = vmatmul.bf16.gmra.mxu0 %v2306
      %v2588 = vpop.f32.mrf.mxu0
      %v2589 = vadd.f32 0.0, %v2588
      %v2590 = vpop.f32.mrf.mxu0
      %2591 = vdwg.mxu0
      %2592 = vmatpush.bf16.msra.mxu0 0
      %2593 = vmatpush.bf16.msra.mxu0 0
      %2594 = vmatpush.bf16.msra.mxu0 0
      %2595 = vmatpush.bf16.msra.mxu0 0
      %2596 = vmatpush.bf16.msra.mxu0 0
      %2597 = vmatpush.bf16.msra.mxu0 0
      %2598 = vmatpush.bf16.msra.mxu0 0
      %2599 = vmatpush.bf16.msra.mxu0 %v2351
      %2600 = vmatmul.bf16.gmra.mxu0 %v2306
      %v2601 = vpop.f32.mrf.mxu0
      %v2602 = vadd.f32 0.0, %v2601
      %v2603 = vpop.f32.mrf.mxu0
      %2604 = vdwg.mxu0
      %2605 = vmatpush.bf16.msra.mxu0 0
      %2606 = vmatpush.bf16.msra.mxu0 0
      %2607 = vmatpush.bf16.msra.mxu0 0
      %2608 = vmatpush.bf16.msra.mxu0 0
      %2609 = vmatpush.bf16.msra.mxu0 0
      %2610 = vmatpush.bf16.msra.mxu0 0
      %2611 = vmatpush.bf16.msra.mxu0 0
      %2612 = vmatpush.bf16.msra.mxu0 %v2354
      %2613 = vmatmul.bf16.gmra.mxu0 %v2306
      %v2614 = vpop.f32.mrf.mxu0
      %v2615 = vadd.f32 0.0, %v2614
      %v2616 = vpop.f32.mrf.mxu0
      %2617 = vdwg.mxu0
      %2618 = vmatpush.bf16.msra.mxu0 0
      %2619 = vmatpush.bf16.msra.mxu0 0
      %2620 = vmatpush.bf16.msra.mxu0 0
      %2621 = vmatpush.bf16.msra.mxu0 0
      %2622 = vmatpush.bf16.msra.mxu0 0
      %2623 = vmatpush.bf16.msra.mxu0 0
      %2624 = vmatpush.bf16.msra.mxu0 0
      %2625 = vmatpush.bf16.msra.mxu0 %v2357
      %2626 = vmatmul.bf16.gmra.mxu0 %v2306
      %v2627 = vpop.f32.mrf.mxu0
      %v2628 = vadd.f32 0.0, %v2627
      %v2629 = vpop.f32.mrf.mxu0
      %2630 = vdwg.mxu0
      %2631 = vmatpush.bf16.msra.mxu0 0
      %2632 = vmatpush.bf16.msra.mxu0 0
      %2633 = vmatpush.bf16.msra.mxu0 0
      %2634 = vmatpush.bf16.msra.mxu0 0
      %2635 = vmatpush.bf16.msra.mxu0 0
      %2636 = vmatpush.bf16.msra.mxu0 0
      %2637 = vmatpush.bf16.msra.mxu0 0
      %2638 = vmatpush.bf16.msra.mxu0 %v2360
      %2639 = vmatmul.bf16.gmra.mxu0 %v2306
      %v2640 = vpop.f32.mrf.mxu0
      %v2641 = vadd.f32 0.0, %v2640
      %v2642 = vpop.f32.mrf.mxu0
      %2643 = vdwg.mxu0
      %2644 = vmatpush.bf16.msra.mxu0 0
      %2645 = vmatpush.bf16.msra.mxu0 0
      %2646 = vmatpush.bf16.msra.mxu0 0
      %2647 = vmatpush.bf16.msra.mxu0 0
      %2648 = vmatpush.bf16.msra.mxu0 0
      %2649 = vmatpush.bf16.msra.mxu0 0
      %2650 = vmatpush.bf16.msra.mxu0 0
      %2651 = vmatpush.bf16.msra.mxu0 %v2363
      %2652 = vmatmul.bf16.gmra.mxu0 %v2306
      %v2653 = vpop.f32.mrf.mxu0
      %v2654 = vadd.f32 0.0, %v2653
      %v2655 = vpop.f32.mrf.mxu0
      %2656 = vdwg.mxu0
      %2657 = vmatpush.bf16.msra.mxu0 0
      %2658 = vmatpush.bf16.msra.mxu0 0
      %2659 = vmatpush.bf16.msra.mxu0 0
      %2660 = vmatpush.bf16.msra.mxu0 0
      %2661 = vmatpush.bf16.msra.mxu0 0
      %2662 = vmatpush.bf16.msra.mxu0 0
      %2663 = vmatpush.bf16.msra.mxu0 0
      %2664 = vmatpush.bf16.msra.mxu0 %v2366
      %2665 = vmatmul.bf16.gmra.mxu0 %v2306
      %v2666 = vpop.f32.mrf.mxu0
      %v2667 = vadd.f32 0.0, %v2666
      %v2668 = vpop.f32.mrf.mxu0
      %2669 = vdwg.mxu0
      %2670 = vmatpush.bf16.msra.mxu0 0
      %2671 = vmatpush.bf16.msra.mxu0 0
      %2672 = vmatpush.bf16.msra.mxu0 0
      %2673 = vmatpush.bf16.msra.mxu0 0
      %2674 = vmatpush.bf16.msra.mxu0 0
      %2675 = vmatpush.bf16.msra.mxu0 0
      %2676 = vmatpush.bf16.msra.mxu0 0
      %2677 = vmatpush.bf16.msra.mxu0 %v2369
      %2678 = vmatmul.bf16.gmra.mxu0 %v2306
      %v2679 = vpop.f32.mrf.mxu0
      %v2680 = vadd.f32 0.0, %v2679
      %v2681 = vpop.f32.mrf.mxu0
      %2682 = vdwg.mxu0
      %2683 = vmatpush.bf16.msra.mxu0 0
      %2684 = vmatpush.bf16.msra.mxu0 0
      %2685 = vmatpush.bf16.msra.mxu0 0
      %2686 = vmatpush.bf16.msra.mxu0 0
      %2687 = vmatpush.bf16.msra.mxu0 0
      %2688 = vmatpush.bf16.msra.mxu0 0
      %2689 = vmatpush.bf16.msra.mxu0 0
      %2690 = vmatpush.bf16.msra.mxu0 %v2372
      %2691 = vmatmul.bf16.gmra.mxu0 %v2306
      %v2692 = vpop.f32.mrf.mxu0
      %v2693 = vadd.f32 0.0, %v2692
      %v2694 = vpop.f32.mrf.mxu0
      %2695 = vdwg.mxu0
      %2696 = vmatpush.bf16.msra.mxu0 0
      %2697 = vmatpush.bf16.msra.mxu0 0
      %2698 = vmatpush.bf16.msra.mxu0 0
      %2699 = vmatpush.bf16.msra.mxu0 0
      %2700 = vmatpush.bf16.msra.mxu0 0
      %2701 = vmatpush.bf16.msra.mxu0 0
      %2702 = vmatpush.bf16.msra.mxu0 0
      %2703 = vmatpush.bf16.msra.mxu0 %v2375
      %2704 = vmatmul.bf16.gmra.mxu0 %v2306
      %v2705 = vpop.f32.mrf.mxu0
      %v2706 = vadd.f32 0.0, %v2705
      %v2707 = vpop.f32.mrf.mxu0
      %2708 = vdwg.mxu0
      %2709 = vmatpush.bf16.msra.mxu0 0
      %2710 = vmatpush.bf16.msra.mxu0 0
      %2711 = vmatpush.bf16.msra.mxu0 0
      %2712 = vmatpush.bf16.msra.mxu0 0
      %2713 = vmatpush.bf16.msra.mxu0 0
      %2714 = vmatpush.bf16.msra.mxu0 0
      %2715 = vmatpush.bf16.msra.mxu0 0
      %2716 = vmatpush.bf16.msra.mxu0 %v2378
      %2717 = vmatmul.bf16.gmra.mxu0 %v2306
      %v2718 = vpop.f32.mrf.mxu0
      %v2719 = vadd.f32 0.0, %v2718
      %v2720 = vpop.f32.mrf.mxu0
      %2721 = vdwg.mxu0
      %2722 = vmatpush.bf16.msra.mxu0 0
      %2723 = vmatpush.bf16.msra.mxu0 0
      %2724 = vmatpush.bf16.msra.mxu0 0
      %2725 = vmatpush.bf16.msra.mxu0 0
      %2726 = vmatpush.bf16.msra.mxu0 0
      %2727 = vmatpush.bf16.msra.mxu0 0
      %2728 = vmatpush.bf16.msra.mxu0 0
      %2729 = vmatpush.bf16.msra.mxu0 %v2381
      %2730 = vmatmul.bf16.gmra.mxu0 %v2306
      %v2731 = vpop.f32.mrf.mxu0
      %v2732 = vadd.f32 0.0, %v2731
      %v2733 = vpop.f32.mrf.mxu0
      %2734 = vdwg.mxu0
      %2735 = vmatpush.bf16.msra.mxu0 0
      %2736 = vmatpush.bf16.msra.mxu0 0
      %2737 = vmatpush.bf16.msra.mxu0 0
      %2738 = vmatpush.bf16.msra.mxu0 0
      %2739 = vmatpush.bf16.msra.mxu0 0
      %2740 = vmatpush.bf16.msra.mxu0 0
      %2741 = vmatpush.bf16.msra.mxu0 0
      %2742 = vmatpush.bf16.msra.mxu0 %v2384
      %2743 = vmatmul.bf16.gmra.mxu0 %v2306
      %v2744 = vpop.f32.mrf.mxu0
      %v2745 = vadd.f32 0.0, %v2744
      %v2746 = vpop.f32.mrf.mxu0
      %2747 = vdwg.mxu0
      %2748 = vmatpush.bf16.msra.mxu0 0
      %2749 = vmatpush.bf16.msra.mxu0 0
      %2750 = vmatpush.bf16.msra.mxu0 0
      %2751 = vmatpush.bf16.msra.mxu0 0
      %2752 = vmatpush.bf16.msra.mxu0 0
      %2753 = vmatpush.bf16.msra.mxu0 0
      %2754 = vmatpush.bf16.msra.mxu0 0
      %2755 = vmatpush.bf16.msra.mxu0 %v2387
      %2756 = vmatmul.bf16.gmra.mxu0 %v2306
      %v2757 = vpop.f32.mrf.mxu0
      %v2758 = vadd.f32 0.0, %v2757
      %v2759 = vpop.f32.mrf.mxu0
      %2760 = vdwg.mxu0
      %2761 = vmatpush.bf16.msra.mxu0 0
      %2762 = vmatpush.bf16.msra.mxu0 0
      %2763 = vmatpush.bf16.msra.mxu0 0
      %2764 = vmatpush.bf16.msra.mxu0 0
      %2765 = vmatpush.bf16.msra.mxu0 0
      %2766 = vmatpush.bf16.msra.mxu0 0
      %2767 = vmatpush.bf16.msra.mxu0 0
      %2768 = vmatpush.bf16.msra.mxu0 %v2390
      %2769 = vmatmul.bf16.gmra.mxu0 %v2306
      %v2770 = vpop.f32.mrf.mxu0
      %v2771 = vadd.f32 0.0, %v2770
      %v2772 = vpop.f32.mrf.mxu0
      %2773 = vdwg.mxu0
      %2774 = vmatpush.bf16.msra.mxu0 0
      %2775 = vmatpush.bf16.msra.mxu0 0
      %2776 = vmatpush.bf16.msra.mxu0 0
      %2777 = vmatpush.bf16.msra.mxu0 0
      %2778 = vmatpush.bf16.msra.mxu0 0
      %2779 = vmatpush.bf16.msra.mxu0 0
      %2780 = vmatpush.bf16.msra.mxu0 0
      %2781 = vmatpush.bf16.msra.mxu0 %v2393
      %2782 = vmatmul.bf16.gmra.mxu0 %v2306
      %v2783 = vpop.f32.mrf.mxu0
      %v2784 = vadd.f32 0.0, %v2783
      %v2785 = vpop.f32.mrf.mxu0
      %2786 = vdwg.mxu0
      %2787 = vmatpush.bf16.msra.mxu0 0
      %2788 = vmatpush.bf16.msra.mxu0 0
      %2789 = vmatpush.bf16.msra.mxu0 0
      %2790 = vmatpush.bf16.msra.mxu0 0
      %2791 = vmatpush.bf16.msra.mxu0 0
      %2792 = vmatpush.bf16.msra.mxu0 0
      %2793 = vmatpush.bf16.msra.mxu0 0
      %2794 = vmatpush.bf16.msra.mxu0 %v2396
      %2795 = vmatmul.bf16.gmra.mxu0 %v2306
      %v2796 = vpop.f32.mrf.mxu0
      %v2797 = vadd.f32 0.0, %v2796
      %v2798 = vpop.f32.mrf.mxu0
      %2799 = vdwg.mxu0
      %2800 = vmatpush.bf16.msra.mxu0 0
      %2801 = vmatpush.bf16.msra.mxu0 0
      %2802 = vmatpush.bf16.msra.mxu0 0
      %2803 = vmatpush.bf16.msra.mxu0 0
      %2804 = vmatpush.bf16.msra.mxu0 0
      %2805 = vmatpush.bf16.msra.mxu0 0
      %2806 = vmatpush.bf16.msra.mxu0 0
      %2807 = vmatpush.bf16.msra.mxu0 %v2399
      %2808 = vmatmul.bf16.gmra.mxu0 %v2306
      %v2809 = vpop.f32.mrf.mxu0
      %v2810 = vadd.f32 0.0, %v2809
      %v2811 = vpop.f32.mrf.mxu0
      %2812 = vdwg.mxu0
      %2813 = vmatpush.bf16.msra.mxu0 0
      %2814 = vmatpush.bf16.msra.mxu0 0
      %2815 = vmatpush.bf16.msra.mxu0 0
      %2816 = vmatpush.bf16.msra.mxu0 0
      %2817 = vmatpush.bf16.msra.mxu0 0
      %2818 = vmatpush.bf16.msra.mxu0 0
      %2819 = vmatpush.bf16.msra.mxu0 0
      %2820 = vmatpush.bf16.msra.mxu0 %v2402
      %2821 = vmatmul.bf16.gmra.mxu0 %v2306
      %v2822 = vpop.f32.mrf.mxu0
      %v2823 = vadd.f32 0.0, %v2822
      %v2824 = vpop.f32.mrf.mxu0
      %2825 = vdwg.mxu0
      %2826 = vmatpush.bf16.msra.mxu0 0
      %2827 = vmatpush.bf16.msra.mxu0 0
      %2828 = vmatpush.bf16.msra.mxu0 0
      %2829 = vmatpush.bf16.msra.mxu0 0
      %2830 = vmatpush.bf16.msra.mxu0 0
      %2831 = vmatpush.bf16.msra.mxu0 0
      %2832 = vmatpush.bf16.msra.mxu0 0
      %2833 = vmatpush.bf16.msra.mxu0 %v2405
      %2834 = vmatmul.bf16.gmra.mxu0 %v2306
      %v2835 = vpop.f32.mrf.mxu0
      %v2836 = vadd.f32 0.0, %v2835
      %v2837 = vpop.f32.mrf.mxu0
      %2838 = vdwg.mxu0
      %2839 = vmatpush.bf16.msra.mxu0 0
      %2840 = vmatpush.bf16.msra.mxu0 0
      %2841 = vmatpush.bf16.msra.mxu0 0
      %2842 = vmatpush.bf16.msra.mxu0 0
      %2843 = vmatpush.bf16.msra.mxu0 0
      %2844 = vmatpush.bf16.msra.mxu0 0
      %2845 = vmatpush.bf16.msra.mxu0 0
      %2846 = vmatpush.bf16.msra.mxu0 %v2408
      %2847 = vmatmul.bf16.gmra.mxu0 %v2306
      %v2848 = vpop.f32.mrf.mxu0
      %v2849 = vadd.f32 0.0, %v2848
      %v2850 = vpop.f32.mrf.mxu0
      %2851 = vdwg.mxu0
      %v2852 = vadd.f32 %v2167, %v2420
      %v2853 = vadd.f32 %v2168, %v2433
      %v2854 = vadd.f32 %v2169, %v2446
      %v2855 = vadd.f32 %v2170, %v2459
      %v2856 = vadd.f32 %v2171, %v2472
      %v2857 = vadd.f32 %v2172, %v2485
      %v2858 = vadd.f32 %v2173, %v2498
      %v2859 = vadd.f32 %v2174, %v2511
      %v2860 = vadd.f32 %v2175, %v2524
      %v2861 = vadd.f32 %v2176, %v2537
      %v2862 = vadd.f32 %v2177, %v2550
      %v2863 = vadd.f32 %v2178, %v2563
      %v2864 = vadd.f32 %v2179, %v2576
      %v2865 = vadd.f32 %v2180, %v2589
      %v2866 = vadd.f32 %v2181, %v2602
      %v2867 = vadd.f32 %v2182, %v2615
      %v2868 = vadd.f32 %v2183, %v2628
      %v2869 = vadd.f32 %v2184, %v2641
      %v2870 = vadd.f32 %v2185, %v2654
      %v2871 = vadd.f32 %v2186, %v2667
      %v2872 = vadd.f32 %v2187, %v2680
      %v2873 = vadd.f32 %v2188, %v2693
      %v2874 = vadd.f32 %v2189, %v2706
      %v2875 = vadd.f32 %v2190, %v2719
      %v2876 = vadd.f32 %v2191, %v2732
      %v2877 = vadd.f32 %v2192, %v2745
      %v2878 = vadd.f32 %v2193, %v2758
      %v2879 = vadd.f32 %v2194, %v2771
      %v2880 = vadd.f32 %v2195, %v2784
      %v2881 = vadd.f32 %v2196, %v2797
      %v2882 = vadd.f32 %v2197, %v2810
      %v2883 = vadd.f32 %v2198, %v2823
      %v2884 = vadd.f32 %v2199, %v2836
      %v2885 = vadd.f32 %v2200, %v2849
      %v2886 = vmul.f32 %v2852, 0.2
      %v2887 = vmul.f32 %v2853, 0.2
      %v2888 = vmul.f32 %v2854, 0.2
      %v2889 = vmul.f32 %v2855, 0.2
      %v2890 = vmul.f32 %v2856, 0.2
      %v2891 = vmul.f32 %v2857, 0.2
      %v2892 = vmul.f32 %v2858, 0.2
      %v2893 = vmul.f32 %v2859, 0.2
      %v2894 = vmul.f32 %v2860, 0.2
      %v2895 = vmul.f32 %v2861, 0.2
      %v2896 = vmul.f32 %v2862, 0.2
      %v2897 = vmul.f32 %v2863, 0.2
      %v2898 = vmul.f32 %v2864, 0.2
      %v2899 = vmul.f32 %v2865, 0.2
      %v2900 = vmul.f32 %v2866, 0.2
      %v2901 = vmul.f32 %v2867, 0.2
      %v2902 = vmul.f32 %v2868, 0.2
      %v2903 = vmul.f32 %v2869, 0.2
      %v2904 = vmul.f32 %v2870, 0.2
      %v2905 = vmul.f32 %v2871, 0.2
      %v2906 = vmul.f32 %v2872, 0.2
      %v2907 = vmul.f32 %v2873, 0.2
      %v2908 = vmul.f32 %v2874, 0.2
      %v2909 = vmul.f32 %v2875, 0.2
      %v2910 = vmul.f32 %v2876, 0.2
      %v2911 = vmul.f32 %v2877, 0.2
      %v2912 = vmul.f32 %v2878, 0.2
      %v2913 = vmul.f32 %v2879, 0.2
      %v2914 = vmul.f32 %v2880, 0.2
      %v2915 = vmul.f32 %v2881, 0.2
      %v2916 = vmul.f32 %v2882, 0.2
      %v2917 = vmul.f32 %v2883, 0.2
      %v2918 = vmul.f32 %v2884, 0.2
      %v2919 = vmul.f32 %v2885, 0.2
      %v2920 = vmax.f32 %v2852, %v2886
      %v2921 = vmax.f32 %v2853, %v2887
      %v2922 = vmax.f32 %v2854, %v2888
      %v2923 = vmax.f32 %v2855, %v2889
      %v2924 = vmax.f32 %v2856, %v2890
      %v2925 = vmax.f32 %v2857, %v2891
      %v2926 = vmax.f32 %v2858, %v2892
      %v2927 = vmax.f32 %v2859, %v2893
      %v2928 = vmax.f32 %v2860, %v2894
      %v2929 = vmax.f32 %v2861, %v2895
      %v2930 = vmax.f32 %v2862, %v2896
      %v2931 = vmax.f32 %v2863, %v2897
      %v2932 = vmax.f32 %v2864, %v2898
      %v2933 = vmax.f32 %v2865, %v2899
      %v2934 = vmax.f32 %v2866, %v2900
      %v2935 = vmax.f32 %v2867, %v2901
      %v2936 = vmax.f32 %v2868, %v2902
      %v2937 = vmax.f32 %v2869, %v2903
      %v2938 = vmax.f32 %v2870, %v2904
      %v2939 = vmax.f32 %v2871, %v2905
      %v2940 = vmax.f32 %v2872, %v2906
      %v2941 = vmax.f32 %v2873, %v2907
      %v2942 = vmax.f32 %v2874, %v2908
      %v2943 = vmax.f32 %v2875, %v2909
      %v2944 = vmax.f32 %v2876, %v2910
      %v2945 = vmax.f32 %v2877, %v2911
      %v2946 = vmax.f32 %v2878, %v2912
      %v2947 = vmax.f32 %v2879, %v2913
      %v2948 = vmax.f32 %v2880, %v2914
      %v2949 = vmax.f32 %v2881, %v2915
      %v2950 = vmax.f32 %v2882, %v2916
      %v2951 = vmax.f32 %v2883, %v2917
      %v2952 = vmax.f32 %v2884, %v2918
      %v2953 = vmax.f32 %v2885, %v2919
      %v2954 = vpack.c.bf16 %v2921, %v2920
      %v2955 = vpack.c.bf16 %v2923, %v2922
      %v2956 = vpack.c.bf16 %v2925, %v2924
      %v2957 = vpack.c.bf16 %v2927, %v2926
      %v2958 = vpack.c.bf16 %v2929, %v2928
      %v2959 = vpack.c.bf16 %v2931, %v2930
      %v2960 = vpack.c.bf16 %v2933, %v2932
      %v2961 = vpack.c.bf16 %v2935, %v2934
      %v2962 = vpack.c.bf16 %v2937, %v2936
      %v2963 = vpack.c.bf16 %v2939, %v2938
      %v2964 = vpack.c.bf16 %v2941, %v2940
      %v2965 = vpack.c.bf16 %v2943, %v2942
      %v2966 = vpack.c.bf16 %v2945, %v2944
      %v2967 = vpack.c.bf16 %v2947, %v2946
      %v2968 = vpack.c.bf16 %v2949, %v2948
      %v2969 = vpack.c.bf16 %v2951, %v2950
      %v2970 = vpack.c.bf16 %v2953, %v2952
      %2971 = vst [vmem:[%s143] sm:$0xff] %v2954
      %2972 = vst [vmem:[%s143 + $0x8] sm:$0xff] %v2955
      %2973 = vst [vmem:[%s143 + $0x10] sm:$0xff] %v2956
      %2974 = vst [vmem:[%s143 + $0x18] sm:$0xff] %v2957
      %2975 = vst [vmem:[%s143 + $0x20] sm:$0xff] %v2958
      %2976 = vst [vmem:[%s143 + $0x28] sm:$0xff] %v2959
      %2977 = vst [vmem:[%s143 + $0x30] sm:$0xff] %v2960
      %2978 = vst [vmem:[%s143 + $0x38] sm:$0xff] %v2961
      %2979 = vst [vmem:[%s143 + $0x40] sm:$0xff] %v2962
      %2980 = vst [vmem:[%s143 + $0x48] sm:$0xff] %v2963
      %2981 = vst [vmem:[%s143 + $0x50] sm:$0xff] %v2964
      %2982 = vst [vmem:[%s143 + $0x58] sm:$0xff] %v2965
      %2983 = vst [vmem:[%s143 + $0x60] sm:$0xff] %v2966
      %2984 = vst [vmem:[%s143 + $0x68] sm:$0xff] %v2967
      %2985 = vst [vmem:[%s143 + $0x70] sm:$0xff] %v2968
      %2986 = vst [vmem:[%s143 + $0x78] sm:$0xff] %v2969
      %vm2987 = vcmask 1043456
      %vm2988 = vcmask 7172
      %vm2989 = vmor %vm2988, %vm2987
      %2990 = vst.msk [vmem:[%s143 + $0x80] sm:$0xff] %vm2989, %v2970
      %p2991 = scmp.lt.s32.totalorder %s13, 1
      %s2992 = scalar_select %p2991, %s13, 1
      %s2993 = smul.addr %s2992, 34
      %s2994 = smul.addr %s2993, 4
      %s2995 = scalar_lea.vmem %s2, %s2994
      // Predicated region
      $region29: #{critic_forward.5} parent=27 // pred_check
        %p2996 = pneg %p78
      $region30: #{critic_forward.5} parent=27 // pred_check_branch
        %2998 = sbr.rel (%p2996) target = $region32
      $region31: #{critic_forward.5} parent=27 // pred_region
        _
      $region32: #{critic_forward.5} parent=27 // pred_fallthru
        _
    $region28: #{critic_forward.5} parent=5 // pred_fallthru
      _
    %p2999 = scmp.le.s32.totalorder 2, %s8
    // Predicated region
    $region33: #{critic_forward.5} parent=5 // pred_check
      %p3000 = pneg %p2999
    $region34: #{critic_forward.5} parent=5 // pred_check_branch
      %3002 = sbr.rel (%p3000) target = $region36
    $region35: #{critic_forward.5} parent=5 // pred_region
      %s3003 = ssub.s32 %s8, 2
      // Predicated region
      $region37: #{critic_forward.5} parent=35 // pred_check
        %p3004 = pneg %p84
      $region38: #{critic_forward.5} parent=35 // pred_check_branch
        %3006 = sbr.rel (%p3004) target = $region40
      $region39: #{critic_forward.5} parent=35 // pred_region
        %p3007 = scmp.lt.s32.totalorder %s14, 1
        %s3008 = scalar_select %p3007, %s14, 1
        %s3009 = smul.addr %s3008, 34
        %s3010 = smul.addr %s3009, 4
        %s3011 = scalar_lea.vmem %s2, %s3010
      $region40: #{critic_forward.5} parent=35 // pred_fallthru
        _
    $region36: #{critic_forward.5} parent=5 // pred_fallthru
      _
  $region6: #{critic_forward.5} parent=0 // loop_footer
    %s12 = sadd.s32 1, %s8
  $region7: #{critic_forward.5} parent=0 // loop_footer_branch
    %7 = sbr.rel target = $region3
  $region8: #{critic_forward.5} parent=0 // loop_exit
    _

// kernel: critic_forward.6
$region0: #{critic_forward.6}
  #allocation0 [shape = 'u32[]', space=smem, size = 0x4, offset = 0x4, fixed_abs, tag = 'smem constant byte address 0x4 - core index']
  #allocation1 [shape = 'u32[72,128]{1,0:T(1,128)}', space=vmem, size = 0x9000, scoped, tag = 'internal scratch']
  %s0 = inlined_call_operand.vmem [shape: bf16[32,2212], index: 0, kind: input, shape index: {}]
  %s1 = inlined_call_operand.vmem [shape: bf16[4,16,32], index: 1, kind: input, shape index: {}]
  %s2 = inlined_call_operand.vmem [shape: f32[16,1], index: 2, kind: input, shape index: {}]
  %s3 = inlined_call_operand.vmem [shape: f32[16,1], index: 3, kind: input, shape index: {}]
  %s4 = inlined_call_operand.vmem [shape: f32[1,2178], index: 4, kind: input, shape index: {}]
  %s5 = inlined_call_operand.vmem [shape: bf16[16,2178], index: 5, kind: output, shape index: {}]
  %s6 = sld [smem:[#allocation0]]
  $region30: #{critic_forward.6} parent=0
    _
  %s8 = ssub.s32 1, %s6
  %s9 = scalar_select 0, %s8, %s6
  // Predicated region
  $region2: #{critic_forward.6} parent=0 // pred_check
    _
  $region3: #{critic_forward.6} parent=0 // pred_check_branch
    %11 = sbr.rel (0) target = $region5
  $region4: #{critic_forward.6} parent=0 // pred_region
    _
  $region5: #{critic_forward.6} parent=0 // pred_fallthru
    _
  // Predicated region
  $region6: #{critic_forward.6} parent=0 // pred_check
    _
  $region7: #{critic_forward.6} parent=0 // pred_check_branch
    %13 = sbr.rel (0) target = $region9
  $region8: #{critic_forward.6} parent=0 // pred_region
    _
  $region9: #{critic_forward.6} parent=0 // pred_fallthru
    _
  // Predicated region
  $region10: #{critic_forward.6} parent=0 // pred_check
    _
  $region11: #{critic_forward.6} parent=0 // pred_check_branch
    %15 = sbr.rel (0) target = $region13
  $region12: #{critic_forward.6} parent=0 // pred_region
    _
  $region13: #{critic_forward.6} parent=0 // pred_fallthru
    _
  // Predicated region
  $region14: #{critic_forward.6} parent=0 // pred_check
    _
  $region15: #{critic_forward.6} parent=0 // pred_check_branch
    %17 = sbr.rel (0) target = $region17
  $region16: #{critic_forward.6} parent=0 // pred_region
    _
  $region17: #{critic_forward.6} parent=0 // pred_fallthru
    _
  // Predicated region
  $region18: #{critic_forward.6} parent=0 // pred_check
    _
  $region19: #{critic_forward.6} parent=0 // pred_check_branch
    %19 = sbr.rel (0) target = $region21
  $region20: #{critic_forward.6} parent=0 // pred_region
    _
  $region21: #{critic_forward.6} parent=0 // pred_fallthru
    _
  %v21 = vld [vmem:[%s1] sm:$0xf]
  %v22 = vld [vmem:[%s1 + $0x4] sm:$0xf]
  %v23 = vld [vmem:[%s0] sm:$0xff]
  %v24 = vld [vmem:[%s0 + $0x8] sm:$0xff]
  %v25 = vld [vmem:[%s0 + $0x10] sm:$0xff]
  %v26 = vld [vmem:[%s0 + $0x18] sm:$0xff]
  %v27 = vld [vmem:[%s0 + $0x20] sm:$0xff]
  %v28 = vld [vmem:[%s0 + $0x28] sm:$0xff]
  %v29 = vld [vmem:[%s0 + $0x30] sm:$0xff]
  %v30 = vld [vmem:[%s0 + $0x38] sm:$0xff]
  %v31 = vld [vmem:[%s0 + $0x40] sm:$0xff]
  %v32 = vld [vmem:[%s0 + $0x48] sm:$0xff]
  %v33 = vld [vmem:[%s0 + $0x50] sm:$0xff]
  %v34 = vld [vmem:[%s0 + $0x58] sm:$0xff]
  %v35 = vld [vmem:[%s0 + $0x60] sm:$0xff]
  %v36 = vld [vmem:[%s0 + $0x68] sm:$0xff]
  %v37 = vld [vmem:[%s0 + $0x70] sm:$0xff]
  %v38 = vld [vmem:[%s0 + $0x78] sm:$0xff]
  %v39 = vld [vmem:[%s0 + $0x80] sm:$0xff]
  %v40 = vld [vmem:[%s0 + $0x88] sm:$0xff]
  %v41 = vld [vmem:[%s0 + $0x90] sm:$0xff]
  %v42 = vld [vmem:[%s0 + $0x98] sm:$0xff]
  %v43 = vld [vmem:[%s0 + $0xa0] sm:$0xff]
  %v44 = vld [vmem:[%s0 + $0xa8] sm:$0xff]
  %v45 = vld [vmem:[%s0 + $0xb0] sm:$0xff]
  %v46 = vld [vmem:[%s0 + $0xb8] sm:$0xff]
  %v47 = vld [vmem:[%s0 + $0xc0] sm:$0xff]
  %v48 = vld [vmem:[%s0 + $0xc8] sm:$0xff]
  %v49 = vld [vmem:[%s0 + $0xd0] sm:$0xff]
  %v50 = vld [vmem:[%s0 + $0xd8] sm:$0xff]
  %v51 = vld [vmem:[%s0 + $0xe0] sm:$0xff]
  %v52 = vld [vmem:[%s0 + $0xe8] sm:$0xff]
  %v53 = vld [vmem:[%s0 + $0xf0] sm:$0xff]
  %v54 = vld [vmem:[%s0 + $0xf8] sm:$0xff]
  %v55 = vld [vmem:[%s0 + $0x100] sm:$0xff]
  %v56 = vld [vmem:[%s0 + $0x108] sm:$0xff]
  %v57 = vld [vmem:[%s0 + $0x110] sm:$0xff]
  %v58 = vld [vmem:[%s0 + $0x118] sm:$0xff]
  %s59 = scalar_lea.vmem %s1, 8
  %v60 = vld [vmem:[%s59] sm:$0xf]
  %v61 = vld [vmem:[%s59 + $0x4] sm:$0xf]
  %v64 = vunpack.c.l.b16 %v60
  %v65 = vunpack.c.l.b16 %v61
  %v66 = vpack.c.b16 %v65, %v64
  %v103 = vunpack.c.l.b16 %v23
  %v104 = vunpack.c.h.b16 %v23
  %v105 = vunpack.c.l.b16 %v24
  %v106 = vunpack.c.h.b16 %v24
  %v107 = vunpack.c.l.b16 %v25
  %v108 = vunpack.c.h.b16 %v25
  %v109 = vunpack.c.l.b16 %v26
  %v110 = vunpack.c.h.b16 %v26
  %v111 = vunpack.c.l.b16 %v27
  %v112 = vunpack.c.h.b16 %v27
  %v113 = vunpack.c.l.b16 %v28
  %v114 = vunpack.c.h.b16 %v28
  %v115 = vunpack.c.l.b16 %v29
  %v116 = vunpack.c.h.b16 %v29
  %v117 = vunpack.c.l.b16 %v30
  %v118 = vunpack.c.h.b16 %v30
  %v119 = vunpack.c.l.b16 %v31
  %v120 = vunpack.c.h.b16 %v31
  %v121 = vunpack.c.l.b16 %v32
  %v122 = vunpack.c.h.b16 %v32
  %v123 = vunpack.c.l.b16 %v33
  %v124 = vunpack.c.h.b16 %v33
  %v125 = vunpack.c.l.b16 %v34
  %v126 = vunpack.c.h.b16 %v34
  %v127 = vunpack.c.l.b16 %v35
  %v128 = vunpack.c.h.b16 %v35
  %v129 = vunpack.c.l.b16 %v36
  %v130 = vunpack.c.h.b16 %v36
  %v131 = vunpack.c.l.b16 %v37
  %v132 = vunpack.c.h.b16 %v37
  %v133 = vunpack.c.l.b16 %v38
  %v134 = vunpack.c.h.b16 %v38
  %v135 = vunpack.c.l.b16 %v39
  %v136 = vunpack.c.h.b16 %v39
  %v137 = vunpack.c.l.b16 %v40
  %v138 = vunpack.c.h.b16 %v40
  %v139 = vunpack.c.l.b16 %v41
  %v140 = vunpack.c.h.b16 %v41
  %v141 = vunpack.c.l.b16 %v42
  %v142 = vunpack.c.h.b16 %v42
  %v143 = vunpack.c.l.b16 %v43
  %v144 = vunpack.c.h.b16 %v43
  %v145 = vunpack.c.l.b16 %v44
  %v146 = vunpack.c.h.b16 %v44
  %v147 = vunpack.c.l.b16 %v45
  %v148 = vunpack.c.h.b16 %v45
  %v149 = vunpack.c.l.b16 %v46
  %v150 = vunpack.c.h.b16 %v46
  %v151 = vunpack.c.l.b16 %v47
  %v152 = vunpack.c.h.b16 %v47
  %v153 = vunpack.c.l.b16 %v48
  %v154 = vunpack.c.h.b16 %v48
  %v155 = vunpack.c.l.b16 %v49
  %v156 = vunpack.c.h.b16 %v49
  %v157 = vunpack.c.l.b16 %v50
  %v158 = vunpack.c.h.b16 %v50
  %v159 = vunpack.c.l.b16 %v51
  %v160 = vunpack.c.h.b16 %v51
  %v161 = vunpack.c.l.b16 %v52
  %v162 = vunpack.c.h.b16 %v52
  %v163 = vunpack.c.l.b16 %v53
  %v164 = vunpack.c.h.b16 %v53
  %v165 = vunpack.c.l.b16 %v54
  %v166 = vunpack.c.h.b16 %v54
  %v167 = vunpack.c.l.b16 %v55
  %v168 = vunpack.c.h.b16 %v55
  %v169 = vunpack.c.l.b16 %v56
  %v170 = vunpack.c.h.b16 %v56
  %v171 = vunpack.c.l.b16 %v57
  %v172 = vunpack.c.h.b16 %v57
  %v173 = vunpack.c.l.b16 %v58
  %v174 = vunpack.c.h.b16 %v58
  %v175 = vpack.c.b16 %v121, %v103
  %v176 = vpack.c.b16 %v122, %v104
  %v177 = vpack.c.b16 %v123, %v105
  %v178 = vpack.c.b16 %v124, %v106
  %v179 = vpack.c.b16 %v125, %v107
  %v180 = vpack.c.b16 %v126, %v108
  %v181 = vpack.c.b16 %v127, %v109
  %v182 = vpack.c.b16 %v128, %v110
  %v183 = vpack.c.b16 %v129, %v111
  %v184 = vpack.c.b16 %v130, %v112
  %v185 = vpack.c.b16 %v131, %v113
  %v186 = vpack.c.b16 %v132, %v114
  %v187 = vpack.c.b16 %v133, %v115
  %v188 = vpack.c.b16 %v134, %v116
  %v189 = vpack.c.b16 %v135, %v117
  %v190 = vpack.c.b16 %v136, %v118
  %v191 = vpack.c.b16 %v137, %v119
  %v192 = vpack.c.b16 %v138, %v120
  %v193 = vpack.c.b16 %v157, %v139
  %v194 = vpack.c.b16 %v158, %v140
  %v195 = vpack.c.b16 %v159, %v141
  %v196 = vpack.c.b16 %v160, %v142
  %v197 = vpack.c.b16 %v161, %v143
  %v198 = vpack.c.b16 %v162, %v144
  %v199 = vpack.c.b16 %v163, %v145
  %v200 = vpack.c.b16 %v164, %v146
  %v201 = vpack.c.b16 %v165, %v147
  %v202 = vpack.c.b16 %v166, %v148
  %v203 = vpack.c.b16 %v167, %v149
  %v204 = vpack.c.b16 %v168, %v150
  %v205 = vpack.c.b16 %v169, %v151
  %v206 = vpack.c.b16 %v170, %v152
  %v207 = vpack.c.b16 %v171, %v153
  %v208 = vpack.c.b16 %v172, %v154
  %v209 = vpack.c.b16 %v173, %v155
  %v210 = vpack.c.b16 %v174, %v156
  %211 = vrot.lane.b32.xlu0 %v175, 127
  %v212 = vpop.permute.xlu0 %211
  %213 = vrot.lane.b32.xlu0 %v176, 127
  %v214 = vpop.permute.xlu0 %213
  %215 = vrot.lane.b32.xlu0 %v177, 127
  %v216 = vpop.permute.xlu0 %215
  %217 = vrot.lane.b32.xlu0 %v178, 127
  %v218 = vpop.permute.xlu0 %217
  %219 = vrot.lane.b32.xlu0 %v179, 127
  %v220 = vpop.permute.xlu0 %219
  %221 = vrot.lane.b32.xlu0 %v180, 127
  %v222 = vpop.permute.xlu0 %221
  %223 = vrot.lane.b32.xlu0 %v181, 127
  %v224 = vpop.permute.xlu0 %223
  %225 = vrot.lane.b32.xlu0 %v182, 127
  %v226 = vpop.permute.xlu0 %225
  %227 = vrot.lane.b32.xlu0 %v183, 127
  %v228 = vpop.permute.xlu0 %227
  %229 = vrot.lane.b32.xlu0 %v184, 127
  %v230 = vpop.permute.xlu0 %229
  %231 = vrot.lane.b32.xlu0 %v185, 127
  %v232 = vpop.permute.xlu0 %231
  %233 = vrot.lane.b32.xlu0 %v186, 127
  %v234 = vpop.permute.xlu0 %233
  %235 = vrot.lane.b32.xlu0 %v187, 127
  %v236 = vpop.permute.xlu0 %235
  %237 = vrot.lane.b32.xlu0 %v188, 127
  %v238 = vpop.permute.xlu0 %237
  %239 = vrot.lane.b32.xlu0 %v189, 127
  %v240 = vpop.permute.xlu0 %239
  %241 = vrot.lane.b32.xlu0 %v190, 127
  %v242 = vpop.permute.xlu0 %241
  %243 = vrot.lane.b32.xlu0 %v191, 127
  %v244 = vpop.permute.xlu0 %243
  %245 = vrot.lane.b32.xlu0 %v192, 127
  %v246 = vpop.permute.xlu0 %245
  %247 = vrot.lane.b32.xlu0 %v193, 127
  %v248 = vpop.permute.xlu0 %247
  %249 = vrot.lane.b32.xlu0 %v194, 127
  %v250 = vpop.permute.xlu0 %249
  %251 = vrot.lane.b32.xlu0 %v195, 127
  %v252 = vpop.permute.xlu0 %251
  %253 = vrot.lane.b32.xlu0 %v196, 127
  %v254 = vpop.permute.xlu0 %253
  %255 = vrot.lane.b32.xlu0 %v197, 127
  %v256 = vpop.permute.xlu0 %255
  %257 = vrot.lane.b32.xlu0 %v198, 127
  %v258 = vpop.permute.xlu0 %257
  %259 = vrot.lane.b32.xlu0 %v199, 127
  %v260 = vpop.permute.xlu0 %259
  %261 = vrot.lane.b32.xlu0 %v200, 127
  %v262 = vpop.permute.xlu0 %261
  %263 = vrot.lane.b32.xlu0 %v201, 127
  %v264 = vpop.permute.xlu0 %263
  %265 = vrot.lane.b32.xlu0 %v202, 127
  %v266 = vpop.permute.xlu0 %265
  %267 = vrot.lane.b32.xlu0 %v203, 127
  %v268 = vpop.permute.xlu0 %267
  %269 = vrot.lane.b32.xlu0 %v204, 127
  %v270 = vpop.permute.xlu0 %269
  %271 = vrot.lane.b32.xlu0 %v205, 127
  %v272 = vpop.permute.xlu0 %271
  %273 = vrot.lane.b32.xlu0 %v206, 127
  %v274 = vpop.permute.xlu0 %273
  %275 = vrot.lane.b32.xlu0 %v207, 127
  %v276 = vpop.permute.xlu0 %275
  %277 = vrot.lane.b32.xlu0 %v208, 127
  %v278 = vpop.permute.xlu0 %277
  %279 = vrot.lane.b32.xlu0 %v209, 127
  %v280 = vpop.permute.xlu0 %279
  %281 = vrot.lane.b32.xlu0 %v210, 127
  %v282 = vpop.permute.xlu0 %281
  %vm283 = vcmask 1039360
  %v284 = vsel %vm283, %v212, %v214
  %v285 = vsel %vm283, %v214, %v216
  %v286 = vsel %vm283, %v216, %v218
  %v287 = vsel %vm283, %v218, %v220
  %v288 = vsel %vm283, %v220, %v222
  %v289 = vsel %vm283, %v222, %v224
  %v290 = vsel %vm283, %v224, %v226
  %v291 = vsel %vm283, %v226, %v228
  %v292 = vsel %vm283, %v228, %v230
  %v293 = vsel %vm283, %v230, %v232
  %v294 = vsel %vm283, %v232, %v234
  %v295 = vsel %vm283, %v234, %v236
  %v296 = vsel %vm283, %v236, %v238
  %v297 = vsel %vm283, %v238, %v240
  %v298 = vsel %vm283, %v240, %v242
  %v299 = vsel %vm283, %v242, %v244
  %v300 = vsel %vm283, %v244, %v246
  %v301 = vsel %vm283, %v248, %v250
  %v302 = vsel %vm283, %v250, %v252
  %v303 = vsel %vm283, %v252, %v254
  %v304 = vsel %vm283, %v254, %v256
  %v305 = vsel %vm283, %v256, %v258
  %v306 = vsel %vm283, %v258, %v260
  %v307 = vsel %vm283, %v260, %v262
  %v308 = vsel %vm283, %v262, %v264
  %v309 = vsel %vm283, %v264, %v266
  %v310 = vsel %vm283, %v266, %v268
  %v311 = vsel %vm283, %v268, %v270
  %v312 = vsel %vm283, %v270, %v272
  %v313 = vsel %vm283, %v272, %v274
  %v314 = vsel %vm283, %v274, %v276
  %v315 = vsel %vm283, %v276, %v278
  %v316 = vsel %vm283, %v278, %v280
  %v317 = vsel %vm283, %v280, %v282
  %vm354 = vcmask 261120
  %v356 = vsel %vm354, %v66, 0
  %358 = vmatpush.bf16.msra.mxu0 0
  %359 = vmatpush.bf16.msra.mxu0 0
  %360 = vmatpush.bf16.msra.mxu0 0
  %361 = vmatpush.bf16.msra.mxu0 0
  %362 = vmatpush.bf16.msra.mxu0 0
  %363 = vmatpush.bf16.msra.mxu0 0
  %364 = vmatpush.bf16.msra.mxu0 %v301
  %365 = vmatpush.bf16.msra.mxu0 %v284
  %366 = vmatmul.bf16.gmra.mxu0 %v356
  %v367 = vpop.f32.mrf.mxu0
  %v368 = vadd.f32 0.0, %v367
  %v369 = vpop.f32.mrf.mxu0
  %v370 = vadd.f32 0.0, %v369
  %371 = vdwg.mxu0
  %372 = vmatpush.bf16.msra.mxu0 0
  %373 = vmatpush.bf16.msra.mxu0 0
  %374 = vmatpush.bf16.msra.mxu0 0
  %375 = vmatpush.bf16.msra.mxu0 0
  %376 = vmatpush.bf16.msra.mxu0 0
  %377 = vmatpush.bf16.msra.mxu0 0
  %378 = vmatpush.bf16.msra.mxu0 %v302
  %379 = vmatpush.bf16.msra.mxu0 %v285
  %380 = vmatmul.bf16.gmra.mxu0 %v356
  %v381 = vpop.f32.mrf.mxu0
  %v382 = vadd.f32 0.0, %v381
  %v383 = vpop.f32.mrf.mxu0
  %v384 = vadd.f32 0.0, %v383
  %385 = vdwg.mxu0
  %386 = vmatpush.bf16.msra.mxu0 0
  %387 = vmatpush.bf16.msra.mxu0 0
  %388 = vmatpush.bf16.msra.mxu0 0
  %389 = vmatpush.bf16.msra.mxu0 0
  %390 = vmatpush.bf16.msra.mxu0 0
  %391 = vmatpush.bf16.msra.mxu0 0
  %392 = vmatpush.bf16.msra.mxu0 %v303
  %393 = vmatpush.bf16.msra.mxu0 %v286
  %394 = vmatmul.bf16.gmra.mxu0 %v356
  %v395 = vpop.f32.mrf.mxu0
  %v396 = vadd.f32 0.0, %v395
  %v397 = vpop.f32.mrf.mxu0
  %v398 = vadd.f32 0.0, %v397
  %399 = vdwg.mxu0
  %400 = vmatpush.bf16.msra.mxu0 0
  %401 = vmatpush.bf16.msra.mxu0 0
  %402 = vmatpush.bf16.msra.mxu0 0
  %403 = vmatpush.bf16.msra.mxu0 0
  %404 = vmatpush.bf16.msra.mxu0 0
  %405 = vmatpush.bf16.msra.mxu0 0
  %406 = vmatpush.bf16.msra.mxu0 %v304
  %407 = vmatpush.bf16.msra.mxu0 %v287
  %408 = vmatmul.bf16.gmra.mxu0 %v356
  %v409 = vpop.f32.mrf.mxu0
  %v410 = vadd.f32 0.0, %v409
  %v411 = vpop.f32.mrf.mxu0
  %v412 = vadd.f32 0.0, %v411
  %413 = vdwg.mxu0
  %414 = vmatpush.bf16.msra.mxu0 0
  %415 = vmatpush.bf16.msra.mxu0 0
  %416 = vmatpush.bf16.msra.mxu0 0
  %417 = vmatpush.bf16.msra.mxu0 0
  %418 = vmatpush.bf16.msra.mxu0 0
  %419 = vmatpush.bf16.msra.mxu0 0
  %420 = vmatpush.bf16.msra.mxu0 %v305
  %421 = vmatpush.bf16.msra.mxu0 %v288
  %422 = vmatmul.bf16.gmra.mxu0 %v356
  %v423 = vpop.f32.mrf.mxu0
  %v424 = vadd.f32 0.0, %v423
  %v425 = vpop.f32.mrf.mxu0
  %v426 = vadd.f32 0.0, %v425
  %427 = vdwg.mxu0
  %428 = vmatpush.bf16.msra.mxu0 0
  %429 = vmatpush.bf16.msra.mxu0 0
  %430 = vmatpush.bf16.msra.mxu0 0
  %431 = vmatpush.bf16.msra.mxu0 0
  %432 = vmatpush.bf16.msra.mxu0 0
  %433 = vmatpush.bf16.msra.mxu0 0
  %434 = vmatpush.bf16.msra.mxu0 %v306
  %435 = vmatpush.bf16.msra.mxu0 %v289
  %436 = vmatmul.bf16.gmra.mxu0 %v356
  %v437 = vpop.f32.mrf.mxu0
  %v438 = vadd.f32 0.0, %v437
  %v439 = vpop.f32.mrf.mxu0
  %v440 = vadd.f32 0.0, %v439
  %441 = vdwg.mxu0
  %442 = vmatpush.bf16.msra.mxu0 0
  %443 = vmatpush.bf16.msra.mxu0 0
  %444 = vmatpush.bf16.msra.mxu0 0
  %445 = vmatpush.bf16.msra.mxu0 0
  %446 = vmatpush.bf16.msra.mxu0 0
  %447 = vmatpush.bf16.msra.mxu0 0
  %448 = vmatpush.bf16.msra.mxu0 %v307
  %449 = vmatpush.bf16.msra.mxu0 %v290
  %450 = vmatmul.bf16.gmra.mxu0 %v356
  %v451 = vpop.f32.mrf.mxu0
  %v452 = vadd.f32 0.0, %v451
  %v453 = vpop.f32.mrf.mxu0
  %v454 = vadd.f32 0.0, %v453
  %455 = vdwg.mxu0
  %456 = vmatpush.bf16.msra.mxu0 0
  %457 = vmatpush.bf16.msra.mxu0 0
  %458 = vmatpush.bf16.msra.mxu0 0
  %459 = vmatpush.bf16.msra.mxu0 0
  %460 = vmatpush.bf16.msra.mxu0 0
  %461 = vmatpush.bf16.msra.mxu0 0
  %462 = vmatpush.bf16.msra.mxu0 %v308
  %463 = vmatpush.bf16.msra.mxu0 %v291
  %464 = vmatmul.bf16.gmra.mxu0 %v356
  %v465 = vpop.f32.mrf.mxu0
  %v466 = vadd.f32 0.0, %v465
  %v467 = vpop.f32.mrf.mxu0
  %v468 = vadd.f32 0.0, %v467
  %469 = vdwg.mxu0
  %470 = vmatpush.bf16.msra.mxu0 0
  %471 = vmatpush.bf16.msra.mxu0 0
  %472 = vmatpush.bf16.msra.mxu0 0
  %473 = vmatpush.bf16.msra.mxu0 0
  %474 = vmatpush.bf16.msra.mxu0 0
  %475 = vmatpush.bf16.msra.mxu0 0
  %476 = vmatpush.bf16.msra.mxu0 %v309
  %477 = vmatpush.bf16.msra.mxu0 %v292
  %478 = vmatmul.bf16.gmra.mxu0 %v356
  %v479 = vpop.f32.mrf.mxu0
  %v480 = vadd.f32 0.0, %v479
  %v481 = vpop.f32.mrf.mxu0
  %v482 = vadd.f32 0.0, %v481
  %483 = vdwg.mxu0
  %484 = vmatpush.bf16.msra.mxu0 0
  %485 = vmatpush.bf16.msra.mxu0 0
  %486 = vmatpush.bf16.msra.mxu0 0
  %487 = vmatpush.bf16.msra.mxu0 0
  %488 = vmatpush.bf16.msra.mxu0 0
  %489 = vmatpush.bf16.msra.mxu0 0
  %490 = vmatpush.bf16.msra.mxu0 %v310
  %491 = vmatpush.bf16.msra.mxu0 %v293
  %492 = vmatmul.bf16.gmra.mxu0 %v356
  %v493 = vpop.f32.mrf.mxu0
  %v494 = vadd.f32 0.0, %v493
  %v495 = vpop.f32.mrf.mxu0
  %v496 = vadd.f32 0.0, %v495
  %497 = vdwg.mxu0
  %498 = vmatpush.bf16.msra.mxu0 0
  %499 = vmatpush.bf16.msra.mxu0 0
  %500 = vmatpush.bf16.msra.mxu0 0
  %501 = vmatpush.bf16.msra.mxu0 0
  %502 = vmatpush.bf16.msra.mxu0 0
  %503 = vmatpush.bf16.msra.mxu0 0
  %504 = vmatpush.bf16.msra.mxu0 %v311
  %505 = vmatpush.bf16.msra.mxu0 %v294
  %506 = vmatmul.bf16.gmra.mxu0 %v356
  %v507 = vpop.f32.mrf.mxu0
  %v508 = vadd.f32 0.0, %v507
  %v509 = vpop.f32.mrf.mxu0
  %v510 = vadd.f32 0.0, %v509
  %511 = vdwg.mxu0
  %512 = vmatpush.bf16.msra.mxu0 0
  %513 = vmatpush.bf16.msra.mxu0 0
  %514 = vmatpush.bf16.msra.mxu0 0
  %515 = vmatpush.bf16.msra.mxu0 0
  %516 = vmatpush.bf16.msra.mxu0 0
  %517 = vmatpush.bf16.msra.mxu0 0
  %518 = vmatpush.bf16.msra.mxu0 %v312
  %519 = vmatpush.bf16.msra.mxu0 %v295
  %520 = vmatmul.bf16.gmra.mxu0 %v356
  %v521 = vpop.f32.mrf.mxu0
  %v522 = vadd.f32 0.0, %v521
  %v523 = vpop.f32.mrf.mxu0
  %v524 = vadd.f32 0.0, %v523
  %525 = vdwg.mxu0
  %526 = vmatpush.bf16.msra.mxu0 0
  %527 = vmatpush.bf16.msra.mxu0 0
  %528 = vmatpush.bf16.msra.mxu0 0
  %529 = vmatpush.bf16.msra.mxu0 0
  %530 = vmatpush.bf16.msra.mxu0 0
  %531 = vmatpush.bf16.msra.mxu0 0
  %532 = vmatpush.bf16.msra.mxu0 %v313
  %533 = vmatpush.bf16.msra.mxu0 %v296
  %534 = vmatmul.bf16.gmra.mxu0 %v356
  %v535 = vpop.f32.mrf.mxu0
  %v536 = vadd.f32 0.0, %v535
  %v537 = vpop.f32.mrf.mxu0
  %v538 = vadd.f32 0.0, %v537
  %539 = vdwg.mxu0
  %540 = vmatpush.bf16.msra.mxu0 0
  %541 = vmatpush.bf16.msra.mxu0 0
  %542 = vmatpush.bf16.msra.mxu0 0
  %543 = vmatpush.bf16.msra.mxu0 0
  %544 = vmatpush.bf16.msra.mxu0 0
  %545 = vmatpush.bf16.msra.mxu0 0
  %546 = vmatpush.bf16.msra.mxu0 %v314
  %547 = vmatpush.bf16.msra.mxu0 %v297
  %548 = vmatmul.bf16.gmra.mxu0 %v356
  %v549 = vpop.f32.mrf.mxu0
  %v550 = vadd.f32 0.0, %v549
  %v551 = vpop.f32.mrf.mxu0
  %v552 = vadd.f32 0.0, %v551
  %553 = vdwg.mxu0
  %554 = vmatpush.bf16.msra.mxu0 0
  %555 = vmatpush.bf16.msra.mxu0 0
  %556 = vmatpush.bf16.msra.mxu0 0
  %557 = vmatpush.bf16.msra.mxu0 0
  %558 = vmatpush.bf16.msra.mxu0 0
  %559 = vmatpush.bf16.msra.mxu0 0
  %560 = vmatpush.bf16.msra.mxu0 %v315
  %561 = vmatpush.bf16.msra.mxu0 %v298
  %562 = vmatmul.bf16.gmra.mxu0 %v356
  %v563 = vpop.f32.mrf.mxu0
  %v564 = vadd.f32 0.0, %v563
  %v565 = vpop.f32.mrf.mxu0
  %v566 = vadd.f32 0.0, %v565
  %567 = vdwg.mxu0
  %568 = vmatpush.bf16.msra.mxu0 0
  %569 = vmatpush.bf16.msra.mxu0 0
  %570 = vmatpush.bf16.msra.mxu0 0
  %571 = vmatpush.bf16.msra.mxu0 0
  %572 = vmatpush.bf16.msra.mxu0 0
  %573 = vmatpush.bf16.msra.mxu0 0
  %574 = vmatpush.bf16.msra.mxu0 %v316
  %575 = vmatpush.bf16.msra.mxu0 %v299
  %576 = vmatmul.bf16.gmra.mxu0 %v356
  %v577 = vpop.f32.mrf.mxu0
  %v578 = vadd.f32 0.0, %v577
  %v579 = vpop.f32.mrf.mxu0
  %v580 = vadd.f32 0.0, %v579
  %581 = vdwg.mxu0
  %582 = vmatpush.bf16.msra.mxu0 0
  %583 = vmatpush.bf16.msra.mxu0 0
  %584 = vmatpush.bf16.msra.mxu0 0
  %585 = vmatpush.bf16.msra.mxu0 0
  %586 = vmatpush.bf16.msra.mxu0 0
  %587 = vmatpush.bf16.msra.mxu0 0
  %588 = vmatpush.bf16.msra.mxu0 %v317
  %589 = vmatpush.bf16.msra.mxu0 %v300
  %590 = vmatmul.bf16.gmra.mxu0 %v356
  %v591 = vpop.f32.mrf.mxu0
  %v592 = vadd.f32 0.0, %v591
  %v593 = vpop.f32.mrf.mxu0
  %v594 = vadd.f32 0.0, %v593
  %595 = vdwg.mxu0
  %596 = vmatpush.bf16.msra.mxu0 0
  %597 = vmatpush.bf16.msra.mxu0 0
  %598 = vmatpush.bf16.msra.mxu0 0
  %599 = vmatpush.bf16.msra.mxu0 0
  %600 = vmatpush.bf16.msra.mxu0 0
  %601 = vmatpush.bf16.msra.mxu0 0
  %602 = vmatpush.bf16.msra.mxu0 %v282
  %603 = vmatpush.bf16.msra.mxu0 %v246
  %604 = vmatmul.bf16.gmra.mxu0 %v356
  %v605 = vpop.f32.mrf.mxu0
  %v606 = vadd.f32 0.0, %v605
  %v607 = vpop.f32.mrf.mxu0
  %v608 = vadd.f32 0.0, %v607
  %609 = vdwg.mxu0
  %v612 = vunpack.c.l.b16 %v21
  %v613 = vunpack.c.l.b16 %v22
  %v614 = vpack.c.b16 %v613, %v612
  %v652 = vsel %vm354, %v614, 0
  %654 = vmatpush.bf16.msra.mxu0 0
  %655 = vmatpush.bf16.msra.mxu0 0
  %656 = vmatpush.bf16.msra.mxu0 0
  %657 = vmatpush.bf16.msra.mxu0 0
  %658 = vmatpush.bf16.msra.mxu0 0
  %659 = vmatpush.bf16.msra.mxu0 0
  %660 = vmatpush.bf16.msra.mxu0 %v193
  %661 = vmatpush.bf16.msra.mxu0 %v175
  %662 = vmatmul.bf16.gmra.mxu0 %v652
  %v663 = vpop.f32.mrf.mxu0
  %v664 = vadd.f32 %v368, %v663
  %v665 = vpop.f32.mrf.mxu0
  %v666 = vadd.f32 %v370, %v665
  %667 = vdwg.mxu0
  %668 = vmatpush.bf16.msra.mxu0 0
  %669 = vmatpush.bf16.msra.mxu0 0
  %670 = vmatpush.bf16.msra.mxu0 0
  %671 = vmatpush.bf16.msra.mxu0 0
  %672 = vmatpush.bf16.msra.mxu0 0
  %673 = vmatpush.bf16.msra.mxu0 0
  %674 = vmatpush.bf16.msra.mxu0 %v194
  %675 = vmatpush.bf16.msra.mxu0 %v176
  %676 = vmatmul.bf16.gmra.mxu0 %v652
  %v677 = vpop.f32.mrf.mxu0
  %v678 = vadd.f32 %v382, %v677
  %v679 = vpop.f32.mrf.mxu0
  %v680 = vadd.f32 %v384, %v679
  %681 = vdwg.mxu0
  %682 = vmatpush.bf16.msra.mxu0 0
  %683 = vmatpush.bf16.msra.mxu0 0
  %684 = vmatpush.bf16.msra.mxu0 0
  %685 = vmatpush.bf16.msra.mxu0 0
  %686 = vmatpush.bf16.msra.mxu0 0
  %687 = vmatpush.bf16.msra.mxu0 0
  %688 = vmatpush.bf16.msra.mxu0 %v195
  %689 = vmatpush.bf16.msra.mxu0 %v177
  %690 = vmatmul.bf16.gmra.mxu0 %v652
  %v691 = vpop.f32.mrf.mxu0
  %v692 = vadd.f32 %v396, %v691
  %v693 = vpop.f32.mrf.mxu0
  %v694 = vadd.f32 %v398, %v693
  %695 = vdwg.mxu0
  %696 = vmatpush.bf16.msra.mxu0 0
  %697 = vmatpush.bf16.msra.mxu0 0
  %698 = vmatpush.bf16.msra.mxu0 0
  %699 = vmatpush.bf16.msra.mxu0 0
  %700 = vmatpush.bf16.msra.mxu0 0
  %701 = vmatpush.bf16.msra.mxu0 0
  %702 = vmatpush.bf16.msra.mxu0 %v196
  %703 = vmatpush.bf16.msra.mxu0 %v178
  %704 = vmatmul.bf16.gmra.mxu0 %v652
  %v705 = vpop.f32.mrf.mxu0
  %v706 = vadd.f32 %v410, %v705
  %v707 = vpop.f32.mrf.mxu0
  %v708 = vadd.f32 %v412, %v707
  %709 = vdwg.mxu0
  %710 = vmatpush.bf16.msra.mxu0 0
  %711 = vmatpush.bf16.msra.mxu0 0
  %712 = vmatpush.bf16.msra.mxu0 0
  %713 = vmatpush.bf16.msra.mxu0 0
  %714 = vmatpush.bf16.msra.mxu0 0
  %715 = vmatpush.bf16.msra.mxu0 0
  %716 = vmatpush.bf16.msra.mxu0 %v197
  %717 = vmatpush.bf16.msra.mxu0 %v179
  %718 = vmatmul.bf16.gmra.mxu0 %v652
  %v719 = vpop.f32.mrf.mxu0
  %v720 = vadd.f32 %v424, %v719
  %v721 = vpop.f32.mrf.mxu0
  %v722 = vadd.f32 %v426, %v721
  %723 = vdwg.mxu0
  %724 = vmatpush.bf16.msra.mxu0 0
  %725 = vmatpush.bf16.msra.mxu0 0
  %726 = vmatpush.bf16.msra.mxu0 0
  %727 = vmatpush.bf16.msra.mxu0 0
  %728 = vmatpush.bf16.msra.mxu0 0
  %729 = vmatpush.bf16.msra.mxu0 0
  %730 = vmatpush.bf16.msra.mxu0 %v198
  %731 = vmatpush.bf16.msra.mxu0 %v180
  %732 = vmatmul.bf16.gmra.mxu0 %v652
  %v733 = vpop.f32.mrf.mxu0
  %v734 = vadd.f32 %v438, %v733
  %v735 = vpop.f32.mrf.mxu0
  %v736 = vadd.f32 %v440, %v735
  %737 = vdwg.mxu0
  %738 = vmatpush.bf16.msra.mxu0 0
  %739 = vmatpush.bf16.msra.mxu0 0
  %740 = vmatpush.bf16.msra.mxu0 0
  %741 = vmatpush.bf16.msra.mxu0 0
  %742 = vmatpush.bf16.msra.mxu0 0
  %743 = vmatpush.bf16.msra.mxu0 0
  %744 = vmatpush.bf16.msra.mxu0 %v199
  %745 = vmatpush.bf16.msra.mxu0 %v181
  %746 = vmatmul.bf16.gmra.mxu0 %v652
  %v747 = vpop.f32.mrf.mxu0
  %v748 = vadd.f32 %v452, %v747
  %v749 = vpop.f32.mrf.mxu0
  %v750 = vadd.f32 %v454, %v749
  %751 = vdwg.mxu0
  %752 = vmatpush.bf16.msra.mxu0 0
  %753 = vmatpush.bf16.msra.mxu0 0
  %754 = vmatpush.bf16.msra.mxu0 0
  %755 = vmatpush.bf16.msra.mxu0 0
  %756 = vmatpush.bf16.msra.mxu0 0
  %757 = vmatpush.bf16.msra.mxu0 0
  %758 = vmatpush.bf16.msra.mxu0 %v200
  %759 = vmatpush.bf16.msra.mxu0 %v182
  %760 = vmatmul.bf16.gmra.mxu0 %v652
  %v761 = vpop.f32.mrf.mxu0
  %v762 = vadd.f32 %v466, %v761
  %v763 = vpop.f32.mrf.mxu0
  %v764 = vadd.f32 %v468, %v763
  %765 = vdwg.mxu0
  %766 = vmatpush.bf16.msra.mxu0 0
  %767 = vmatpush.bf16.msra.mxu0 0
  %768 = vmatpush.bf16.msra.mxu0 0
  %769 = vmatpush.bf16.msra.mxu0 0
  %770 = vmatpush.bf16.msra.mxu0 0
  %771 = vmatpush.bf16.msra.mxu0 0
  %772 = vmatpush.bf16.msra.mxu0 %v201
  %773 = vmatpush.bf16.msra.mxu0 %v183
  %774 = vmatmul.bf16.gmra.mxu0 %v652
  %v775 = vpop.f32.mrf.mxu0
  %v776 = vadd.f32 %v480, %v775
  %v777 = vpop.f32.mrf.mxu0
  %v778 = vadd.f32 %v482, %v777
  %779 = vdwg.mxu0
  %780 = vmatpush.bf16.msra.mxu0 0
  %781 = vmatpush.bf16.msra.mxu0 0
  %782 = vmatpush.bf16.msra.mxu0 0
  %783 = vmatpush.bf16.msra.mxu0 0
  %784 = vmatpush.bf16.msra.mxu0 0
  %785 = vmatpush.bf16.msra.mxu0 0
  %786 = vmatpush.bf16.msra.mxu0 %v202
  %787 = vmatpush.bf16.msra.mxu0 %v184
  %788 = vmatmul.bf16.gmra.mxu0 %v652
  %v789 = vpop.f32.mrf.mxu0
  %v790 = vadd.f32 %v494, %v789
  %v791 = vpop.f32.mrf.mxu0
  %v792 = vadd.f32 %v496, %v791
  %793 = vdwg.mxu0
  %794 = vmatpush.bf16.msra.mxu0 0
  %795 = vmatpush.bf16.msra.mxu0 0
  %796 = vmatpush.bf16.msra.mxu0 0
  %797 = vmatpush.bf16.msra.mxu0 0
  %798 = vmatpush.bf16.msra.mxu0 0
  %799 = vmatpush.bf16.msra.mxu0 0
  %800 = vmatpush.bf16.msra.mxu0 %v203
  %801 = vmatpush.bf16.msra.mxu0 %v185
  %802 = vmatmul.bf16.gmra.mxu0 %v652
  %v803 = vpop.f32.mrf.mxu0
  %v804 = vadd.f32 %v508, %v803
  %v805 = vpop.f32.mrf.mxu0
  %v806 = vadd.f32 %v510, %v805
  %807 = vdwg.mxu0
  %808 = vmatpush.bf16.msra.mxu0 0
  %809 = vmatpush.bf16.msra.mxu0 0
  %810 = vmatpush.bf16.msra.mxu0 0
  %811 = vmatpush.bf16.msra.mxu0 0
  %812 = vmatpush.bf16.msra.mxu0 0
  %813 = vmatpush.bf16.msra.mxu0 0
  %814 = vmatpush.bf16.msra.mxu0 %v204
  %815 = vmatpush.bf16.msra.mxu0 %v186
  %816 = vmatmul.bf16.gmra.mxu0 %v652
  %v817 = vpop.f32.mrf.mxu0
  %v818 = vadd.f32 %v522, %v817
  %v819 = vpop.f32.mrf.mxu0
  %v820 = vadd.f32 %v524, %v819
  %821 = vdwg.mxu0
  %822 = vmatpush.bf16.msra.mxu0 0
  %823 = vmatpush.bf16.msra.mxu0 0
  %824 = vmatpush.bf16.msra.mxu0 0
  %825 = vmatpush.bf16.msra.mxu0 0
  %826 = vmatpush.bf16.msra.mxu0 0
  %827 = vmatpush.bf16.msra.mxu0 0
  %828 = vmatpush.bf16.msra.mxu0 %v205
  %829 = vmatpush.bf16.msra.mxu0 %v187
  %830 = vmatmul.bf16.gmra.mxu0 %v652
  %v831 = vpop.f32.mrf.mxu0
  %v832 = vadd.f32 %v536, %v831
  %v833 = vpop.f32.mrf.mxu0
  %v834 = vadd.f32 %v538, %v833
  %835 = vdwg.mxu0
  %836 = vmatpush.bf16.msra.mxu0 0
  %837 = vmatpush.bf16.msra.mxu0 0
  %838 = vmatpush.bf16.msra.mxu0 0
  %839 = vmatpush.bf16.msra.mxu0 0
  %840 = vmatpush.bf16.msra.mxu0 0
  %841 = vmatpush.bf16.msra.mxu0 0
  %842 = vmatpush.bf16.msra.mxu0 %v206
  %843 = vmatpush.bf16.msra.mxu0 %v188
  %844 = vmatmul.bf16.gmra.mxu0 %v652
  %v845 = vpop.f32.mrf.mxu0
  %v846 = vadd.f32 %v550, %v845
  %v847 = vpop.f32.mrf.mxu0
  %v848 = vadd.f32 %v552, %v847
  %849 = vdwg.mxu0
  %850 = vmatpush.bf16.msra.mxu0 0
  %851 = vmatpush.bf16.msra.mxu0 0
  %852 = vmatpush.bf16.msra.mxu0 0
  %853 = vmatpush.bf16.msra.mxu0 0
  %854 = vmatpush.bf16.msra.mxu0 0
  %855 = vmatpush.bf16.msra.mxu0 0
  %856 = vmatpush.bf16.msra.mxu0 %v207
  %857 = vmatpush.bf16.msra.mxu0 %v189
  %858 = vmatmul.bf16.gmra.mxu0 %v652
  %v859 = vpop.f32.mrf.mxu0
  %v860 = vadd.f32 %v564, %v859
  %v861 = vpop.f32.mrf.mxu0
  %v862 = vadd.f32 %v566, %v861
  %863 = vdwg.mxu0
  %864 = vmatpush.bf16.msra.mxu0 0
  %865 = vmatpush.bf16.msra.mxu0 0
  %866 = vmatpush.bf16.msra.mxu0 0
  %867 = vmatpush.bf16.msra.mxu0 0
  %868 = vmatpush.bf16.msra.mxu0 0
  %869 = vmatpush.bf16.msra.mxu0 0
  %870 = vmatpush.bf16.msra.mxu0 %v208
  %871 = vmatpush.bf16.msra.mxu0 %v190
  %872 = vmatmul.bf16.gmra.mxu0 %v652
  %v873 = vpop.f32.mrf.mxu0
  %v874 = vadd.f32 %v578, %v873
  %v875 = vpop.f32.mrf.mxu0
  %v876 = vadd.f32 %v580, %v875
  %877 = vdwg.mxu0
  %878 = vmatpush.bf16.msra.mxu0 0
  %879 = vmatpush.bf16.msra.mxu0 0
  %880 = vmatpush.bf16.msra.mxu0 0
  %881 = vmatpush.bf16.msra.mxu0 0
  %882 = vmatpush.bf16.msra.mxu0 0
  %883 = vmatpush.bf16.msra.mxu0 0
  %884 = vmatpush.bf16.msra.mxu0 %v209
  %885 = vmatpush.bf16.msra.mxu0 %v191
  %886 = vmatmul.bf16.gmra.mxu0 %v652
  %v887 = vpop.f32.mrf.mxu0
  %v888 = vadd.f32 %v592, %v887
  %v889 = vpop.f32.mrf.mxu0
  %v890 = vadd.f32 %v594, %v889
  %891 = vdwg.mxu0
  %892 = vmatpush.bf16.msra.mxu0 0
  %893 = vmatpush.bf16.msra.mxu0 0
  %894 = vmatpush.bf16.msra.mxu0 0
  %895 = vmatpush.bf16.msra.mxu0 0
  %896 = vmatpush.bf16.msra.mxu0 0
  %897 = vmatpush.bf16.msra.mxu0 0
  %898 = vmatpush.bf16.msra.mxu0 %v210
  %899 = vmatpush.bf16.msra.mxu0 %v192
  %900 = vmatmul.bf16.gmra.mxu0 %v652
  %v901 = vpop.f32.mrf.mxu0
  %v902 = vadd.f32 %v606, %v901
  %v903 = vpop.f32.mrf.mxu0
  %v904 = vadd.f32 %v608, %v903
  %905 = vdwg.mxu0
  %s906 = scalar_lea.vmem %s1, 16
  %v907 = vld [vmem:[%s906] sm:$0xf]
  %v908 = vld [vmem:[%s906 + $0x4] sm:$0xf]
  %v911 = vunpack.c.l.b16 %v907
  %v912 = vunpack.c.l.b16 %v908
  %v913 = vpack.c.b16 %v912, %v911
  %914 = vrot.lane.b32.xlu0 %v175, 95
  %v915 = vpop.permute.xlu0 %914
  %916 = vrot.lane.b32.xlu0 %v176, 95
  %v917 = vpop.permute.xlu0 %916
  %918 = vrot.lane.b32.xlu0 %v177, 95
  %v919 = vpop.permute.xlu0 %918
  %920 = vrot.lane.b32.xlu0 %v178, 95
  %v921 = vpop.permute.xlu0 %920
  %922 = vrot.lane.b32.xlu0 %v179, 95
  %v923 = vpop.permute.xlu0 %922
  %924 = vrot.lane.b32.xlu0 %v180, 95
  %v925 = vpop.permute.xlu0 %924
  %926 = vrot.lane.b32.xlu0 %v181, 95
  %v927 = vpop.permute.xlu0 %926
  %928 = vrot.lane.b32.xlu0 %v182, 95
  %v929 = vpop.permute.xlu0 %928
  %930 = vrot.lane.b32.xlu0 %v183, 95
  %v931 = vpop.permute.xlu0 %930
  %932 = vrot.lane.b32.xlu0 %v184, 95
  %v933 = vpop.permute.xlu0 %932
  %934 = vrot.lane.b32.xlu0 %v185, 95
  %v935 = vpop.permute.xlu0 %934
  %936 = vrot.lane.b32.xlu0 %v186, 95
  %v937 = vpop.permute.xlu0 %936
  %938 = vrot.lane.b32.xlu0 %v187, 95
  %v939 = vpop.permute.xlu0 %938
  %940 = vrot.lane.b32.xlu0 %v188, 95
  %v941 = vpop.permute.xlu0 %940
  %942 = vrot.lane.b32.xlu0 %v189, 95
  %v943 = vpop.permute.xlu0 %942
  %944 = vrot.lane.b32.xlu0 %v190, 95
  %v945 = vpop.permute.xlu0 %944
  %946 = vrot.lane.b32.xlu0 %v191, 95
  %v947 = vpop.permute.xlu0 %946
  %948 = vrot.lane.b32.xlu0 %v192, 95
  %v949 = vpop.permute.xlu0 %948
  %950 = vrot.lane.b32.xlu0 %v193, 95
  %v951 = vpop.permute.xlu0 %950
  %952 = vrot.lane.b32.xlu0 %v194, 95
  %v953 = vpop.permute.xlu0 %952
  %954 = vrot.lane.b32.xlu0 %v195, 95
  %v955 = vpop.permute.xlu0 %954
  %956 = vrot.lane.b32.xlu0 %v196, 95
  %v957 = vpop.permute.xlu0 %956
  %958 = vrot.lane.b32.xlu0 %v197, 95
  %v959 = vpop.permute.xlu0 %958
  %960 = vrot.lane.b32.xlu0 %v198, 95
  %v961 = vpop.permute.xlu0 %960
  %962 = vrot.lane.b32.xlu0 %v199, 95
  %v963 = vpop.permute.xlu0 %962
  %964 = vrot.lane.b32.xlu0 %v200, 95
  %v965 = vpop.permute.xlu0 %964
  %966 = vrot.lane.b32.xlu0 %v201, 95
  %v967 = vpop.permute.xlu0 %966
  %968 = vrot.lane.b32.xlu0 %v202, 95
  %v969 = vpop.permute.xlu0 %968
  %970 = vrot.lane.b32.xlu0 %v203, 95
  %v971 = vpop.permute.xlu0 %970
  %972 = vrot.lane.b32.xlu0 %v204, 95
  %v973 = vpop.permute.xlu0 %972
  %974 = vrot.lane.b32.xlu0 %v205, 95
  %v975 = vpop.permute.xlu0 %974
  %976 = vrot.lane.b32.xlu0 %v206, 95
  %v977 = vpop.permute.xlu0 %976
  %978 = vrot.lane.b32.xlu0 %v207, 95
  %v979 = vpop.permute.xlu0 %978
  %980 = vrot.lane.b32.xlu0 %v208, 95
  %v981 = vpop.permute.xlu0 %980
  %982 = vrot.lane.b32.xlu0 %v209, 95
  %v983 = vpop.permute.xlu0 %982
  %984 = vrot.lane.b32.xlu0 %v210, 95
  %v985 = vpop.permute.xlu0 %984
  %vm986 = vcmask 777216
  %v987 = vsel %vm986, %v915, %v917
  %v988 = vsel %vm986, %v917, %v919
  %v989 = vsel %vm986, %v919, %v921
  %v990 = vsel %vm986, %v921, %v923
  %v991 = vsel %vm986, %v923, %v925
  %v992 = vsel %vm986, %v925, %v927
  %v993 = vsel %vm986, %v927, %v929
  %v994 = vsel %vm986, %v929, %v931
  %v995 = vsel %vm986, %v931, %v933
  %v996 = vsel %vm986, %v933, %v935
  %v997 = vsel %vm986, %v935, %v937
  %v998 = vsel %vm986, %v937, %v939
  %v999 = vsel %vm986, %v939, %v941
  %v1000 = vsel %vm986, %v941, %v943
  %v1001 = vsel %vm986, %v943, %v945
  %v1002 = vsel %vm986, %v945, %v947
  %v1003 = vsel %vm986, %v947, %v949
  %v1004 = vsel %vm986, %v951, %v953
  %v1005 = vsel %vm986, %v953, %v955
  %v1006 = vsel %vm986, %v955, %v957
  %v1007 = vsel %vm986, %v957, %v959
  %v1008 = vsel %vm986, %v959, %v961
  %v1009 = vsel %vm986, %v961, %v963
  %v1010 = vsel %vm986, %v963, %v965
  %v1011 = vsel %vm986, %v965, %v967
  %v1012 = vsel %vm986, %v967, %v969
  %v1013 = vsel %vm986, %v969, %v971
  %v1014 = vsel %vm986, %v971, %v973
  %v1015 = vsel %vm986, %v973, %v975
  %v1016 = vsel %vm986, %v975, %v977
  %v1017 = vsel %vm986, %v977, %v979
  %v1018 = vsel %vm986, %v979, %v981
  %v1019 = vsel %vm986, %v981, %v983
  %v1020 = vsel %vm986, %v983, %v985
  %v1058 = vsel %vm354, %v913, 0
  %1060 = vmatpush.bf16.msra.mxu0 0
  %1061 = vmatpush.bf16.msra.mxu0 0
  %1062 = vmatpush.bf16.msra.mxu0 0
  %1063 = vmatpush.bf16.msra.mxu0 0
  %1064 = vmatpush.bf16.msra.mxu0 0
  %1065 = vmatpush.bf16.msra.mxu0 0
  %1066 = vmatpush.bf16.msra.mxu0 %v1004
  %1067 = vmatpush.bf16.msra.mxu0 %v987
  %1068 = vmatmul.bf16.gmra.mxu0 %v1058
  %v1069 = vpop.f32.mrf.mxu0
  %v1070 = vadd.f32 0.0, %v1069
  %v1071 = vpop.f32.mrf.mxu0
  %v1072 = vadd.f32 0.0, %v1071
  %1073 = vdwg.mxu0
  %1074 = vmatpush.bf16.msra.mxu0 0
  %1075 = vmatpush.bf16.msra.mxu0 0
  %1076 = vmatpush.bf16.msra.mxu0 0
  %1077 = vmatpush.bf16.msra.mxu0 0
  %1078 = vmatpush.bf16.msra.mxu0 0
  %1079 = vmatpush.bf16.msra.mxu0 0
  %1080 = vmatpush.bf16.msra.mxu0 %v1005
  %1081 = vmatpush.bf16.msra.mxu0 %v988
  %1082 = vmatmul.bf16.gmra.mxu0 %v1058
  %v1083 = vpop.f32.mrf.mxu0
  %v1084 = vadd.f32 0.0, %v1083
  %v1085 = vpop.f32.mrf.mxu0
  %v1086 = vadd.f32 0.0, %v1085
  %1087 = vdwg.mxu0
  %1088 = vmatpush.bf16.msra.mxu0 0
  %1089 = vmatpush.bf16.msra.mxu0 0
  %1090 = vmatpush.bf16.msra.mxu0 0
  %1091 = vmatpush.bf16.msra.mxu0 0
  %1092 = vmatpush.bf16.msra.mxu0 0
  %1093 = vmatpush.bf16.msra.mxu0 0
  %1094 = vmatpush.bf16.msra.mxu0 %v1006
  %1095 = vmatpush.bf16.msra.mxu0 %v989
  %1096 = vmatmul.bf16.gmra.mxu0 %v1058
  %v1097 = vpop.f32.mrf.mxu0
  %v1098 = vadd.f32 0.0, %v1097
  %v1099 = vpop.f32.mrf.mxu0
  %v1100 = vadd.f32 0.0, %v1099
  %1101 = vdwg.mxu0
  %1102 = vmatpush.bf16.msra.mxu0 0
  %1103 = vmatpush.bf16.msra.mxu0 0
  %1104 = vmatpush.bf16.msra.mxu0 0
  %1105 = vmatpush.bf16.msra.mxu0 0
  %1106 = vmatpush.bf16.msra.mxu0 0
  %1107 = vmatpush.bf16.msra.mxu0 0
  %1108 = vmatpush.bf16.msra.mxu0 %v1007
  %1109 = vmatpush.bf16.msra.mxu0 %v990
  %1110 = vmatmul.bf16.gmra.mxu0 %v1058
  %v1111 = vpop.f32.mrf.mxu0
  %v1112 = vadd.f32 0.0, %v1111
  %v1113 = vpop.f32.mrf.mxu0
  %v1114 = vadd.f32 0.0, %v1113
  %1115 = vdwg.mxu0
  %1116 = vmatpush.bf16.msra.mxu0 0
  %1117 = vmatpush.bf16.msra.mxu0 0
  %1118 = vmatpush.bf16.msra.mxu0 0
  %1119 = vmatpush.bf16.msra.mxu0 0
  %1120 = vmatpush.bf16.msra.mxu0 0
  %1121 = vmatpush.bf16.msra.mxu0 0
  %1122 = vmatpush.bf16.msra.mxu0 %v1008
  %1123 = vmatpush.bf16.msra.mxu0 %v991
  %1124 = vmatmul.bf16.gmra.mxu0 %v1058
  %v1125 = vpop.f32.mrf.mxu0
  %v1126 = vadd.f32 0.0, %v1125
  %v1127 = vpop.f32.mrf.mxu0
  %v1128 = vadd.f32 0.0, %v1127
  %1129 = vdwg.mxu0
  %1130 = vmatpush.bf16.msra.mxu0 0
  %1131 = vmatpush.bf16.msra.mxu0 0
  %1132 = vmatpush.bf16.msra.mxu0 0
  %1133 = vmatpush.bf16.msra.mxu0 0
  %1134 = vmatpush.bf16.msra.mxu0 0
  %1135 = vmatpush.bf16.msra.mxu0 0
  %1136 = vmatpush.bf16.msra.mxu0 %v1009
  %1137 = vmatpush.bf16.msra.mxu0 %v992
  %1138 = vmatmul.bf16.gmra.mxu0 %v1058
  %v1139 = vpop.f32.mrf.mxu0
  %v1140 = vadd.f32 0.0, %v1139
  %v1141 = vpop.f32.mrf.mxu0
  %v1142 = vadd.f32 0.0, %v1141
  %1143 = vdwg.mxu0
  %1144 = vmatpush.bf16.msra.mxu0 0
  %1145 = vmatpush.bf16.msra.mxu0 0
  %1146 = vmatpush.bf16.msra.mxu0 0
  %1147 = vmatpush.bf16.msra.mxu0 0
  %1148 = vmatpush.bf16.msra.mxu0 0
  %1149 = vmatpush.bf16.msra.mxu0 0
  %1150 = vmatpush.bf16.msra.mxu0 %v1010
  %1151 = vmatpush.bf16.msra.mxu0 %v993
  %1152 = vmatmul.bf16.gmra.mxu0 %v1058
  %v1153 = vpop.f32.mrf.mxu0
  %v1154 = vadd.f32 0.0, %v1153
  %v1155 = vpop.f32.mrf.mxu0
  %v1156 = vadd.f32 0.0, %v1155
  %1157 = vdwg.mxu0
  %1158 = vmatpush.bf16.msra.mxu0 0
  %1159 = vmatpush.bf16.msra.mxu0 0
  %1160 = vmatpush.bf16.msra.mxu0 0
  %1161 = vmatpush.bf16.msra.mxu0 0
  %1162 = vmatpush.bf16.msra.mxu0 0
  %1163 = vmatpush.bf16.msra.mxu0 0
  %1164 = vmatpush.bf16.msra.mxu0 %v1011
  %1165 = vmatpush.bf16.msra.mxu0 %v994
  %1166 = vmatmul.bf16.gmra.mxu0 %v1058
  %v1167 = vpop.f32.mrf.mxu0
  %v1168 = vadd.f32 0.0, %v1167
  %v1169 = vpop.f32.mrf.mxu0
  %v1170 = vadd.f32 0.0, %v1169
  %1171 = vdwg.mxu0
  %1172 = vmatpush.bf16.msra.mxu0 0
  %1173 = vmatpush.bf16.msra.mxu0 0
  %1174 = vmatpush.bf16.msra.mxu0 0
  %1175 = vmatpush.bf16.msra.mxu0 0
  %1176 = vmatpush.bf16.msra.mxu0 0
  %1177 = vmatpush.bf16.msra.mxu0 0
  %1178 = vmatpush.bf16.msra.mxu0 %v1012
  %1179 = vmatpush.bf16.msra.mxu0 %v995
  %1180 = vmatmul.bf16.gmra.mxu0 %v1058
  %v1181 = vpop.f32.mrf.mxu0
  %v1182 = vadd.f32 0.0, %v1181
  %v1183 = vpop.f32.mrf.mxu0
  %v1184 = vadd.f32 0.0, %v1183
  %1185 = vdwg.mxu0
  %1186 = vmatpush.bf16.msra.mxu0 0
  %1187 = vmatpush.bf16.msra.mxu0 0
  %1188 = vmatpush.bf16.msra.mxu0 0
  %1189 = vmatpush.bf16.msra.mxu0 0
  %1190 = vmatpush.bf16.msra.mxu0 0
  %1191 = vmatpush.bf16.msra.mxu0 0
  %1192 = vmatpush.bf16.msra.mxu0 %v1013
  %1193 = vmatpush.bf16.msra.mxu0 %v996
  %1194 = vmatmul.bf16.gmra.mxu0 %v1058
  %v1195 = vpop.f32.mrf.mxu0
  %v1196 = vadd.f32 0.0, %v1195
  %v1197 = vpop.f32.mrf.mxu0
  %v1198 = vadd.f32 0.0, %v1197
  %1199 = vdwg.mxu0
  %1200 = vmatpush.bf16.msra.mxu0 0
  %1201 = vmatpush.bf16.msra.mxu0 0
  %1202 = vmatpush.bf16.msra.mxu0 0
  %1203 = vmatpush.bf16.msra.mxu0 0
  %1204 = vmatpush.bf16.msra.mxu0 0
  %1205 = vmatpush.bf16.msra.mxu0 0
  %1206 = vmatpush.bf16.msra.mxu0 %v1014
  %1207 = vmatpush.bf16.msra.mxu0 %v997
  %1208 = vmatmul.bf16.gmra.mxu0 %v1058
  %v1209 = vpop.f32.mrf.mxu0
  %v1210 = vadd.f32 0.0, %v1209
  %v1211 = vpop.f32.mrf.mxu0
  %v1212 = vadd.f32 0.0, %v1211
  %1213 = vdwg.mxu0
  %1214 = vmatpush.bf16.msra.mxu0 0
  %1215 = vmatpush.bf16.msra.mxu0 0
  %1216 = vmatpush.bf16.msra.mxu0 0
  %1217 = vmatpush.bf16.msra.mxu0 0
  %1218 = vmatpush.bf16.msra.mxu0 0
  %1219 = vmatpush.bf16.msra.mxu0 0
  %1220 = vmatpush.bf16.msra.mxu0 %v1015
  %1221 = vmatpush.bf16.msra.mxu0 %v998
  %1222 = vmatmul.bf16.gmra.mxu0 %v1058
  %v1223 = vpop.f32.mrf.mxu0
  %v1224 = vadd.f32 0.0, %v1223
  %v1225 = vpop.f32.mrf.mxu0
  %v1226 = vadd.f32 0.0, %v1225
  %1227 = vdwg.mxu0
  %1228 = vmatpush.bf16.msra.mxu0 0
  %1229 = vmatpush.bf16.msra.mxu0 0
  %1230 = vmatpush.bf16.msra.mxu0 0
  %1231 = vmatpush.bf16.msra.mxu0 0
  %1232 = vmatpush.bf16.msra.mxu0 0
  %1233 = vmatpush.bf16.msra.mxu0 0
  %1234 = vmatpush.bf16.msra.mxu0 %v1016
  %1235 = vmatpush.bf16.msra.mxu0 %v999
  %1236 = vmatmul.bf16.gmra.mxu0 %v1058
  %v1237 = vpop.f32.mrf.mxu0
  %v1238 = vadd.f32 0.0, %v1237
  %v1239 = vpop.f32.mrf.mxu0
  %v1240 = vadd.f32 0.0, %v1239
  %1241 = vdwg.mxu0
  %1242 = vmatpush.bf16.msra.mxu0 0
  %1243 = vmatpush.bf16.msra.mxu0 0
  %1244 = vmatpush.bf16.msra.mxu0 0
  %1245 = vmatpush.bf16.msra.mxu0 0
  %1246 = vmatpush.bf16.msra.mxu0 0
  %1247 = vmatpush.bf16.msra.mxu0 0
  %1248 = vmatpush.bf16.msra.mxu0 %v1017
  %1249 = vmatpush.bf16.msra.mxu0 %v1000
  %1250 = vmatmul.bf16.gmra.mxu0 %v1058
  %v1251 = vpop.f32.mrf.mxu0
  %v1252 = vadd.f32 0.0, %v1251
  %v1253 = vpop.f32.mrf.mxu0
  %v1254 = vadd.f32 0.0, %v1253
  %1255 = vdwg.mxu0
  %1256 = vmatpush.bf16.msra.mxu0 0
  %1257 = vmatpush.bf16.msra.mxu0 0
  %1258 = vmatpush.bf16.msra.mxu0 0
  %1259 = vmatpush.bf16.msra.mxu0 0
  %1260 = vmatpush.bf16.msra.mxu0 0
  %1261 = vmatpush.bf16.msra.mxu0 0
  %1262 = vmatpush.bf16.msra.mxu0 %v1018
  %1263 = vmatpush.bf16.msra.mxu0 %v1001
  %1264 = vmatmul.bf16.gmra.mxu0 %v1058
  %v1265 = vpop.f32.mrf.mxu0
  %v1266 = vadd.f32 0.0, %v1265
  %v1267 = vpop.f32.mrf.mxu0
  %v1268 = vadd.f32 0.0, %v1267
  %1269 = vdwg.mxu0
  %1270 = vmatpush.bf16.msra.mxu0 0
  %1271 = vmatpush.bf16.msra.mxu0 0
  %1272 = vmatpush.bf16.msra.mxu0 0
  %1273 = vmatpush.bf16.msra.mxu0 0
  %1274 = vmatpush.bf16.msra.mxu0 0
  %1275 = vmatpush.bf16.msra.mxu0 0
  %1276 = vmatpush.bf16.msra.mxu0 %v1019
  %1277 = vmatpush.bf16.msra.mxu0 %v1002
  %1278 = vmatmul.bf16.gmra.mxu0 %v1058
  %v1279 = vpop.f32.mrf.mxu0
  %v1280 = vadd.f32 0.0, %v1279
  %v1281 = vpop.f32.mrf.mxu0
  %v1282 = vadd.f32 0.0, %v1281
  %1283 = vdwg.mxu0
  %1284 = vmatpush.bf16.msra.mxu0 0
  %1285 = vmatpush.bf16.msra.mxu0 0
  %1286 = vmatpush.bf16.msra.mxu0 0
  %1287 = vmatpush.bf16.msra.mxu0 0
  %1288 = vmatpush.bf16.msra.mxu0 0
  %1289 = vmatpush.bf16.msra.mxu0 0
  %1290 = vmatpush.bf16.msra.mxu0 %v1020
  %1291 = vmatpush.bf16.msra.mxu0 %v1003
  %1292 = vmatmul.bf16.gmra.mxu0 %v1058
  %v1293 = vpop.f32.mrf.mxu0
  %v1294 = vadd.f32 0.0, %v1293
  %v1295 = vpop.f32.mrf.mxu0
  %v1296 = vadd.f32 0.0, %v1295
  %1297 = vdwg.mxu0
  %1298 = vmatpush.bf16.msra.mxu0 0
  %1299 = vmatpush.bf16.msra.mxu0 0
  %1300 = vmatpush.bf16.msra.mxu0 0
  %1301 = vmatpush.bf16.msra.mxu0 0
  %1302 = vmatpush.bf16.msra.mxu0 0
  %1303 = vmatpush.bf16.msra.mxu0 0
  %1304 = vmatpush.bf16.msra.mxu0 %v985
  %1305 = vmatpush.bf16.msra.mxu0 %v949
  %1306 = vmatmul.bf16.gmra.mxu0 %v1058
  %v1307 = vpop.f32.mrf.mxu0
  %v1308 = vadd.f32 0.0, %v1307
  %v1309 = vpop.f32.mrf.mxu0
  %v1310 = vadd.f32 0.0, %v1309
  %1311 = vdwg.mxu0
  %v1312 = vadd.f32 %v664, %v1070
  %v1313 = vadd.f32 %v678, %v1084
  %v1314 = vadd.f32 %v692, %v1098
  %v1315 = vadd.f32 %v706, %v1112
  %v1316 = vadd.f32 %v720, %v1126
  %v1317 = vadd.f32 %v734, %v1140
  %v1318 = vadd.f32 %v748, %v1154
  %v1319 = vadd.f32 %v762, %v1168
  %v1320 = vadd.f32 %v776, %v1182
  %v1321 = vadd.f32 %v790, %v1196
  %v1322 = vadd.f32 %v804, %v1210
  %v1323 = vadd.f32 %v818, %v1224
  %v1324 = vadd.f32 %v832, %v1238
  %v1325 = vadd.f32 %v846, %v1252
  %v1326 = vadd.f32 %v860, %v1266
  %v1327 = vadd.f32 %v874, %v1280
  %v1328 = vadd.f32 %v888, %v1294
  %v1329 = vadd.f32 %v902, %v1308
  %v1330 = vadd.f32 %v666, %v1072
  %v1331 = vadd.f32 %v680, %v1086
  %v1332 = vadd.f32 %v694, %v1100
  %v1333 = vadd.f32 %v708, %v1114
  %v1334 = vadd.f32 %v722, %v1128
  %v1335 = vadd.f32 %v736, %v1142
  %v1336 = vadd.f32 %v750, %v1156
  %v1337 = vadd.f32 %v764, %v1170
  %v1338 = vadd.f32 %v778, %v1184
  %v1339 = vadd.f32 %v792, %v1198
  %v1340 = vadd.f32 %v806, %v1212
  %v1341 = vadd.f32 %v820, %v1226
  %v1342 = vadd.f32 %v834, %v1240
  %v1343 = vadd.f32 %v848, %v1254
  %v1344 = vadd.f32 %v862, %v1268
  %v1345 = vadd.f32 %v876, %v1282
  %v1346 = vadd.f32 %v890, %v1296
  %v1347 = vadd.f32 %v904, %v1310
  %s1348 = scalar_lea.vmem %s1, 24
  %v1349 = vld [vmem:[%s1348] sm:$0xf]
  %v1350 = vld [vmem:[%s1348 + $0x4] sm:$0xf]
  %v1353 = vunpack.c.l.b16 %v1349
  %v1354 = vunpack.c.l.b16 %v1350
  %v1355 = vpack.c.b16 %v1354, %v1353
  %1356 = vrot.lane.b32.xlu0 %v175, 94
  %v1357 = vpop.permute.xlu0 %1356
  %1358 = vrot.lane.b32.xlu0 %v176, 94
  %v1359 = vpop.permute.xlu0 %1358
  %1360 = vrot.lane.b32.xlu0 %v177, 94
  %v1361 = vpop.permute.xlu0 %1360
  %1362 = vrot.lane.b32.xlu0 %v178, 94
  %v1363 = vpop.permute.xlu0 %1362
  %1364 = vrot.lane.b32.xlu0 %v179, 94
  %v1365 = vpop.permute.xlu0 %1364
  %1366 = vrot.lane.b32.xlu0 %v180, 94
  %v1367 = vpop.permute.xlu0 %1366
  %1368 = vrot.lane.b32.xlu0 %v181, 94
  %v1369 = vpop.permute.xlu0 %1368
  %1370 = vrot.lane.b32.xlu0 %v182, 94
  %v1371 = vpop.permute.xlu0 %1370
  %1372 = vrot.lane.b32.xlu0 %v183, 94
  %v1373 = vpop.permute.xlu0 %1372
  %1374 = vrot.lane.b32.xlu0 %v184, 94
  %v1375 = vpop.permute.xlu0 %1374
  %1376 = vrot.lane.b32.xlu0 %v185, 94
  %v1377 = vpop.permute.xlu0 %1376
  %1378 = vrot.lane.b32.xlu0 %v186, 94
  %v1379 = vpop.permute.xlu0 %1378
  %1380 = vrot.lane.b32.xlu0 %v187, 94
  %v1381 = vpop.permute.xlu0 %1380
  %1382 = vrot.lane.b32.xlu0 %v188, 94
  %v1383 = vpop.permute.xlu0 %1382
  %1384 = vrot.lane.b32.xlu0 %v189, 94
  %v1385 = vpop.permute.xlu0 %1384
  %1386 = vrot.lane.b32.xlu0 %v190, 94
  %v1387 = vpop.permute.xlu0 %1386
  %1388 = vrot.lane.b32.xlu0 %v191, 94
  %v1389 = vpop.permute.xlu0 %1388
  %1390 = vrot.lane.b32.xlu0 %v192, 94
  %v1391 = vpop.permute.xlu0 %1390
  %1392 = vrot.lane.b32.xlu0 %v193, 94
  %v1393 = vpop.permute.xlu0 %1392
  %1394 = vrot.lane.b32.xlu0 %v194, 94
  %v1395 = vpop.permute.xlu0 %1394
  %1396 = vrot.lane.b32.xlu0 %v195, 94
  %v1397 = vpop.permute.xlu0 %1396
  %1398 = vrot.lane.b32.xlu0 %v196, 94
  %v1399 = vpop.permute.xlu0 %1398
  %1400 = vrot.lane.b32.xlu0 %v197, 94
  %v1401 = vpop.permute.xlu0 %1400
  %1402 = vrot.lane.b32.xlu0 %v198, 94
  %v1403 = vpop.permute.xlu0 %1402
  %1404 = vrot.lane.b32.xlu0 %v199, 94
  %v1405 = vpop.permute.xlu0 %1404
  %1406 = vrot.lane.b32.xlu0 %v200, 94
  %v1407 = vpop.permute.xlu0 %1406
  %1408 = vrot.lane.b32.xlu0 %v201, 94
  %v1409 = vpop.permute.xlu0 %1408
  %1410 = vrot.lane.b32.xlu0 %v202, 94
  %v1411 = vpop.permute.xlu0 %1410
  %1412 = vrot.lane.b32.xlu0 %v203, 94
  %v1413 = vpop.permute.xlu0 %1412
  %1414 = vrot.lane.b32.xlu0 %v204, 94
  %v1415 = vpop.permute.xlu0 %1414
  %1416 = vrot.lane.b32.xlu0 %v205, 94
  %v1417 = vpop.permute.xlu0 %1416
  %1418 = vrot.lane.b32.xlu0 %v206, 94
  %v1419 = vpop.permute.xlu0 %1418
  %1420 = vrot.lane.b32.xlu0 %v207, 94
  %v1421 = vpop.permute.xlu0 %1420
  %1422 = vrot.lane.b32.xlu0 %v208, 94
  %v1423 = vpop.permute.xlu0 %1422
  %1424 = vrot.lane.b32.xlu0 %v209, 94
  %v1425 = vpop.permute.xlu0 %1424
  %1426 = vrot.lane.b32.xlu0 %v210, 94
  %v1427 = vpop.permute.xlu0 %1426
  %vm1428 = vcmask 769024
  %v1429 = vsel %vm1428, %v1357, %v1359
  %v1430 = vsel %vm1428, %v1359, %v1361
  %v1431 = vsel %vm1428, %v1361, %v1363
  %v1432 = vsel %vm1428, %v1363, %v1365
  %v1433 = vsel %vm1428, %v1365, %v1367
  %v1434 = vsel %vm1428, %v1367, %v1369
  %v1435 = vsel %vm1428, %v1369, %v1371
  %v1436 = vsel %vm1428, %v1371, %v1373
  %v1437 = vsel %vm1428, %v1373, %v1375
  %v1438 = vsel %vm1428, %v1375, %v1377
  %v1439 = vsel %vm1428, %v1377, %v1379
  %v1440 = vsel %vm1428, %v1379, %v1381
  %v1441 = vsel %vm1428, %v1381, %v1383
  %v1442 = vsel %vm1428, %v1383, %v1385
  %v1443 = vsel %vm1428, %v1385, %v1387
  %v1444 = vsel %vm1428, %v1387, %v1389
  %v1445 = vsel %vm1428, %v1389, %v1391
  %v1446 = vsel %vm1428, %v1393, %v1395
  %v1447 = vsel %vm1428, %v1395, %v1397
  %v1448 = vsel %vm1428, %v1397, %v1399
  %v1449 = vsel %vm1428, %v1399, %v1401
  %v1450 = vsel %vm1428, %v1401, %v1403
  %v1451 = vsel %vm1428, %v1403, %v1405
  %v1452 = vsel %vm1428, %v1405, %v1407
  %v1453 = vsel %vm1428, %v1407, %v1409
  %v1454 = vsel %vm1428, %v1409, %v1411
  %v1455 = vsel %vm1428, %v1411, %v1413
  %v1456 = vsel %vm1428, %v1413, %v1415
  %v1457 = vsel %vm1428, %v1415, %v1417
  %v1458 = vsel %vm1428, %v1417, %v1419
  %v1459 = vsel %vm1428, %v1419, %v1421
  %v1460 = vsel %vm1428, %v1421, %v1423
  %v1461 = vsel %vm1428, %v1423, %v1425
  %v1462 = vsel %vm1428, %v1425, %v1427
  %v1500 = vsel %vm354, %v1355, 0
  %1502 = vmatpush.bf16.msra.mxu0 0
  %1503 = vmatpush.bf16.msra.mxu0 0
  %1504 = vmatpush.bf16.msra.mxu0 0
  %1505 = vmatpush.bf16.msra.mxu0 0
  %1506 = vmatpush.bf16.msra.mxu0 0
  %1507 = vmatpush.bf16.msra.mxu0 0
  %1508 = vmatpush.bf16.msra.mxu0 %v1446
  %1509 = vmatpush.bf16.msra.mxu0 %v1429
  %1510 = vmatmul.bf16.gmra.mxu0 %v1500
  %v1511 = vpop.f32.mrf.mxu0
  %v1512 = vadd.f32 0.0, %v1511
  %v1513 = vpop.f32.mrf.mxu0
  %v1514 = vadd.f32 0.0, %v1513
  %1515 = vdwg.mxu0
  %1516 = vmatpush.bf16.msra.mxu0 0
  %1517 = vmatpush.bf16.msra.mxu0 0
  %1518 = vmatpush.bf16.msra.mxu0 0
  %1519 = vmatpush.bf16.msra.mxu0 0
  %1520 = vmatpush.bf16.msra.mxu0 0
  %1521 = vmatpush.bf16.msra.mxu0 0
  %1522 = vmatpush.bf16.msra.mxu0 %v1447
  %1523 = vmatpush.bf16.msra.mxu0 %v1430
  %1524 = vmatmul.bf16.gmra.mxu0 %v1500
  %v1525 = vpop.f32.mrf.mxu0
  %v1526 = vadd.f32 0.0, %v1525
  %v1527 = vpop.f32.mrf.mxu0
  %v1528 = vadd.f32 0.0, %v1527
  %1529 = vdwg.mxu0
  %1530 = vmatpush.bf16.msra.mxu0 0
  %1531 = vmatpush.bf16.msra.mxu0 0
  %1532 = vmatpush.bf16.msra.mxu0 0
  %1533 = vmatpush.bf16.msra.mxu0 0
  %1534 = vmatpush.bf16.msra.mxu0 0
  %1535 = vmatpush.bf16.msra.mxu0 0
  %1536 = vmatpush.bf16.msra.mxu0 %v1448
  %1537 = vmatpush.bf16.msra.mxu0 %v1431
  %1538 = vmatmul.bf16.gmra.mxu0 %v1500
  %v1539 = vpop.f32.mrf.mxu0
  %v1540 = vadd.f32 0.0, %v1539
  %v1541 = vpop.f32.mrf.mxu0
  %v1542 = vadd.f32 0.0, %v1541
  %1543 = vdwg.mxu0
  %1544 = vmatpush.bf16.msra.mxu0 0
  %1545 = vmatpush.bf16.msra.mxu0 0
  %1546 = vmatpush.bf16.msra.mxu0 0
  %1547 = vmatpush.bf16.msra.mxu0 0
  %1548 = vmatpush.bf16.msra.mxu0 0
  %1549 = vmatpush.bf16.msra.mxu0 0
  %1550 = vmatpush.bf16.msra.mxu0 %v1449
  %1551 = vmatpush.bf16.msra.mxu0 %v1432
  %1552 = vmatmul.bf16.gmra.mxu0 %v1500
  %v1553 = vpop.f32.mrf.mxu0
  %v1554 = vadd.f32 0.0, %v1553
  %v1555 = vpop.f32.mrf.mxu0
  %v1556 = vadd.f32 0.0, %v1555
  %1557 = vdwg.mxu0
  %1558 = vmatpush.bf16.msra.mxu0 0
  %1559 = vmatpush.bf16.msra.mxu0 0
  %1560 = vmatpush.bf16.msra.mxu0 0
  %1561 = vmatpush.bf16.msra.mxu0 0
  %1562 = vmatpush.bf16.msra.mxu0 0
  %1563 = vmatpush.bf16.msra.mxu0 0
  %1564 = vmatpush.bf16.msra.mxu0 %v1450
  %1565 = vmatpush.bf16.msra.mxu0 %v1433
  %1566 = vmatmul.bf16.gmra.mxu0 %v1500
  %v1567 = vpop.f32.mrf.mxu0
  %v1568 = vadd.f32 0.0, %v1567
  %v1569 = vpop.f32.mrf.mxu0
  %v1570 = vadd.f32 0.0, %v1569
  %1571 = vdwg.mxu0
  %1572 = vmatpush.bf16.msra.mxu0 0
  %1573 = vmatpush.bf16.msra.mxu0 0
  %1574 = vmatpush.bf16.msra.mxu0 0
  %1575 = vmatpush.bf16.msra.mxu0 0
  %1576 = vmatpush.bf16.msra.mxu0 0
  %1577 = vmatpush.bf16.msra.mxu0 0
  %1578 = vmatpush.bf16.msra.mxu0 %v1451
  %1579 = vmatpush.bf16.msra.mxu0 %v1434
  %1580 = vmatmul.bf16.gmra.mxu0 %v1500
  %v1581 = vpop.f32.mrf.mxu0
  %v1582 = vadd.f32 0.0, %v1581
  %v1583 = vpop.f32.mrf.mxu0
  %v1584 = vadd.f32 0.0, %v1583
  %1585 = vdwg.mxu0
  %1586 = vmatpush.bf16.msra.mxu0 0
  %1587 = vmatpush.bf16.msra.mxu0 0
  %1588 = vmatpush.bf16.msra.mxu0 0
  %1589 = vmatpush.bf16.msra.mxu0 0
  %1590 = vmatpush.bf16.msra.mxu0 0
  %1591 = vmatpush.bf16.msra.mxu0 0
  %1592 = vmatpush.bf16.msra.mxu0 %v1452
  %1593 = vmatpush.bf16.msra.mxu0 %v1435
  %1594 = vmatmul.bf16.gmra.mxu0 %v1500
  %v1595 = vpop.f32.mrf.mxu0
  %v1596 = vadd.f32 0.0, %v1595
  %v1597 = vpop.f32.mrf.mxu0
  %v1598 = vadd.f32 0.0, %v1597
  %1599 = vdwg.mxu0
  %1600 = vmatpush.bf16.msra.mxu0 0
  %1601 = vmatpush.bf16.msra.mxu0 0
  %1602 = vmatpush.bf16.msra.mxu0 0
  %1603 = vmatpush.bf16.msra.mxu0 0
  %1604 = vmatpush.bf16.msra.mxu0 0
  %1605 = vmatpush.bf16.msra.mxu0 0
  %1606 = vmatpush.bf16.msra.mxu0 %v1453
  %1607 = vmatpush.bf16.msra.mxu0 %v1436
  %1608 = vmatmul.bf16.gmra.mxu0 %v1500
  %v1609 = vpop.f32.mrf.mxu0
  %v1610 = vadd.f32 0.0, %v1609
  %v1611 = vpop.f32.mrf.mxu0
  %v1612 = vadd.f32 0.0, %v1611
  %1613 = vdwg.mxu0
  %1614 = vmatpush.bf16.msra.mxu0 0
  %1615 = vmatpush.bf16.msra.mxu0 0
  %1616 = vmatpush.bf16.msra.mxu0 0
  %1617 = vmatpush.bf16.msra.mxu0 0
  %1618 = vmatpush.bf16.msra.mxu0 0
  %1619 = vmatpush.bf16.msra.mxu0 0
  %1620 = vmatpush.bf16.msra.mxu0 %v1454
  %1621 = vmatpush.bf16.msra.mxu0 %v1437
  %1622 = vmatmul.bf16.gmra.mxu0 %v1500
  %v1623 = vpop.f32.mrf.mxu0
  %v1624 = vadd.f32 0.0, %v1623
  %v1625 = vpop.f32.mrf.mxu0
  %v1626 = vadd.f32 0.0, %v1625
  %1627 = vdwg.mxu0
  %1628 = vmatpush.bf16.msra.mxu0 0
  %1629 = vmatpush.bf16.msra.mxu0 0
  %1630 = vmatpush.bf16.msra.mxu0 0
  %1631 = vmatpush.bf16.msra.mxu0 0
  %1632 = vmatpush.bf16.msra.mxu0 0
  %1633 = vmatpush.bf16.msra.mxu0 0
  %1634 = vmatpush.bf16.msra.mxu0 %v1455
  %1635 = vmatpush.bf16.msra.mxu0 %v1438
  %1636 = vmatmul.bf16.gmra.mxu0 %v1500
  %v1637 = vpop.f32.mrf.mxu0
  %v1638 = vadd.f32 0.0, %v1637
  %v1639 = vpop.f32.mrf.mxu0
  %v1640 = vadd.f32 0.0, %v1639
  %1641 = vdwg.mxu0
  %1642 = vmatpush.bf16.msra.mxu0 0
  %1643 = vmatpush.bf16.msra.mxu0 0
  %1644 = vmatpush.bf16.msra.mxu0 0
  %1645 = vmatpush.bf16.msra.mxu0 0
  %1646 = vmatpush.bf16.msra.mxu0 0
  %1647 = vmatpush.bf16.msra.mxu0 0
  %1648 = vmatpush.bf16.msra.mxu0 %v1456
  %1649 = vmatpush.bf16.msra.mxu0 %v1439
  %1650 = vmatmul.bf16.gmra.mxu0 %v1500
  %v1651 = vpop.f32.mrf.mxu0
  %v1652 = vadd.f32 0.0, %v1651
  %v1653 = vpop.f32.mrf.mxu0
  %v1654 = vadd.f32 0.0, %v1653
  %1655 = vdwg.mxu0
  %1656 = vmatpush.bf16.msra.mxu0 0
  %1657 = vmatpush.bf16.msra.mxu0 0
  %1658 = vmatpush.bf16.msra.mxu0 0
  %1659 = vmatpush.bf16.msra.mxu0 0
  %1660 = vmatpush.bf16.msra.mxu0 0
  %1661 = vmatpush.bf16.msra.mxu0 0
  %1662 = vmatpush.bf16.msra.mxu0 %v1457
  %1663 = vmatpush.bf16.msra.mxu0 %v1440
  %1664 = vmatmul.bf16.gmra.mxu0 %v1500
  %v1665 = vpop.f32.mrf.mxu0
  %v1666 = vadd.f32 0.0, %v1665
  %v1667 = vpop.f32.mrf.mxu0
  %v1668 = vadd.f32 0.0, %v1667
  %1669 = vdwg.mxu0
  %1670 = vmatpush.bf16.msra.mxu0 0
  %1671 = vmatpush.bf16.msra.mxu0 0
  %1672 = vmatpush.bf16.msra.mxu0 0
  %1673 = vmatpush.bf16.msra.mxu0 0
  %1674 = vmatpush.bf16.msra.mxu0 0
  %1675 = vmatpush.bf16.msra.mxu0 0
  %1676 = vmatpush.bf16.msra.mxu0 %v1458
  %1677 = vmatpush.bf16.msra.mxu0 %v1441
  %1678 = vmatmul.bf16.gmra.mxu0 %v1500
  %v1679 = vpop.f32.mrf.mxu0
  %v1680 = vadd.f32 0.0, %v1679
  %v1681 = vpop.f32.mrf.mxu0
  %v1682 = vadd.f32 0.0, %v1681
  %1683 = vdwg.mxu0
  %1684 = vmatpush.bf16.msra.mxu0 0
  %1685 = vmatpush.bf16.msra.mxu0 0
  %1686 = vmatpush.bf16.msra.mxu0 0
  %1687 = vmatpush.bf16.msra.mxu0 0
  %1688 = vmatpush.bf16.msra.mxu0 0
  %1689 = vmatpush.bf16.msra.mxu0 0
  %1690 = vmatpush.bf16.msra.mxu0 %v1459
  %1691 = vmatpush.bf16.msra.mxu0 %v1442
  %1692 = vmatmul.bf16.gmra.mxu0 %v1500
  %v1693 = vpop.f32.mrf.mxu0
  %v1694 = vadd.f32 0.0, %v1693
  %v1695 = vpop.f32.mrf.mxu0
  %v1696 = vadd.f32 0.0, %v1695
  %1697 = vdwg.mxu0
  %1698 = vmatpush.bf16.msra.mxu0 0
  %1699 = vmatpush.bf16.msra.mxu0 0
  %1700 = vmatpush.bf16.msra.mxu0 0
  %1701 = vmatpush.bf16.msra.mxu0 0
  %1702 = vmatpush.bf16.msra.mxu0 0
  %1703 = vmatpush.bf16.msra.mxu0 0
  %1704 = vmatpush.bf16.msra.mxu0 %v1460
  %1705 = vmatpush.bf16.msra.mxu0 %v1443
  %1706 = vmatmul.bf16.gmra.mxu0 %v1500
  %v1707 = vpop.f32.mrf.mxu0
  %v1708 = vadd.f32 0.0, %v1707
  %v1709 = vpop.f32.mrf.mxu0
  %v1710 = vadd.f32 0.0, %v1709
  %1711 = vdwg.mxu0
  %1712 = vmatpush.bf16.msra.mxu0 0
  %1713 = vmatpush.bf16.msra.mxu0 0
  %1714 = vmatpush.bf16.msra.mxu0 0
  %1715 = vmatpush.bf16.msra.mxu0 0
  %1716 = vmatpush.bf16.msra.mxu0 0
  %1717 = vmatpush.bf16.msra.mxu0 0
  %1718 = vmatpush.bf16.msra.mxu0 %v1461
  %1719 = vmatpush.bf16.msra.mxu0 %v1444
  %1720 = vmatmul.bf16.gmra.mxu0 %v1500
  %v1721 = vpop.f32.mrf.mxu0
  %v1722 = vadd.f32 0.0, %v1721
  %v1723 = vpop.f32.mrf.mxu0
  %v1724 = vadd.f32 0.0, %v1723
  %1725 = vdwg.mxu0
  %1726 = vmatpush.bf16.msra.mxu0 0
  %1727 = vmatpush.bf16.msra.mxu0 0
  %1728 = vmatpush.bf16.msra.mxu0 0
  %1729 = vmatpush.bf16.msra.mxu0 0
  %1730 = vmatpush.bf16.msra.mxu0 0
  %1731 = vmatpush.bf16.msra.mxu0 0
  %1732 = vmatpush.bf16.msra.mxu0 %v1462
  %1733 = vmatpush.bf16.msra.mxu0 %v1445
  %1734 = vmatmul.bf16.gmra.mxu0 %v1500
  %v1735 = vpop.f32.mrf.mxu0
  %v1736 = vadd.f32 0.0, %v1735
  %v1737 = vpop.f32.mrf.mxu0
  %v1738 = vadd.f32 0.0, %v1737
  %1739 = vdwg.mxu0
  %1740 = vmatpush.bf16.msra.mxu0 0
  %1741 = vmatpush.bf16.msra.mxu0 0
  %1742 = vmatpush.bf16.msra.mxu0 0
  %1743 = vmatpush.bf16.msra.mxu0 0
  %1744 = vmatpush.bf16.msra.mxu0 0
  %1745 = vmatpush.bf16.msra.mxu0 0
  %1746 = vmatpush.bf16.msra.mxu0 %v1427
  %1747 = vmatpush.bf16.msra.mxu0 %v1391
  %1748 = vmatmul.bf16.gmra.mxu0 %v1500
  %v1749 = vpop.f32.mrf.mxu0
  %v1750 = vadd.f32 0.0, %v1749
  %v1751 = vpop.f32.mrf.mxu0
  %v1752 = vadd.f32 0.0, %v1751
  %1753 = vdwg.mxu0
  %v1754 = vadd.f32 %v1312, %v1512
  %v1755 = vadd.f32 %v1313, %v1526
  %v1756 = vadd.f32 %v1314, %v1540
  %v1757 = vadd.f32 %v1315, %v1554
  %v1758 = vadd.f32 %v1316, %v1568
  %v1759 = vadd.f32 %v1317, %v1582
  %v1760 = vadd.f32 %v1318, %v1596
  %v1761 = vadd.f32 %v1319, %v1610
  %v1762 = vadd.f32 %v1320, %v1624
  %v1763 = vadd.f32 %v1321, %v1638
  %v1764 = vadd.f32 %v1322, %v1652
  %v1765 = vadd.f32 %v1323, %v1666
  %v1766 = vadd.f32 %v1324, %v1680
  %v1767 = vadd.f32 %v1325, %v1694
  %v1768 = vadd.f32 %v1326, %v1708
  %v1769 = vadd.f32 %v1327, %v1722
  %v1770 = vadd.f32 %v1328, %v1736
  %v1771 = vadd.f32 %v1329, %v1750
  %v1772 = vadd.f32 %v1330, %v1514
  %v1773 = vadd.f32 %v1331, %v1528
  %v1774 = vadd.f32 %v1332, %v1542
  %v1775 = vadd.f32 %v1333, %v1556
  %v1776 = vadd.f32 %v1334, %v1570
  %v1777 = vadd.f32 %v1335, %v1584
  %v1778 = vadd.f32 %v1336, %v1598
  %v1779 = vadd.f32 %v1337, %v1612
  %v1780 = vadd.f32 %v1338, %v1626
  %v1781 = vadd.f32 %v1339, %v1640
  %v1782 = vadd.f32 %v1340, %v1654
  %v1783 = vadd.f32 %v1341, %v1668
  %v1784 = vadd.f32 %v1342, %v1682
  %v1785 = vadd.f32 %v1343, %v1696
  %v1786 = vadd.f32 %v1344, %v1710
  %v1787 = vadd.f32 %v1345, %v1724
  %v1788 = vadd.f32 %v1346, %v1738
  %v1789 = vadd.f32 %v1347, %v1752
  %v1790 = vld [vmem:[%s2] sm:$0xff]
  %v1791 = vld [vmem:[%s2 + $0x8] sm:$0xff]
  %v1792 = vld [vmem:[%s3] sm:$0xff]
  %v1793 = vld [vmem:[%s3 + $0x8] sm:$0xff]
  %v1794 = vld [vmem:[%s4] sm:$0xff]
  %v1795 = vld [vmem:[%s4 + $0x8] sm:$0xff]
  %v1796 = vld [vmem:[%s4 + $0x10] sm:$0x3]
  %v1800 = vperm.slane %v1794, 0
  %v1801 = vperm.slane %v1794, 1
  %v1802 = vperm.slane %v1794, 2
  %v1803 = vperm.slane %v1794, 3
  %v1804 = vperm.slane %v1794, 4
  %v1805 = vperm.slane %v1794, 5
  %v1806 = vperm.slane %v1794, 6
  %v1807 = vperm.slane %v1794, 7
  %v1808 = vperm.slane %v1795, 0
  %v1809 = vperm.slane %v1795, 1
  %v1810 = vperm.slane %v1795, 2
  %v1811 = vperm.slane %v1795, 3
  %v1812 = vperm.slane %v1795, 4
  %v1813 = vperm.slane %v1795, 5
  %v1814 = vperm.slane %v1795, 6
  %v1815 = vperm.slane %v1795, 7
  %v1816 = vperm.slane %v1796, 0
  %v1817 = vperm.slane %v1796, 1
  %v1836 = vmul.f32 %v1754, %v1800
  %v1837 = vmul.f32 %v1755, %v1801
  %v1838 = vmul.f32 %v1756, %v1802
  %v1839 = vmul.f32 %v1757, %v1803
  %v1840 = vmul.f32 %v1758, %v1804
  %v1841 = vmul.f32 %v1759, %v1805
  %v1842 = vmul.f32 %v1760, %v1806
  %v1843 = vmul.f32 %v1761, %v1807
  %v1844 = vmul.f32 %v1762, %v1808
  %v1845 = vmul.f32 %v1763, %v1809
  %v1846 = vmul.f32 %v1764, %v1810
  %v1847 = vmul.f32 %v1765, %v1811
  %v1848 = vmul.f32 %v1766, %v1812
  %v1849 = vmul.f32 %v1767, %v1813
  %v1850 = vmul.f32 %v1768, %v1814
  %v1851 = vmul.f32 %v1769, %v1815
  %v1852 = vmul.f32 %v1770, %v1816
  %v1853 = vmul.f32 %v1771, %v1817
  %v1854 = vmul.f32 %v1772, %v1800
  %v1855 = vmul.f32 %v1773, %v1801
  %v1856 = vmul.f32 %v1774, %v1802
  %v1857 = vmul.f32 %v1775, %v1803
  %v1858 = vmul.f32 %v1776, %v1804
  %v1859 = vmul.f32 %v1777, %v1805
  %v1860 = vmul.f32 %v1778, %v1806
  %v1861 = vmul.f32 %v1779, %v1807
  %v1862 = vmul.f32 %v1780, %v1808
  %v1863 = vmul.f32 %v1781, %v1809
  %v1864 = vmul.f32 %v1782, %v1810
  %v1865 = vmul.f32 %v1783, %v1811
  %v1866 = vmul.f32 %v1784, %v1812
  %v1867 = vmul.f32 %v1785, %v1813
  %v1868 = vmul.f32 %v1786, %v1814
  %v1869 = vmul.f32 %v1787, %v1815
  %v1870 = vmul.f32 %v1788, %v1816
  %v1871 = vmul.f32 %v1789, %v1817
  %v1872 = vadd.f32 %v1836, %v1837
  %v1873 = vadd.f32 %v1872, %v1838
  %v1874 = vadd.f32 %v1873, %v1839
  %v1875 = vadd.f32 %v1874, %v1840
  %v1876 = vadd.f32 %v1875, %v1841
  %v1877 = vadd.f32 %v1876, %v1842
  %v1878 = vadd.f32 %v1877, %v1843
  %v1879 = vadd.f32 %v1878, %v1844
  %v1880 = vadd.f32 %v1879, %v1845
  %v1881 = vadd.f32 %v1880, %v1846
  %v1882 = vadd.f32 %v1881, %v1847
  %v1883 = vadd.f32 %v1882, %v1848
  %v1884 = vadd.f32 %v1883, %v1849
  %v1885 = vadd.f32 %v1884, %v1850
  %v1886 = vadd.f32 %v1885, %v1851
  %v1887 = vadd.f32 %v1886, %v1852
  %vm1888 = vcmask 15360
  %v1889 = vsel %vm1888, %v1853, 0.0
  %v1890 = vadd.f32 %v1887, %v1889
  %1891 = vadd.xlane.f32.xlu0 %v1890
  %v1892 = vpop.xlane.xlu0 %1891
  %v1893 = vadd.f32 %v1854, %v1855
  %v1894 = vadd.f32 %v1893, %v1856
  %v1895 = vadd.f32 %v1894, %v1857
  %v1896 = vadd.f32 %v1895, %v1858
  %v1897 = vadd.f32 %v1896, %v1859
  %v1898 = vadd.f32 %v1897, %v1860
  %v1899 = vadd.f32 %v1898, %v1861
  %v1900 = vadd.f32 %v1899, %v1862
  %v1901 = vadd.f32 %v1900, %v1863
  %v1902 = vadd.f32 %v1901, %v1864
  %v1903 = vadd.f32 %v1902, %v1865
  %v1904 = vadd.f32 %v1903, %v1866
  %v1905 = vadd.f32 %v1904, %v1867
  %v1906 = vadd.f32 %v1905, %v1868
  %v1907 = vadd.f32 %v1906, %v1869
  %v1908 = vadd.f32 %v1907, %v1870
  %v1909 = vsel %vm1888, %v1871, 0.0
  %v1910 = vadd.f32 %v1908, %v1909
  %1911 = vadd.xlane.f32.xlu0 %v1910
  %v1912 = vpop.xlane.xlu0 %1911
  %v1913 = vmul.f32 %v1892, 0.00048828125
  %v1914 = vmul.f32 %v1912, 0.00048828125
  %v1915 = vmul.f32 %v1754, %v1754
  %v1916 = vmul.f32 %v1755, %v1755
  %v1917 = vmul.f32 %v1756, %v1756
  %v1918 = vmul.f32 %v1757, %v1757
  %v1919 = vmul.f32 %v1758, %v1758
  %v1920 = vmul.f32 %v1759, %v1759
  %v1921 = vmul.f32 %v1760, %v1760
  %v1922 = vmul.f32 %v1761, %v1761
  %v1923 = vmul.f32 %v1762, %v1762
  %v1924 = vmul.f32 %v1763, %v1763
  %v1925 = vmul.f32 %v1764, %v1764
  %v1926 = vmul.f32 %v1765, %v1765
  %v1927 = vmul.f32 %v1766, %v1766
  %v1928 = vmul.f32 %v1767, %v1767
  %v1929 = vmul.f32 %v1768, %v1768
  %v1930 = vmul.f32 %v1769, %v1769
  %v1931 = vmul.f32 %v1770, %v1770
  %v1932 = vmul.f32 %v1771, %v1771
  %v1933 = vmul.f32 %v1772, %v1772
  %v1934 = vmul.f32 %v1773, %v1773
  %v1935 = vmul.f32 %v1774, %v1774
  %v1936 = vmul.f32 %v1775, %v1775
  %v1937 = vmul.f32 %v1776, %v1776
  %v1938 = vmul.f32 %v1777, %v1777
  %v1939 = vmul.f32 %v1778, %v1778
  %v1940 = vmul.f32 %v1779, %v1779
  %v1941 = vmul.f32 %v1780, %v1780
  %v1942 = vmul.f32 %v1781, %v1781
  %v1943 = vmul.f32 %v1782, %v1782
  %v1944 = vmul.f32 %v1783, %v1783
  %v1945 = vmul.f32 %v1784, %v1784
  %v1946 = vmul.f32 %v1785, %v1785
  %v1947 = vmul.f32 %v1786, %v1786
  %v1948 = vmul.f32 %v1787, %v1787
  %v1949 = vmul.f32 %v1788, %v1788
  %v1950 = vmul.f32 %v1789, %v1789
  %v1951 = vmul.f32 %v1915, %v1800
  %v1952 = vmul.f32 %v1916, %v1801
  %v1953 = vmul.f32 %v1917, %v1802
  %v1954 = vmul.f32 %v1918, %v1803
  %v1955 = vmul.f32 %v1919, %v1804
  %v1956 = vmul.f32 %v1920, %v1805
  %v1957 = vmul.f32 %v1921, %v1806
  %v1958 = vmul.f32 %v1922, %v1807
  %v1959 = vmul.f32 %v1923, %v1808
  %v1960 = vmul.f32 %v1924, %v1809
  %v1961 = vmul.f32 %v1925, %v1810
  %v1962 = vmul.f32 %v1926, %v1811
  %v1963 = vmul.f32 %v1927, %v1812
  %v1964 = vmul.f32 %v1928, %v1813
  %v1965 = vmul.f32 %v1929, %v1814
  %v1966 = vmul.f32 %v1930, %v1815
  %v1967 = vmul.f32 %v1931, %v1816
  %v1968 = vmul.f32 %v1932, %v1817
  %v1969 = vmul.f32 %v1933, %v1800
  %v1970 = vmul.f32 %v1934, %v1801
  %v1971 = vmul.f32 %v1935, %v1802
  %v1972 = vmul.f32 %v1936, %v1803
  %v1973 = vmul.f32 %v1937, %v1804
  %v1974 = vmul.f32 %v1938, %v1805
  %v1975 = vmul.f32 %v1939, %v1806
  %v1976 = vmul.f32 %v1940, %v1807
  %v1977 = vmul.f32 %v1941, %v1808
  %v1978 = vmul.f32 %v1942, %v1809
  %v1979 = vmul.f32 %v1943, %v1810
  %v1980 = vmul.f32 %v1944, %v1811
  %v1981 = vmul.f32 %v1945, %v1812
  %v1982 = vmul.f32 %v1946, %v1813
  %v1983 = vmul.f32 %v1947, %v1814
  %v1984 = vmul.f32 %v1948, %v1815
  %v1985 = vmul.f32 %v1949, %v1816
  %v1986 = vmul.f32 %v1950, %v1817
  %v1987 = vadd.f32 %v1951, %v1952
  %v1988 = vadd.f32 %v1987, %v1953
  %v1989 = vadd.f32 %v1988, %v1954
  %v1990 = vadd.f32 %v1989, %v1955
  %v1991 = vadd.f32 %v1990, %v1956
  %v1992 = vadd.f32 %v1991, %v1957
  %v1993 = vadd.f32 %v1992, %v1958
  %v1994 = vadd.f32 %v1993, %v1959
  %v1995 = vadd.f32 %v1994, %v1960
  %v1996 = vadd.f32 %v1995, %v1961
  %v1997 = vadd.f32 %v1996, %v1962
  %v1998 = vadd.f32 %v1997, %v1963
  %v1999 = vadd.f32 %v1998, %v1964
  %v2000 = vadd.f32 %v1999, %v1965
  %v2001 = vadd.f32 %v2000, %v1966
  %v2002 = vadd.f32 %v2001, %v1967
  %v2003 = vsel %vm1888, %v1968, 0.0
  %v2004 = vadd.f32 %v2002, %v2003
  %2005 = vadd.xlane.f32.xlu0 %v2004
  %v2006 = vpop.xlane.xlu0 %2005
  %v2007 = vadd.f32 %v1969, %v1970
  %v2008 = vadd.f32 %v2007, %v1971
  %v2009 = vadd.f32 %v2008, %v1972
  %v2010 = vadd.f32 %v2009, %v1973
  %v2011 = vadd.f32 %v2010, %v1974
  %v2012 = vadd.f32 %v2011, %v1975
  %v2013 = vadd.f32 %v2012, %v1976
  %v2014 = vadd.f32 %v2013, %v1977
  %v2015 = vadd.f32 %v2014, %v1978
  %v2016 = vadd.f32 %v2015, %v1979
  %v2017 = vadd.f32 %v2016, %v1980
  %v2018 = vadd.f32 %v2017, %v1981
  %v2019 = vadd.f32 %v2018, %v1982
  %v2020 = vadd.f32 %v2019, %v1983
  %v2021 = vadd.f32 %v2020, %v1984
  %v2022 = vadd.f32 %v2021, %v1985
  %v2023 = vsel %vm1888, %v1986, 0.0
  %v2024 = vadd.f32 %v2022, %v2023
  %2025 = vadd.xlane.f32.xlu0 %v2024
  %v2026 = vpop.xlane.xlu0 %2025
  %v2027 = vmul.f32 %v2006, 0.00048828125
  %v2028 = vmul.f32 %v2026, 0.00048828125
  %v2029 = vmul.f32 %v1913, %v1913
  %v2030 = vmul.f32 %v1914, %v1914
  %v2031 = vsub.f32 %v2027, %v2029
  %v2032 = vsub.f32 %v2028, %v2030
  %v2033 = vmax.f32 %v2031, 0.0
  %v2034 = vmax.f32 %v2032, 0.0
  %v2035 = vadd.f32 %v2033, 1e-05
  %v2036 = vadd.f32 %v2034, 1e-05
  %v2037 = vrsqrt.pop %v2035
  %v2038 = vmul.f32 %v2037, %v2035
  %v2039 = vmul.f32 %v2038, %v2037
  %v2040 = vmul.f32 0.5, %v2039
  %v2041 = vsub.f32 1.5, %v2040
  %v2042 = vmul.f32 %v2037, %v2041
  %vm2043 = vweird.f32 %v2035
  %vm2044 = vweird.f32 %v2037
  %vm2045 = vmor %vm2043, %vm2044
  %v2046 = vsel %vm2045, %v2037, %v2042
  %v2047 = vrsqrt.pop %v2036
  %v2048 = vmul.f32 %v2047, %v2036
  %v2049 = vmul.f32 %v2048, %v2047
  %v2050 = vmul.f32 0.5, %v2049
  %v2051 = vsub.f32 1.5, %v2050
  %v2052 = vmul.f32 %v2047, %v2051
  %vm2053 = vweird.f32 %v2036
  %vm2054 = vweird.f32 %v2047
  %vm2055 = vmor %vm2053, %vm2054
  %v2056 = vsel %vm2055, %v2047, %v2052
  %v2057 = vmul.f32 %v1790, %v2046
  %v2058 = vmul.f32 %v1791, %v2056
  %v2059 = vmul.f32 %v1913, %v2057
  %v2060 = vmul.f32 %v1914, %v2058
  %v2061 = vsub.f32 %v1792, %v2059
  %v2062 = vsub.f32 %v1793, %v2060
  %2064 = vset.pattern.permute.xlu0 0
  %2065 = vperm.xlu0 %2064, %v2057
  %v2066 = vpop.permute.xlu0 %2065
  %2069 = vset.pattern.permute.xlu0 0
  %2070 = vperm.xlu0 %2069, %v2058
  %v2071 = vpop.permute.xlu0 %2070
  %v2073 = vmul.f32 %v1754, %v2066
  %v2074 = vmul.f32 %v1755, %v2066
  %v2075 = vmul.f32 %v1756, %v2066
  %v2076 = vmul.f32 %v1757, %v2066
  %v2077 = vmul.f32 %v1758, %v2066
  %v2078 = vmul.f32 %v1759, %v2066
  %v2079 = vmul.f32 %v1760, %v2066
  %v2080 = vmul.f32 %v1761, %v2066
  %v2081 = vmul.f32 %v1762, %v2066
  %v2082 = vmul.f32 %v1763, %v2066
  %v2083 = vmul.f32 %v1764, %v2066
  %v2084 = vmul.f32 %v1765, %v2066
  %v2085 = vmul.f32 %v1766, %v2066
  %v2086 = vmul.f32 %v1767, %v2066
  %v2087 = vmul.f32 %v1768, %v2066
  %v2088 = vmul.f32 %v1769, %v2066
  %v2089 = vmul.f32 %v1770, %v2066
  %v2090 = vmul.f32 %v1771, %v2066
  %v2091 = vmul.f32 %v1772, %v2071
  %v2092 = vmul.f32 %v1773, %v2071
  %v2093 = vmul.f32 %v1774, %v2071
  %v2094 = vmul.f32 %v1775, %v2071
  %v2095 = vmul.f32 %v1776, %v2071
  %v2096 = vmul.f32 %v1777, %v2071
  %v2097 = vmul.f32 %v1778, %v2071
  %v2098 = vmul.f32 %v1779, %v2071
  %v2099 = vmul.f32 %v1780, %v2071
  %v2100 = vmul.f32 %v1781, %v2071
  %v2101 = vmul.f32 %v1782, %v2071
  %v2102 = vmul.f32 %v1783, %v2071
  %v2103 = vmul.f32 %v1784, %v2071
  %v2104 = vmul.f32 %v1785, %v2071
  %v2105 = vmul.f32 %v1786, %v2071
  %v2106 = vmul.f32 %v1787, %v2071
  %v2107 = vmul.f32 %v1788, %v2071
  %v2108 = vmul.f32 %v1789, %v2071
  %2110 = vset.pattern.permute.xlu0 0
  %2111 = vperm.xlu0 %2110, %v2061
  %v2112 = vpop.permute.xlu0 %2111
  %2115 = vset.pattern.permute.xlu0 0
  %2116 = vperm.xlu0 %2115, %v2062
  %v2117 = vpop.permute.xlu0 %2116
  %v2119 = vadd.f32 %v2073, %v2112
  %v2120 = vadd.f32 %v2074, %v2112
  %v2121 = vadd.f32 %v2075, %v2112
  %v2122 = vadd.f32 %v2076, %v2112
  %v2123 = vadd.f32 %v2077, %v2112
  %v2124 = vadd.f32 %v2078, %v2112
  %v2125 = vadd.f32 %v2079, %v2112
  %v2126 = vadd.f32 %v2080, %v2112
  %v2127 = vadd.f32 %v2081, %v2112
  %v2128 = vadd.f32 %v2082, %v2112
  %v2129 = vadd.f32 %v2083, %v2112
  %v2130 = vadd.f32 %v2084, %v2112
  %v2131 = vadd.f32 %v2085, %v2112
  %v2132 = vadd.f32 %v2086, %v2112
  %v2133 = vadd.f32 %v2087, %v2112
  %v2134 = vadd.f32 %v2088, %v2112
  %v2135 = vadd.f32 %v2089, %v2112
  %v2136 = vadd.f32 %v2090, %v2112
  %v2137 = vadd.f32 %v2091, %v2117
  %v2138 = vadd.f32 %v2092, %v2117
  %v2139 = vadd.f32 %v2093, %v2117
  %v2140 = vadd.f32 %v2094, %v2117
  %v2141 = vadd.f32 %v2095, %v2117
  %v2142 = vadd.f32 %v2096, %v2117
  %v2143 = vadd.f32 %v2097, %v2117
  %v2144 = vadd.f32 %v2098, %v2117
  %v2145 = vadd.f32 %v2099, %v2117
  %v2146 = vadd.f32 %v2100, %v2117
  %v2147 = vadd.f32 %v2101, %v2117
  %v2148 = vadd.f32 %v2102, %v2117
  %v2149 = vadd.f32 %v2103, %v2117
  %v2150 = vadd.f32 %v2104, %v2117
  %v2151 = vadd.f32 %v2105, %v2117
  %v2152 = vadd.f32 %v2106, %v2117
  %v2153 = vadd.f32 %v2107, %v2117
  %v2154 = vadd.f32 %v2108, %v2117
  %v2155 = vmul.f32 %v2119, 0.2
  %v2156 = vmul.f32 %v2120, 0.2
  %v2157 = vmul.f32 %v2121, 0.2
  %v2158 = vmul.f32 %v2122, 0.2
  %v2159 = vmul.f32 %v2123, 0.2
  %v2160 = vmul.f32 %v2124, 0.2
  %v2161 = vmul.f32 %v2125, 0.2
  %v2162 = vmul.f32 %v2126, 0.2
  %v2163 = vmul.f32 %v2127, 0.2
  %v2164 = vmul.f32 %v2128, 0.2
  %v2165 = vmul.f32 %v2129, 0.2
  %v2166 = vmul.f32 %v2130, 0.2
  %v2167 = vmul.f32 %v2131, 0.2
  %v2168 = vmul.f32 %v2132, 0.2
  %v2169 = vmul.f32 %v2133, 0.2
  %v2170 = vmul.f32 %v2134, 0.2
  %v2171 = vmul.f32 %v2135, 0.2
  %v2172 = vmul.f32 %v2136, 0.2
  %v2173 = vmul.f32 %v2137, 0.2
  %v2174 = vmul.f32 %v2138, 0.2
  %v2175 = vmul.f32 %v2139, 0.2
  %v2176 = vmul.f32 %v2140, 0.2
  %v2177 = vmul.f32 %v2141, 0.2
  %v2178 = vmul.f32 %v2142, 0.2
  %v2179 = vmul.f32 %v2143, 0.2
  %v2180 = vmul.f32 %v2144, 0.2
  %v2181 = vmul.f32 %v2145, 0.2
  %v2182 = vmul.f32 %v2146, 0.2
  %v2183 = vmul.f32 %v2147, 0.2
  %v2184 = vmul.f32 %v2148, 0.2
  %v2185 = vmul.f32 %v2149, 0.2
  %v2186 = vmul.f32 %v2150, 0.2
  %v2187 = vmul.f32 %v2151, 0.2
  %v2188 = vmul.f32 %v2152, 0.2
  %v2189 = vmul.f32 %v2153, 0.2
  %v2190 = vmul.f32 %v2154, 0.2
  %v2191 = vmax.f32 %v2119, %v2155
  %v2192 = vmax.f32 %v2120, %v2156
  %v2193 = vmax.f32 %v2121, %v2157
  %v2194 = vmax.f32 %v2122, %v2158
  %v2195 = vmax.f32 %v2123, %v2159
  %v2196 = vmax.f32 %v2124, %v2160
  %v2197 = vmax.f32 %v2125, %v2161
  %v2198 = vmax.f32 %v2126, %v2162
  %v2199 = vmax.f32 %v2127, %v2163
  %v2200 = vmax.f32 %v2128, %v2164
  %v2201 = vmax.f32 %v2129, %v2165
  %v2202 = vmax.f32 %v2130, %v2166
  %v2203 = vmax.f32 %v2131, %v2167
  %v2204 = vmax.f32 %v2132, %v2168
  %v2205 = vmax.f32 %v2133, %v2169
  %v2206 = vmax.f32 %v2134, %v2170
  %v2207 = vmax.f32 %v2135, %v2171
  %v2208 = vmax.f32 %v2136, %v2172
  %v2209 = vmax.f32 %v2137, %v2173
  %v2210 = vmax.f32 %v2138, %v2174
  %v2211 = vmax.f32 %v2139, %v2175
  %v2212 = vmax.f32 %v2140, %v2176
  %v2213 = vmax.f32 %v2141, %v2177
  %v2214 = vmax.f32 %v2142, %v2178
  %v2215 = vmax.f32 %v2143, %v2179
  %v2216 = vmax.f32 %v2144, %v2180
  %v2217 = vmax.f32 %v2145, %v2181
  %v2218 = vmax.f32 %v2146, %v2182
  %v2219 = vmax.f32 %v2147, %v2183
  %v2220 = vmax.f32 %v2148, %v2184
  %v2221 = vmax.f32 %v2149, %v2185
  %v2222 = vmax.f32 %v2150, %v2186
  %v2223 = vmax.f32 %v2151, %v2187
  %v2224 = vmax.f32 %v2152, %v2188
  %v2225 = vmax.f32 %v2153, %v2189
  %v2226 = vmax.f32 %v2154, %v2190
  %v2227 = vpack.c.bf16 %v2192, %v2191
  %v2228 = vpack.c.bf16 %v2194, %v2193
  %v2229 = vpack.c.bf16 %v2196, %v2195
  %v2230 = vpack.c.bf16 %v2198, %v2197
  %v2231 = vpack.c.bf16 %v2200, %v2199
  %v2232 = vpack.c.bf16 %v2202, %v2201
  %v2233 = vpack.c.bf16 %v2204, %v2203
  %v2234 = vpack.c.bf16 %v2206, %v2205
  %v2235 = vpack.c.bf16 %v2208, %v2207
  %v2236 = vpack.c.bf16 %v2210, %v2209
  %v2237 = vpack.c.bf16 %v2212, %v2211
  %v2238 = vpack.c.bf16 %v2214, %v2213
  %v2239 = vpack.c.bf16 %v2216, %v2215
  %v2240 = vpack.c.bf16 %v2218, %v2217
  %v2241 = vpack.c.bf16 %v2220, %v2219
  %v2242 = vpack.c.bf16 %v2222, %v2221
  %v2243 = vpack.c.bf16 %v2224, %v2223
  %v2244 = vpack.c.bf16 %v2226, %v2225
  %2245 = vst [vmem:[%s5] sm:$0xff] %v2227
  %2246 = vst [vmem:[%s5 + $0x8] sm:$0xff] %v2228
  %2247 = vst [vmem:[%s5 + $0x10] sm:$0xff] %v2229
  %2248 = vst [vmem:[%s5 + $0x18] sm:$0xff] %v2230
  %2249 = vst [vmem:[%s5 + $0x20] sm:$0xff] %v2231
  %2250 = vst [vmem:[%s5 + $0x28] sm:$0xff] %v2232
  %2251 = vst [vmem:[%s5 + $0x30] sm:$0xff] %v2233
  %2252 = vst [vmem:[%s5 + $0x38] sm:$0xff] %v2234
  %vm2253 = vcmask 1043456
  %vm2254 = vcmask 15364
  %vm2255 = vmor %vm2254, %vm2253
  %2256 = vst.msk [vmem:[%s5 + $0x40] sm:$0xff] %vm2255, %v2235
  %2257 = vst [vmem:[%s5 + $0x48] sm:$0xff] %v2236
  %2258 = vst [vmem:[%s5 + $0x50] sm:$0xff] %v2237
  %2259 = vst [vmem:[%s5 + $0x58] sm:$0xff] %v2238
  %2260 = vst [vmem:[%s5 + $0x60] sm:$0xff] %v2239
  %2261 = vst [vmem:[%s5 + $0x68] sm:$0xff] %v2240
  %2262 = vst [vmem:[%s5 + $0x70] sm:$0xff] %v2241
  %2263 = vst [vmem:[%s5 + $0x78] sm:$0xff] %v2242
  %2264 = vst [vmem:[%s5 + $0x80] sm:$0xff] %v2243
  %2265 = vst.msk [vmem:[%s5 + $0x88] sm:$0xff] %vm2255, %v2244
  // Predicated region
  $region22: #{critic_forward.6} parent=0 // pred_check
    _
  $region23: #{critic_forward.6} parent=0 // pred_check_branch
    %2267 = sbr.rel (0) target = $region25
  $region24: #{critic_forward.6} parent=0 // pred_region
    _
  $region25: #{critic_forward.6} parent=0 // pred_fallthru
    _
  // Predicated region
  $region26: #{critic_forward.6} parent=0 // pred_check
    _
  $region27: #{critic_forward.6} parent=0 // pred_check_branch
    %2269 = sbr.rel (0) target = $region29
  $region28: #{critic_forward.6} parent=0 // pred_region
    _
  $region29: #{critic_forward.6} parent=0 // pred_fallthru
    _

// kernel: critic_forward.7
$region0: #{critic_forward.7}
  #allocation0 [shape = 'u32[]', space=smem, size = 0x4, offset = 0x4, fixed_abs, tag = 'smem constant byte address 0x4 - core index']
  #allocation1 [shape = 'u32[72,128]{1,0:T(1,128)}', space=vmem, size = 0x9000, scoped, tag = 'internal scratch']
  %s0 = inlined_call_operand.vmem [shape: bf16[64,596], index: 0, kind: input, shape index: {}]
  %s1 = inlined_call_operand.vmem [shape: bf16[4,32,64], index: 1, kind: input, shape index: {}]
  %s2 = inlined_call_operand.vmem [shape: f32[32,1], index: 2, kind: input, shape index: {}]
  %s3 = inlined_call_operand.vmem [shape: f32[32,1], index: 3, kind: input, shape index: {}]
  %s4 = inlined_call_operand.vmem [shape: f32[1,578], index: 4, kind: input, shape index: {}]
  %s5 = inlined_call_operand.vmem [shape: bf16[32,578], index: 5, kind: output, shape index: {}]
  %s6 = sld [smem:[#allocation0]]
  $region30: #{critic_forward.7} parent=0
    _
  %s8 = ssub.s32 1, %s6
  %s9 = scalar_select 0, %s8, %s6
  // Predicated region
  $region2: #{critic_forward.7} parent=0 // pred_check
    _
  $region3: #{critic_forward.7} parent=0 // pred_check_branch
    %11 = sbr.rel (0) target = $region5
  $region4: #{critic_forward.7} parent=0 // pred_region
    _
  $region5: #{critic_forward.7} parent=0 // pred_fallthru
    _
  // Predicated region
  $region6: #{critic_forward.7} parent=0 // pred_check
    _
  $region7: #{critic_forward.7} parent=0 // pred_check_branch
    %13 = sbr.rel (0) target = $region9
  $region8: #{critic_forward.7} parent=0 // pred_region
    _
  $region9: #{critic_forward.7} parent=0 // pred_fallthru
    _
  // Predicated region
  $region10: #{critic_forward.7} parent=0 // pred_check
    _
  $region11: #{critic_forward.7} parent=0 // pred_check_branch
    %15 = sbr.rel (0) target = $region13
  $region12: #{critic_forward.7} parent=0 // pred_region
    _
  $region13: #{critic_forward.7} parent=0 // pred_fallthru
    _
  // Predicated region
  $region14: #{critic_forward.7} parent=0 // pred_check
    _
  $region15: #{critic_forward.7} parent=0 // pred_check_branch
    %17 = sbr.rel (0) target = $region17
  $region16: #{critic_forward.7} parent=0 // pred_region
    _
  $region17: #{critic_forward.7} parent=0 // pred_fallthru
    _
  // Predicated region
  $region18: #{critic_forward.7} parent=0 // pred_check
    _
  $region19: #{critic_forward.7} parent=0 // pred_check_branch
    %19 = sbr.rel (0) target = $region21
  $region20: #{critic_forward.7} parent=0 // pred_region
    _
  $region21: #{critic_forward.7} parent=0 // pred_fallthru
    _
  %v21 = vld [vmem:[%s1] sm:$0xf]
  %v22 = vld [vmem:[%s1 + $0x4] sm:$0xf]
  %v23 = vld [vmem:[%s1 + $0x8] sm:$0xf]
  %v24 = vld [vmem:[%s1 + $0xc] sm:$0xf]
  %v25 = vld [vmem:[%s0] sm:$0xff]
  %v26 = vld [vmem:[%s0 + $0x8] sm:$0xff]
  %v27 = vld [vmem:[%s0 + $0x10] sm:$0xf]
  %v28 = vld [vmem:[%s0 + $0x14] sm:$0xff]
  %v29 = vld [vmem:[%s0 + $0x1c] sm:$0xff]
  %v30 = vld [vmem:[%s0 + $0x24] sm:$0xf]
  %v31 = vld [vmem:[%s0 + $0x28] sm:$0xff]
  %v32 = vld [vmem:[%s0 + $0x30] sm:$0xff]
  %v33 = vld [vmem:[%s0 + $0x38] sm:$0xf]
  %v34 = vld [vmem:[%s0 + $0x3c] sm:$0xff]
  %v35 = vld [vmem:[%s0 + $0x44] sm:$0xff]
  %v36 = vld [vmem:[%s0 + $0x4c] sm:$0xf]
  %v37 = vld [vmem:[%s0 + $0x50] sm:$0xff]
  %v38 = vld [vmem:[%s0 + $0x58] sm:$0xff]
  %v39 = vld [vmem:[%s0 + $0x60] sm:$0xf]
  %v40 = vld [vmem:[%s0 + $0x64] sm:$0xff]
  %v41 = vld [vmem:[%s0 + $0x6c] sm:$0xff]
  %v42 = vld [vmem:[%s0 + $0x74] sm:$0xf]
  %v43 = vld [vmem:[%s0 + $0x78] sm:$0xff]
  %v44 = vld [vmem:[%s0 + $0x80] sm:$0xff]
  %v45 = vld [vmem:[%s0 + $0x88] sm:$0xf]
  %v46 = vld [vmem:[%s0 + $0x8c] sm:$0xff]
  %v47 = vld [vmem:[%s0 + $0x94] sm:$0xff]
  %v48 = vld [vmem:[%s0 + $0x9c] sm:$0xf]
  %s49 = scalar_lea.vmem %s1, 16
  %v50 = vld [vmem:[%s49] sm:$0xf]
  %v51 = vld [vmem:[%s49 + $0x4] sm:$0xf]
  %v52 = vld [vmem:[%s49 + $0x8] sm:$0xf]
  %v53 = vld [vmem:[%s49 + $0xc] sm:$0xf]
  %v58 = vunpack.c.l.b16 %v50
  %v59 = vunpack.c.l.b16 %v51
  %v60 = vunpack.c.l.b16 %v52
  %v61 = vunpack.c.l.b16 %v53
  %v62 = vpack.c.b16 %v59, %v58
  %v63 = vpack.c.b16 %v61, %v60
  %v88 = vunpack.c.l.b16 %v25
  %v89 = vunpack.c.h.b16 %v25
  %v90 = vunpack.c.l.b16 %v26
  %v91 = vunpack.c.h.b16 %v26
  %v92 = vunpack.c.l.b16 %v27
  %v93 = vunpack.c.l.b16 %v28
  %v94 = vunpack.c.h.b16 %v28
  %v95 = vunpack.c.l.b16 %v29
  %v96 = vunpack.c.h.b16 %v29
  %v97 = vunpack.c.l.b16 %v30
  %v98 = vunpack.c.l.b16 %v31
  %v99 = vunpack.c.h.b16 %v31
  %v100 = vunpack.c.l.b16 %v32
  %v101 = vunpack.c.h.b16 %v32
  %v102 = vunpack.c.l.b16 %v33
  %v103 = vunpack.c.l.b16 %v34
  %v104 = vunpack.c.h.b16 %v34
  %v105 = vunpack.c.l.b16 %v35
  %v106 = vunpack.c.h.b16 %v35
  %v107 = vunpack.c.l.b16 %v36
  %v108 = vunpack.c.l.b16 %v37
  %v109 = vunpack.c.h.b16 %v37
  %v110 = vunpack.c.l.b16 %v38
  %v111 = vunpack.c.h.b16 %v38
  %v112 = vunpack.c.l.b16 %v39
  %v113 = vunpack.c.l.b16 %v40
  %v114 = vunpack.c.h.b16 %v40
  %v115 = vunpack.c.l.b16 %v41
  %v116 = vunpack.c.h.b16 %v41
  %v117 = vunpack.c.l.b16 %v42
  %v118 = vunpack.c.l.b16 %v43
  %v119 = vunpack.c.h.b16 %v43
  %v120 = vunpack.c.l.b16 %v44
  %v121 = vunpack.c.h.b16 %v44
  %v122 = vunpack.c.l.b16 %v45
  %v123 = vunpack.c.l.b16 %v46
  %v124 = vunpack.c.h.b16 %v46
  %v125 = vunpack.c.l.b16 %v47
  %v126 = vunpack.c.h.b16 %v47
  %v127 = vunpack.c.l.b16 %v48
  %v128 = vpack.c.b16 %v93, %v88
  %v129 = vpack.c.b16 %v94, %v89
  %v130 = vpack.c.b16 %v95, %v90
  %v131 = vpack.c.b16 %v96, %v91
  %v132 = vpack.c.b16 %v97, %v92
  %v133 = vpack.c.b16 %v103, %v98
  %v134 = vpack.c.b16 %v104, %v99
  %v135 = vpack.c.b16 %v105, %v100
  %v136 = vpack.c.b16 %v106, %v101
  %v137 = vpack.c.b16 %v107, %v102
  %v138 = vpack.c.b16 %v113, %v108
  %v139 = vpack.c.b16 %v114, %v109
  %v140 = vpack.c.b16 %v115, %v110
  %v141 = vpack.c.b16 %v116, %v111
  %v142 = vpack.c.b16 %v117, %v112
  %v143 = vpack.c.b16 %v123, %v118
  %v144 = vpack.c.b16 %v124, %v119
  %v145 = vpack.c.b16 %v125, %v120
  %v146 = vpack.c.b16 %v126, %v121
  %v147 = vpack.c.b16 %v127, %v122
  %148 = vrot.lane.b32.xlu0 %v128, 127
  %v149 = vpop.permute.xlu0 %148
  %150 = vrot.lane.b32.xlu0 %v129, 127
  %v151 = vpop.permute.xlu0 %150
  %152 = vrot.lane.b32.xlu0 %v130, 127
  %v153 = vpop.permute.xlu0 %152
  %154 = vrot.lane.b32.xlu0 %v131, 127
  %v155 = vpop.permute.xlu0 %154
  %156 = vrot.lane.b32.xlu0 %v132, 127
  %v157 = vpop.permute.xlu0 %156
  %158 = vrot.lane.b32.xlu0 %v133, 127
  %v159 = vpop.permute.xlu0 %158
  %160 = vrot.lane.b32.xlu0 %v134, 127
  %v161 = vpop.permute.xlu0 %160
  %162 = vrot.lane.b32.xlu0 %v135, 127
  %v163 = vpop.permute.xlu0 %162
  %164 = vrot.lane.b32.xlu0 %v136, 127
  %v165 = vpop.permute.xlu0 %164
  %166 = vrot.lane.b32.xlu0 %v137, 127
  %v167 = vpop.permute.xlu0 %166
  %168 = vrot.lane.b32.xlu0 %v138, 127
  %v169 = vpop.permute.xlu0 %168
  %170 = vrot.lane.b32.xlu0 %v139, 127
  %v171 = vpop.permute.xlu0 %170
  %172 = vrot.lane.b32.xlu0 %v140, 127
  %v173 = vpop.permute.xlu0 %172
  %174 = vrot.lane.b32.xlu0 %v141, 127
  %v175 = vpop.permute.xlu0 %174
  %176 = vrot.lane.b32.xlu0 %v142, 127
  %v177 = vpop.permute.xlu0 %176
  %178 = vrot.lane.b32.xlu0 %v143, 127
  %v179 = vpop.permute.xlu0 %178
  %180 = vrot.lane.b32.xlu0 %v144, 127
  %v181 = vpop.permute.xlu0 %180
  %182 = vrot.lane.b32.xlu0 %v145, 127
  %v183 = vpop.permute.xlu0 %182
  %184 = vrot.lane.b32.xlu0 %v146, 127
  %v185 = vpop.permute.xlu0 %184
  %186 = vrot.lane.b32.xlu0 %v147, 127
  %v187 = vpop.permute.xlu0 %186
  %vm188 = vcmask 1039360
  %v189 = vsel %vm188, %v149, %v151
  %v190 = vsel %vm188, %v151, %v153
  %v191 = vsel %vm188, %v153, %v155
  %v192 = vsel %vm188, %v155, %v157
  %v193 = vsel %vm188, %v159, %v161
  %v194 = vsel %vm188, %v161, %v163
  %v195 = vsel %vm188, %v163, %v165
  %v196 = vsel %vm188, %v165, %v167
  %v197 = vsel %vm188, %v169, %v171
  %v198 = vsel %vm188, %v171, %v173
  %v199 = vsel %vm188, %v173, %v175
  %v200 = vsel %vm188, %v175, %v177
  %v201 = vsel %vm188, %v179, %v181
  %v202 = vsel %vm188, %v181, %v183
  %v203 = vsel %vm188, %v183, %v185
  %v204 = vsel %vm188, %v185, %v187
  %vm225 = vcmask 523264
  %v227 = vsel %vm225, %v62, 0
  %v230 = vsel %vm225, %v63, 0
  %232 = vmatpush.bf16.msra.mxu0 0
  %233 = vmatpush.bf16.msra.mxu0 0
  %234 = vmatpush.bf16.msra.mxu0 0
  %235 = vmatpush.bf16.msra.mxu0 0
  %236 = vmatpush.bf16.msra.mxu0 %v201
  %237 = vmatpush.bf16.msra.mxu0 %v197
  %238 = vmatpush.bf16.msra.mxu0 %v193
  %239 = vmatpush.bf16.msra.mxu0 %v189
  %240 = vmatmul.bf16.gmra.mxu0 %v227
  %v241 = vpop.f32.mrf.mxu0
  %v242 = vadd.f32 0.0, %v241
  %v243 = vpop.f32.mrf.mxu0
  %v244 = vadd.f32 0.0, %v243
  %245 = vmatmul.bf16.gmra.mxu0 %v230
  %v246 = vpop.f32.mrf.mxu0
  %v247 = vadd.f32 0.0, %v246
  %v248 = vpop.f32.mrf.mxu0
  %v249 = vadd.f32 0.0, %v248
  %250 = vdwg.mxu0
  %251 = vmatpush.bf16.msra.mxu0 0
  %252 = vmatpush.bf16.msra.mxu0 0
  %253 = vmatpush.bf16.msra.mxu0 0
  %254 = vmatpush.bf16.msra.mxu0 0
  %255 = vmatpush.bf16.msra.mxu0 %v202
  %256 = vmatpush.bf16.msra.mxu0 %v198
  %257 = vmatpush.bf16.msra.mxu0 %v194
  %258 = vmatpush.bf16.msra.mxu0 %v190
  %259 = vmatmul.bf16.gmra.mxu0 %v227
  %v260 = vpop.f32.mrf.mxu0
  %v261 = vadd.f32 0.0, %v260
  %v262 = vpop.f32.mrf.mxu0
  %v263 = vadd.f32 0.0, %v262
  %264 = vmatmul.bf16.gmra.mxu0 %v230
  %v265 = vpop.f32.mrf.mxu0
  %v266 = vadd.f32 0.0, %v265
  %v267 = vpop.f32.mrf.mxu0
  %v268 = vadd.f32 0.0, %v267
  %269 = vdwg.mxu0
  %270 = vmatpush.bf16.msra.mxu0 0
  %271 = vmatpush.bf16.msra.mxu0 0
  %272 = vmatpush.bf16.msra.mxu0 0
  %273 = vmatpush.bf16.msra.mxu0 0
  %274 = vmatpush.bf16.msra.mxu0 %v203
  %275 = vmatpush.bf16.msra.mxu0 %v199
  %276 = vmatpush.bf16.msra.mxu0 %v195
  %277 = vmatpush.bf16.msra.mxu0 %v191
  %278 = vmatmul.bf16.gmra.mxu0 %v227
  %v279 = vpop.f32.mrf.mxu0
  %v280 = vadd.f32 0.0, %v279
  %v281 = vpop.f32.mrf.mxu0
  %v282 = vadd.f32 0.0, %v281
  %283 = vmatmul.bf16.gmra.mxu0 %v230
  %v284 = vpop.f32.mrf.mxu0
  %v285 = vadd.f32 0.0, %v284
  %v286 = vpop.f32.mrf.mxu0
  %v287 = vadd.f32 0.0, %v286
  %288 = vdwg.mxu0
  %289 = vmatpush.bf16.msra.mxu0 0
  %290 = vmatpush.bf16.msra.mxu0 0
  %291 = vmatpush.bf16.msra.mxu0 0
  %292 = vmatpush.bf16.msra.mxu0 0
  %293 = vmatpush.bf16.msra.mxu0 %v204
  %294 = vmatpush.bf16.msra.mxu0 %v200
  %295 = vmatpush.bf16.msra.mxu0 %v196
  %296 = vmatpush.bf16.msra.mxu0 %v192
  %297 = vmatmul.bf16.gmra.mxu0 %v227
  %v298 = vpop.f32.mrf.mxu0
  %v299 = vadd.f32 0.0, %v298
  %v300 = vpop.f32.mrf.mxu0
  %v301 = vadd.f32 0.0, %v300
  %302 = vmatmul.bf16.gmra.mxu0 %v230
  %v303 = vpop.f32.mrf.mxu0
  %v304 = vadd.f32 0.0, %v303
  %v305 = vpop.f32.mrf.mxu0
  %v306 = vadd.f32 0.0, %v305
  %307 = vdwg.mxu0
  %308 = vmatpush.bf16.msra.mxu0 0
  %309 = vmatpush.bf16.msra.mxu0 0
  %310 = vmatpush.bf16.msra.mxu0 0
  %311 = vmatpush.bf16.msra.mxu0 0
  %312 = vmatpush.bf16.msra.mxu0 %v187
  %313 = vmatpush.bf16.msra.mxu0 %v177
  %314 = vmatpush.bf16.msra.mxu0 %v167
  %315 = vmatpush.bf16.msra.mxu0 %v157
  %316 = vmatmul.bf16.gmra.mxu0 %v227
  %v317 = vpop.f32.mrf.mxu0
  %v318 = vadd.f32 0.0, %v317
  %v319 = vpop.f32.mrf.mxu0
  %v320 = vadd.f32 0.0, %v319
  %321 = vmatmul.bf16.gmra.mxu0 %v230
  %v322 = vpop.f32.mrf.mxu0
  %v323 = vadd.f32 0.0, %v322
  %v324 = vpop.f32.mrf.mxu0
  %v325 = vadd.f32 0.0, %v324
  %326 = vdwg.mxu0
  %v331 = vunpack.c.l.b16 %v21
  %v332 = vunpack.c.l.b16 %v22
  %v333 = vunpack.c.l.b16 %v23
  %v334 = vunpack.c.l.b16 %v24
  %v335 = vpack.c.b16 %v332, %v331
  %v336 = vpack.c.b16 %v334, %v333
  %v358 = vsel %vm225, %v335, 0
  %v361 = vsel %vm225, %v336, 0
  %363 = vmatpush.bf16.msra.mxu0 0
  %364 = vmatpush.bf16.msra.mxu0 0
  %365 = vmatpush.bf16.msra.mxu0 0
  %366 = vmatpush.bf16.msra.mxu0 0
  %367 = vmatpush.bf16.msra.mxu0 %v143
  %368 = vmatpush.bf16.msra.mxu0 %v138
  %369 = vmatpush.bf16.msra.mxu0 %v133
  %370 = vmatpush.bf16.msra.mxu0 %v128
  %371 = vmatmul.bf16.gmra.mxu0 %v358
  %v372 = vpop.f32.mrf.mxu0
  %v373 = vadd.f32 %v242, %v372
  %v374 = vpop.f32.mrf.mxu0
  %v375 = vadd.f32 %v244, %v374
  %376 = vmatmul.bf16.gmra.mxu0 %v361
  %v377 = vpop.f32.mrf.mxu0
  %v378 = vadd.f32 %v247, %v377
  %v379 = vpop.f32.mrf.mxu0
  %v380 = vadd.f32 %v249, %v379
  %381 = vdwg.mxu0
  %382 = vmatpush.bf16.msra.mxu0 0
  %383 = vmatpush.bf16.msra.mxu0 0
  %384 = vmatpush.bf16.msra.mxu0 0
  %385 = vmatpush.bf16.msra.mxu0 0
  %386 = vmatpush.bf16.msra.mxu0 %v144
  %387 = vmatpush.bf16.msra.mxu0 %v139
  %388 = vmatpush.bf16.msra.mxu0 %v134
  %389 = vmatpush.bf16.msra.mxu0 %v129
  %390 = vmatmul.bf16.gmra.mxu0 %v358
  %v391 = vpop.f32.mrf.mxu0
  %v392 = vadd.f32 %v261, %v391
  %v393 = vpop.f32.mrf.mxu0
  %v394 = vadd.f32 %v263, %v393
  %395 = vmatmul.bf16.gmra.mxu0 %v361
  %v396 = vpop.f32.mrf.mxu0
  %v397 = vadd.f32 %v266, %v396
  %v398 = vpop.f32.mrf.mxu0
  %v399 = vadd.f32 %v268, %v398
  %400 = vdwg.mxu0
  %401 = vmatpush.bf16.msra.mxu0 0
  %402 = vmatpush.bf16.msra.mxu0 0
  %403 = vmatpush.bf16.msra.mxu0 0
  %404 = vmatpush.bf16.msra.mxu0 0
  %405 = vmatpush.bf16.msra.mxu0 %v145
  %406 = vmatpush.bf16.msra.mxu0 %v140
  %407 = vmatpush.bf16.msra.mxu0 %v135
  %408 = vmatpush.bf16.msra.mxu0 %v130
  %409 = vmatmul.bf16.gmra.mxu0 %v358
  %v410 = vpop.f32.mrf.mxu0
  %v411 = vadd.f32 %v280, %v410
  %v412 = vpop.f32.mrf.mxu0
  %v413 = vadd.f32 %v282, %v412
  %414 = vmatmul.bf16.gmra.mxu0 %v361
  %v415 = vpop.f32.mrf.mxu0
  %v416 = vadd.f32 %v285, %v415
  %v417 = vpop.f32.mrf.mxu0
  %v418 = vadd.f32 %v287, %v417
  %419 = vdwg.mxu0
  %420 = vmatpush.bf16.msra.mxu0 0
  %421 = vmatpush.bf16.msra.mxu0 0
  %422 = vmatpush.bf16.msra.mxu0 0
  %423 = vmatpush.bf16.msra.mxu0 0
  %424 = vmatpush.bf16.msra.mxu0 %v146
  %425 = vmatpush.bf16.msra.mxu0 %v141
  %426 = vmatpush.bf16.msra.mxu0 %v136
  %427 = vmatpush.bf16.msra.mxu0 %v131
  %428 = vmatmul.bf16.gmra.mxu0 %v358
  %v429 = vpop.f32.mrf.mxu0
  %v430 = vadd.f32 %v299, %v429
  %v431 = vpop.f32.mrf.mxu0
  %v432 = vadd.f32 %v301, %v431
  %433 = vmatmul.bf16.gmra.mxu0 %v361
  %v434 = vpop.f32.mrf.mxu0
  %v435 = vadd.f32 %v304, %v434
  %v436 = vpop.f32.mrf.mxu0
  %v437 = vadd.f32 %v306, %v436
  %438 = vdwg.mxu0
  %439 = vmatpush.bf16.msra.mxu0 0
  %440 = vmatpush.bf16.msra.mxu0 0
  %441 = vmatpush.bf16.msra.mxu0 0
  %442 = vmatpush.bf16.msra.mxu0 0
  %443 = vmatpush.bf16.msra.mxu0 %v147
  %444 = vmatpush.bf16.msra.mxu0 %v142
  %445 = vmatpush.bf16.msra.mxu0 %v137
  %446 = vmatpush.bf16.msra.mxu0 %v132
  %447 = vmatmul.bf16.gmra.mxu0 %v358
  %v448 = vpop.f32.mrf.mxu0
  %v449 = vadd.f32 %v318, %v448
  %v450 = vpop.f32.mrf.mxu0
  %v451 = vadd.f32 %v320, %v450
  %452 = vmatmul.bf16.gmra.mxu0 %v361
  %v453 = vpop.f32.mrf.mxu0
  %v454 = vadd.f32 %v323, %v453
  %v455 = vpop.f32.mrf.mxu0
  %v456 = vadd.f32 %v325, %v455
  %457 = vdwg.mxu0
  %s458 = scalar_lea.vmem %s1, 32
  %v459 = vld [vmem:[%s458] sm:$0xf]
  %v460 = vld [vmem:[%s458 + $0x4] sm:$0xf]
  %v461 = vld [vmem:[%s458 + $0x8] sm:$0xf]
  %v462 = vld [vmem:[%s458 + $0xc] sm:$0xf]
  %v467 = vunpack.c.l.b16 %v459
  %v468 = vunpack.c.l.b16 %v460
  %v469 = vunpack.c.l.b16 %v461
  %v470 = vunpack.c.l.b16 %v462
  %v471 = vpack.c.b16 %v468, %v467
  %v472 = vpack.c.b16 %v470, %v469
  %473 = vrot.lane.b32.xlu0 %v128, 111
  %v474 = vpop.permute.xlu0 %473
  %475 = vrot.lane.b32.xlu0 %v129, 111
  %v476 = vpop.permute.xlu0 %475
  %477 = vrot.lane.b32.xlu0 %v130, 111
  %v478 = vpop.permute.xlu0 %477
  %479 = vrot.lane.b32.xlu0 %v131, 111
  %v480 = vpop.permute.xlu0 %479
  %481 = vrot.lane.b32.xlu0 %v132, 111
  %v482 = vpop.permute.xlu0 %481
  %483 = vrot.lane.b32.xlu0 %v133, 111
  %v484 = vpop.permute.xlu0 %483
  %485 = vrot.lane.b32.xlu0 %v134, 111
  %v486 = vpop.permute.xlu0 %485
  %487 = vrot.lane.b32.xlu0 %v135, 111
  %v488 = vpop.permute.xlu0 %487
  %489 = vrot.lane.b32.xlu0 %v136, 111
  %v490 = vpop.permute.xlu0 %489
  %491 = vrot.lane.b32.xlu0 %v137, 111
  %v492 = vpop.permute.xlu0 %491
  %493 = vrot.lane.b32.xlu0 %v138, 111
  %v494 = vpop.permute.xlu0 %493
  %495 = vrot.lane.b32.xlu0 %v139, 111
  %v496 = vpop.permute.xlu0 %495
  %497 = vrot.lane.b32.xlu0 %v140, 111
  %v498 = vpop.permute.xlu0 %497
  %499 = vrot.lane.b32.xlu0 %v141, 111
  %v500 = vpop.permute.xlu0 %499
  %501 = vrot.lane.b32.xlu0 %v142, 111
  %v502 = vpop.permute.xlu0 %501
  %503 = vrot.lane.b32.xlu0 %v143, 111
  %v504 = vpop.permute.xlu0 %503
  %505 = vrot.lane.b32.xlu0 %v144, 111
  %v506 = vpop.permute.xlu0 %505
  %507 = vrot.lane.b32.xlu0 %v145, 111
  %v508 = vpop.permute.xlu0 %507
  %509 = vrot.lane.b32.xlu0 %v146, 111
  %v510 = vpop.permute.xlu0 %509
  %511 = vrot.lane.b32.xlu0 %v147, 111
  %v512 = vpop.permute.xlu0 %511
  %vm513 = vcmask 908288
  %v514 = vsel %vm513, %v474, %v476
  %v515 = vsel %vm513, %v476, %v478
  %v516 = vsel %vm513, %v478, %v480
  %v517 = vsel %vm513, %v480, %v482
  %v518 = vsel %vm513, %v484, %v486
  %v519 = vsel %vm513, %v486, %v488
  %v520 = vsel %vm513, %v488, %v490
  %v521 = vsel %vm513, %v490, %v492
  %v522 = vsel %vm513, %v494, %v496
  %v523 = vsel %vm513, %v496, %v498
  %v524 = vsel %vm513, %v498, %v500
  %v525 = vsel %vm513, %v500, %v502
  %v526 = vsel %vm513, %v504, %v506
  %v527 = vsel %vm513, %v506, %v508
  %v528 = vsel %vm513, %v508, %v510
  %v529 = vsel %vm513, %v510, %v512
  %v551 = vsel %vm225, %v471, 0
  %v554 = vsel %vm225, %v472, 0
  %556 = vmatpush.bf16.msra.mxu0 0
  %557 = vmatpush.bf16.msra.mxu0 0
  %558 = vmatpush.bf16.msra.mxu0 0
  %559 = vmatpush.bf16.msra.mxu0 0
  %560 = vmatpush.bf16.msra.mxu0 %v526
  %561 = vmatpush.bf16.msra.mxu0 %v522
  %562 = vmatpush.bf16.msra.mxu0 %v518
  %563 = vmatpush.bf16.msra.mxu0 %v514
  %564 = vmatmul.bf16.gmra.mxu0 %v551
  %v565 = vpop.f32.mrf.mxu0
  %v566 = vadd.f32 0.0, %v565
  %v567 = vpop.f32.mrf.mxu0
  %v568 = vadd.f32 0.0, %v567
  %569 = vmatmul.bf16.gmra.mxu0 %v554
  %v570 = vpop.f32.mrf.mxu0
  %v571 = vadd.f32 0.0, %v570
  %v572 = vpop.f32.mrf.mxu0
  %v573 = vadd.f32 0.0, %v572
  %574 = vdwg.mxu0
  %575 = vmatpush.bf16.msra.mxu0 0
  %576 = vmatpush.bf16.msra.mxu0 0
  %577 = vmatpush.bf16.msra.mxu0 0
  %578 = vmatpush.bf16.msra.mxu0 0
  %579 = vmatpush.bf16.msra.mxu0 %v527
  %580 = vmatpush.bf16.msra.mxu0 %v523
  %581 = vmatpush.bf16.msra.mxu0 %v519
  %582 = vmatpush.bf16.msra.mxu0 %v515
  %583 = vmatmul.bf16.gmra.mxu0 %v551
  %v584 = vpop.f32.mrf.mxu0
  %v585 = vadd.f32 0.0, %v584
  %v586 = vpop.f32.mrf.mxu0
  %v587 = vadd.f32 0.0, %v586
  %588 = vmatmul.bf16.gmra.mxu0 %v554
  %v589 = vpop.f32.mrf.mxu0
  %v590 = vadd.f32 0.0, %v589
  %v591 = vpop.f32.mrf.mxu0
  %v592 = vadd.f32 0.0, %v591
  %593 = vdwg.mxu0
  %594 = vmatpush.bf16.msra.mxu0 0
  %595 = vmatpush.bf16.msra.mxu0 0
  %596 = vmatpush.bf16.msra.mxu0 0
  %597 = vmatpush.bf16.msra.mxu0 0
  %598 = vmatpush.bf16.msra.mxu0 %v528
  %599 = vmatpush.bf16.msra.mxu0 %v524
  %600 = vmatpush.bf16.msra.mxu0 %v520
  %601 = vmatpush.bf16.msra.mxu0 %v516
  %602 = vmatmul.bf16.gmra.mxu0 %v551
  %v603 = vpop.f32.mrf.mxu0
  %v604 = vadd.f32 0.0, %v603
  %v605 = vpop.f32.mrf.mxu0
  %v606 = vadd.f32 0.0, %v605
  %607 = vmatmul.bf16.gmra.mxu0 %v554
  %v608 = vpop.f32.mrf.mxu0
  %v609 = vadd.f32 0.0, %v608
  %v610 = vpop.f32.mrf.mxu0
  %v611 = vadd.f32 0.0, %v610
  %612 = vdwg.mxu0
  %613 = vmatpush.bf16.msra.mxu0 0
  %614 = vmatpush.bf16.msra.mxu0 0
  %615 = vmatpush.bf16.msra.mxu0 0
  %616 = vmatpush.bf16.msra.mxu0 0
  %617 = vmatpush.bf16.msra.mxu0 %v529
  %618 = vmatpush.bf16.msra.mxu0 %v525
  %619 = vmatpush.bf16.msra.mxu0 %v521
  %620 = vmatpush.bf16.msra.mxu0 %v517
  %621 = vmatmul.bf16.gmra.mxu0 %v551
  %v622 = vpop.f32.mrf.mxu0
  %v623 = vadd.f32 0.0, %v622
  %v624 = vpop.f32.mrf.mxu0
  %v625 = vadd.f32 0.0, %v624
  %626 = vmatmul.bf16.gmra.mxu0 %v554
  %v627 = vpop.f32.mrf.mxu0
  %v628 = vadd.f32 0.0, %v627
  %v629 = vpop.f32.mrf.mxu0
  %v630 = vadd.f32 0.0, %v629
  %631 = vdwg.mxu0
  %632 = vmatpush.bf16.msra.mxu0 0
  %633 = vmatpush.bf16.msra.mxu0 0
  %634 = vmatpush.bf16.msra.mxu0 0
  %635 = vmatpush.bf16.msra.mxu0 0
  %636 = vmatpush.bf16.msra.mxu0 %v512
  %637 = vmatpush.bf16.msra.mxu0 %v502
  %638 = vmatpush.bf16.msra.mxu0 %v492
  %639 = vmatpush.bf16.msra.mxu0 %v482
  %640 = vmatmul.bf16.gmra.mxu0 %v551
  %v641 = vpop.f32.mrf.mxu0
  %v642 = vadd.f32 0.0, %v641
  %v643 = vpop.f32.mrf.mxu0
  %v644 = vadd.f32 0.0, %v643
  %645 = vmatmul.bf16.gmra.mxu0 %v554
  %v646 = vpop.f32.mrf.mxu0
  %v647 = vadd.f32 0.0, %v646
  %v648 = vpop.f32.mrf.mxu0
  %v649 = vadd.f32 0.0, %v648
  %650 = vdwg.mxu0
  %v651 = vadd.f32 %v373, %v566
  %v652 = vadd.f32 %v392, %v585
  %v653 = vadd.f32 %v411, %v604
  %v654 = vadd.f32 %v430, %v623
  %v655 = vadd.f32 %v449, %v642
  %v656 = vadd.f32 %v375, %v568
  %v657 = vadd.f32 %v394, %v587
  %v658 = vadd.f32 %v413, %v606
  %v659 = vadd.f32 %v432, %v625
  %v660 = vadd.f32 %v451, %v644
  %v661 = vadd.f32 %v378, %v571
  %v662 = vadd.f32 %v397, %v590
  %v663 = vadd.f32 %v416, %v609
  %v664 = vadd.f32 %v435, %v628
  %v665 = vadd.f32 %v454, %v647
  %v666 = vadd.f32 %v380, %v573
  %v667 = vadd.f32 %v399, %v592
  %v668 = vadd.f32 %v418, %v611
  %v669 = vadd.f32 %v437, %v630
  %v670 = vadd.f32 %v456, %v649
  %s671 = scalar_lea.vmem %s1, 48
  %v672 = vld [vmem:[%s671] sm:$0xf]
  %v673 = vld [vmem:[%s671 + $0x4] sm:$0xf]
  %v674 = vld [vmem:[%s671 + $0x8] sm:$0xf]
  %v675 = vld [vmem:[%s671 + $0xc] sm:$0xf]
  %v680 = vunpack.c.l.b16 %v672
  %v681 = vunpack.c.l.b16 %v673
  %v682 = vunpack.c.l.b16 %v674
  %v683 = vunpack.c.l.b16 %v675
  %v684 = vpack.c.b16 %v681, %v680
  %v685 = vpack.c.b16 %v683, %v682
  %686 = vrot.lane.b32.xlu0 %v128, 110
  %v687 = vpop.permute.xlu0 %686
  %688 = vrot.lane.b32.xlu0 %v129, 110
  %v689 = vpop.permute.xlu0 %688
  %690 = vrot.lane.b32.xlu0 %v130, 110
  %v691 = vpop.permute.xlu0 %690
  %692 = vrot.lane.b32.xlu0 %v131, 110
  %v693 = vpop.permute.xlu0 %692
  %694 = vrot.lane.b32.xlu0 %v132, 110
  %v695 = vpop.permute.xlu0 %694
  %696 = vrot.lane.b32.xlu0 %v133, 110
  %v697 = vpop.permute.xlu0 %696
  %698 = vrot.lane.b32.xlu0 %v134, 110
  %v699 = vpop.permute.xlu0 %698
  %700 = vrot.lane.b32.xlu0 %v135, 110
  %v701 = vpop.permute.xlu0 %700
  %702 = vrot.lane.b32.xlu0 %v136, 110
  %v703 = vpop.permute.xlu0 %702
  %704 = vrot.lane.b32.xlu0 %v137, 110
  %v705 = vpop.permute.xlu0 %704
  %706 = vrot.lane.b32.xlu0 %v138, 110
  %v707 = vpop.permute.xlu0 %706
  %708 = vrot.lane.b32.xlu0 %v139, 110
  %v709 = vpop.permute.xlu0 %708
  %710 = vrot.lane.b32.xlu0 %v140, 110
  %v711 = vpop.permute.xlu0 %710
  %712 = vrot.lane.b32.xlu0 %v141, 110
  %v713 = vpop.permute.xlu0 %712
  %714 = vrot.lane.b32.xlu0 %v142, 110
  %v715 = vpop.permute.xlu0 %714
  %716 = vrot.lane.b32.xlu0 %v143, 110
  %v717 = vpop.permute.xlu0 %716
  %718 = vrot.lane.b32.xlu0 %v144, 110
  %v719 = vpop.permute.xlu0 %718
  %720 = vrot.lane.b32.xlu0 %v145, 110
  %v721 = vpop.permute.xlu0 %720
  %722 = vrot.lane.b32.xlu0 %v146, 110
  %v723 = vpop.permute.xlu0 %722
  %724 = vrot.lane.b32.xlu0 %v147, 110
  %v725 = vpop.permute.xlu0 %724
  %vm726 = vcmask 900096
  %v727 = vsel %vm726, %v687, %v689
  %v728 = vsel %vm726, %v689, %v691
  %v729 = vsel %vm726, %v691, %v693
  %v730 = vsel %vm726, %v693, %v695
  %v731 = vsel %vm726, %v697, %v699
  %v732 = vsel %vm726, %v699, %v701
  %v733 = vsel %vm726, %v701, %v703
  %v734 = vsel %vm726, %v703, %v705
  %v735 = vsel %vm726, %v707, %v709
  %v736 = vsel %vm726, %v709, %v711
  %v737 = vsel %vm726, %v711, %v713
  %v738 = vsel %vm726, %v713, %v715
  %v739 = vsel %vm726, %v717, %v719
  %v740 = vsel %vm726, %v719, %v721
  %v741 = vsel %vm726, %v721, %v723
  %v742 = vsel %vm726, %v723, %v725
  %v764 = vsel %vm225, %v684, 0
  %v767 = vsel %vm225, %v685, 0
  %769 = vmatpush.bf16.msra.mxu0 0
  %770 = vmatpush.bf16.msra.mxu0 0
  %771 = vmatpush.bf16.msra.mxu0 0
  %772 = vmatpush.bf16.msra.mxu0 0
  %773 = vmatpush.bf16.msra.mxu0 %v739
  %774 = vmatpush.bf16.msra.mxu0 %v735
  %775 = vmatpush.bf16.msra.mxu0 %v731
  %776 = vmatpush.bf16.msra.mxu0 %v727
  %777 = vmatmul.bf16.gmra.mxu0 %v764
  %v778 = vpop.f32.mrf.mxu0
  %v779 = vadd.f32 0.0, %v778
  %v780 = vpop.f32.mrf.mxu0
  %v781 = vadd.f32 0.0, %v780
  %782 = vmatmul.bf16.gmra.mxu0 %v767
  %v783 = vpop.f32.mrf.mxu0
  %v784 = vadd.f32 0.0, %v783
  %v785 = vpop.f32.mrf.mxu0
  %v786 = vadd.f32 0.0, %v785
  %787 = vdwg.mxu0
  %788 = vmatpush.bf16.msra.mxu0 0
  %789 = vmatpush.bf16.msra.mxu0 0
  %790 = vmatpush.bf16.msra.mxu0 0
  %791 = vmatpush.bf16.msra.mxu0 0
  %792 = vmatpush.bf16.msra.mxu0 %v740
  %793 = vmatpush.bf16.msra.mxu0 %v736
  %794 = vmatpush.bf16.msra.mxu0 %v732
  %795 = vmatpush.bf16.msra.mxu0 %v728
  %796 = vmatmul.bf16.gmra.mxu0 %v764
  %v797 = vpop.f32.mrf.mxu0
  %v798 = vadd.f32 0.0, %v797
  %v799 = vpop.f32.mrf.mxu0
  %v800 = vadd.f32 0.0, %v799
  %801 = vmatmul.bf16.gmra.mxu0 %v767
  %v802 = vpop.f32.mrf.mxu0
  %v803 = vadd.f32 0.0, %v802
  %v804 = vpop.f32.mrf.mxu0
  %v805 = vadd.f32 0.0, %v804
  %806 = vdwg.mxu0
  %807 = vmatpush.bf16.msra.mxu0 0
  %808 = vmatpush.bf16.msra.mxu0 0
  %809 = vmatpush.bf16.msra.mxu0 0
  %810 = vmatpush.bf16.msra.mxu0 0
  %811 = vmatpush.bf16.msra.mxu0 %v741
  %812 = vmatpush.bf16.msra.mxu0 %v737
  %813 = vmatpush.bf16.msra.mxu0 %v733
  %814 = vmatpush.bf16.msra.mxu0 %v729
  %815 = vmatmul.bf16.gmra.mxu0 %v764
  %v816 = vpop.f32.mrf.mxu0
  %v817 = vadd.f32 0.0, %v816
  %v818 = vpop.f32.mrf.mxu0
  %v819 = vadd.f32 0.0, %v818
  %820 = vmatmul.bf16.gmra.mxu0 %v767
  %v821 = vpop.f32.mrf.mxu0
  %v822 = vadd.f32 0.0, %v821
  %v823 = vpop.f32.mrf.mxu0
  %v824 = vadd.f32 0.0, %v823
  %825 = vdwg.mxu0
  %826 = vmatpush.bf16.msra.mxu0 0
  %827 = vmatpush.bf16.msra.mxu0 0
  %828 = vmatpush.bf16.msra.mxu0 0
  %829 = vmatpush.bf16.msra.mxu0 0
  %830 = vmatpush.bf16.msra.mxu0 %v742
  %831 = vmatpush.bf16.msra.mxu0 %v738
  %832 = vmatpush.bf16.msra.mxu0 %v734
  %833 = vmatpush.bf16.msra.mxu0 %v730
  %834 = vmatmul.bf16.gmra.mxu0 %v764
  %v835 = vpop.f32.mrf.mxu0
  %v836 = vadd.f32 0.0, %v835
  %v837 = vpop.f32.mrf.mxu0
  %v838 = vadd.f32 0.0, %v837
  %839 = vmatmul.bf16.gmra.mxu0 %v767
  %v840 = vpop.f32.mrf.mxu0
  %v841 = vadd.f32 0.0, %v840
  %v842 = vpop.f32.mrf.mxu0
  %v843 = vadd.f32 0.0, %v842
  %844 = vdwg.mxu0
  %845 = vmatpush.bf16.msra.mxu0 0
  %846 = vmatpush.bf16.msra.mxu0 0
  %847 = vmatpush.bf16.msra.mxu0 0
  %848 = vmatpush.bf16.msra.mxu0 0
  %849 = vmatpush.bf16.msra.mxu0 %v725
  %850 = vmatpush.bf16.msra.mxu0 %v715
  %851 = vmatpush.bf16.msra.mxu0 %v705
  %852 = vmatpush.bf16.msra.mxu0 %v695
  %853 = vmatmul.bf16.gmra.mxu0 %v764
  %v854 = vpop.f32.mrf.mxu0
  %v855 = vadd.f32 0.0, %v854
  %v856 = vpop.f32.mrf.mxu0
  %v857 = vadd.f32 0.0, %v856
  %858 = vmatmul.bf16.gmra.mxu0 %v767
  %v859 = vpop.f32.mrf.mxu0
  %v860 = vadd.f32 0.0, %v859
  %v861 = vpop.f32.mrf.mxu0
  %v862 = vadd.f32 0.0, %v861
  %863 = vdwg.mxu0
  %v864 = vadd.f32 %v651, %v779
  %v865 = vadd.f32 %v652, %v798
  %v866 = vadd.f32 %v653, %v817
  %v867 = vadd.f32 %v654, %v836
  %v868 = vadd.f32 %v655, %v855
  %v869 = vadd.f32 %v656, %v781
  %v870 = vadd.f32 %v657, %v800
  %v871 = vadd.f32 %v658, %v819
  %v872 = vadd.f32 %v659, %v838
  %v873 = vadd.f32 %v660, %v857
  %v874 = vadd.f32 %v661, %v784
  %v875 = vadd.f32 %v662, %v803
  %v876 = vadd.f32 %v663, %v822
  %v877 = vadd.f32 %v664, %v841
  %v878 = vadd.f32 %v665, %v860
  %v879 = vadd.f32 %v666, %v786
  %v880 = vadd.f32 %v667, %v805
  %v881 = vadd.f32 %v668, %v824
  %v882 = vadd.f32 %v669, %v843
  %v883 = vadd.f32 %v670, %v862
  %v884 = vld [vmem:[%s2] sm:$0xff]
  %v885 = vld [vmem:[%s2 + $0x8] sm:$0xff]
  %v886 = vld [vmem:[%s2 + $0x10] sm:$0xff]
  %v887 = vld [vmem:[%s2 + $0x18] sm:$0xff]
  %v888 = vld [vmem:[%s3] sm:$0xff]
  %v889 = vld [vmem:[%s3 + $0x8] sm:$0xff]
  %v890 = vld [vmem:[%s3 + $0x10] sm:$0xff]
  %v891 = vld [vmem:[%s3 + $0x18] sm:$0xff]
  %v892 = vld [vmem:[%s4] sm:$0x1f]
  %v894 = vperm.slane %v892, 0
  %v895 = vperm.slane %v892, 1
  %v896 = vperm.slane %v892, 2
  %v897 = vperm.slane %v892, 3
  %v898 = vperm.slane %v892, 4
  %v904 = vmul.f32 %v864, %v894
  %v905 = vmul.f32 %v865, %v895
  %v906 = vmul.f32 %v866, %v896
  %v907 = vmul.f32 %v867, %v897
  %v908 = vmul.f32 %v868, %v898
  %v909 = vmul.f32 %v869, %v894
  %v910 = vmul.f32 %v870, %v895
  %v911 = vmul.f32 %v871, %v896
  %v912 = vmul.f32 %v872, %v897
  %v913 = vmul.f32 %v873, %v898
  %v914 = vmul.f32 %v874, %v894
  %v915 = vmul.f32 %v875, %v895
  %v916 = vmul.f32 %v876, %v896
  %v917 = vmul.f32 %v877, %v897
  %v918 = vmul.f32 %v878, %v898
  %v919 = vmul.f32 %v879, %v894
  %v920 = vmul.f32 %v880, %v895
  %v921 = vmul.f32 %v881, %v896
  %v922 = vmul.f32 %v882, %v897
  %v923 = vmul.f32 %v883, %v898
  %v924 = vadd.f32 %v904, %v905
  %v925 = vadd.f32 %v924, %v906
  %v926 = vadd.f32 %v925, %v907
  %vm927 = vcmask 539648
  %v928 = vsel %vm927, %v908, 0.0
  %v929 = vadd.f32 %v926, %v928
  %930 = vadd.xlane.f32.xlu0 %v929
  %v931 = vpop.xlane.xlu0 %930
  %v932 = vadd.f32 %v909, %v910
  %v933 = vadd.f32 %v932, %v911
  %v934 = vadd.f32 %v933, %v912
  %v935 = vsel %vm927, %v913, 0.0
  %v936 = vadd.f32 %v934, %v935
  %937 = vadd.xlane.f32.xlu0 %v936
  %v938 = vpop.xlane.xlu0 %937
  %v939 = vadd.f32 %v914, %v915
  %v940 = vadd.f32 %v939, %v916
  %v941 = vadd.f32 %v940, %v917
  %v942 = vsel %vm927, %v918, 0.0
  %v943 = vadd.f32 %v941, %v942
  %944 = vadd.xlane.f32.xlu0 %v943
  %v945 = vpop.xlane.xlu0 %944
  %v946 = vadd.f32 %v919, %v920
  %v947 = vadd.f32 %v946, %v921
  %v948 = vadd.f32 %v947, %v922
  %v949 = vsel %vm927, %v923, 0.0
  %v950 = vadd.f32 %v948, %v949
  %951 = vadd.xlane.f32.xlu0 %v950
  %v952 = vpop.xlane.xlu0 %951
  %v953 = vmul.f32 %v931, 0.001953125
  %v954 = vmul.f32 %v938, 0.001953125
  %v955 = vmul.f32 %v945, 0.001953125
  %v956 = vmul.f32 %v952, 0.001953125
  %v957 = vmul.f32 %v864, %v864
  %v958 = vmul.f32 %v865, %v865
  %v959 = vmul.f32 %v866, %v866
  %v960 = vmul.f32 %v867, %v867
  %v961 = vmul.f32 %v868, %v868
  %v962 = vmul.f32 %v869, %v869
  %v963 = vmul.f32 %v870, %v870
  %v964 = vmul.f32 %v871, %v871
  %v965 = vmul.f32 %v872, %v872
  %v966 = vmul.f32 %v873, %v873
  %v967 = vmul.f32 %v874, %v874
  %v968 = vmul.f32 %v875, %v875
  %v969 = vmul.f32 %v876, %v876
  %v970 = vmul.f32 %v877, %v877
  %v971 = vmul.f32 %v878, %v878
  %v972 = vmul.f32 %v879, %v879
  %v973 = vmul.f32 %v880, %v880
  %v974 = vmul.f32 %v881, %v881
  %v975 = vmul.f32 %v882, %v882
  %v976 = vmul.f32 %v883, %v883
  %v977 = vmul.f32 %v957, %v894
  %v978 = vmul.f32 %v958, %v895
  %v979 = vmul.f32 %v959, %v896
  %v980 = vmul.f32 %v960, %v897
  %v981 = vmul.f32 %v961, %v898
  %v982 = vmul.f32 %v962, %v894
  %v983 = vmul.f32 %v963, %v895
  %v984 = vmul.f32 %v964, %v896
  %v985 = vmul.f32 %v965, %v897
  %v986 = vmul.f32 %v966, %v898
  %v987 = vmul.f32 %v967, %v894
  %v988 = vmul.f32 %v968, %v895
  %v989 = vmul.f32 %v969, %v896
  %v990 = vmul.f32 %v970, %v897
  %v991 = vmul.f32 %v971, %v898
  %v992 = vmul.f32 %v972, %v894
  %v993 = vmul.f32 %v973, %v895
  %v994 = vmul.f32 %v974, %v896
  %v995 = vmul.f32 %v975, %v897
  %v996 = vmul.f32 %v976, %v898
  %v997 = vadd.f32 %v977, %v978
  %v998 = vadd.f32 %v997, %v979
  %v999 = vadd.f32 %v998, %v980
  %v1000 = vsel %vm927, %v981, 0.0
  %v1001 = vadd.f32 %v999, %v1000
  %1002 = vadd.xlane.f32.xlu0 %v1001
  %v1003 = vpop.xlane.xlu0 %1002
  %v1004 = vadd.f32 %v982, %v983
  %v1005 = vadd.f32 %v1004, %v984
  %v1006 = vadd.f32 %v1005, %v985
  %v1007 = vsel %vm927, %v986, 0.0
  %v1008 = vadd.f32 %v1006, %v1007
  %1009 = vadd.xlane.f32.xlu0 %v1008
  %v1010 = vpop.xlane.xlu0 %1009
  %v1011 = vadd.f32 %v987, %v988
  %v1012 = vadd.f32 %v1011, %v989
  %v1013 = vadd.f32 %v1012, %v990
  %v1014 = vsel %vm927, %v991, 0.0
  %v1015 = vadd.f32 %v1013, %v1014
  %1016 = vadd.xlane.f32.xlu0 %v1015
  %v1017 = vpop.xlane.xlu0 %1016
  %v1018 = vadd.f32 %v992, %v993
  %v1019 = vadd.f32 %v1018, %v994
  %v1020 = vadd.f32 %v1019, %v995
  %v1021 = vsel %vm927, %v996, 0.0
  %v1022 = vadd.f32 %v1020, %v1021
  %1023 = vadd.xlane.f32.xlu0 %v1022
  %v1024 = vpop.xlane.xlu0 %1023
  %v1025 = vmul.f32 %v1003, 0.001953125
  %v1026 = vmul.f32 %v1010, 0.001953125
  %v1027 = vmul.f32 %v1017, 0.001953125
  %v1028 = vmul.f32 %v1024, 0.001953125
  %v1029 = vmul.f32 %v953, %v953
  %v1030 = vmul.f32 %v954, %v954
  %v1031 = vmul.f32 %v955, %v955
  %v1032 = vmul.f32 %v956, %v956
  %v1033 = vsub.f32 %v1025, %v1029
  %v1034 = vsub.f32 %v1026, %v1030
  %v1035 = vsub.f32 %v1027, %v1031
  %v1036 = vsub.f32 %v1028, %v1032
  %v1037 = vmax.f32 %v1033, 0.0
  %v1038 = vmax.f32 %v1034, 0.0
  %v1039 = vmax.f32 %v1035, 0.0
  %v1040 = vmax.f32 %v1036, 0.0
  %v1041 = vadd.f32 %v1037, 1e-05
  %v1042 = vadd.f32 %v1038, 1e-05
  %v1043 = vadd.f32 %v1039, 1e-05
  %v1044 = vadd.f32 %v1040, 1e-05
  %v1045 = vrsqrt.pop %v1041
  %v1046 = vmul.f32 %v1045, %v1041
  %v1047 = vmul.f32 %v1046, %v1045
  %v1048 = vmul.f32 0.5, %v1047
  %v1049 = vsub.f32 1.5, %v1048
  %v1050 = vmul.f32 %v1045, %v1049
  %vm1051 = vweird.f32 %v1041
  %vm1052 = vweird.f32 %v1045
  %vm1053 = vmor %vm1051, %vm1052
  %v1054 = vsel %vm1053, %v1045, %v1050
  %v1055 = vrsqrt.pop %v1042
  %v1056 = vmul.f32 %v1055, %v1042
  %v1057 = vmul.f32 %v1056, %v1055
  %v1058 = vmul.f32 0.5, %v1057
  %v1059 = vsub.f32 1.5, %v1058
  %v1060 = vmul.f32 %v1055, %v1059
  %vm1061 = vweird.f32 %v1042
  %vm1062 = vweird.f32 %v1055
  %vm1063 = vmor %vm1061, %vm1062
  %v1064 = vsel %vm1063, %v1055, %v1060
  %v1065 = vrsqrt.pop %v1043
  %v1066 = vmul.f32 %v1065, %v1043
  %v1067 = vmul.f32 %v1066, %v1065
  %v1068 = vmul.f32 0.5, %v1067
  %v1069 = vsub.f32 1.5, %v1068
  %v1070 = vmul.f32 %v1065, %v1069
  %vm1071 = vweird.f32 %v1043
  %vm1072 = vweird.f32 %v1065
  %vm1073 = vmor %vm1071, %vm1072
  %v1074 = vsel %vm1073, %v1065, %v1070
  %v1075 = vrsqrt.pop %v1044
  %v1076 = vmul.f32 %v1075, %v1044
  %v1077 = vmul.f32 %v1076, %v1075
  %v1078 = vmul.f32 0.5, %v1077
  %v1079 = vsub.f32 1.5, %v1078
  %v1080 = vmul.f32 %v1075, %v1079
  %vm1081 = vweird.f32 %v1044
  %vm1082 = vweird.f32 %v1075
  %vm1083 = vmor %vm1081, %vm1082
  %v1084 = vsel %vm1083, %v1075, %v1080
  %v1085 = vmul.f32 %v884, %v1054
  %v1086 = vmul.f32 %v885, %v1064
  %v1087 = vmul.f32 %v886, %v1074
  %v1088 = vmul.f32 %v887, %v1084
  %v1089 = vmul.f32 %v953, %v1085
  %v1090 = vmul.f32 %v954, %v1086
  %v1091 = vmul.f32 %v955, %v1087
  %v1092 = vmul.f32 %v956, %v1088
  %v1093 = vsub.f32 %v888, %v1089
  %v1094 = vsub.f32 %v889, %v1090
  %v1095 = vsub.f32 %v890, %v1091
  %v1096 = vsub.f32 %v891, %v1092
  %1098 = vset.pattern.permute.xlu0 0
  %1099 = vperm.xlu0 %1098, %v1085
  %v1100 = vpop.permute.xlu0 %1099
  %1103 = vset.pattern.permute.xlu0 0
  %1104 = vperm.xlu0 %1103, %v1086
  %v1105 = vpop.permute.xlu0 %1104
  %1108 = vset.pattern.permute.xlu0 0
  %1109 = vperm.xlu0 %1108, %v1087
  %v1110 = vpop.permute.xlu0 %1109
  %1113 = vset.pattern.permute.xlu0 0
  %1114 = vperm.xlu0 %1113, %v1088
  %v1115 = vpop.permute.xlu0 %1114
  %v1117 = vmul.f32 %v864, %v1100
  %v1118 = vmul.f32 %v865, %v1100
  %v1119 = vmul.f32 %v866, %v1100
  %v1120 = vmul.f32 %v867, %v1100
  %v1121 = vmul.f32 %v868, %v1100
  %v1122 = vmul.f32 %v869, %v1105
  %v1123 = vmul.f32 %v870, %v1105
  %v1124 = vmul.f32 %v871, %v1105
  %v1125 = vmul.f32 %v872, %v1105
  %v1126 = vmul.f32 %v873, %v1105
  %v1127 = vmul.f32 %v874, %v1110
  %v1128 = vmul.f32 %v875, %v1110
  %v1129 = vmul.f32 %v876, %v1110
  %v1130 = vmul.f32 %v877, %v1110
  %v1131 = vmul.f32 %v878, %v1110
  %v1132 = vmul.f32 %v879, %v1115
  %v1133 = vmul.f32 %v880, %v1115
  %v1134 = vmul.f32 %v881, %v1115
  %v1135 = vmul.f32 %v882, %v1115
  %v1136 = vmul.f32 %v883, %v1115
  %1138 = vset.pattern.permute.xlu0 0
  %1139 = vperm.xlu0 %1138, %v1093
  %v1140 = vpop.permute.xlu0 %1139
  %1143 = vset.pattern.permute.xlu0 0
  %1144 = vperm.xlu0 %1143, %v1094
  %v1145 = vpop.permute.xlu0 %1144
  %1148 = vset.pattern.permute.xlu0 0
  %1149 = vperm.xlu0 %1148, %v1095
  %v1150 = vpop.permute.xlu0 %1149
  %1153 = vset.pattern.permute.xlu0 0
  %1154 = vperm.xlu0 %1153, %v1096
  %v1155 = vpop.permute.xlu0 %1154
  %v1157 = vadd.f32 %v1117, %v1140
  %v1158 = vadd.f32 %v1118, %v1140
  %v1159 = vadd.f32 %v1119, %v1140
  %v1160 = vadd.f32 %v1120, %v1140
  %v1161 = vadd.f32 %v1121, %v1140
  %v1162 = vadd.f32 %v1122, %v1145
  %v1163 = vadd.f32 %v1123, %v1145
  %v1164 = vadd.f32 %v1124, %v1145
  %v1165 = vadd.f32 %v1125, %v1145
  %v1166 = vadd.f32 %v1126, %v1145
  %v1167 = vadd.f32 %v1127, %v1150
  %v1168 = vadd.f32 %v1128, %v1150
  %v1169 = vadd.f32 %v1129, %v1150
  %v1170 = vadd.f32 %v1130, %v1150
  %v1171 = vadd.f32 %v1131, %v1150
  %v1172 = vadd.f32 %v1132, %v1155
  %v1173 = vadd.f32 %v1133, %v1155
  %v1174 = vadd.f32 %v1134, %v1155
  %v1175 = vadd.f32 %v1135, %v1155
  %v1176 = vadd.f32 %v1136, %v1155
  %v1177 = vmul.f32 %v1157, 0.2
  %v1178 = vmul.f32 %v1158, 0.2
  %v1179 = vmul.f32 %v1159, 0.2
  %v1180 = vmul.f32 %v1160, 0.2
  %v1181 = vmul.f32 %v1161, 0.2
  %v1182 = vmul.f32 %v1162, 0.2
  %v1183 = vmul.f32 %v1163, 0.2
  %v1184 = vmul.f32 %v1164, 0.2
  %v1185 = vmul.f32 %v1165, 0.2
  %v1186 = vmul.f32 %v1166, 0.2
  %v1187 = vmul.f32 %v1167, 0.2
  %v1188 = vmul.f32 %v1168, 0.2
  %v1189 = vmul.f32 %v1169, 0.2
  %v1190 = vmul.f32 %v1170, 0.2
  %v1191 = vmul.f32 %v1171, 0.2
  %v1192 = vmul.f32 %v1172, 0.2
  %v1193 = vmul.f32 %v1173, 0.2
  %v1194 = vmul.f32 %v1174, 0.2
  %v1195 = vmul.f32 %v1175, 0.2
  %v1196 = vmul.f32 %v1176, 0.2
  %v1197 = vmax.f32 %v1157, %v1177
  %v1198 = vmax.f32 %v1158, %v1178
  %v1199 = vmax.f32 %v1159, %v1179
  %v1200 = vmax.f32 %v1160, %v1180
  %v1201 = vmax.f32 %v1161, %v1181
  %v1202 = vmax.f32 %v1162, %v1182
  %v1203 = vmax.f32 %v1163, %v1183
  %v1204 = vmax.f32 %v1164, %v1184
  %v1205 = vmax.f32 %v1165, %v1185
  %v1206 = vmax.f32 %v1166, %v1186
  %v1207 = vmax.f32 %v1167, %v1187
  %v1208 = vmax.f32 %v1168, %v1188
  %v1209 = vmax.f32 %v1169, %v1189
  %v1210 = vmax.f32 %v1170, %v1190
  %v1211 = vmax.f32 %v1171, %v1191
  %v1212 = vmax.f32 %v1172, %v1192
  %v1213 = vmax.f32 %v1173, %v1193
  %v1214 = vmax.f32 %v1174, %v1194
  %v1215 = vmax.f32 %v1175, %v1195
  %v1216 = vmax.f32 %v1176, %v1196
  %v1217 = vpack.c.bf16 %v1198, %v1197
  %v1218 = vpack.c.bf16 %v1200, %v1199
  %v1219 = vpack.c.bf16 %v1201, %v1201
  %v1220 = vpack.c.bf16 %v1203, %v1202
  %v1221 = vpack.c.bf16 %v1205, %v1204
  %v1222 = vpack.c.bf16 %v1206, %v1206
  %v1223 = vpack.c.bf16 %v1208, %v1207
  %v1224 = vpack.c.bf16 %v1210, %v1209
  %v1225 = vpack.c.bf16 %v1211, %v1211
  %v1226 = vpack.c.bf16 %v1213, %v1212
  %v1227 = vpack.c.bf16 %v1215, %v1214
  %v1228 = vpack.c.bf16 %v1216, %v1216
  %1229 = vst [vmem:[%s5] sm:$0xff] %v1217
  %1230 = vst [vmem:[%s5 + $0x8] sm:$0xff] %v1218
  %vm1231 = vcmask 535552
  %1232 = vst.msk [vmem:[%s5 + $0x10] sm:$0xf] %vm1231, %v1219
  %1233 = vst [vmem:[%s5 + $0x14] sm:$0xff] %v1220
  %1234 = vst [vmem:[%s5 + $0x1c] sm:$0xff] %v1221
  %1235 = vst.msk [vmem:[%s5 + $0x24] sm:$0xf] %vm1231, %v1222
  %1236 = vst [vmem:[%s5 + $0x28] sm:$0xff] %v1223
  %1237 = vst [vmem:[%s5 + $0x30] sm:$0xff] %v1224
  %1238 = vst.msk [vmem:[%s5 + $0x38] sm:$0xf] %vm1231, %v1225
  %1239 = vst [vmem:[%s5 + $0x3c] sm:$0xff] %v1226
  %1240 = vst [vmem:[%s5 + $0x44] sm:$0xff] %v1227
  %1241 = vst.msk [vmem:[%s5 + $0x4c] sm:$0xf] %vm1231, %v1228
  // Predicated region
  $region22: #{critic_forward.7} parent=0 // pred_check
    _
  $region23: #{critic_forward.7} parent=0 // pred_check_branch
    %1243 = sbr.rel (0) target = $region25
  $region24: #{critic_forward.7} parent=0 // pred_region
    _
  $region25: #{critic_forward.7} parent=0 // pred_fallthru
    _
  // Predicated region
  $region26: #{critic_forward.7} parent=0 // pred_check
    _
  $region27: #{critic_forward.7} parent=0 // pred_check_branch
    %1245 = sbr.rel (0) target = $region29
  $region28: #{critic_forward.7} parent=0 // pred_region
    _
  $region29: #{critic_forward.7} parent=0 // pred_fallthru
    _

// kernel: critic_forward.8
$region0: #{critic_forward.8}
  #allocation0 [shape = 'u32[]', space=smem, size = 0x4, offset = 0x4, fixed_abs, tag = 'smem constant byte address 0x4 - core index']
  #allocation1 [shape = 'u32[72,128]{1,0:T(1,128)}', space=vmem, size = 0x9000, scoped, tag = 'internal scratch']
  %s0 = inlined_call_operand.vmem [shape: bf16[128,172], index: 0, kind: input, shape index: {}]
  %s1 = inlined_call_operand.vmem [shape: bf16[4,64,128], index: 1, kind: input, shape index: {}]
  %s2 = inlined_call_operand.vmem [shape: f32[64,1], index: 2, kind: input, shape index: {}]
  %s3 = inlined_call_operand.vmem [shape: f32[64,1], index: 3, kind: input, shape index: {}]
  %s4 = inlined_call_operand.vmem [shape: f32[1,162], index: 4, kind: input, shape index: {}]
  %s5 = inlined_call_operand.vmem [shape: bf16[64,162], index: 5, kind: output, shape index: {}]
  %s6 = sld [smem:[#allocation0]]
  $region30: #{critic_forward.8} parent=0
    _
  %s8 = ssub.s32 1, %s6
  %s9 = scalar_select 0, %s8, %s6
  // Predicated region
  $region2: #{critic_forward.8} parent=0 // pred_check
    _
  $region3: #{critic_forward.8} parent=0 // pred_check_branch
    %11 = sbr.rel (0) target = $region5
  $region4: #{critic_forward.8} parent=0 // pred_region
    _
  $region5: #{critic_forward.8} parent=0 // pred_fallthru
    _
  // Predicated region
  $region6: #{critic_forward.8} parent=0 // pred_check
    _
  $region7: #{critic_forward.8} parent=0 // pred_check_branch
    %13 = sbr.rel (0) target = $region9
  $region8: #{critic_forward.8} parent=0 // pred_region
    _
  $region9: #{critic_forward.8} parent=0 // pred_fallthru
    _
  // Predicated region
  $region10: #{critic_forward.8} parent=0 // pred_check
    _
  $region11: #{critic_forward.8} parent=0 // pred_check_branch
    %15 = sbr.rel (0) target = $region13
  $region12: #{critic_forward.8} parent=0 // pred_region
    _
  $region13: #{critic_forward.8} parent=0 // pred_fallthru
    _
  // Predicated region
  $region14: #{critic_forward.8} parent=0 // pred_check
    _
  $region15: #{critic_forward.8} parent=0 // pred_check_branch
    %17 = sbr.rel (0) target = $region17
  $region16: #{critic_forward.8} parent=0 // pred_region
    _
  $region17: #{critic_forward.8} parent=0 // pred_fallthru
    _
  // Predicated region
  $region18: #{critic_forward.8} parent=0 // pred_check
    _
  $region19: #{critic_forward.8} parent=0 // pred_check_branch
    %19 = sbr.rel (0) target = $region21
  $region20: #{critic_forward.8} parent=0 // pred_region
    _
  $region21: #{critic_forward.8} parent=0 // pred_fallthru
    _
  %v20 = vld [vmem:[%s1] sm:$0xf]
  %v21 = vld [vmem:[%s1 + $0x4] sm:$0xf]
  %v22 = vld [vmem:[%s1 + $0x8] sm:$0xf]
  %v23 = vld [vmem:[%s1 + $0xc] sm:$0xf]
  %v24 = vld [vmem:[%s1 + $0x10] sm:$0xf]
  %v25 = vld [vmem:[%s1 + $0x14] sm:$0xf]
  %v26 = vld [vmem:[%s1 + $0x18] sm:$0xf]
  %v27 = vld [vmem:[%s1 + $0x1c] sm:$0xf]
  %v28 = vld [vmem:[%s0] sm:$0xff]
  %v29 = vld [vmem:[%s0 + $0x8] sm:$0xff]
  %v30 = vld [vmem:[%s0 + $0x10] sm:$0xff]
  %v31 = vld [vmem:[%s0 + $0x18] sm:$0xff]
  %v32 = vld [vmem:[%s0 + $0x20] sm:$0xff]
  %v33 = vld [vmem:[%s0 + $0x28] sm:$0xff]
  %v34 = vld [vmem:[%s0 + $0x30] sm:$0xff]
  %v35 = vld [vmem:[%s0 + $0x38] sm:$0xff]
  %v36 = vld [vmem:[%s0 + $0x40] sm:$0xff]
  %v37 = vld [vmem:[%s0 + $0x48] sm:$0xff]
  %v38 = vld [vmem:[%s0 + $0x50] sm:$0xff]
  %v39 = vld [vmem:[%s0 + $0x58] sm:$0xff]
  %v40 = vld [vmem:[%s0 + $0x60] sm:$0xff]
  %v41 = vld [vmem:[%s0 + $0x68] sm:$0xff]
  %v42 = vld [vmem:[%s0 + $0x70] sm:$0xff]
  %v43 = vld [vmem:[%s0 + $0x78] sm:$0xff]
  %s44 = scalar_lea.vmem %s1, 32
  %v45 = vld [vmem:[%s44] sm:$0xf]
  %v46 = vld [vmem:[%s44 + $0x4] sm:$0xf]
  %v47 = vld [vmem:[%s44 + $0x8] sm:$0xf]
  %v48 = vld [vmem:[%s44 + $0xc] sm:$0xf]
  %v49 = vld [vmem:[%s44 + $0x10] sm:$0xf]
  %v50 = vld [vmem:[%s44 + $0x14] sm:$0xf]
  %v51 = vld [vmem:[%s44 + $0x18] sm:$0xf]
  %v52 = vld [vmem:[%s44 + $0x1c] sm:$0xf]
  %v61 = vunpack.c.l.b16 %v45
  %v62 = vunpack.c.l.b16 %v46
  %v63 = vunpack.c.l.b16 %v47
  %v64 = vunpack.c.l.b16 %v48
  %v65 = vunpack.c.l.b16 %v49
  %v66 = vunpack.c.l.b16 %v50
  %v67 = vunpack.c.l.b16 %v51
  %v68 = vunpack.c.l.b16 %v52
  %v69 = vpack.c.b16 %v62, %v61
  %v70 = vpack.c.b16 %v64, %v63
  %v71 = vpack.c.b16 %v66, %v65
  %v72 = vpack.c.b16 %v68, %v67
  %v93 = vunpack.c.l.b16 %v28
  %v94 = vunpack.c.h.b16 %v28
  %v95 = vunpack.c.l.b16 %v29
  %v96 = vunpack.c.h.b16 %v29
  %v97 = vunpack.c.l.b16 %v30
  %v98 = vunpack.c.h.b16 %v30
  %v99 = vunpack.c.l.b16 %v31
  %v100 = vunpack.c.h.b16 %v31
  %v101 = vunpack.c.l.b16 %v32
  %v102 = vunpack.c.h.b16 %v32
  %v103 = vunpack.c.l.b16 %v33
  %v104 = vunpack.c.h.b16 %v33
  %v105 = vunpack.c.l.b16 %v34
  %v106 = vunpack.c.h.b16 %v34
  %v107 = vunpack.c.l.b16 %v35
  %v108 = vunpack.c.h.b16 %v35
  %v109 = vunpack.c.l.b16 %v36
  %v110 = vunpack.c.h.b16 %v36
  %v111 = vunpack.c.l.b16 %v37
  %v112 = vunpack.c.h.b16 %v37
  %v113 = vunpack.c.l.b16 %v38
  %v114 = vunpack.c.h.b16 %v38
  %v115 = vunpack.c.l.b16 %v39
  %v116 = vunpack.c.h.b16 %v39
  %v117 = vunpack.c.l.b16 %v40
  %v118 = vunpack.c.h.b16 %v40
  %v119 = vunpack.c.l.b16 %v41
  %v120 = vunpack.c.h.b16 %v41
  %v121 = vunpack.c.l.b16 %v42
  %v122 = vunpack.c.h.b16 %v42
  %v123 = vunpack.c.l.b16 %v43
  %v124 = vunpack.c.h.b16 %v43
  %v125 = vpack.c.b16 %v95, %v93
  %v126 = vpack.c.b16 %v96, %v94
  %v127 = vpack.c.b16 %v99, %v97
  %v128 = vpack.c.b16 %v100, %v98
  %v129 = vpack.c.b16 %v103, %v101
  %v130 = vpack.c.b16 %v104, %v102
  %v131 = vpack.c.b16 %v107, %v105
  %v132 = vpack.c.b16 %v108, %v106
  %v133 = vpack.c.b16 %v111, %v109
  %v134 = vpack.c.b16 %v112, %v110
  %v135 = vpack.c.b16 %v115, %v113
  %v136 = vpack.c.b16 %v116, %v114
  %v137 = vpack.c.b16 %v119, %v117
  %v138 = vpack.c.b16 %v120, %v118
  %v139 = vpack.c.b16 %v123, %v121
  %v140 = vpack.c.b16 %v124, %v122
  %141 = vrot.lane.b32.xlu0 %v125, 127
  %v142 = vpop.permute.xlu0 %141
  %143 = vrot.lane.b32.xlu0 %v126, 127
  %v144 = vpop.permute.xlu0 %143
  %145 = vrot.lane.b32.xlu0 %v127, 127
  %v146 = vpop.permute.xlu0 %145
  %147 = vrot.lane.b32.xlu0 %v128, 127
  %v148 = vpop.permute.xlu0 %147
  %149 = vrot.lane.b32.xlu0 %v129, 127
  %v150 = vpop.permute.xlu0 %149
  %151 = vrot.lane.b32.xlu0 %v130, 127
  %v152 = vpop.permute.xlu0 %151
  %153 = vrot.lane.b32.xlu0 %v131, 127
  %v154 = vpop.permute.xlu0 %153
  %155 = vrot.lane.b32.xlu0 %v132, 127
  %v156 = vpop.permute.xlu0 %155
  %157 = vrot.lane.b32.xlu0 %v133, 127
  %v158 = vpop.permute.xlu0 %157
  %159 = vrot.lane.b32.xlu0 %v134, 127
  %v160 = vpop.permute.xlu0 %159
  %161 = vrot.lane.b32.xlu0 %v135, 127
  %v162 = vpop.permute.xlu0 %161
  %163 = vrot.lane.b32.xlu0 %v136, 127
  %v164 = vpop.permute.xlu0 %163
  %165 = vrot.lane.b32.xlu0 %v137, 127
  %v166 = vpop.permute.xlu0 %165
  %167 = vrot.lane.b32.xlu0 %v138, 127
  %v168 = vpop.permute.xlu0 %167
  %169 = vrot.lane.b32.xlu0 %v139, 127
  %v170 = vpop.permute.xlu0 %169
  %171 = vrot.lane.b32.xlu0 %v140, 127
  %v172 = vpop.permute.xlu0 %171
  %vm173 = vcmask 1039360
  %v174 = vsel %vm173, %v142, %v144
  %v175 = vsel %vm173, %v146, %v148
  %v176 = vsel %vm173, %v150, %v152
  %v177 = vsel %vm173, %v154, %v156
  %v178 = vsel %vm173, %v158, %v160
  %v179 = vsel %vm173, %v162, %v164
  %v180 = vsel %vm173, %v166, %v168
  %v181 = vsel %vm173, %v170, %v172
  %198 = vmatpush.bf16.msra.mxu0 %v181
  %199 = vmatpush.bf16.msra.mxu0 %v180
  %200 = vmatpush.bf16.msra.mxu0 %v179
  %201 = vmatpush.bf16.msra.mxu0 %v178
  %202 = vmatpush.bf16.msra.mxu0 %v177
  %203 = vmatpush.bf16.msra.mxu0 %v176
  %204 = vmatpush.bf16.msra.mxu0 %v175
  %205 = vmatpush.bf16.msra.mxu0 %v174
  %206 = vmatmul.bf16.gmra.mxu0 %v69
  %v207 = vpop.f32.mrf.mxu0
  %v208 = vadd.f32 0.0, %v207
  %v209 = vpop.f32.mrf.mxu0
  %v210 = vadd.f32 0.0, %v209
  %211 = vmatmul.bf16.gmra.mxu0 %v70
  %v212 = vpop.f32.mrf.mxu0
  %v213 = vadd.f32 0.0, %v212
  %v214 = vpop.f32.mrf.mxu0
  %v215 = vadd.f32 0.0, %v214
  %216 = vmatmul.bf16.gmra.mxu0 %v71
  %v217 = vpop.f32.mrf.mxu0
  %v218 = vadd.f32 0.0, %v217
  %v219 = vpop.f32.mrf.mxu0
  %v220 = vadd.f32 0.0, %v219
  %221 = vmatmul.bf16.gmra.mxu0 %v72
  %v222 = vpop.f32.mrf.mxu0
  %v223 = vadd.f32 0.0, %v222
  %v224 = vpop.f32.mrf.mxu0
  %v225 = vadd.f32 0.0, %v224
  %226 = vdwg.mxu0
  %227 = vmatpush.bf16.msra.mxu0 %v172
  %228 = vmatpush.bf16.msra.mxu0 %v168
  %229 = vmatpush.bf16.msra.mxu0 %v164
  %230 = vmatpush.bf16.msra.mxu0 %v160
  %231 = vmatpush.bf16.msra.mxu0 %v156
  %232 = vmatpush.bf16.msra.mxu0 %v152
  %233 = vmatpush.bf16.msra.mxu0 %v148
  %234 = vmatpush.bf16.msra.mxu0 %v144
  %235 = vmatmul.bf16.gmra.mxu0 %v69
  %v236 = vpop.f32.mrf.mxu0
  %v237 = vadd.f32 0.0, %v236
  %v238 = vpop.f32.mrf.mxu0
  %v239 = vadd.f32 0.0, %v238
  %240 = vmatmul.bf16.gmra.mxu0 %v70
  %v241 = vpop.f32.mrf.mxu0
  %v242 = vadd.f32 0.0, %v241
  %v243 = vpop.f32.mrf.mxu0
  %v244 = vadd.f32 0.0, %v243
  %245 = vmatmul.bf16.gmra.mxu0 %v71
  %v246 = vpop.f32.mrf.mxu0
  %v247 = vadd.f32 0.0, %v246
  %v248 = vpop.f32.mrf.mxu0
  %v249 = vadd.f32 0.0, %v248
  %250 = vmatmul.bf16.gmra.mxu0 %v72
  %v251 = vpop.f32.mrf.mxu0
  %v252 = vadd.f32 0.0, %v251
  %v253 = vpop.f32.mrf.mxu0
  %v254 = vadd.f32 0.0, %v253
  %255 = vdwg.mxu0
  %v264 = vunpack.c.l.b16 %v20
  %v265 = vunpack.c.l.b16 %v21
  %v266 = vunpack.c.l.b16 %v22
  %v267 = vunpack.c.l.b16 %v23
  %v268 = vunpack.c.l.b16 %v24
  %v269 = vunpack.c.l.b16 %v25
  %v270 = vunpack.c.l.b16 %v26
  %v271 = vunpack.c.l.b16 %v27
  %v272 = vpack.c.b16 %v265, %v264
  %v273 = vpack.c.b16 %v267, %v266
  %v274 = vpack.c.b16 %v269, %v268
  %v275 = vpack.c.b16 %v271, %v270
  %296 = vmatpush.bf16.msra.mxu0 %v139
  %297 = vmatpush.bf16.msra.mxu0 %v137
  %298 = vmatpush.bf16.msra.mxu0 %v135
  %299 = vmatpush.bf16.msra.mxu0 %v133
  %300 = vmatpush.bf16.msra.mxu0 %v131
  %301 = vmatpush.bf16.msra.mxu0 %v129
  %302 = vmatpush.bf16.msra.mxu0 %v127
  %303 = vmatpush.bf16.msra.mxu0 %v125
  %304 = vmatmul.bf16.gmra.mxu0 %v272
  %v305 = vpop.f32.mrf.mxu0
  %v306 = vadd.f32 %v208, %v305
  %v307 = vpop.f32.mrf.mxu0
  %v308 = vadd.f32 %v210, %v307
  %309 = vmatmul.bf16.gmra.mxu0 %v273
  %v310 = vpop.f32.mrf.mxu0
  %v311 = vadd.f32 %v213, %v310
  %v312 = vpop.f32.mrf.mxu0
  %v313 = vadd.f32 %v215, %v312
  %314 = vmatmul.bf16.gmra.mxu0 %v274
  %v315 = vpop.f32.mrf.mxu0
  %v316 = vadd.f32 %v218, %v315
  %v317 = vpop.f32.mrf.mxu0
  %v318 = vadd.f32 %v220, %v317
  %319 = vmatmul.bf16.gmra.mxu0 %v275
  %v320 = vpop.f32.mrf.mxu0
  %v321 = vadd.f32 %v223, %v320
  %v322 = vpop.f32.mrf.mxu0
  %v323 = vadd.f32 %v225, %v322
  %324 = vdwg.mxu0
  %325 = vmatpush.bf16.msra.mxu0 %v140
  %326 = vmatpush.bf16.msra.mxu0 %v138
  %327 = vmatpush.bf16.msra.mxu0 %v136
  %328 = vmatpush.bf16.msra.mxu0 %v134
  %329 = vmatpush.bf16.msra.mxu0 %v132
  %330 = vmatpush.bf16.msra.mxu0 %v130
  %331 = vmatpush.bf16.msra.mxu0 %v128
  %332 = vmatpush.bf16.msra.mxu0 %v126
  %333 = vmatmul.bf16.gmra.mxu0 %v272
  %v334 = vpop.f32.mrf.mxu0
  %v335 = vadd.f32 %v237, %v334
  %v336 = vpop.f32.mrf.mxu0
  %v337 = vadd.f32 %v239, %v336
  %338 = vmatmul.bf16.gmra.mxu0 %v273
  %v339 = vpop.f32.mrf.mxu0
  %v340 = vadd.f32 %v242, %v339
  %v341 = vpop.f32.mrf.mxu0
  %v342 = vadd.f32 %v244, %v341
  %343 = vmatmul.bf16.gmra.mxu0 %v274
  %v344 = vpop.f32.mrf.mxu0
  %v345 = vadd.f32 %v247, %v344
  %v346 = vpop.f32.mrf.mxu0
  %v347 = vadd.f32 %v249, %v346
  %348 = vmatmul.bf16.gmra.mxu0 %v275
  %v349 = vpop.f32.mrf.mxu0
  %v350 = vadd.f32 %v252, %v349
  %v351 = vpop.f32.mrf.mxu0
  %v352 = vadd.f32 %v254, %v351
  %353 = vdwg.mxu0
  %s354 = scalar_lea.vmem %s1, 64
  %v355 = vld [vmem:[%s354] sm:$0xf]
  %v356 = vld [vmem:[%s354 + $0x4] sm:$0xf]
  %v357 = vld [vmem:[%s354 + $0x8] sm:$0xf]
  %v358 = vld [vmem:[%s354 + $0xc] sm:$0xf]
  %v359 = vld [vmem:[%s354 + $0x10] sm:$0xf]
  %v360 = vld [vmem:[%s354 + $0x14] sm:$0xf]
  %v361 = vld [vmem:[%s354 + $0x18] sm:$0xf]
  %v362 = vld [vmem:[%s354 + $0x1c] sm:$0xf]
  %v371 = vunpack.c.l.b16 %v355
  %v372 = vunpack.c.l.b16 %v356
  %v373 = vunpack.c.l.b16 %v357
  %v374 = vunpack.c.l.b16 %v358
  %v375 = vunpack.c.l.b16 %v359
  %v376 = vunpack.c.l.b16 %v360
  %v377 = vunpack.c.l.b16 %v361
  %v378 = vunpack.c.l.b16 %v362
  %v379 = vpack.c.b16 %v372, %v371
  %v380 = vpack.c.b16 %v374, %v373
  %v381 = vpack.c.b16 %v376, %v375
  %v382 = vpack.c.b16 %v378, %v377
  %387 = vrot.lane.b32.xlu0 %v125, 119
  %v388 = vpop.permute.xlu0 %387
  %389 = vrot.lane.b32.xlu0 %v126, 119
  %v390 = vpop.permute.xlu0 %389
  %391 = vrot.lane.b32.xlu0 %v127, 119
  %v392 = vpop.permute.xlu0 %391
  %393 = vrot.lane.b32.xlu0 %v128, 119
  %v394 = vpop.permute.xlu0 %393
  %395 = vrot.lane.b32.xlu0 %v129, 119
  %v396 = vpop.permute.xlu0 %395
  %397 = vrot.lane.b32.xlu0 %v130, 119
  %v398 = vpop.permute.xlu0 %397
  %399 = vrot.lane.b32.xlu0 %v131, 119
  %v400 = vpop.permute.xlu0 %399
  %401 = vrot.lane.b32.xlu0 %v132, 119
  %v402 = vpop.permute.xlu0 %401
  %403 = vrot.lane.b32.xlu0 %v133, 119
  %v404 = vpop.permute.xlu0 %403
  %405 = vrot.lane.b32.xlu0 %v134, 119
  %v406 = vpop.permute.xlu0 %405
  %407 = vrot.lane.b32.xlu0 %v135, 119
  %v408 = vpop.permute.xlu0 %407
  %409 = vrot.lane.b32.xlu0 %v136, 119
  %v410 = vpop.permute.xlu0 %409
  %411 = vrot.lane.b32.xlu0 %v137, 119
  %v412 = vpop.permute.xlu0 %411
  %413 = vrot.lane.b32.xlu0 %v138, 119
  %v414 = vpop.permute.xlu0 %413
  %415 = vrot.lane.b32.xlu0 %v139, 119
  %v416 = vpop.permute.xlu0 %415
  %417 = vrot.lane.b32.xlu0 %v140, 119
  %v418 = vpop.permute.xlu0 %417
  %vm419 = vcmask 973824
  %v420 = vsel %vm419, %v388, %v390
  %v421 = vsel %vm419, %v392, %v394
  %v422 = vsel %vm419, %v396, %v398
  %v423 = vsel %vm419, %v400, %v402
  %v424 = vsel %vm419, %v404, %v406
  %v425 = vsel %vm419, %v408, %v410
  %v426 = vsel %vm419, %v412, %v414
  %v427 = vsel %vm419, %v416, %v418
  %444 = vmatpush.bf16.msra.mxu0 %v427
  %445 = vmatpush.bf16.msra.mxu0 %v426
  %446 = vmatpush.bf16.msra.mxu0 %v425
  %447 = vmatpush.bf16.msra.mxu0 %v424
  %448 = vmatpush.bf16.msra.mxu0 %v423
  %449 = vmatpush.bf16.msra.mxu0 %v422
  %450 = vmatpush.bf16.msra.mxu0 %v421
  %451 = vmatpush.bf16.msra.mxu0 %v420
  %452 = vmatmul.bf16.gmra.mxu0 %v379
  %v453 = vpop.f32.mrf.mxu0
  %v454 = vadd.f32 0.0, %v453
  %v455 = vpop.f32.mrf.mxu0
  %v456 = vadd.f32 0.0, %v455
  %457 = vmatmul.bf16.gmra.mxu0 %v380
  %v458 = vpop.f32.mrf.mxu0
  %v459 = vadd.f32 0.0, %v458
  %v460 = vpop.f32.mrf.mxu0
  %v461 = vadd.f32 0.0, %v460
  %462 = vmatmul.bf16.gmra.mxu0 %v381
  %v463 = vpop.f32.mrf.mxu0
  %v464 = vadd.f32 0.0, %v463
  %v465 = vpop.f32.mrf.mxu0
  %v466 = vadd.f32 0.0, %v465
  %467 = vmatmul.bf16.gmra.mxu0 %v382
  %v468 = vpop.f32.mrf.mxu0
  %v469 = vadd.f32 0.0, %v468
  %v470 = vpop.f32.mrf.mxu0
  %v471 = vadd.f32 0.0, %v470
  %472 = vdwg.mxu0
  %473 = vmatpush.bf16.msra.mxu0 %v418
  %474 = vmatpush.bf16.msra.mxu0 %v414
  %475 = vmatpush.bf16.msra.mxu0 %v410
  %476 = vmatpush.bf16.msra.mxu0 %v406
  %477 = vmatpush.bf16.msra.mxu0 %v402
  %478 = vmatpush.bf16.msra.mxu0 %v398
  %479 = vmatpush.bf16.msra.mxu0 %v394
  %480 = vmatpush.bf16.msra.mxu0 %v390
  %481 = vmatmul.bf16.gmra.mxu0 %v379
  %v482 = vpop.f32.mrf.mxu0
  %v483 = vadd.f32 0.0, %v482
  %v484 = vpop.f32.mrf.mxu0
  %v485 = vadd.f32 0.0, %v484
  %486 = vmatmul.bf16.gmra.mxu0 %v380
  %v487 = vpop.f32.mrf.mxu0
  %v488 = vadd.f32 0.0, %v487
  %v489 = vpop.f32.mrf.mxu0
  %v490 = vadd.f32 0.0, %v489
  %491 = vmatmul.bf16.gmra.mxu0 %v381
  %v492 = vpop.f32.mrf.mxu0
  %v493 = vadd.f32 0.0, %v492
  %v494 = vpop.f32.mrf.mxu0
  %v495 = vadd.f32 0.0, %v494
  %496 = vmatmul.bf16.gmra.mxu0 %v382
  %v497 = vpop.f32.mrf.mxu0
  %v498 = vadd.f32 0.0, %v497
  %v499 = vpop.f32.mrf.mxu0
  %v500 = vadd.f32 0.0, %v499
  %501 = vdwg.mxu0
  %v502 = vadd.f32 %v306, %v454
  %v503 = vadd.f32 %v335, %v483
  %v504 = vadd.f32 %v308, %v456
  %v505 = vadd.f32 %v337, %v485
  %v506 = vadd.f32 %v311, %v459
  %v507 = vadd.f32 %v340, %v488
  %v508 = vadd.f32 %v313, %v461
  %v509 = vadd.f32 %v342, %v490
  %v510 = vadd.f32 %v316, %v464
  %v511 = vadd.f32 %v345, %v493
  %v512 = vadd.f32 %v318, %v466
  %v513 = vadd.f32 %v347, %v495
  %v514 = vadd.f32 %v321, %v469
  %v515 = vadd.f32 %v350, %v498
  %v516 = vadd.f32 %v323, %v471
  %v517 = vadd.f32 %v352, %v500
  %s518 = scalar_lea.vmem %s1, 96
  %v519 = vld [vmem:[%s518] sm:$0xf]
  %v520 = vld [vmem:[%s518 + $0x4] sm:$0xf]
  %v521 = vld [vmem:[%s518 + $0x8] sm:$0xf]
  %v522 = vld [vmem:[%s518 + $0xc] sm:$0xf]
  %v523 = vld [vmem:[%s518 + $0x10] sm:$0xf]
  %v524 = vld [vmem:[%s518 + $0x14] sm:$0xf]
  %v525 = vld [vmem:[%s518 + $0x18] sm:$0xf]
  %v526 = vld [vmem:[%s518 + $0x1c] sm:$0xf]
  %v535 = vunpack.c.l.b16 %v519
  %v536 = vunpack.c.l.b16 %v520
  %v537 = vunpack.c.l.b16 %v521
  %v538 = vunpack.c.l.b16 %v522
  %v539 = vunpack.c.l.b16 %v523
  %v540 = vunpack.c.l.b16 %v524
  %v541 = vunpack.c.l.b16 %v525
  %v542 = vunpack.c.l.b16 %v526
  %v543 = vpack.c.b16 %v536, %v535
  %v544 = vpack.c.b16 %v538, %v537
  %v545 = vpack.c.b16 %v540, %v539
  %v546 = vpack.c.b16 %v542, %v541
  %551 = vrot.lane.b32.xlu0 %v125, 118
  %v552 = vpop.permute.xlu0 %551
  %553 = vrot.lane.b32.xlu0 %v126, 118
  %v554 = vpop.permute.xlu0 %553
  %555 = vrot.lane.b32.xlu0 %v127, 118
  %v556 = vpop.permute.xlu0 %555
  %557 = vrot.lane.b32.xlu0 %v128, 118
  %v558 = vpop.permute.xlu0 %557
  %559 = vrot.lane.b32.xlu0 %v129, 118
  %v560 = vpop.permute.xlu0 %559
  %561 = vrot.lane.b32.xlu0 %v130, 118
  %v562 = vpop.permute.xlu0 %561
  %563 = vrot.lane.b32.xlu0 %v131, 118
  %v564 = vpop.permute.xlu0 %563
  %565 = vrot.lane.b32.xlu0 %v132, 118
  %v566 = vpop.permute.xlu0 %565
  %567 = vrot.lane.b32.xlu0 %v133, 118
  %v568 = vpop.permute.xlu0 %567
  %569 = vrot.lane.b32.xlu0 %v134, 118
  %v570 = vpop.permute.xlu0 %569
  %571 = vrot.lane.b32.xlu0 %v135, 118
  %v572 = vpop.permute.xlu0 %571
  %573 = vrot.lane.b32.xlu0 %v136, 118
  %v574 = vpop.permute.xlu0 %573
  %575 = vrot.lane.b32.xlu0 %v137, 118
  %v576 = vpop.permute.xlu0 %575
  %577 = vrot.lane.b32.xlu0 %v138, 118
  %v578 = vpop.permute.xlu0 %577
  %579 = vrot.lane.b32.xlu0 %v139, 118
  %v580 = vpop.permute.xlu0 %579
  %581 = vrot.lane.b32.xlu0 %v140, 118
  %v582 = vpop.permute.xlu0 %581
  %vm583 = vcmask 965632
  %v584 = vsel %vm583, %v552, %v554
  %v585 = vsel %vm583, %v556, %v558
  %v586 = vsel %vm583, %v560, %v562
  %v587 = vsel %vm583, %v564, %v566
  %v588 = vsel %vm583, %v568, %v570
  %v589 = vsel %vm583, %v572, %v574
  %v590 = vsel %vm583, %v576, %v578
  %v591 = vsel %vm583, %v580, %v582
  %608 = vmatpush.bf16.msra.mxu0 %v591
  %609 = vmatpush.bf16.msra.mxu0 %v590
  %610 = vmatpush.bf16.msra.mxu0 %v589
  %611 = vmatpush.bf16.msra.mxu0 %v588
  %612 = vmatpush.bf16.msra.mxu0 %v587
  %613 = vmatpush.bf16.msra.mxu0 %v586
  %614 = vmatpush.bf16.msra.mxu0 %v585
  %615 = vmatpush.bf16.msra.mxu0 %v584
  %616 = vmatmul.bf16.gmra.mxu0 %v543
  %v617 = vpop.f32.mrf.mxu0
  %v618 = vadd.f32 0.0, %v617
  %v619 = vpop.f32.mrf.mxu0
  %v620 = vadd.f32 0.0, %v619
  %621 = vmatmul.bf16.gmra.mxu0 %v544
  %v622 = vpop.f32.mrf.mxu0
  %v623 = vadd.f32 0.0, %v622
  %v624 = vpop.f32.mrf.mxu0
  %v625 = vadd.f32 0.0, %v624
  %626 = vmatmul.bf16.gmra.mxu0 %v545
  %v627 = vpop.f32.mrf.mxu0
  %v628 = vadd.f32 0.0, %v627
  %v629 = vpop.f32.mrf.mxu0
  %v630 = vadd.f32 0.0, %v629
  %631 = vmatmul.bf16.gmra.mxu0 %v546
  %v632 = vpop.f32.mrf.mxu0
  %v633 = vadd.f32 0.0, %v632
  %v634 = vpop.f32.mrf.mxu0
  %v635 = vadd.f32 0.0, %v634
  %636 = vdwg.mxu0
  %637 = vmatpush.bf16.msra.mxu0 %v582
  %638 = vmatpush.bf16.msra.mxu0 %v578
  %639 = vmatpush.bf16.msra.mxu0 %v574
  %640 = vmatpush.bf16.msra.mxu0 %v570
  %641 = vmatpush.bf16.msra.mxu0 %v566
  %642 = vmatpush.bf16.msra.mxu0 %v562
  %643 = vmatpush.bf16.msra.mxu0 %v558
  %644 = vmatpush.bf16.msra.mxu0 %v554
  %645 = vmatmul.bf16.gmra.mxu0 %v543
  %v646 = vpop.f32.mrf.mxu0
  %v647 = vadd.f32 0.0, %v646
  %v648 = vpop.f32.mrf.mxu0
  %v649 = vadd.f32 0.0, %v648
  %650 = vmatmul.bf16.gmra.mxu0 %v544
  %v651 = vpop.f32.mrf.mxu0
  %v652 = vadd.f32 0.0, %v651
  %v653 = vpop.f32.mrf.mxu0
  %v654 = vadd.f32 0.0, %v653
  %655 = vmatmul.bf16.gmra.mxu0 %v545
  %v656 = vpop.f32.mrf.mxu0
  %v657 = vadd.f32 0.0, %v656
  %v658 = vpop.f32.mrf.mxu0
  %v659 = vadd.f32 0.0, %v658
  %660 = vmatmul.bf16.gmra.mxu0 %v546
  %v661 = vpop.f32.mrf.mxu0
  %v662 = vadd.f32 0.0, %v661
  %v663 = vpop.f32.mrf.mxu0
  %v664 = vadd.f32 0.0, %v663
  %665 = vdwg.mxu0
  %v666 = vadd.f32 %v502, %v618
  %v667 = vadd.f32 %v503, %v647
  %v668 = vadd.f32 %v504, %v620
  %v669 = vadd.f32 %v505, %v649
  %v670 = vadd.f32 %v506, %v623
  %v671 = vadd.f32 %v507, %v652
  %v672 = vadd.f32 %v508, %v625
  %v673 = vadd.f32 %v509, %v654
  %v674 = vadd.f32 %v510, %v628
  %v675 = vadd.f32 %v511, %v657
  %v676 = vadd.f32 %v512, %v630
  %v677 = vadd.f32 %v513, %v659
  %v678 = vadd.f32 %v514, %v633
  %v679 = vadd.f32 %v515, %v662
  %v680 = vadd.f32 %v516, %v635
  %v681 = vadd.f32 %v517, %v664
  %v682 = vld [vmem:[%s2] sm:$0xff]
  %v683 = vld [vmem:[%s2 + $0x8] sm:$0xff]
  %v684 = vld [vmem:[%s2 + $0x10] sm:$0xff]
  %v685 = vld [vmem:[%s2 + $0x18] sm:$0xff]
  %v686 = vld [vmem:[%s2 + $0x20] sm:$0xff]
  %v687 = vld [vmem:[%s2 + $0x28] sm:$0xff]
  %v688 = vld [vmem:[%s2 + $0x30] sm:$0xff]
  %v689 = vld [vmem:[%s2 + $0x38] sm:$0xff]
  %v690 = vld [vmem:[%s3] sm:$0xff]
  %v691 = vld [vmem:[%s3 + $0x8] sm:$0xff]
  %v692 = vld [vmem:[%s3 + $0x10] sm:$0xff]
  %v693 = vld [vmem:[%s3 + $0x18] sm:$0xff]
  %v694 = vld [vmem:[%s3 + $0x20] sm:$0xff]
  %v695 = vld [vmem:[%s3 + $0x28] sm:$0xff]
  %v696 = vld [vmem:[%s3 + $0x30] sm:$0xff]
  %v697 = vld [vmem:[%s3 + $0x38] sm:$0xff]
  %v698 = vld [vmem:[%s4] sm:$0x3]
  %v700 = vperm.slane %v698, 0
  %v701 = vperm.slane %v698, 1
  %v704 = vmul.f32 %v666, %v700
  %v705 = vmul.f32 %v667, %v701
  %v706 = vmul.f32 %v668, %v700
  %v707 = vmul.f32 %v669, %v701
  %v708 = vmul.f32 %v670, %v700
  %v709 = vmul.f32 %v671, %v701
  %v710 = vmul.f32 %v672, %v700
  %v711 = vmul.f32 %v673, %v701
  %v712 = vmul.f32 %v674, %v700
  %v713 = vmul.f32 %v675, %v701
  %v714 = vmul.f32 %v676, %v700
  %v715 = vmul.f32 %v677, %v701
  %v716 = vmul.f32 %v678, %v700
  %v717 = vmul.f32 %v679, %v701
  %v718 = vmul.f32 %v680, %v700
  %v719 = vmul.f32 %v681, %v701
  %vm720 = vcmask 277504
  %v721 = vsel %vm720, %v705, 0.0
  %v722 = vadd.f32 %v704, %v721
  %723 = vadd.xlane.f32.xlu0 %v722
  %v724 = vpop.xlane.xlu0 %723
  %v725 = vsel %vm720, %v707, 0.0
  %v726 = vadd.f32 %v706, %v725
  %727 = vadd.xlane.f32.xlu0 %v726
  %v728 = vpop.xlane.xlu0 %727
  %v729 = vsel %vm720, %v709, 0.0
  %v730 = vadd.f32 %v708, %v729
  %731 = vadd.xlane.f32.xlu0 %v730
  %v732 = vpop.xlane.xlu0 %731
  %v733 = vsel %vm720, %v711, 0.0
  %v734 = vadd.f32 %v710, %v733
  %735 = vadd.xlane.f32.xlu0 %v734
  %v736 = vpop.xlane.xlu0 %735
  %v737 = vsel %vm720, %v713, 0.0
  %v738 = vadd.f32 %v712, %v737
  %739 = vadd.xlane.f32.xlu0 %v738
  %v740 = vpop.xlane.xlu0 %739
  %v741 = vsel %vm720, %v715, 0.0
  %v742 = vadd.f32 %v714, %v741
  %743 = vadd.xlane.f32.xlu0 %v742
  %v744 = vpop.xlane.xlu0 %743
  %v745 = vsel %vm720, %v717, 0.0
  %v746 = vadd.f32 %v716, %v745
  %747 = vadd.xlane.f32.xlu0 %v746
  %v748 = vpop.xlane.xlu0 %747
  %v749 = vsel %vm720, %v719, 0.0
  %v750 = vadd.f32 %v718, %v749
  %751 = vadd.xlane.f32.xlu0 %v750
  %v752 = vpop.xlane.xlu0 %751
  %v753 = vmul.f32 %v724, 0.0078125
  %v754 = vmul.f32 %v728, 0.0078125
  %v755 = vmul.f32 %v732, 0.0078125
  %v756 = vmul.f32 %v736, 0.0078125
  %v757 = vmul.f32 %v740, 0.0078125
  %v758 = vmul.f32 %v744, 0.0078125
  %v759 = vmul.f32 %v748, 0.0078125
  %v760 = vmul.f32 %v752, 0.0078125
  %v761 = vmul.f32 %v666, %v666
  %v762 = vmul.f32 %v667, %v667
  %v763 = vmul.f32 %v668, %v668
  %v764 = vmul.f32 %v669, %v669
  %v765 = vmul.f32 %v670, %v670
  %v766 = vmul.f32 %v671, %v671
  %v767 = vmul.f32 %v672, %v672
  %v768 = vmul.f32 %v673, %v673
  %v769 = vmul.f32 %v674, %v674
  %v770 = vmul.f32 %v675, %v675
  %v771 = vmul.f32 %v676, %v676
  %v772 = vmul.f32 %v677, %v677
  %v773 = vmul.f32 %v678, %v678
  %v774 = vmul.f32 %v679, %v679
  %v775 = vmul.f32 %v680, %v680
  %v776 = vmul.f32 %v681, %v681
  %v777 = vmul.f32 %v761, %v700
  %v778 = vmul.f32 %v762, %v701
  %v779 = vmul.f32 %v763, %v700
  %v780 = vmul.f32 %v764, %v701
  %v781 = vmul.f32 %v765, %v700
  %v782 = vmul.f32 %v766, %v701
  %v783 = vmul.f32 %v767, %v700
  %v784 = vmul.f32 %v768, %v701
  %v785 = vmul.f32 %v769, %v700
  %v786 = vmul.f32 %v770, %v701
  %v787 = vmul.f32 %v771, %v700
  %v788 = vmul.f32 %v772, %v701
  %v789 = vmul.f32 %v773, %v700
  %v790 = vmul.f32 %v774, %v701
  %v791 = vmul.f32 %v775, %v700
  %v792 = vmul.f32 %v776, %v701
  %v793 = vsel %vm720, %v778, 0.0
  %v794 = vadd.f32 %v777, %v793
  %795 = vadd.xlane.f32.xlu0 %v794
  %v796 = vpop.xlane.xlu0 %795
  %v797 = vsel %vm720, %v780, 0.0
  %v798 = vadd.f32 %v779, %v797
  %799 = vadd.xlane.f32.xlu0 %v798
  %v800 = vpop.xlane.xlu0 %799
  %v801 = vsel %vm720, %v782, 0.0
  %v802 = vadd.f32 %v781, %v801
  %803 = vadd.xlane.f32.xlu0 %v802
  %v804 = vpop.xlane.xlu0 %803
  %v805 = vsel %vm720, %v784, 0.0
  %v806 = vadd.f32 %v783, %v805
  %807 = vadd.xlane.f32.xlu0 %v806
  %v808 = vpop.xlane.xlu0 %807
  %v809 = vsel %vm720, %v786, 0.0
  %v810 = vadd.f32 %v785, %v809
  %811 = vadd.xlane.f32.xlu0 %v810
  %v812 = vpop.xlane.xlu0 %811
  %v813 = vsel %vm720, %v788, 0.0
  %v814 = vadd.f32 %v787, %v813
  %815 = vadd.xlane.f32.xlu0 %v814
  %v816 = vpop.xlane.xlu0 %815
  %v817 = vsel %vm720, %v790, 0.0
  %v818 = vadd.f32 %v789, %v817
  %819 = vadd.xlane.f32.xlu0 %v818
  %v820 = vpop.xlane.xlu0 %819
  %v821 = vsel %vm720, %v792, 0.0
  %v822 = vadd.f32 %v791, %v821
  %823 = vadd.xlane.f32.xlu0 %v822
  %v824 = vpop.xlane.xlu0 %823
  %v825 = vmul.f32 %v796, 0.0078125
  %v826 = vmul.f32 %v800, 0.0078125
  %v827 = vmul.f32 %v804, 0.0078125
  %v828 = vmul.f32 %v808, 0.0078125
  %v829 = vmul.f32 %v812, 0.0078125
  %v830 = vmul.f32 %v816, 0.0078125
  %v831 = vmul.f32 %v820, 0.0078125
  %v832 = vmul.f32 %v824, 0.0078125
  %v833 = vmul.f32 %v753, %v753
  %v834 = vmul.f32 %v754, %v754
  %v835 = vmul.f32 %v755, %v755
  %v836 = vmul.f32 %v756, %v756
  %v837 = vmul.f32 %v757, %v757
  %v838 = vmul.f32 %v758, %v758
  %v839 = vmul.f32 %v759, %v759
  %v840 = vmul.f32 %v760, %v760
  %v841 = vsub.f32 %v825, %v833
  %v842 = vsub.f32 %v826, %v834
  %v843 = vsub.f32 %v827, %v835
  %v844 = vsub.f32 %v828, %v836
  %v845 = vsub.f32 %v829, %v837
  %v846 = vsub.f32 %v830, %v838
  %v847 = vsub.f32 %v831, %v839
  %v848 = vsub.f32 %v832, %v840
  %v849 = vmax.f32 %v841, 0.0
  %v850 = vmax.f32 %v842, 0.0
  %v851 = vmax.f32 %v843, 0.0
  %v852 = vmax.f32 %v844, 0.0
  %v853 = vmax.f32 %v845, 0.0
  %v854 = vmax.f32 %v846, 0.0
  %v855 = vmax.f32 %v847, 0.0
  %v856 = vmax.f32 %v848, 0.0
  %v857 = vadd.f32 %v849, 1e-05
  %v858 = vadd.f32 %v850, 1e-05
  %v859 = vadd.f32 %v851, 1e-05
  %v860 = vadd.f32 %v852, 1e-05
  %v861 = vadd.f32 %v853, 1e-05
  %v862 = vadd.f32 %v854, 1e-05
  %v863 = vadd.f32 %v855, 1e-05
  %v864 = vadd.f32 %v856, 1e-05
  %v865 = vrsqrt.pop %v857
  %v866 = vmul.f32 %v865, %v857
  %v867 = vmul.f32 %v866, %v865
  %v868 = vmul.f32 0.5, %v867
  %v869 = vsub.f32 1.5, %v868
  %v870 = vmul.f32 %v865, %v869
  %vm871 = vweird.f32 %v857
  %vm872 = vweird.f32 %v865
  %vm873 = vmor %vm871, %vm872
  %v874 = vsel %vm873, %v865, %v870
  %v875 = vrsqrt.pop %v858
  %v876 = vmul.f32 %v875, %v858
  %v877 = vmul.f32 %v876, %v875
  %v878 = vmul.f32 0.5, %v877
  %v879 = vsub.f32 1.5, %v878
  %v880 = vmul.f32 %v875, %v879
  %vm881 = vweird.f32 %v858
  %vm882 = vweird.f32 %v875
  %vm883 = vmor %vm881, %vm882
  %v884 = vsel %vm883, %v875, %v880
  %v885 = vrsqrt.pop %v859
  %v886 = vmul.f32 %v885, %v859
  %v887 = vmul.f32 %v886, %v885
  %v888 = vmul.f32 0.5, %v887
  %v889 = vsub.f32 1.5, %v888
  %v890 = vmul.f32 %v885, %v889
  %vm891 = vweird.f32 %v859
  %vm892 = vweird.f32 %v885
  %vm893 = vmor %vm891, %vm892
  %v894 = vsel %vm893, %v885, %v890
  %v895 = vrsqrt.pop %v860
  %v896 = vmul.f32 %v895, %v860
  %v897 = vmul.f32 %v896, %v895
  %v898 = vmul.f32 0.5, %v897
  %v899 = vsub.f32 1.5, %v898
  %v900 = vmul.f32 %v895, %v899
  %vm901 = vweird.f32 %v860
  %vm902 = vweird.f32 %v895
  %vm903 = vmor %vm901, %vm902
  %v904 = vsel %vm903, %v895, %v900
  %v905 = vrsqrt.pop %v861
  %v906 = vmul.f32 %v905, %v861
  %v907 = vmul.f32 %v906, %v905
  %v908 = vmul.f32 0.5, %v907
  %v909 = vsub.f32 1.5, %v908
  %v910 = vmul.f32 %v905, %v909
  %vm911 = vweird.f32 %v861
  %vm912 = vweird.f32 %v905
  %vm913 = vmor %vm911, %vm912
  %v914 = vsel %vm913, %v905, %v910
  %v915 = vrsqrt.pop %v862
  %v916 = vmul.f32 %v915, %v862
  %v917 = vmul.f32 %v916, %v915
  %v918 = vmul.f32 0.5, %v917
  %v919 = vsub.f32 1.5, %v918
  %v920 = vmul.f32 %v915, %v919
  %vm921 = vweird.f32 %v862
  %vm922 = vweird.f32 %v915
  %vm923 = vmor %vm921, %vm922
  %v924 = vsel %vm923, %v915, %v920
  %v925 = vrsqrt.pop %v863
  %v926 = vmul.f32 %v925, %v863
  %v927 = vmul.f32 %v926, %v925
  %v928 = vmul.f32 0.5, %v927
  %v929 = vsub.f32 1.5, %v928
  %v930 = vmul.f32 %v925, %v929
  %vm931 = vweird.f32 %v863
  %vm932 = vweird.f32 %v925
  %vm933 = vmor %vm931, %vm932
  %v934 = vsel %vm933, %v925, %v930
  %v935 = vrsqrt.pop %v864
  %v936 = vmul.f32 %v935, %v864
  %v937 = vmul.f32 %v936, %v935
  %v938 = vmul.f32 0.5, %v937
  %v939 = vsub.f32 1.5, %v938
  %v940 = vmul.f32 %v935, %v939
  %vm941 = vweird.f32 %v864
  %vm942 = vweird.f32 %v935
  %vm943 = vmor %vm941, %vm942
  %v944 = vsel %vm943, %v935, %v940
  %v945 = vmul.f32 %v682, %v874
  %v946 = vmul.f32 %v683, %v884
  %v947 = vmul.f32 %v684, %v894
  %v948 = vmul.f32 %v685, %v904
  %v949 = vmul.f32 %v686, %v914
  %v950 = vmul.f32 %v687, %v924
  %v951 = vmul.f32 %v688, %v934
  %v952 = vmul.f32 %v689, %v944
  %v953 = vmul.f32 %v753, %v945
  %v954 = vmul.f32 %v754, %v946
  %v955 = vmul.f32 %v755, %v947
  %v956 = vmul.f32 %v756, %v948
  %v957 = vmul.f32 %v757, %v949
  %v958 = vmul.f32 %v758, %v950
  %v959 = vmul.f32 %v759, %v951
  %v960 = vmul.f32 %v760, %v952
  %v961 = vsub.f32 %v690, %v953
  %v962 = vsub.f32 %v691, %v954
  %v963 = vsub.f32 %v692, %v955
  %v964 = vsub.f32 %v693, %v956
  %v965 = vsub.f32 %v694, %v957
  %v966 = vsub.f32 %v695, %v958
  %v967 = vsub.f32 %v696, %v959
  %v968 = vsub.f32 %v697, %v960
  %970 = vset.pattern.permute.xlu0 0
  %971 = vperm.xlu0 %970, %v945
  %v972 = vpop.permute.xlu0 %971
  %975 = vset.pattern.permute.xlu0 0
  %976 = vperm.xlu0 %975, %v946
  %v977 = vpop.permute.xlu0 %976
  %980 = vset.pattern.permute.xlu0 0
  %981 = vperm.xlu0 %980, %v947
  %v982 = vpop.permute.xlu0 %981
  %985 = vset.pattern.permute.xlu0 0
  %986 = vperm.xlu0 %985, %v948
  %v987 = vpop.permute.xlu0 %986
  %990 = vset.pattern.permute.xlu0 0
  %991 = vperm.xlu0 %990, %v949
  %v992 = vpop.permute.xlu0 %991
  %995 = vset.pattern.permute.xlu0 0
  %996 = vperm.xlu0 %995, %v950
  %v997 = vpop.permute.xlu0 %996
  %1000 = vset.pattern.permute.xlu0 0
  %1001 = vperm.xlu0 %1000, %v951
  %v1002 = vpop.permute.xlu0 %1001
  %1005 = vset.pattern.permute.xlu0 0
  %1006 = vperm.xlu0 %1005, %v952
  %v1007 = vpop.permute.xlu0 %1006
  %v1009 = vmul.f32 %v666, %v972
  %v1010 = vmul.f32 %v667, %v972
  %v1011 = vmul.f32 %v668, %v977
  %v1012 = vmul.f32 %v669, %v977
  %v1013 = vmul.f32 %v670, %v982
  %v1014 = vmul.f32 %v671, %v982
  %v1015 = vmul.f32 %v672, %v987
  %v1016 = vmul.f32 %v673, %v987
  %v1017 = vmul.f32 %v674, %v992
  %v1018 = vmul.f32 %v675, %v992
  %v1019 = vmul.f32 %v676, %v997
  %v1020 = vmul.f32 %v677, %v997
  %v1021 = vmul.f32 %v678, %v1002
  %v1022 = vmul.f32 %v679, %v1002
  %v1023 = vmul.f32 %v680, %v1007
  %v1024 = vmul.f32 %v681, %v1007
  %1026 = vset.pattern.permute.xlu0 0
  %1027 = vperm.xlu0 %1026, %v961
  %v1028 = vpop.permute.xlu0 %1027
  %1031 = vset.pattern.permute.xlu0 0
  %1032 = vperm.xlu0 %1031, %v962
  %v1033 = vpop.permute.xlu0 %1032
  %1036 = vset.pattern.permute.xlu0 0
  %1037 = vperm.xlu0 %1036, %v963
  %v1038 = vpop.permute.xlu0 %1037
  %1041 = vset.pattern.permute.xlu0 0
  %1042 = vperm.xlu0 %1041, %v964
  %v1043 = vpop.permute.xlu0 %1042
  %1046 = vset.pattern.permute.xlu0 0
  %1047 = vperm.xlu0 %1046, %v965
  %v1048 = vpop.permute.xlu0 %1047
  %1051 = vset.pattern.permute.xlu0 0
  %1052 = vperm.xlu0 %1051, %v966
  %v1053 = vpop.permute.xlu0 %1052
  %1056 = vset.pattern.permute.xlu0 0
  %1057 = vperm.xlu0 %1056, %v967
  %v1058 = vpop.permute.xlu0 %1057
  %1061 = vset.pattern.permute.xlu0 0
  %1062 = vperm.xlu0 %1061, %v968
  %v1063 = vpop.permute.xlu0 %1062
  %v1065 = vadd.f32 %v1009, %v1028
  %v1066 = vadd.f32 %v1010, %v1028
  %v1067 = vadd.f32 %v1011, %v1033
  %v1068 = vadd.f32 %v1012, %v1033
  %v1069 = vadd.f32 %v1013, %v1038
  %v1070 = vadd.f32 %v1014, %v1038
  %v1071 = vadd.f32 %v1015, %v1043
  %v1072 = vadd.f32 %v1016, %v1043
  %v1073 = vadd.f32 %v1017, %v1048
  %v1074 = vadd.f32 %v1018, %v1048
  %v1075 = vadd.f32 %v1019, %v1053
  %v1076 = vadd.f32 %v1020, %v1053
  %v1077 = vadd.f32 %v1021, %v1058
  %v1078 = vadd.f32 %v1022, %v1058
  %v1079 = vadd.f32 %v1023, %v1063
  %v1080 = vadd.f32 %v1024, %v1063
  %v1081 = vmul.f32 %v1065, 0.2
  %v1082 = vmul.f32 %v1066, 0.2
  %v1083 = vmul.f32 %v1067, 0.2
  %v1084 = vmul.f32 %v1068, 0.2
  %v1085 = vmul.f32 %v1069, 0.2
  %v1086 = vmul.f32 %v1070, 0.2
  %v1087 = vmul.f32 %v1071, 0.2
  %v1088 = vmul.f32 %v1072, 0.2
  %v1089 = vmul.f32 %v1073, 0.2
  %v1090 = vmul.f32 %v1074, 0.2
  %v1091 = vmul.f32 %v1075, 0.2
  %v1092 = vmul.f32 %v1076, 0.2
  %v1093 = vmul.f32 %v1077, 0.2
  %v1094 = vmul.f32 %v1078, 0.2
  %v1095 = vmul.f32 %v1079, 0.2
  %v1096 = vmul.f32 %v1080, 0.2
  %v1097 = vmax.f32 %v1065, %v1081
  %v1098 = vmax.f32 %v1066, %v1082
  %v1099 = vmax.f32 %v1067, %v1083
  %v1100 = vmax.f32 %v1068, %v1084
  %v1101 = vmax.f32 %v1069, %v1085
  %v1102 = vmax.f32 %v1070, %v1086
  %v1103 = vmax.f32 %v1071, %v1087
  %v1104 = vmax.f32 %v1072, %v1088
  %v1105 = vmax.f32 %v1073, %v1089
  %v1106 = vmax.f32 %v1074, %v1090
  %v1107 = vmax.f32 %v1075, %v1091
  %v1108 = vmax.f32 %v1076, %v1092
  %v1109 = vmax.f32 %v1077, %v1093
  %v1110 = vmax.f32 %v1078, %v1094
  %v1111 = vmax.f32 %v1079, %v1095
  %v1112 = vmax.f32 %v1080, %v1096
  %v1113 = vpack.c.bf16 %v1098, %v1097
  %v1114 = vpack.c.bf16 %v1100, %v1099
  %v1115 = vpack.c.bf16 %v1102, %v1101
  %v1116 = vpack.c.bf16 %v1104, %v1103
  %v1117 = vpack.c.bf16 %v1106, %v1105
  %v1118 = vpack.c.bf16 %v1108, %v1107
  %v1119 = vpack.c.bf16 %v1110, %v1109
  %v1120 = vpack.c.bf16 %v1112, %v1111
  %vm1121 = vcmask 1043456
  %vm1122 = vcmask 277508
  %vm1123 = vmor %vm1122, %vm1121
  %1124 = vst.msk [vmem:[%s5] sm:$0xff] %vm1123, %v1113
  %1125 = vst.msk [vmem:[%s5 + $0x8] sm:$0xff] %vm1123, %v1114
  %1126 = vst.msk [vmem:[%s5 + $0x10] sm:$0xff] %vm1123, %v1115
  %1127 = vst.msk [vmem:[%s5 + $0x18] sm:$0xff] %vm1123, %v1116
  %1128 = vst.msk [vmem:[%s5 + $0x20] sm:$0xff] %vm1123, %v1117
  %1129 = vst.msk [vmem:[%s5 + $0x28] sm:$0xff] %vm1123, %v1118
  %1130 = vst.msk [vmem:[%s5 + $0x30] sm:$0xff] %vm1123, %v1119
  %1131 = vst.msk [vmem:[%s5 + $0x38] sm:$0xff] %vm1123, %v1120
  // Predicated region
  $region22: #{critic_forward.8} parent=0 // pred_check
    _
  $region23: #{critic_forward.8} parent=0 // pred_check_branch
    %1133 = sbr.rel (0) target = $region25
  $region24: #{critic_forward.8} parent=0 // pred_region
    _
  $region25: #{critic_forward.8} parent=0 // pred_fallthru
    _
  // Predicated region
  $region26: #{critic_forward.8} parent=0 // pred_check
    _
  $region27: #{critic_forward.8} parent=0 // pred_check_branch
    %1135 = sbr.rel (0) target = $region29
  $region28: #{critic_forward.8} parent=0 // pred_region
    _
  $region29: #{critic_forward.8} parent=0 // pred_fallthru
    _

// kernel: critic_forward.9
$region0: #{critic_forward.9}
  #allocation0 [shape = 'u32[]', space=smem, size = 0x4, offset = 0x4, fixed_abs, tag = 'smem constant byte address 0x4 - core index']
  #allocation1 [shape = 'u32[72,128]{1,0:T(1,128)}', space=vmem, size = 0x9000, scoped, tag = 'internal scratch']
  #allocation2 [shape = 'f32[1,1]{1,0:T(1,128)S(1)}', space=vmem, size = 0x200, scoped, tag = 'scoped memory for critic_forward.9']
  %s0 = inlined_call_operand.vmem [shape: bf16[256,56], index: 0, kind: input, shape index: {}]
  %s1 = inlined_call_operand.vmem [shape: bf16[4,128,256], index: 1, kind: input, shape index: {}]
  %s2 = inlined_call_operand.vmem [shape: f32[128,1], index: 2, kind: input, shape index: {}]
  %s3 = inlined_call_operand.vmem [shape: f32[128,1], index: 3, kind: input, shape index: {}]
  %s4 = inlined_call_operand.vmem [shape: f32[1,50], index: 4, kind: input, shape index: {}]
  %s5 = inlined_call_operand.vmem [shape: f32[128,50], index: 5, kind: input, shape index: {}]
  %s6 = inlined_call_operand.<no memory space> [shape: f32[1,1], index: 6, kind: input, shape index: {}]
  %s7 = inlined_call_operand.vmem [shape: f32[2,1], index: 7, kind: output, shape index: {}]
  %s8 = sld [smem:[#allocation0]]
  $region38: #{critic_forward.9} parent=0
    _
  %s10 = ssub.s32 1, %s8
  %s11 = scalar_select 0, %s10, %s8
  %v12 = vstv %s6
  %13 = vst [vmem:[#allocation2] sm:$0x1] %v12
  // Predicated region
  $region2: #{critic_forward.9} parent=0 // pred_check
    _
  $region3: #{critic_forward.9} parent=0 // pred_check_branch
    %15 = sbr.rel (0) target = $region5
  $region4: #{critic_forward.9} parent=0 // pred_region
    _
  $region5: #{critic_forward.9} parent=0 // pred_fallthru
    _
  // Predicated region
  $region6: #{critic_forward.9} parent=0 // pred_check
    _
  $region7: #{critic_forward.9} parent=0 // pred_check_branch
    %17 = sbr.rel (0) target = $region9
  $region8: #{critic_forward.9} parent=0 // pred_region
    _
  $region9: #{critic_forward.9} parent=0 // pred_fallthru
    _
  // Predicated region
  $region10: #{critic_forward.9} parent=0 // pred_check
    _
  $region11: #{critic_forward.9} parent=0 // pred_check_branch
    %19 = sbr.rel (0) target = $region13
  $region12: #{critic_forward.9} parent=0 // pred_region
    _
  $region13: #{critic_forward.9} parent=0 // pred_fallthru
    _
  // Predicated region
  $region14: #{critic_forward.9} parent=0 // pred_check
    _
  $region15: #{critic_forward.9} parent=0 // pred_check_branch
    %21 = sbr.rel (0) target = $region17
  $region16: #{critic_forward.9} parent=0 // pred_region
    _
  $region17: #{critic_forward.9} parent=0 // pred_fallthru
    _
  // Predicated region
  $region18: #{critic_forward.9} parent=0 // pred_check
    _
  $region19: #{critic_forward.9} parent=0 // pred_check_branch
    %23 = sbr.rel (0) target = $region21
  $region20: #{critic_forward.9} parent=0 // pred_region
    _
  $region21: #{critic_forward.9} parent=0 // pred_fallthru
    _
  // Predicated region
  $region22: #{critic_forward.9} parent=0 // pred_check
    _
  $region23: #{critic_forward.9} parent=0 // pred_check_branch
    %25 = sbr.rel (0) target = $region25
  $region24: #{critic_forward.9} parent=0 // pred_region
    _
  $region25: #{critic_forward.9} parent=0 // pred_fallthru
    _
  // Predicated region
  $region26: #{critic_forward.9} parent=0 // pred_check
    _
  $region27: #{critic_forward.9} parent=0 // pred_check_branch
    %27 = sbr.rel (0) target = $region29
  $region28: #{critic_forward.9} parent=0 // pred_region
    _
  $region29: #{critic_forward.9} parent=0 // pred_fallthru
    _
  %v28 = vld [vmem:[%s1] sm:$0xff]
  %v29 = vld [vmem:[%s1 + $0x8] sm:$0xff]
  %v30 = vld [vmem:[%s1 + $0x10] sm:$0xff]
  %v31 = vld [vmem:[%s1 + $0x18] sm:$0xff]
  %v32 = vld [vmem:[%s1 + $0x20] sm:$0xff]
  %v33 = vld [vmem:[%s1 + $0x28] sm:$0xff]
  %v34 = vld [vmem:[%s1 + $0x30] sm:$0xff]
  %v35 = vld [vmem:[%s1 + $0x38] sm:$0xff]
  %v36 = vld [vmem:[%s1 + $0x40] sm:$0xff]
  %v37 = vld [vmem:[%s1 + $0x48] sm:$0xff]
  %v38 = vld [vmem:[%s1 + $0x50] sm:$0xff]
  %v39 = vld [vmem:[%s1 + $0x58] sm:$0xff]
  %v40 = vld [vmem:[%s1 + $0x60] sm:$0xff]
  %v41 = vld [vmem:[%s1 + $0x68] sm:$0xff]
  %v42 = vld [vmem:[%s1 + $0x70] sm:$0xff]
  %v43 = vld [vmem:[%s1 + $0x78] sm:$0xff]
  %v44 = vld [vmem:[%s0] sm:$0xf]
  %v45 = vld [vmem:[%s0 + $0x4] sm:$0xf]
  %v46 = vld [vmem:[%s0 + $0x8] sm:$0xf]
  %v47 = vld [vmem:[%s0 + $0xc] sm:$0xf]
  %v48 = vld [vmem:[%s0 + $0x10] sm:$0xf]
  %v49 = vld [vmem:[%s0 + $0x14] sm:$0xf]
  %v50 = vld [vmem:[%s0 + $0x18] sm:$0xf]
  %v51 = vld [vmem:[%s0 + $0x1c] sm:$0xf]
  %v52 = vld [vmem:[%s0 + $0x20] sm:$0xf]
  %v53 = vld [vmem:[%s0 + $0x24] sm:$0xf]
  %v54 = vld [vmem:[%s0 + $0x28] sm:$0xf]
  %v55 = vld [vmem:[%s0 + $0x2c] sm:$0xf]
  %v56 = vld [vmem:[%s0 + $0x30] sm:$0xf]
  %v57 = vld [vmem:[%s0 + $0x34] sm:$0xf]
  %v58 = vld [vmem:[%s0 + $0x38] sm:$0xf]
  %v59 = vld [vmem:[%s0 + $0x3c] sm:$0xf]
  %v60 = vld [vmem:[%s0 + $0x40] sm:$0xf]
  %v61 = vld [vmem:[%s0 + $0x44] sm:$0xf]
  %v62 = vld [vmem:[%s0 + $0x48] sm:$0xf]
  %v63 = vld [vmem:[%s0 + $0x4c] sm:$0xf]
  %v64 = vld [vmem:[%s0 + $0x50] sm:$0xf]
  %v65 = vld [vmem:[%s0 + $0x54] sm:$0xf]
  %v66 = vld [vmem:[%s0 + $0x58] sm:$0xf]
  %v67 = vld [vmem:[%s0 + $0x5c] sm:$0xf]
  %v68 = vld [vmem:[%s0 + $0x60] sm:$0xf]
  %v69 = vld [vmem:[%s0 + $0x64] sm:$0xf]
  %v70 = vld [vmem:[%s0 + $0x68] sm:$0xf]
  %v71 = vld [vmem:[%s0 + $0x6c] sm:$0xf]
  %v72 = vld [vmem:[%s0 + $0x70] sm:$0xf]
  %v73 = vld [vmem:[%s0 + $0x74] sm:$0xf]
  %v74 = vld [vmem:[%s0 + $0x78] sm:$0xf]
  %v75 = vld [vmem:[%s0 + $0x7c] sm:$0xf]
  %s76 = scalar_lea.vmem %s1, 128
  %v77 = vld [vmem:[%s76] sm:$0xff]
  %v78 = vld [vmem:[%s76 + $0x8] sm:$0xff]
  %v79 = vld [vmem:[%s76 + $0x10] sm:$0xff]
  %v80 = vld [vmem:[%s76 + $0x18] sm:$0xff]
  %v81 = vld [vmem:[%s76 + $0x20] sm:$0xff]
  %v82 = vld [vmem:[%s76 + $0x28] sm:$0xff]
  %v83 = vld [vmem:[%s76 + $0x30] sm:$0xff]
  %v84 = vld [vmem:[%s76 + $0x38] sm:$0xff]
  %v85 = vld [vmem:[%s76 + $0x40] sm:$0xff]
  %v86 = vld [vmem:[%s76 + $0x48] sm:$0xff]
  %v87 = vld [vmem:[%s76 + $0x50] sm:$0xff]
  %v88 = vld [vmem:[%s76 + $0x58] sm:$0xff]
  %v89 = vld [vmem:[%s76 + $0x60] sm:$0xff]
  %v90 = vld [vmem:[%s76 + $0x68] sm:$0xff]
  %v91 = vld [vmem:[%s76 + $0x70] sm:$0xff]
  %v92 = vld [vmem:[%s76 + $0x78] sm:$0xff]
  %v109 = vunpack.c.l.b16 %v77
  %v110 = vunpack.c.h.b16 %v77
  %v111 = vunpack.c.l.b16 %v78
  %v112 = vunpack.c.h.b16 %v78
  %v113 = vunpack.c.l.b16 %v79
  %v114 = vunpack.c.h.b16 %v79
  %v115 = vunpack.c.l.b16 %v80
  %v116 = vunpack.c.h.b16 %v80
  %v117 = vunpack.c.l.b16 %v81
  %v118 = vunpack.c.h.b16 %v81
  %v119 = vunpack.c.l.b16 %v82
  %v120 = vunpack.c.h.b16 %v82
  %v121 = vunpack.c.l.b16 %v83
  %v122 = vunpack.c.h.b16 %v83
  %v123 = vunpack.c.l.b16 %v84
  %v124 = vunpack.c.h.b16 %v84
  %v125 = vunpack.c.l.b16 %v85
  %v126 = vunpack.c.h.b16 %v85
  %v127 = vunpack.c.l.b16 %v86
  %v128 = vunpack.c.h.b16 %v86
  %v129 = vunpack.c.l.b16 %v87
  %v130 = vunpack.c.h.b16 %v87
  %v131 = vunpack.c.l.b16 %v88
  %v132 = vunpack.c.h.b16 %v88
  %v133 = vunpack.c.l.b16 %v89
  %v134 = vunpack.c.h.b16 %v89
  %v135 = vunpack.c.l.b16 %v90
  %v136 = vunpack.c.h.b16 %v90
  %v137 = vunpack.c.l.b16 %v91
  %v138 = vunpack.c.h.b16 %v91
  %v139 = vunpack.c.l.b16 %v92
  %v140 = vunpack.c.h.b16 %v92
  %v141 = vpack.c.b16 %v111, %v109
  %v142 = vpack.c.b16 %v112, %v110
  %v143 = vpack.c.b16 %v115, %v113
  %v144 = vpack.c.b16 %v116, %v114
  %v145 = vpack.c.b16 %v119, %v117
  %v146 = vpack.c.b16 %v120, %v118
  %v147 = vpack.c.b16 %v123, %v121
  %v148 = vpack.c.b16 %v124, %v122
  %v149 = vpack.c.b16 %v127, %v125
  %v150 = vpack.c.b16 %v128, %v126
  %v151 = vpack.c.b16 %v131, %v129
  %v152 = vpack.c.b16 %v132, %v130
  %v153 = vpack.c.b16 %v135, %v133
  %v154 = vpack.c.b16 %v136, %v134
  %v155 = vpack.c.b16 %v139, %v137
  %v156 = vpack.c.b16 %v140, %v138
  %v205 = vunpack.c.l.b16 %v44
  %v206 = vunpack.c.l.b16 %v45
  %v207 = vunpack.c.l.b16 %v46
  %v208 = vunpack.c.l.b16 %v47
  %v209 = vunpack.c.l.b16 %v48
  %v210 = vunpack.c.l.b16 %v49
  %v211 = vunpack.c.l.b16 %v50
  %v212 = vunpack.c.l.b16 %v51
  %v213 = vunpack.c.l.b16 %v52
  %v214 = vunpack.c.l.b16 %v53
  %v215 = vunpack.c.l.b16 %v54
  %v216 = vunpack.c.l.b16 %v55
  %v217 = vunpack.c.l.b16 %v56
  %v218 = vunpack.c.l.b16 %v57
  %v219 = vunpack.c.l.b16 %v58
  %v220 = vunpack.c.l.b16 %v59
  %v221 = vunpack.c.l.b16 %v60
  %v222 = vunpack.c.l.b16 %v61
  %v223 = vunpack.c.l.b16 %v62
  %v224 = vunpack.c.l.b16 %v63
  %v225 = vunpack.c.l.b16 %v64
  %v226 = vunpack.c.l.b16 %v65
  %v227 = vunpack.c.l.b16 %v66
  %v228 = vunpack.c.l.b16 %v67
  %v229 = vunpack.c.l.b16 %v68
  %v230 = vunpack.c.l.b16 %v69
  %v231 = vunpack.c.l.b16 %v70
  %v232 = vunpack.c.l.b16 %v71
  %v233 = vunpack.c.l.b16 %v72
  %v234 = vunpack.c.l.b16 %v73
  %v235 = vunpack.c.l.b16 %v74
  %v236 = vunpack.c.l.b16 %v75
  %v237 = vpack.c.b16 %v206, %v205
  %v238 = vpack.c.b16 %v208, %v207
  %v239 = vpack.c.b16 %v210, %v209
  %v240 = vpack.c.b16 %v212, %v211
  %v241 = vpack.c.b16 %v214, %v213
  %v242 = vpack.c.b16 %v216, %v215
  %v243 = vpack.c.b16 %v218, %v217
  %v244 = vpack.c.b16 %v220, %v219
  %v245 = vpack.c.b16 %v222, %v221
  %v246 = vpack.c.b16 %v224, %v223
  %v247 = vpack.c.b16 %v226, %v225
  %v248 = vpack.c.b16 %v228, %v227
  %v249 = vpack.c.b16 %v230, %v229
  %v250 = vpack.c.b16 %v232, %v231
  %v251 = vpack.c.b16 %v234, %v233
  %v252 = vpack.c.b16 %v236, %v235
  %253 = vrot.lane.b32.xlu0 %v237, 127
  %v254 = vpop.permute.xlu0 %253
  %255 = vrot.lane.b32.xlu0 %v238, 127
  %v256 = vpop.permute.xlu0 %255
  %257 = vrot.lane.b32.xlu0 %v239, 127
  %v258 = vpop.permute.xlu0 %257
  %259 = vrot.lane.b32.xlu0 %v240, 127
  %v260 = vpop.permute.xlu0 %259
  %261 = vrot.lane.b32.xlu0 %v241, 127
  %v262 = vpop.permute.xlu0 %261
  %263 = vrot.lane.b32.xlu0 %v242, 127
  %v264 = vpop.permute.xlu0 %263
  %265 = vrot.lane.b32.xlu0 %v243, 127
  %v266 = vpop.permute.xlu0 %265
  %267 = vrot.lane.b32.xlu0 %v244, 127
  %v268 = vpop.permute.xlu0 %267
  %269 = vrot.lane.b32.xlu0 %v245, 127
  %v270 = vpop.permute.xlu0 %269
  %271 = vrot.lane.b32.xlu0 %v246, 127
  %v272 = vpop.permute.xlu0 %271
  %273 = vrot.lane.b32.xlu0 %v247, 127
  %v274 = vpop.permute.xlu0 %273
  %275 = vrot.lane.b32.xlu0 %v248, 127
  %v276 = vpop.permute.xlu0 %275
  %277 = vrot.lane.b32.xlu0 %v249, 127
  %v278 = vpop.permute.xlu0 %277
  %279 = vrot.lane.b32.xlu0 %v250, 127
  %v280 = vpop.permute.xlu0 %279
  %281 = vrot.lane.b32.xlu0 %v251, 127
  %v282 = vpop.permute.xlu0 %281
  %283 = vrot.lane.b32.xlu0 %v252, 127
  %v284 = vpop.permute.xlu0 %283
  %301 = vmatpush.bf16.msra.mxu0 %v268
  %302 = vmatpush.bf16.msra.mxu0 %v266
  %303 = vmatpush.bf16.msra.mxu0 %v264
  %304 = vmatpush.bf16.msra.mxu0 %v262
  %305 = vmatpush.bf16.msra.mxu0 %v260
  %306 = vmatpush.bf16.msra.mxu0 %v258
  %307 = vmatpush.bf16.msra.mxu0 %v256
  %308 = vmatpush.bf16.msra.mxu0 %v254
  %309 = vmatmul.bf16.gmra.mxu0 %v141
  %v310 = vpop.f32.mrf.mxu0
  %v311 = vadd.f32 0.0, %v310
  %v312 = vpop.f32.mrf.mxu0
  %v313 = vadd.f32 0.0, %v312
  %314 = vmatmul.bf16.gmra.mxu0 %v143
  %v315 = vpop.f32.mrf.mxu0
  %v316 = vadd.f32 0.0, %v315
  %v317 = vpop.f32.mrf.mxu0
  %v318 = vadd.f32 0.0, %v317
  %319 = vmatmul.bf16.gmra.mxu0 %v145
  %v320 = vpop.f32.mrf.mxu0
  %v321 = vadd.f32 0.0, %v320
  %v322 = vpop.f32.mrf.mxu0
  %v323 = vadd.f32 0.0, %v322
  %324 = vmatmul.bf16.gmra.mxu0 %v147
  %v325 = vpop.f32.mrf.mxu0
  %v326 = vadd.f32 0.0, %v325
  %v327 = vpop.f32.mrf.mxu0
  %v328 = vadd.f32 0.0, %v327
  %329 = vmatmul.bf16.gmra.mxu0 %v149
  %v330 = vpop.f32.mrf.mxu0
  %v331 = vadd.f32 0.0, %v330
  %v332 = vpop.f32.mrf.mxu0
  %v333 = vadd.f32 0.0, %v332
  %334 = vmatmul.bf16.gmra.mxu0 %v151
  %v335 = vpop.f32.mrf.mxu0
  %v336 = vadd.f32 0.0, %v335
  %v337 = vpop.f32.mrf.mxu0
  %v338 = vadd.f32 0.0, %v337
  %339 = vmatmul.bf16.gmra.mxu0 %v153
  %v340 = vpop.f32.mrf.mxu0
  %v341 = vadd.f32 0.0, %v340
  %v342 = vpop.f32.mrf.mxu0
  %v343 = vadd.f32 0.0, %v342
  %344 = vmatmul.bf16.gmra.mxu0 %v155
  %v345 = vpop.f32.mrf.mxu0
  %v346 = vadd.f32 0.0, %v345
  %v347 = vpop.f32.mrf.mxu0
  %v348 = vadd.f32 0.0, %v347
  %349 = vdwg.mxu0
  %350 = vmatpush.bf16.msra.mxu0 %v284
  %351 = vmatpush.bf16.msra.mxu0 %v282
  %352 = vmatpush.bf16.msra.mxu0 %v280
  %353 = vmatpush.bf16.msra.mxu0 %v278
  %354 = vmatpush.bf16.msra.mxu0 %v276
  %355 = vmatpush.bf16.msra.mxu0 %v274
  %356 = vmatpush.bf16.msra.mxu0 %v272
  %357 = vmatpush.bf16.msra.mxu0 %v270
  %358 = vmatmul.bf16.gmra.mxu0 %v142
  %v359 = vpop.f32.mrf.mxu0
  %v360 = vadd.f32 %v311, %v359
  %v361 = vpop.f32.mrf.mxu0
  %v362 = vadd.f32 %v313, %v361
  %363 = vmatmul.bf16.gmra.mxu0 %v144
  %v364 = vpop.f32.mrf.mxu0
  %v365 = vadd.f32 %v316, %v364
  %v366 = vpop.f32.mrf.mxu0
  %v367 = vadd.f32 %v318, %v366
  %368 = vmatmul.bf16.gmra.mxu0 %v146
  %v369 = vpop.f32.mrf.mxu0
  %v370 = vadd.f32 %v321, %v369
  %v371 = vpop.f32.mrf.mxu0
  %v372 = vadd.f32 %v323, %v371
  %373 = vmatmul.bf16.gmra.mxu0 %v148
  %v374 = vpop.f32.mrf.mxu0
  %v375 = vadd.f32 %v326, %v374
  %v376 = vpop.f32.mrf.mxu0
  %v377 = vadd.f32 %v328, %v376
  %378 = vmatmul.bf16.gmra.mxu0 %v150
  %v379 = vpop.f32.mrf.mxu0
  %v380 = vadd.f32 %v331, %v379
  %v381 = vpop.f32.mrf.mxu0
  %v382 = vadd.f32 %v333, %v381
  %383 = vmatmul.bf16.gmra.mxu0 %v152
  %v384 = vpop.f32.mrf.mxu0
  %v385 = vadd.f32 %v336, %v384
  %v386 = vpop.f32.mrf.mxu0
  %v387 = vadd.f32 %v338, %v386
  %388 = vmatmul.bf16.gmra.mxu0 %v154
  %v389 = vpop.f32.mrf.mxu0
  %v390 = vadd.f32 %v341, %v389
  %v391 = vpop.f32.mrf.mxu0
  %v392 = vadd.f32 %v343, %v391
  %393 = vmatmul.bf16.gmra.mxu0 %v156
  %v394 = vpop.f32.mrf.mxu0
  %v395 = vadd.f32 %v346, %v394
  %v396 = vpop.f32.mrf.mxu0
  %v397 = vadd.f32 %v348, %v396
  %398 = vdwg.mxu0
  %v415 = vunpack.c.l.b16 %v28
  %v416 = vunpack.c.h.b16 %v28
  %v417 = vunpack.c.l.b16 %v29
  %v418 = vunpack.c.h.b16 %v29
  %v419 = vunpack.c.l.b16 %v30
  %v420 = vunpack.c.h.b16 %v30
  %v421 = vunpack.c.l.b16 %v31
  %v422 = vunpack.c.h.b16 %v31
  %v423 = vunpack.c.l.b16 %v32
  %v424 = vunpack.c.h.b16 %v32
  %v425 = vunpack.c.l.b16 %v33
  %v426 = vunpack.c.h.b16 %v33
  %v427 = vunpack.c.l.b16 %v34
  %v428 = vunpack.c.h.b16 %v34
  %v429 = vunpack.c.l.b16 %v35
  %v430 = vunpack.c.h.b16 %v35
  %v431 = vunpack.c.l.b16 %v36
  %v432 = vunpack.c.h.b16 %v36
  %v433 = vunpack.c.l.b16 %v37
  %v434 = vunpack.c.h.b16 %v37
  %v435 = vunpack.c.l.b16 %v38
  %v436 = vunpack.c.h.b16 %v38
  %v437 = vunpack.c.l.b16 %v39
  %v438 = vunpack.c.h.b16 %v39
  %v439 = vunpack.c.l.b16 %v40
  %v440 = vunpack.c.h.b16 %v40
  %v441 = vunpack.c.l.b16 %v41
  %v442 = vunpack.c.h.b16 %v41
  %v443 = vunpack.c.l.b16 %v42
  %v444 = vunpack.c.h.b16 %v42
  %v445 = vunpack.c.l.b16 %v43
  %v446 = vunpack.c.h.b16 %v43
  %v447 = vpack.c.b16 %v417, %v415
  %v448 = vpack.c.b16 %v418, %v416
  %v449 = vpack.c.b16 %v421, %v419
  %v450 = vpack.c.b16 %v422, %v420
  %v451 = vpack.c.b16 %v425, %v423
  %v452 = vpack.c.b16 %v426, %v424
  %v453 = vpack.c.b16 %v429, %v427
  %v454 = vpack.c.b16 %v430, %v428
  %v455 = vpack.c.b16 %v433, %v431
  %v456 = vpack.c.b16 %v434, %v432
  %v457 = vpack.c.b16 %v437, %v435
  %v458 = vpack.c.b16 %v438, %v436
  %v459 = vpack.c.b16 %v441, %v439
  %v460 = vpack.c.b16 %v442, %v440
  %v461 = vpack.c.b16 %v445, %v443
  %v462 = vpack.c.b16 %v446, %v444
  %495 = vmatpush.bf16.msra.mxu0 %v244
  %496 = vmatpush.bf16.msra.mxu0 %v243
  %497 = vmatpush.bf16.msra.mxu0 %v242
  %498 = vmatpush.bf16.msra.mxu0 %v241
  %499 = vmatpush.bf16.msra.mxu0 %v240
  %500 = vmatpush.bf16.msra.mxu0 %v239
  %501 = vmatpush.bf16.msra.mxu0 %v238
  %502 = vmatpush.bf16.msra.mxu0 %v237
  %503 = vmatmul.bf16.gmra.mxu0 %v447
  %v504 = vpop.f32.mrf.mxu0
  %v505 = vadd.f32 %v360, %v504
  %v506 = vpop.f32.mrf.mxu0
  %v507 = vadd.f32 %v362, %v506
  %508 = vmatmul.bf16.gmra.mxu0 %v449
  %v509 = vpop.f32.mrf.mxu0
  %v510 = vadd.f32 %v365, %v509
  %v511 = vpop.f32.mrf.mxu0
  %v512 = vadd.f32 %v367, %v511
  %513 = vmatmul.bf16.gmra.mxu0 %v451
  %v514 = vpop.f32.mrf.mxu0
  %v515 = vadd.f32 %v370, %v514
  %v516 = vpop.f32.mrf.mxu0
  %v517 = vadd.f32 %v372, %v516
  %518 = vmatmul.bf16.gmra.mxu0 %v453
  %v519 = vpop.f32.mrf.mxu0
  %v520 = vadd.f32 %v375, %v519
  %v521 = vpop.f32.mrf.mxu0
  %v522 = vadd.f32 %v377, %v521
  %523 = vmatmul.bf16.gmra.mxu0 %v455
  %v524 = vpop.f32.mrf.mxu0
  %v525 = vadd.f32 %v380, %v524
  %v526 = vpop.f32.mrf.mxu0
  %v527 = vadd.f32 %v382, %v526
  %528 = vmatmul.bf16.gmra.mxu0 %v457
  %v529 = vpop.f32.mrf.mxu0
  %v530 = vadd.f32 %v385, %v529
  %v531 = vpop.f32.mrf.mxu0
  %v532 = vadd.f32 %v387, %v531
  %533 = vmatmul.bf16.gmra.mxu0 %v459
  %v534 = vpop.f32.mrf.mxu0
  %v535 = vadd.f32 %v390, %v534
  %v536 = vpop.f32.mrf.mxu0
  %v537 = vadd.f32 %v392, %v536
  %538 = vmatmul.bf16.gmra.mxu0 %v461
  %v539 = vpop.f32.mrf.mxu0
  %v540 = vadd.f32 %v395, %v539
  %v541 = vpop.f32.mrf.mxu0
  %v542 = vadd.f32 %v397, %v541
  %543 = vdwg.mxu0
  %544 = vmatpush.bf16.msra.mxu0 %v252
  %545 = vmatpush.bf16.msra.mxu0 %v251
  %546 = vmatpush.bf16.msra.mxu0 %v250
  %547 = vmatpush.bf16.msra.mxu0 %v249
  %548 = vmatpush.bf16.msra.mxu0 %v248
  %549 = vmatpush.bf16.msra.mxu0 %v247
  %550 = vmatpush.bf16.msra.mxu0 %v246
  %551 = vmatpush.bf16.msra.mxu0 %v245
  %552 = vmatmul.bf16.gmra.mxu0 %v448
  %v553 = vpop.f32.mrf.mxu0
  %v554 = vadd.f32 %v505, %v553
  %v555 = vpop.f32.mrf.mxu0
  %v556 = vadd.f32 %v507, %v555
  %557 = vmatmul.bf16.gmra.mxu0 %v450
  %v558 = vpop.f32.mrf.mxu0
  %v559 = vadd.f32 %v510, %v558
  %v560 = vpop.f32.mrf.mxu0
  %v561 = vadd.f32 %v512, %v560
  %562 = vmatmul.bf16.gmra.mxu0 %v452
  %v563 = vpop.f32.mrf.mxu0
  %v564 = vadd.f32 %v515, %v563
  %v565 = vpop.f32.mrf.mxu0
  %v566 = vadd.f32 %v517, %v565
  %567 = vmatmul.bf16.gmra.mxu0 %v454
  %v568 = vpop.f32.mrf.mxu0
  %v569 = vadd.f32 %v520, %v568
  %v570 = vpop.f32.mrf.mxu0
  %v571 = vadd.f32 %v522, %v570
  %572 = vmatmul.bf16.gmra.mxu0 %v456
  %v573 = vpop.f32.mrf.mxu0
  %v574 = vadd.f32 %v525, %v573
  %v575 = vpop.f32.mrf.mxu0
  %v576 = vadd.f32 %v527, %v575
  %577 = vmatmul.bf16.gmra.mxu0 %v458
  %v578 = vpop.f32.mrf.mxu0
  %v579 = vadd.f32 %v530, %v578
  %v580 = vpop.f32.mrf.mxu0
  %v581 = vadd.f32 %v532, %v580
  %582 = vmatmul.bf16.gmra.mxu0 %v460
  %v583 = vpop.f32.mrf.mxu0
  %v584 = vadd.f32 %v535, %v583
  %v585 = vpop.f32.mrf.mxu0
  %v586 = vadd.f32 %v537, %v585
  %587 = vmatmul.bf16.gmra.mxu0 %v462
  %v588 = vpop.f32.mrf.mxu0
  %v589 = vadd.f32 %v540, %v588
  %v590 = vpop.f32.mrf.mxu0
  %v591 = vadd.f32 %v542, %v590
  %592 = vdwg.mxu0
  %s593 = scalar_lea.vmem %s1, 256
  %v594 = vld [vmem:[%s593] sm:$0xff]
  %v595 = vld [vmem:[%s593 + $0x8] sm:$0xff]
  %v596 = vld [vmem:[%s593 + $0x10] sm:$0xff]
  %v597 = vld [vmem:[%s593 + $0x18] sm:$0xff]
  %v598 = vld [vmem:[%s593 + $0x20] sm:$0xff]
  %v599 = vld [vmem:[%s593 + $0x28] sm:$0xff]
  %v600 = vld [vmem:[%s593 + $0x30] sm:$0xff]
  %v601 = vld [vmem:[%s593 + $0x38] sm:$0xff]
  %v602 = vld [vmem:[%s593 + $0x40] sm:$0xff]
  %v603 = vld [vmem:[%s593 + $0x48] sm:$0xff]
  %v604 = vld [vmem:[%s593 + $0x50] sm:$0xff]
  %v605 = vld [vmem:[%s593 + $0x58] sm:$0xff]
  %v606 = vld [vmem:[%s593 + $0x60] sm:$0xff]
  %v607 = vld [vmem:[%s593 + $0x68] sm:$0xff]
  %v608 = vld [vmem:[%s593 + $0x70] sm:$0xff]
  %v609 = vld [vmem:[%s593 + $0x78] sm:$0xff]
  %v626 = vunpack.c.l.b16 %v594
  %v627 = vunpack.c.h.b16 %v594
  %v628 = vunpack.c.l.b16 %v595
  %v629 = vunpack.c.h.b16 %v595
  %v630 = vunpack.c.l.b16 %v596
  %v631 = vunpack.c.h.b16 %v596
  %v632 = vunpack.c.l.b16 %v597
  %v633 = vunpack.c.h.b16 %v597
  %v634 = vunpack.c.l.b16 %v598
  %v635 = vunpack.c.h.b16 %v598
  %v636 = vunpack.c.l.b16 %v599
  %v637 = vunpack.c.h.b16 %v599
  %v638 = vunpack.c.l.b16 %v600
  %v639 = vunpack.c.h.b16 %v600
  %v640 = vunpack.c.l.b16 %v601
  %v641 = vunpack.c.h.b16 %v601
  %v642 = vunpack.c.l.b16 %v602
  %v643 = vunpack.c.h.b16 %v602
  %v644 = vunpack.c.l.b16 %v603
  %v645 = vunpack.c.h.b16 %v603
  %v646 = vunpack.c.l.b16 %v604
  %v647 = vunpack.c.h.b16 %v604
  %v648 = vunpack.c.l.b16 %v605
  %v649 = vunpack.c.h.b16 %v605
  %v650 = vunpack.c.l.b16 %v606
  %v651 = vunpack.c.h.b16 %v606
  %v652 = vunpack.c.l.b16 %v607
  %v653 = vunpack.c.h.b16 %v607
  %v654 = vunpack.c.l.b16 %v608
  %v655 = vunpack.c.h.b16 %v608
  %v656 = vunpack.c.l.b16 %v609
  %v657 = vunpack.c.h.b16 %v609
  %v658 = vpack.c.b16 %v628, %v626
  %v659 = vpack.c.b16 %v629, %v627
  %v660 = vpack.c.b16 %v632, %v630
  %v661 = vpack.c.b16 %v633, %v631
  %v662 = vpack.c.b16 %v636, %v634
  %v663 = vpack.c.b16 %v637, %v635
  %v664 = vpack.c.b16 %v640, %v638
  %v665 = vpack.c.b16 %v641, %v639
  %v666 = vpack.c.b16 %v644, %v642
  %v667 = vpack.c.b16 %v645, %v643
  %v668 = vpack.c.b16 %v648, %v646
  %v669 = vpack.c.b16 %v649, %v647
  %v670 = vpack.c.b16 %v652, %v650
  %v671 = vpack.c.b16 %v653, %v651
  %v672 = vpack.c.b16 %v656, %v654
  %v673 = vpack.c.b16 %v657, %v655
  %690 = vrot.lane.b32.xlu0 %v237, 123
  %v691 = vpop.permute.xlu0 %690
  %692 = vrot.lane.b32.xlu0 %v238, 123
  %v693 = vpop.permute.xlu0 %692
  %694 = vrot.lane.b32.xlu0 %v239, 123
  %v695 = vpop.permute.xlu0 %694
  %696 = vrot.lane.b32.xlu0 %v240, 123
  %v697 = vpop.permute.xlu0 %696
  %698 = vrot.lane.b32.xlu0 %v241, 123
  %v699 = vpop.permute.xlu0 %698
  %700 = vrot.lane.b32.xlu0 %v242, 123
  %v701 = vpop.permute.xlu0 %700
  %702 = vrot.lane.b32.xlu0 %v243, 123
  %v703 = vpop.permute.xlu0 %702
  %704 = vrot.lane.b32.xlu0 %v244, 123
  %v705 = vpop.permute.xlu0 %704
  %706 = vrot.lane.b32.xlu0 %v245, 123
  %v707 = vpop.permute.xlu0 %706
  %708 = vrot.lane.b32.xlu0 %v246, 123
  %v709 = vpop.permute.xlu0 %708
  %710 = vrot.lane.b32.xlu0 %v247, 123
  %v711 = vpop.permute.xlu0 %710
  %712 = vrot.lane.b32.xlu0 %v248, 123
  %v713 = vpop.permute.xlu0 %712
  %714 = vrot.lane.b32.xlu0 %v249, 123
  %v715 = vpop.permute.xlu0 %714
  %716 = vrot.lane.b32.xlu0 %v250, 123
  %v717 = vpop.permute.xlu0 %716
  %718 = vrot.lane.b32.xlu0 %v251, 123
  %v719 = vpop.permute.xlu0 %718
  %720 = vrot.lane.b32.xlu0 %v252, 123
  %v721 = vpop.permute.xlu0 %720
  %738 = vmatpush.bf16.msra.mxu0 %v705
  %739 = vmatpush.bf16.msra.mxu0 %v703
  %740 = vmatpush.bf16.msra.mxu0 %v701
  %741 = vmatpush.bf16.msra.mxu0 %v699
  %742 = vmatpush.bf16.msra.mxu0 %v697
  %743 = vmatpush.bf16.msra.mxu0 %v695
  %744 = vmatpush.bf16.msra.mxu0 %v693
  %745 = vmatpush.bf16.msra.mxu0 %v691
  %746 = vmatmul.bf16.gmra.mxu0 %v658
  %v747 = vpop.f32.mrf.mxu0
  %v748 = vadd.f32 0.0, %v747
  %v749 = vpop.f32.mrf.mxu0
  %v750 = vadd.f32 0.0, %v749
  %751 = vmatmul.bf16.gmra.mxu0 %v660
  %v752 = vpop.f32.mrf.mxu0
  %v753 = vadd.f32 0.0, %v752
  %v754 = vpop.f32.mrf.mxu0
  %v755 = vadd.f32 0.0, %v754
  %756 = vmatmul.bf16.gmra.mxu0 %v662
  %v757 = vpop.f32.mrf.mxu0
  %v758 = vadd.f32 0.0, %v757
  %v759 = vpop.f32.mrf.mxu0
  %v760 = vadd.f32 0.0, %v759
  %761 = vmatmul.bf16.gmra.mxu0 %v664
  %v762 = vpop.f32.mrf.mxu0
  %v763 = vadd.f32 0.0, %v762
  %v764 = vpop.f32.mrf.mxu0
  %v765 = vadd.f32 0.0, %v764
  %766 = vmatmul.bf16.gmra.mxu0 %v666
  %v767 = vpop.f32.mrf.mxu0
  %v768 = vadd.f32 0.0, %v767
  %v769 = vpop.f32.mrf.mxu0
  %v770 = vadd.f32 0.0, %v769
  %771 = vmatmul.bf16.gmra.mxu0 %v668
  %v772 = vpop.f32.mrf.mxu0
  %v773 = vadd.f32 0.0, %v772
  %v774 = vpop.f32.mrf.mxu0
  %v775 = vadd.f32 0.0, %v774
  %776 = vmatmul.bf16.gmra.mxu0 %v670
  %v777 = vpop.f32.mrf.mxu0
  %v778 = vadd.f32 0.0, %v777
  %v779 = vpop.f32.mrf.mxu0
  %v780 = vadd.f32 0.0, %v779
  %781 = vmatmul.bf16.gmra.mxu0 %v672
  %v782 = vpop.f32.mrf.mxu0
  %v783 = vadd.f32 0.0, %v782
  %v784 = vpop.f32.mrf.mxu0
  %v785 = vadd.f32 0.0, %v784
  %786 = vdwg.mxu0
  %787 = vmatpush.bf16.msra.mxu0 %v721
  %788 = vmatpush.bf16.msra.mxu0 %v719
  %789 = vmatpush.bf16.msra.mxu0 %v717
  %790 = vmatpush.bf16.msra.mxu0 %v715
  %791 = vmatpush.bf16.msra.mxu0 %v713
  %792 = vmatpush.bf16.msra.mxu0 %v711
  %793 = vmatpush.bf16.msra.mxu0 %v709
  %794 = vmatpush.bf16.msra.mxu0 %v707
  %795 = vmatmul.bf16.gmra.mxu0 %v659
  %v796 = vpop.f32.mrf.mxu0
  %v797 = vadd.f32 %v748, %v796
  %v798 = vpop.f32.mrf.mxu0
  %v799 = vadd.f32 %v750, %v798
  %800 = vmatmul.bf16.gmra.mxu0 %v661
  %v801 = vpop.f32.mrf.mxu0
  %v802 = vadd.f32 %v753, %v801
  %v803 = vpop.f32.mrf.mxu0
  %v804 = vadd.f32 %v755, %v803
  %805 = vmatmul.bf16.gmra.mxu0 %v663
  %v806 = vpop.f32.mrf.mxu0
  %v807 = vadd.f32 %v758, %v806
  %v808 = vpop.f32.mrf.mxu0
  %v809 = vadd.f32 %v760, %v808
  %810 = vmatmul.bf16.gmra.mxu0 %v665
  %v811 = vpop.f32.mrf.mxu0
  %v812 = vadd.f32 %v763, %v811
  %v813 = vpop.f32.mrf.mxu0
  %v814 = vadd.f32 %v765, %v813
  %815 = vmatmul.bf16.gmra.mxu0 %v667
  %v816 = vpop.f32.mrf.mxu0
  %v817 = vadd.f32 %v768, %v816
  %v818 = vpop.f32.mrf.mxu0
  %v819 = vadd.f32 %v770, %v818
  %820 = vmatmul.bf16.gmra.mxu0 %v669
  %v821 = vpop.f32.mrf.mxu0
  %v822 = vadd.f32 %v773, %v821
  %v823 = vpop.f32.mrf.mxu0
  %v824 = vadd.f32 %v775, %v823
  %825 = vmatmul.bf16.gmra.mxu0 %v671
  %v826 = vpop.f32.mrf.mxu0
  %v827 = vadd.f32 %v778, %v826
  %v828 = vpop.f32.mrf.mxu0
  %v829 = vadd.f32 %v780, %v828
  %830 = vmatmul.bf16.gmra.mxu0 %v673
  %v831 = vpop.f32.mrf.mxu0
  %v832 = vadd.f32 %v783, %v831
  %v833 = vpop.f32.mrf.mxu0
  %v834 = vadd.f32 %v785, %v833
  %835 = vdwg.mxu0
  %v836 = vadd.f32 %v554, %v797
  %v837 = vadd.f32 %v556, %v799
  %v838 = vadd.f32 %v559, %v802
  %v839 = vadd.f32 %v561, %v804
  %v840 = vadd.f32 %v564, %v807
  %v841 = vadd.f32 %v566, %v809
  %v842 = vadd.f32 %v569, %v812
  %v843 = vadd.f32 %v571, %v814
  %v844 = vadd.f32 %v574, %v817
  %v845 = vadd.f32 %v576, %v819
  %v846 = vadd.f32 %v579, %v822
  %v847 = vadd.f32 %v581, %v824
  %v848 = vadd.f32 %v584, %v827
  %v849 = vadd.f32 %v586, %v829
  %v850 = vadd.f32 %v589, %v832
  %v851 = vadd.f32 %v591, %v834
  %s852 = scalar_lea.vmem %s1, 384
  %v853 = vld [vmem:[%s852] sm:$0xff]
  %v854 = vld [vmem:[%s852 + $0x8] sm:$0xff]
  %v855 = vld [vmem:[%s852 + $0x10] sm:$0xff]
  %v856 = vld [vmem:[%s852 + $0x18] sm:$0xff]
  %v857 = vld [vmem:[%s852 + $0x20] sm:$0xff]
  %v858 = vld [vmem:[%s852 + $0x28] sm:$0xff]
  %v859 = vld [vmem:[%s852 + $0x30] sm:$0xff]
  %v860 = vld [vmem:[%s852 + $0x38] sm:$0xff]
  %v861 = vld [vmem:[%s852 + $0x40] sm:$0xff]
  %v862 = vld [vmem:[%s852 + $0x48] sm:$0xff]
  %v863 = vld [vmem:[%s852 + $0x50] sm:$0xff]
  %v864 = vld [vmem:[%s852 + $0x58] sm:$0xff]
  %v865 = vld [vmem:[%s852 + $0x60] sm:$0xff]
  %v866 = vld [vmem:[%s852 + $0x68] sm:$0xff]
  %v867 = vld [vmem:[%s852 + $0x70] sm:$0xff]
  %v868 = vld [vmem:[%s852 + $0x78] sm:$0xff]
  %v885 = vunpack.c.l.b16 %v853
  %v886 = vunpack.c.h.b16 %v853
  %v887 = vunpack.c.l.b16 %v854
  %v888 = vunpack.c.h.b16 %v854
  %v889 = vunpack.c.l.b16 %v855
  %v890 = vunpack.c.h.b16 %v855
  %v891 = vunpack.c.l.b16 %v856
  %v892 = vunpack.c.h.b16 %v856
  %v893 = vunpack.c.l.b16 %v857
  %v894 = vunpack.c.h.b16 %v857
  %v895 = vunpack.c.l.b16 %v858
  %v896 = vunpack.c.h.b16 %v858
  %v897 = vunpack.c.l.b16 %v859
  %v898 = vunpack.c.h.b16 %v859
  %v899 = vunpack.c.l.b16 %v860
  %v900 = vunpack.c.h.b16 %v860
  %v901 = vunpack.c.l.b16 %v861
  %v902 = vunpack.c.h.b16 %v861
  %v903 = vunpack.c.l.b16 %v862
  %v904 = vunpack.c.h.b16 %v862
  %v905 = vunpack.c.l.b16 %v863
  %v906 = vunpack.c.h.b16 %v863
  %v907 = vunpack.c.l.b16 %v864
  %v908 = vunpack.c.h.b16 %v864
  %v909 = vunpack.c.l.b16 %v865
  %v910 = vunpack.c.h.b16 %v865
  %v911 = vunpack.c.l.b16 %v866
  %v912 = vunpack.c.h.b16 %v866
  %v913 = vunpack.c.l.b16 %v867
  %v914 = vunpack.c.h.b16 %v867
  %v915 = vunpack.c.l.b16 %v868
  %v916 = vunpack.c.h.b16 %v868
  %v917 = vpack.c.b16 %v887, %v885
  %v918 = vpack.c.b16 %v888, %v886
  %v919 = vpack.c.b16 %v891, %v889
  %v920 = vpack.c.b16 %v892, %v890
  %v921 = vpack.c.b16 %v895, %v893
  %v922 = vpack.c.b16 %v896, %v894
  %v923 = vpack.c.b16 %v899, %v897
  %v924 = vpack.c.b16 %v900, %v898
  %v925 = vpack.c.b16 %v903, %v901
  %v926 = vpack.c.b16 %v904, %v902
  %v927 = vpack.c.b16 %v907, %v905
  %v928 = vpack.c.b16 %v908, %v906
  %v929 = vpack.c.b16 %v911, %v909
  %v930 = vpack.c.b16 %v912, %v910
  %v931 = vpack.c.b16 %v915, %v913
  %v932 = vpack.c.b16 %v916, %v914
  %949 = vrot.lane.b32.xlu0 %v237, 122
  %v950 = vpop.permute.xlu0 %949
  %951 = vrot.lane.b32.xlu0 %v238, 122
  %v952 = vpop.permute.xlu0 %951
  %953 = vrot.lane.b32.xlu0 %v239, 122
  %v954 = vpop.permute.xlu0 %953
  %955 = vrot.lane.b32.xlu0 %v240, 122
  %v956 = vpop.permute.xlu0 %955
  %957 = vrot.lane.b32.xlu0 %v241, 122
  %v958 = vpop.permute.xlu0 %957
  %959 = vrot.lane.b32.xlu0 %v242, 122
  %v960 = vpop.permute.xlu0 %959
  %961 = vrot.lane.b32.xlu0 %v243, 122
  %v962 = vpop.permute.xlu0 %961
  %963 = vrot.lane.b32.xlu0 %v244, 122
  %v964 = vpop.permute.xlu0 %963
  %965 = vrot.lane.b32.xlu0 %v245, 122
  %v966 = vpop.permute.xlu0 %965
  %967 = vrot.lane.b32.xlu0 %v246, 122
  %v968 = vpop.permute.xlu0 %967
  %969 = vrot.lane.b32.xlu0 %v247, 122
  %v970 = vpop.permute.xlu0 %969
  %971 = vrot.lane.b32.xlu0 %v248, 122
  %v972 = vpop.permute.xlu0 %971
  %973 = vrot.lane.b32.xlu0 %v249, 122
  %v974 = vpop.permute.xlu0 %973
  %975 = vrot.lane.b32.xlu0 %v250, 122
  %v976 = vpop.permute.xlu0 %975
  %977 = vrot.lane.b32.xlu0 %v251, 122
  %v978 = vpop.permute.xlu0 %977
  %979 = vrot.lane.b32.xlu0 %v252, 122
  %v980 = vpop.permute.xlu0 %979
  %997 = vmatpush.bf16.msra.mxu0 %v964
  %998 = vmatpush.bf16.msra.mxu0 %v962
  %999 = vmatpush.bf16.msra.mxu0 %v960
  %1000 = vmatpush.bf16.msra.mxu0 %v958
  %1001 = vmatpush.bf16.msra.mxu0 %v956
  %1002 = vmatpush.bf16.msra.mxu0 %v954
  %1003 = vmatpush.bf16.msra.mxu0 %v952
  %1004 = vmatpush.bf16.msra.mxu0 %v950
  %1005 = vmatmul.bf16.gmra.mxu0 %v917
  %v1006 = vpop.f32.mrf.mxu0
  %v1007 = vadd.f32 0.0, %v1006
  %v1008 = vpop.f32.mrf.mxu0
  %v1009 = vadd.f32 0.0, %v1008
  %1010 = vmatmul.bf16.gmra.mxu0 %v919
  %v1011 = vpop.f32.mrf.mxu0
  %v1012 = vadd.f32 0.0, %v1011
  %v1013 = vpop.f32.mrf.mxu0
  %v1014 = vadd.f32 0.0, %v1013
  %1015 = vmatmul.bf16.gmra.mxu0 %v921
  %v1016 = vpop.f32.mrf.mxu0
  %v1017 = vadd.f32 0.0, %v1016
  %v1018 = vpop.f32.mrf.mxu0
  %v1019 = vadd.f32 0.0, %v1018
  %1020 = vmatmul.bf16.gmra.mxu0 %v923
  %v1021 = vpop.f32.mrf.mxu0
  %v1022 = vadd.f32 0.0, %v1021
  %v1023 = vpop.f32.mrf.mxu0
  %v1024 = vadd.f32 0.0, %v1023
  %1025 = vmatmul.bf16.gmra.mxu0 %v925
  %v1026 = vpop.f32.mrf.mxu0
  %v1027 = vadd.f32 0.0, %v1026
  %v1028 = vpop.f32.mrf.mxu0
  %v1029 = vadd.f32 0.0, %v1028
  %1030 = vmatmul.bf16.gmra.mxu0 %v927
  %v1031 = vpop.f32.mrf.mxu0
  %v1032 = vadd.f32 0.0, %v1031
  %v1033 = vpop.f32.mrf.mxu0
  %v1034 = vadd.f32 0.0, %v1033
  %1035 = vmatmul.bf16.gmra.mxu0 %v929
  %v1036 = vpop.f32.mrf.mxu0
  %v1037 = vadd.f32 0.0, %v1036
  %v1038 = vpop.f32.mrf.mxu0
  %v1039 = vadd.f32 0.0, %v1038
  %1040 = vmatmul.bf16.gmra.mxu0 %v931
  %v1041 = vpop.f32.mrf.mxu0
  %v1042 = vadd.f32 0.0, %v1041
  %v1043 = vpop.f32.mrf.mxu0
  %v1044 = vadd.f32 0.0, %v1043
  %1045 = vdwg.mxu0
  %1046 = vmatpush.bf16.msra.mxu0 %v980
  %1047 = vmatpush.bf16.msra.mxu0 %v978
  %1048 = vmatpush.bf16.msra.mxu0 %v976
  %1049 = vmatpush.bf16.msra.mxu0 %v974
  %1050 = vmatpush.bf16.msra.mxu0 %v972
  %1051 = vmatpush.bf16.msra.mxu0 %v970
  %1052 = vmatpush.bf16.msra.mxu0 %v968
  %1053 = vmatpush.bf16.msra.mxu0 %v966
  %1054 = vmatmul.bf16.gmra.mxu0 %v918
  %v1055 = vpop.f32.mrf.mxu0
  %v1056 = vadd.f32 %v1007, %v1055
  %v1057 = vpop.f32.mrf.mxu0
  %v1058 = vadd.f32 %v1009, %v1057
  %1059 = vmatmul.bf16.gmra.mxu0 %v920
  %v1060 = vpop.f32.mrf.mxu0
  %v1061 = vadd.f32 %v1012, %v1060
  %v1062 = vpop.f32.mrf.mxu0
  %v1063 = vadd.f32 %v1014, %v1062
  %1064 = vmatmul.bf16.gmra.mxu0 %v922
  %v1065 = vpop.f32.mrf.mxu0
  %v1066 = vadd.f32 %v1017, %v1065
  %v1067 = vpop.f32.mrf.mxu0
  %v1068 = vadd.f32 %v1019, %v1067
  %1069 = vmatmul.bf16.gmra.mxu0 %v924
  %v1070 = vpop.f32.mrf.mxu0
  %v1071 = vadd.f32 %v1022, %v1070
  %v1072 = vpop.f32.mrf.mxu0
  %v1073 = vadd.f32 %v1024, %v1072
  %1074 = vmatmul.bf16.gmra.mxu0 %v926
  %v1075 = vpop.f32.mrf.mxu0
  %v1076 = vadd.f32 %v1027, %v1075
  %v1077 = vpop.f32.mrf.mxu0
  %v1078 = vadd.f32 %v1029, %v1077
  %1079 = vmatmul.bf16.gmra.mxu0 %v928
  %v1080 = vpop.f32.mrf.mxu0
  %v1081 = vadd.f32 %v1032, %v1080
  %v1082 = vpop.f32.mrf.mxu0
  %v1083 = vadd.f32 %v1034, %v1082
  %1084 = vmatmul.bf16.gmra.mxu0 %v930
  %v1085 = vpop.f32.mrf.mxu0
  %v1086 = vadd.f32 %v1037, %v1085
  %v1087 = vpop.f32.mrf.mxu0
  %v1088 = vadd.f32 %v1039, %v1087
  %1089 = vmatmul.bf16.gmra.mxu0 %v932
  %v1090 = vpop.f32.mrf.mxu0
  %v1091 = vadd.f32 %v1042, %v1090
  %v1092 = vpop.f32.mrf.mxu0
  %v1093 = vadd.f32 %v1044, %v1092
  %1094 = vdwg.mxu0
  %v1095 = vadd.f32 %v836, %v1056
  %v1096 = vadd.f32 %v837, %v1058
  %v1097 = vadd.f32 %v838, %v1061
  %v1098 = vadd.f32 %v839, %v1063
  %v1099 = vadd.f32 %v840, %v1066
  %v1100 = vadd.f32 %v841, %v1068
  %v1101 = vadd.f32 %v842, %v1071
  %v1102 = vadd.f32 %v843, %v1073
  %v1103 = vadd.f32 %v844, %v1076
  %v1104 = vadd.f32 %v845, %v1078
  %v1105 = vadd.f32 %v846, %v1081
  %v1106 = vadd.f32 %v847, %v1083
  %v1107 = vadd.f32 %v848, %v1086
  %v1108 = vadd.f32 %v849, %v1088
  %v1109 = vadd.f32 %v850, %v1091
  %v1110 = vadd.f32 %v851, %v1093
  %v1111 = vld [vmem:[%s2] sm:$0xff]
  %v1112 = vld [vmem:[%s2 + $0x8] sm:$0xff]
  %v1113 = vld [vmem:[%s2 + $0x10] sm:$0xff]
  %v1114 = vld [vmem:[%s2 + $0x18] sm:$0xff]
  %v1115 = vld [vmem:[%s2 + $0x20] sm:$0xff]
  %v1116 = vld [vmem:[%s2 + $0x28] sm:$0xff]
  %v1117 = vld [vmem:[%s2 + $0x30] sm:$0xff]
  %v1118 = vld [vmem:[%s2 + $0x38] sm:$0xff]
  %v1119 = vld [vmem:[%s2 + $0x40] sm:$0xff]
  %v1120 = vld [vmem:[%s2 + $0x48] sm:$0xff]
  %v1121 = vld [vmem:[%s2 + $0x50] sm:$0xff]
  %v1122 = vld [vmem:[%s2 + $0x58] sm:$0xff]
  %v1123 = vld [vmem:[%s2 + $0x60] sm:$0xff]
  %v1124 = vld [vmem:[%s2 + $0x68] sm:$0xff]
  %v1125 = vld [vmem:[%s2 + $0x70] sm:$0xff]
  %v1126 = vld [vmem:[%s2 + $0x78] sm:$0xff]
  %v1127 = vld [vmem:[%s3] sm:$0xff]
  %v1128 = vld [vmem:[%s3 + $0x8] sm:$0xff]
  %v1129 = vld [vmem:[%s3 + $0x10] sm:$0xff]
  %v1130 = vld [vmem:[%s3 + $0x18] sm:$0xff]
  %v1131 = vld [vmem:[%s3 + $0x20] sm:$0xff]
  %v1132 = vld [vmem:[%s3 + $0x28] sm:$0xff]
  %v1133 = vld [vmem:[%s3 + $0x30] sm:$0xff]
  %v1134 = vld [vmem:[%s3 + $0x38] sm:$0xff]
  %v1135 = vld [vmem:[%s3 + $0x40] sm:$0xff]
  %v1136 = vld [vmem:[%s3 + $0x48] sm:$0xff]
  %v1137 = vld [vmem:[%s3 + $0x50] sm:$0xff]
  %v1138 = vld [vmem:[%s3 + $0x58] sm:$0xff]
  %v1139 = vld [vmem:[%s3 + $0x60] sm:$0xff]
  %v1140 = vld [vmem:[%s3 + $0x68] sm:$0xff]
  %v1141 = vld [vmem:[%s3 + $0x70] sm:$0xff]
  %v1142 = vld [vmem:[%s3 + $0x78] sm:$0xff]
  %v1143 = vld [vmem:[%s4] sm:$0x1]
  %v1145 = vperm.slane %v1143, 0
  %v1147 = vmul.f32 %v1095, %v1145
  %v1148 = vmul.f32 %v1096, %v1145
  %v1149 = vmul.f32 %v1097, %v1145
  %v1150 = vmul.f32 %v1098, %v1145
  %v1151 = vmul.f32 %v1099, %v1145
  %v1152 = vmul.f32 %v1100, %v1145
  %v1153 = vmul.f32 %v1101, %v1145
  %v1154 = vmul.f32 %v1102, %v1145
  %v1155 = vmul.f32 %v1103, %v1145
  %v1156 = vmul.f32 %v1104, %v1145
  %v1157 = vmul.f32 %v1105, %v1145
  %v1158 = vmul.f32 %v1106, %v1145
  %v1159 = vmul.f32 %v1107, %v1145
  %v1160 = vmul.f32 %v1108, %v1145
  %v1161 = vmul.f32 %v1109, %v1145
  %v1162 = vmul.f32 %v1110, %v1145
  %vm1163 = vcmask 408576
  %v1164 = vsel %vm1163, %v1147, 0.0
  %1165 = vadd.xlane.f32.xlu0 %v1164
  %v1166 = vpop.xlane.xlu0 %1165
  %v1167 = vsel %vm1163, %v1148, 0.0
  %1168 = vadd.xlane.f32.xlu0 %v1167
  %v1169 = vpop.xlane.xlu0 %1168
  %v1170 = vsel %vm1163, %v1149, 0.0
  %1171 = vadd.xlane.f32.xlu0 %v1170
  %v1172 = vpop.xlane.xlu0 %1171
  %v1173 = vsel %vm1163, %v1150, 0.0
  %1174 = vadd.xlane.f32.xlu0 %v1173
  %v1175 = vpop.xlane.xlu0 %1174
  %v1176 = vsel %vm1163, %v1151, 0.0
  %1177 = vadd.xlane.f32.xlu0 %v1176
  %v1178 = vpop.xlane.xlu0 %1177
  %v1179 = vsel %vm1163, %v1152, 0.0
  %1180 = vadd.xlane.f32.xlu0 %v1179
  %v1181 = vpop.xlane.xlu0 %1180
  %v1182 = vsel %vm1163, %v1153, 0.0
  %1183 = vadd.xlane.f32.xlu0 %v1182
  %v1184 = vpop.xlane.xlu0 %1183
  %v1185 = vsel %vm1163, %v1154, 0.0
  %1186 = vadd.xlane.f32.xlu0 %v1185
  %v1187 = vpop.xlane.xlu0 %1186
  %v1188 = vsel %vm1163, %v1155, 0.0
  %1189 = vadd.xlane.f32.xlu0 %v1188
  %v1190 = vpop.xlane.xlu0 %1189
  %v1191 = vsel %vm1163, %v1156, 0.0
  %1192 = vadd.xlane.f32.xlu0 %v1191
  %v1193 = vpop.xlane.xlu0 %1192
  %v1194 = vsel %vm1163, %v1157, 0.0
  %1195 = vadd.xlane.f32.xlu0 %v1194
  %v1196 = vpop.xlane.xlu0 %1195
  %v1197 = vsel %vm1163, %v1158, 0.0
  %1198 = vadd.xlane.f32.xlu0 %v1197
  %v1199 = vpop.xlane.xlu0 %1198
  %v1200 = vsel %vm1163, %v1159, 0.0
  %1201 = vadd.xlane.f32.xlu0 %v1200
  %v1202 = vpop.xlane.xlu0 %1201
  %v1203 = vsel %vm1163, %v1160, 0.0
  %1204 = vadd.xlane.f32.xlu0 %v1203
  %v1205 = vpop.xlane.xlu0 %1204
  %v1206 = vsel %vm1163, %v1161, 0.0
  %1207 = vadd.xlane.f32.xlu0 %v1206
  %v1208 = vpop.xlane.xlu0 %1207
  %v1209 = vsel %vm1163, %v1162, 0.0
  %1210 = vadd.xlane.f32.xlu0 %v1209
  %v1211 = vpop.xlane.xlu0 %1210
  %v1212 = vmul.f32 %v1166, 0.03125
  %v1213 = vmul.f32 %v1169, 0.03125
  %v1214 = vmul.f32 %v1172, 0.03125
  %v1215 = vmul.f32 %v1175, 0.03125
  %v1216 = vmul.f32 %v1178, 0.03125
  %v1217 = vmul.f32 %v1181, 0.03125
  %v1218 = vmul.f32 %v1184, 0.03125
  %v1219 = vmul.f32 %v1187, 0.03125
  %v1220 = vmul.f32 %v1190, 0.03125
  %v1221 = vmul.f32 %v1193, 0.03125
  %v1222 = vmul.f32 %v1196, 0.03125
  %v1223 = vmul.f32 %v1199, 0.03125
  %v1224 = vmul.f32 %v1202, 0.03125
  %v1225 = vmul.f32 %v1205, 0.03125
  %v1226 = vmul.f32 %v1208, 0.03125
  %v1227 = vmul.f32 %v1211, 0.03125
  %v1228 = vmul.f32 %v1095, %v1095
  %v1229 = vmul.f32 %v1096, %v1096
  %v1230 = vmul.f32 %v1097, %v1097
  %v1231 = vmul.f32 %v1098, %v1098
  %v1232 = vmul.f32 %v1099, %v1099
  %v1233 = vmul.f32 %v1100, %v1100
  %v1234 = vmul.f32 %v1101, %v1101
  %v1235 = vmul.f32 %v1102, %v1102
  %v1236 = vmul.f32 %v1103, %v1103
  %v1237 = vmul.f32 %v1104, %v1104
  %v1238 = vmul.f32 %v1105, %v1105
  %v1239 = vmul.f32 %v1106, %v1106
  %v1240 = vmul.f32 %v1107, %v1107
  %v1241 = vmul.f32 %v1108, %v1108
  %v1242 = vmul.f32 %v1109, %v1109
  %v1243 = vmul.f32 %v1110, %v1110
  %v1244 = vmul.f32 %v1228, %v1145
  %v1245 = vmul.f32 %v1229, %v1145
  %v1246 = vmul.f32 %v1230, %v1145
  %v1247 = vmul.f32 %v1231, %v1145
  %v1248 = vmul.f32 %v1232, %v1145
  %v1249 = vmul.f32 %v1233, %v1145
  %v1250 = vmul.f32 %v1234, %v1145
  %v1251 = vmul.f32 %v1235, %v1145
  %v1252 = vmul.f32 %v1236, %v1145
  %v1253 = vmul.f32 %v1237, %v1145
  %v1254 = vmul.f32 %v1238, %v1145
  %v1255 = vmul.f32 %v1239, %v1145
  %v1256 = vmul.f32 %v1240, %v1145
  %v1257 = vmul.f32 %v1241, %v1145
  %v1258 = vmul.f32 %v1242, %v1145
  %v1259 = vmul.f32 %v1243, %v1145
  %v1260 = vsel %vm1163, %v1244, 0.0
  %1261 = vadd.xlane.f32.xlu0 %v1260
  %v1262 = vpop.xlane.xlu0 %1261
  %v1263 = vsel %vm1163, %v1245, 0.0
  %1264 = vadd.xlane.f32.xlu0 %v1263
  %v1265 = vpop.xlane.xlu0 %1264
  %v1266 = vsel %vm1163, %v1246, 0.0
  %1267 = vadd.xlane.f32.xlu0 %v1266
  %v1268 = vpop.xlane.xlu0 %1267
  %v1269 = vsel %vm1163, %v1247, 0.0
  %1270 = vadd.xlane.f32.xlu0 %v1269
  %v1271 = vpop.xlane.xlu0 %1270
  %v1272 = vsel %vm1163, %v1248, 0.0
  %1273 = vadd.xlane.f32.xlu0 %v1272
  %v1274 = vpop.xlane.xlu0 %1273
  %v1275 = vsel %vm1163, %v1249, 0.0
  %1276 = vadd.xlane.f32.xlu0 %v1275
  %v1277 = vpop.xlane.xlu0 %1276
  %v1278 = vsel %vm1163, %v1250, 0.0
  %1279 = vadd.xlane.f32.xlu0 %v1278
  %v1280 = vpop.xlane.xlu0 %1279
  %v1281 = vsel %vm1163, %v1251, 0.0
  %1282 = vadd.xlane.f32.xlu0 %v1281
  %v1283 = vpop.xlane.xlu0 %1282
  %v1284 = vsel %vm1163, %v1252, 0.0
  %1285 = vadd.xlane.f32.xlu0 %v1284
  %v1286 = vpop.xlane.xlu0 %1285
  %v1287 = vsel %vm1163, %v1253, 0.0
  %1288 = vadd.xlane.f32.xlu0 %v1287
  %v1289 = vpop.xlane.xlu0 %1288
  %v1290 = vsel %vm1163, %v1254, 0.0
  %1291 = vadd.xlane.f32.xlu0 %v1290
  %v1292 = vpop.xlane.xlu0 %1291
  %v1293 = vsel %vm1163, %v1255, 0.0
  %1294 = vadd.xlane.f32.xlu0 %v1293
  %v1295 = vpop.xlane.xlu0 %1294
  %v1296 = vsel %vm1163, %v1256, 0.0
  %1297 = vadd.xlane.f32.xlu0 %v1296
  %v1298 = vpop.xlane.xlu0 %1297
  %v1299 = vsel %vm1163, %v1257, 0.0
  %1300 = vadd.xlane.f32.xlu0 %v1299
  %v1301 = vpop.xlane.xlu0 %1300
  %v1302 = vsel %vm1163, %v1258, 0.0
  %1303 = vadd.xlane.f32.xlu0 %v1302
  %v1304 = vpop.xlane.xlu0 %1303
  %v1305 = vsel %vm1163, %v1259, 0.0
  %1306 = vadd.xlane.f32.xlu0 %v1305
  %v1307 = vpop.xlane.xlu0 %1306
  %v1308 = vmul.f32 %v1262, 0.03125
  %v1309 = vmul.f32 %v1265, 0.03125
  %v1310 = vmul.f32 %v1268, 0.03125
  %v1311 = vmul.f32 %v1271, 0.03125
  %v1312 = vmul.f32 %v1274, 0.03125
  %v1313 = vmul.f32 %v1277, 0.03125
  %v1314 = vmul.f32 %v1280, 0.03125
  %v1315 = vmul.f32 %v1283, 0.03125
  %v1316 = vmul.f32 %v1286, 0.03125
  %v1317 = vmul.f32 %v1289, 0.03125
  %v1318 = vmul.f32 %v1292, 0.03125
  %v1319 = vmul.f32 %v1295, 0.03125
  %v1320 = vmul.f32 %v1298, 0.03125
  %v1321 = vmul.f32 %v1301, 0.03125
  %v1322 = vmul.f32 %v1304, 0.03125
  %v1323 = vmul.f32 %v1307, 0.03125
  %v1324 = vmul.f32 %v1212, %v1212
  %v1325 = vmul.f32 %v1213, %v1213
  %v1326 = vmul.f32 %v1214, %v1214
  %v1327 = vmul.f32 %v1215, %v1215
  %v1328 = vmul.f32 %v1216, %v1216
  %v1329 = vmul.f32 %v1217, %v1217
  %v1330 = vmul.f32 %v1218, %v1218
  %v1331 = vmul.f32 %v1219, %v1219
  %v1332 = vmul.f32 %v1220, %v1220
  %v1333 = vmul.f32 %v1221, %v1221
  %v1334 = vmul.f32 %v1222, %v1222
  %v1335 = vmul.f32 %v1223, %v1223
  %v1336 = vmul.f32 %v1224, %v1224
  %v1337 = vmul.f32 %v1225, %v1225
  %v1338 = vmul.f32 %v1226, %v1226
  %v1339 = vmul.f32 %v1227, %v1227
  %v1340 = vsub.f32 %v1308, %v1324
  %v1341 = vsub.f32 %v1309, %v1325
  %v1342 = vsub.f32 %v1310, %v1326
  %v1343 = vsub.f32 %v1311, %v1327
  %v1344 = vsub.f32 %v1312, %v1328
  %v1345 = vsub.f32 %v1313, %v1329
  %v1346 = vsub.f32 %v1314, %v1330
  %v1347 = vsub.f32 %v1315, %v1331
  %v1348 = vsub.f32 %v1316, %v1332
  %v1349 = vsub.f32 %v1317, %v1333
  %v1350 = vsub.f32 %v1318, %v1334
  %v1351 = vsub.f32 %v1319, %v1335
  %v1352 = vsub.f32 %v1320, %v1336
  %v1353 = vsub.f32 %v1321, %v1337
  %v1354 = vsub.f32 %v1322, %v1338
  %v1355 = vsub.f32 %v1323, %v1339
  %v1356 = vmax.f32 %v1340, 0.0
  %v1357 = vmax.f32 %v1341, 0.0
  %v1358 = vmax.f32 %v1342, 0.0
  %v1359 = vmax.f32 %v1343, 0.0
  %v1360 = vmax.f32 %v1344, 0.0
  %v1361 = vmax.f32 %v1345, 0.0
  %v1362 = vmax.f32 %v1346, 0.0
  %v1363 = vmax.f32 %v1347, 0.0
  %v1364 = vmax.f32 %v1348, 0.0
  %v1365 = vmax.f32 %v1349, 0.0
  %v1366 = vmax.f32 %v1350, 0.0
  %v1367 = vmax.f32 %v1351, 0.0
  %v1368 = vmax.f32 %v1352, 0.0
  %v1369 = vmax.f32 %v1353, 0.0
  %v1370 = vmax.f32 %v1354, 0.0
  %v1371 = vmax.f32 %v1355, 0.0
  %v1372 = vadd.f32 %v1356, 1e-05
  %v1373 = vadd.f32 %v1357, 1e-05
  %v1374 = vadd.f32 %v1358, 1e-05
  %v1375 = vadd.f32 %v1359, 1e-05
  %v1376 = vadd.f32 %v1360, 1e-05
  %v1377 = vadd.f32 %v1361, 1e-05
  %v1378 = vadd.f32 %v1362, 1e-05
  %v1379 = vadd.f32 %v1363, 1e-05
  %v1380 = vadd.f32 %v1364, 1e-05
  %v1381 = vadd.f32 %v1365, 1e-05
  %v1382 = vadd.f32 %v1366, 1e-05
  %v1383 = vadd.f32 %v1367, 1e-05
  %v1384 = vadd.f32 %v1368, 1e-05
  %v1385 = vadd.f32 %v1369, 1e-05
  %v1386 = vadd.f32 %v1370, 1e-05
  %v1387 = vadd.f32 %v1371, 1e-05
  %v1388 = vrsqrt.pop %v1372
  %v1389 = vmul.f32 %v1388, %v1372
  %v1390 = vmul.f32 %v1389, %v1388
  %v1391 = vmul.f32 0.5, %v1390
  %v1392 = vsub.f32 1.5, %v1391
  %v1393 = vmul.f32 %v1388, %v1392
  %vm1394 = vweird.f32 %v1372
  %vm1395 = vweird.f32 %v1388
  %vm1396 = vmor %vm1394, %vm1395
  %v1397 = vsel %vm1396, %v1388, %v1393
  %v1398 = vrsqrt.pop %v1373
  %v1399 = vmul.f32 %v1398, %v1373
  %v1400 = vmul.f32 %v1399, %v1398
  %v1401 = vmul.f32 0.5, %v1400
  %v1402 = vsub.f32 1.5, %v1401
  %v1403 = vmul.f32 %v1398, %v1402
  %vm1404 = vweird.f32 %v1373
  %vm1405 = vweird.f32 %v1398
  %vm1406 = vmor %vm1404, %vm1405
  %v1407 = vsel %vm1406, %v1398, %v1403
  %v1408 = vrsqrt.pop %v1374
  %v1409 = vmul.f32 %v1408, %v1374
  %v1410 = vmul.f32 %v1409, %v1408
  %v1411 = vmul.f32 0.5, %v1410
  %v1412 = vsub.f32 1.5, %v1411
  %v1413 = vmul.f32 %v1408, %v1412
  %vm1414 = vweird.f32 %v1374
  %vm1415 = vweird.f32 %v1408
  %vm1416 = vmor %vm1414, %vm1415
  %v1417 = vsel %vm1416, %v1408, %v1413
  %v1418 = vrsqrt.pop %v1375
  %v1419 = vmul.f32 %v1418, %v1375
  %v1420 = vmul.f32 %v1419, %v1418
  %v1421 = vmul.f32 0.5, %v1420
  %v1422 = vsub.f32 1.5, %v1421
  %v1423 = vmul.f32 %v1418, %v1422
  %vm1424 = vweird.f32 %v1375
  %vm1425 = vweird.f32 %v1418
  %vm1426 = vmor %vm1424, %vm1425
  %v1427 = vsel %vm1426, %v1418, %v1423
  %v1428 = vrsqrt.pop %v1376
  %v1429 = vmul.f32 %v1428, %v1376
  %v1430 = vmul.f32 %v1429, %v1428
  %v1431 = vmul.f32 0.5, %v1430
  %v1432 = vsub.f32 1.5, %v1431
  %v1433 = vmul.f32 %v1428, %v1432
  %vm1434 = vweird.f32 %v1376
  %vm1435 = vweird.f32 %v1428
  %vm1436 = vmor %vm1434, %vm1435
  %v1437 = vsel %vm1436, %v1428, %v1433
  %v1438 = vrsqrt.pop %v1377
  %v1439 = vmul.f32 %v1438, %v1377
  %v1440 = vmul.f32 %v1439, %v1438
  %v1441 = vmul.f32 0.5, %v1440
  %v1442 = vsub.f32 1.5, %v1441
  %v1443 = vmul.f32 %v1438, %v1442
  %vm1444 = vweird.f32 %v1377
  %vm1445 = vweird.f32 %v1438
  %vm1446 = vmor %vm1444, %vm1445
  %v1447 = vsel %vm1446, %v1438, %v1443
  %v1448 = vrsqrt.pop %v1378
  %v1449 = vmul.f32 %v1448, %v1378
  %v1450 = vmul.f32 %v1449, %v1448
  %v1451 = vmul.f32 0.5, %v1450
  %v1452 = vsub.f32 1.5, %v1451
  %v1453 = vmul.f32 %v1448, %v1452
  %vm1454 = vweird.f32 %v1378
  %vm1455 = vweird.f32 %v1448
  %vm1456 = vmor %vm1454, %vm1455
  %v1457 = vsel %vm1456, %v1448, %v1453
  %v1458 = vrsqrt.pop %v1379
  %v1459 = vmul.f32 %v1458, %v1379
  %v1460 = vmul.f32 %v1459, %v1458
  %v1461 = vmul.f32 0.5, %v1460
  %v1462 = vsub.f32 1.5, %v1461
  %v1463 = vmul.f32 %v1458, %v1462
  %vm1464 = vweird.f32 %v1379
  %vm1465 = vweird.f32 %v1458
  %vm1466 = vmor %vm1464, %vm1465
  %v1467 = vsel %vm1466, %v1458, %v1463
  %v1468 = vrsqrt.pop %v1380
  %v1469 = vmul.f32 %v1468, %v1380
  %v1470 = vmul.f32 %v1469, %v1468
  %v1471 = vmul.f32 0.5, %v1470
  %v1472 = vsub.f32 1.5, %v1471
  %v1473 = vmul.f32 %v1468, %v1472
  %vm1474 = vweird.f32 %v1380
  %vm1475 = vweird.f32 %v1468
  %vm1476 = vmor %vm1474, %vm1475
  %v1477 = vsel %vm1476, %v1468, %v1473
  %v1478 = vrsqrt.pop %v1381
  %v1479 = vmul.f32 %v1478, %v1381
  %v1480 = vmul.f32 %v1479, %v1478
  %v1481 = vmul.f32 0.5, %v1480
  %v1482 = vsub.f32 1.5, %v1481
  %v1483 = vmul.f32 %v1478, %v1482
  %vm1484 = vweird.f32 %v1381
  %vm1485 = vweird.f32 %v1478
  %vm1486 = vmor %vm1484, %vm1485
  %v1487 = vsel %vm1486, %v1478, %v1483
  %v1488 = vrsqrt.pop %v1382
  %v1489 = vmul.f32 %v1488, %v1382
  %v1490 = vmul.f32 %v1489, %v1488
  %v1491 = vmul.f32 0.5, %v1490
  %v1492 = vsub.f32 1.5, %v1491
  %v1493 = vmul.f32 %v1488, %v1492
  %vm1494 = vweird.f32 %v1382
  %vm1495 = vweird.f32 %v1488
  %vm1496 = vmor %vm1494, %vm1495
  %v1497 = vsel %vm1496, %v1488, %v1493
  %v1498 = vrsqrt.pop %v1383
  %v1499 = vmul.f32 %v1498, %v1383
  %v1500 = vmul.f32 %v1499, %v1498
  %v1501 = vmul.f32 0.5, %v1500
  %v1502 = vsub.f32 1.5, %v1501
  %v1503 = vmul.f32 %v1498, %v1502
  %vm1504 = vweird.f32 %v1383
  %vm1505 = vweird.f32 %v1498
  %vm1506 = vmor %vm1504, %vm1505
  %v1507 = vsel %vm1506, %v1498, %v1503
  %v1508 = vrsqrt.pop %v1384
  %v1509 = vmul.f32 %v1508, %v1384
  %v1510 = vmul.f32 %v1509, %v1508
  %v1511 = vmul.f32 0.5, %v1510
  %v1512 = vsub.f32 1.5, %v1511
  %v1513 = vmul.f32 %v1508, %v1512
  %vm1514 = vweird.f32 %v1384
  %vm1515 = vweird.f32 %v1508
  %vm1516 = vmor %vm1514, %vm1515
  %v1517 = vsel %vm1516, %v1508, %v1513
  %v1518 = vrsqrt.pop %v1385
  %v1519 = vmul.f32 %v1518, %v1385
  %v1520 = vmul.f32 %v1519, %v1518
  %v1521 = vmul.f32 0.5, %v1520
  %v1522 = vsub.f32 1.5, %v1521
  %v1523 = vmul.f32 %v1518, %v1522
  %vm1524 = vweird.f32 %v1385
  %vm1525 = vweird.f32 %v1518
  %vm1526 = vmor %vm1524, %vm1525
  %v1527 = vsel %vm1526, %v1518, %v1523
  %v1528 = vrsqrt.pop %v1386
  %v1529 = vmul.f32 %v1528, %v1386
  %v1530 = vmul.f32 %v1529, %v1528
  %v1531 = vmul.f32 0.5, %v1530
  %v1532 = vsub.f32 1.5, %v1531
  %v1533 = vmul.f32 %v1528, %v1532
  %vm1534 = vweird.f32 %v1386
  %vm1535 = vweird.f32 %v1528
  %vm1536 = vmor %vm1534, %vm1535
  %v1537 = vsel %vm1536, %v1528, %v1533
  %v1538 = vrsqrt.pop %v1387
  %v1539 = vmul.f32 %v1538, %v1387
  %v1540 = vmul.f32 %v1539, %v1538
  %v1541 = vmul.f32 0.5, %v1540
  %v1542 = vsub.f32 1.5, %v1541
  %v1543 = vmul.f32 %v1538, %v1542
  %vm1544 = vweird.f32 %v1387
  %vm1545 = vweird.f32 %v1538
  %vm1546 = vmor %vm1544, %vm1545
  %v1547 = vsel %vm1546, %v1538, %v1543
  %v1548 = vmul.f32 %v1111, %v1397
  %v1549 = vmul.f32 %v1112, %v1407
  %v1550 = vmul.f32 %v1113, %v1417
  %v1551 = vmul.f32 %v1114, %v1427
  %v1552 = vmul.f32 %v1115, %v1437
  %v1553 = vmul.f32 %v1116, %v1447
  %v1554 = vmul.f32 %v1117, %v1457
  %v1555 = vmul.f32 %v1118, %v1467
  %v1556 = vmul.f32 %v1119, %v1477
  %v1557 = vmul.f32 %v1120, %v1487
  %v1558 = vmul.f32 %v1121, %v1497
  %v1559 = vmul.f32 %v1122, %v1507
  %v1560 = vmul.f32 %v1123, %v1517
  %v1561 = vmul.f32 %v1124, %v1527
  %v1562 = vmul.f32 %v1125, %v1537
  %v1563 = vmul.f32 %v1126, %v1547
  %v1564 = vmul.f32 %v1212, %v1548
  %v1565 = vmul.f32 %v1213, %v1549
  %v1566 = vmul.f32 %v1214, %v1550
  %v1567 = vmul.f32 %v1215, %v1551
  %v1568 = vmul.f32 %v1216, %v1552
  %v1569 = vmul.f32 %v1217, %v1553
  %v1570 = vmul.f32 %v1218, %v1554
  %v1571 = vmul.f32 %v1219, %v1555
  %v1572 = vmul.f32 %v1220, %v1556
  %v1573 = vmul.f32 %v1221, %v1557
  %v1574 = vmul.f32 %v1222, %v1558
  %v1575 = vmul.f32 %v1223, %v1559
  %v1576 = vmul.f32 %v1224, %v1560
  %v1577 = vmul.f32 %v1225, %v1561
  %v1578 = vmul.f32 %v1226, %v1562
  %v1579 = vmul.f32 %v1227, %v1563
  %v1580 = vsub.f32 %v1127, %v1564
  %v1581 = vsub.f32 %v1128, %v1565
  %v1582 = vsub.f32 %v1129, %v1566
  %v1583 = vsub.f32 %v1130, %v1567
  %v1584 = vsub.f32 %v1131, %v1568
  %v1585 = vsub.f32 %v1132, %v1569
  %v1586 = vsub.f32 %v1133, %v1570
  %v1587 = vsub.f32 %v1134, %v1571
  %v1588 = vsub.f32 %v1135, %v1572
  %v1589 = vsub.f32 %v1136, %v1573
  %v1590 = vsub.f32 %v1137, %v1574
  %v1591 = vsub.f32 %v1138, %v1575
  %v1592 = vsub.f32 %v1139, %v1576
  %v1593 = vsub.f32 %v1140, %v1577
  %v1594 = vsub.f32 %v1141, %v1578
  %v1595 = vsub.f32 %v1142, %v1579
  %1597 = vset.pattern.permute.xlu0 0
  %1598 = vperm.xlu0 %1597, %v1548
  %v1599 = vpop.permute.xlu0 %1598
  %1602 = vset.pattern.permute.xlu0 0
  %1603 = vperm.xlu0 %1602, %v1549
  %v1604 = vpop.permute.xlu0 %1603
  %1607 = vset.pattern.permute.xlu0 0
  %1608 = vperm.xlu0 %1607, %v1550
  %v1609 = vpop.permute.xlu0 %1608
  %1612 = vset.pattern.permute.xlu0 0
  %1613 = vperm.xlu0 %1612, %v1551
  %v1614 = vpop.permute.xlu0 %1613
  %1617 = vset.pattern.permute.xlu0 0
  %1618 = vperm.xlu0 %1617, %v1552
  %v1619 = vpop.permute.xlu0 %1618
  %1622 = vset.pattern.permute.xlu0 0
  %1623 = vperm.xlu0 %1622, %v1553
  %v1624 = vpop.permute.xlu0 %1623
  %1627 = vset.pattern.permute.xlu0 0
  %1628 = vperm.xlu0 %1627, %v1554
  %v1629 = vpop.permute.xlu0 %1628
  %1632 = vset.pattern.permute.xlu0 0
  %1633 = vperm.xlu0 %1632, %v1555
  %v1634 = vpop.permute.xlu0 %1633
  %1637 = vset.pattern.permute.xlu0 0
  %1638 = vperm.xlu0 %1637, %v1556
  %v1639 = vpop.permute.xlu0 %1638
  %1642 = vset.pattern.permute.xlu0 0
  %1643 = vperm.xlu0 %1642, %v1557
  %v1644 = vpop.permute.xlu0 %1643
  %1647 = vset.pattern.permute.xlu0 0
  %1648 = vperm.xlu0 %1647, %v1558
  %v1649 = vpop.permute.xlu0 %1648
  %1652 = vset.pattern.permute.xlu0 0
  %1653 = vperm.xlu0 %1652, %v1559
  %v1654 = vpop.permute.xlu0 %1653
  %1657 = vset.pattern.permute.xlu0 0
  %1658 = vperm.xlu0 %1657, %v1560
  %v1659 = vpop.permute.xlu0 %1658
  %1662 = vset.pattern.permute.xlu0 0
  %1663 = vperm.xlu0 %1662, %v1561
  %v1664 = vpop.permute.xlu0 %1663
  %1667 = vset.pattern.permute.xlu0 0
  %1668 = vperm.xlu0 %1667, %v1562
  %v1669 = vpop.permute.xlu0 %1668
  %1672 = vset.pattern.permute.xlu0 0
  %1673 = vperm.xlu0 %1672, %v1563
  %v1674 = vpop.permute.xlu0 %1673
  %v1676 = vmul.f32 %v1095, %v1599
  %v1677 = vmul.f32 %v1096, %v1604
  %v1678 = vmul.f32 %v1097, %v1609
  %v1679 = vmul.f32 %v1098, %v1614
  %v1680 = vmul.f32 %v1099, %v1619
  %v1681 = vmul.f32 %v1100, %v1624
  %v1682 = vmul.f32 %v1101, %v1629
  %v1683 = vmul.f32 %v1102, %v1634
  %v1684 = vmul.f32 %v1103, %v1639
  %v1685 = vmul.f32 %v1104, %v1644
  %v1686 = vmul.f32 %v1105, %v1649
  %v1687 = vmul.f32 %v1106, %v1654
  %v1688 = vmul.f32 %v1107, %v1659
  %v1689 = vmul.f32 %v1108, %v1664
  %v1690 = vmul.f32 %v1109, %v1669
  %v1691 = vmul.f32 %v1110, %v1674
  %1693 = vset.pattern.permute.xlu0 0
  %1694 = vperm.xlu0 %1693, %v1580
  %v1695 = vpop.permute.xlu0 %1694
  %1698 = vset.pattern.permute.xlu0 0
  %1699 = vperm.xlu0 %1698, %v1581
  %v1700 = vpop.permute.xlu0 %1699
  %1703 = vset.pattern.permute.xlu0 0
  %1704 = vperm.xlu0 %1703, %v1582
  %v1705 = vpop.permute.xlu0 %1704
  %1708 = vset.pattern.permute.xlu0 0
  %1709 = vperm.xlu0 %1708, %v1583
  %v1710 = vpop.permute.xlu0 %1709
  %1713 = vset.pattern.permute.xlu0 0
  %1714 = vperm.xlu0 %1713, %v1584
  %v1715 = vpop.permute.xlu0 %1714
  %1718 = vset.pattern.permute.xlu0 0
  %1719 = vperm.xlu0 %1718, %v1585
  %v1720 = vpop.permute.xlu0 %1719
  %1723 = vset.pattern.permute.xlu0 0
  %1724 = vperm.xlu0 %1723, %v1586
  %v1725 = vpop.permute.xlu0 %1724
  %1728 = vset.pattern.permute.xlu0 0
  %1729 = vperm.xlu0 %1728, %v1587
  %v1730 = vpop.permute.xlu0 %1729
  %1733 = vset.pattern.permute.xlu0 0
  %1734 = vperm.xlu0 %1733, %v1588
  %v1735 = vpop.permute.xlu0 %1734
  %1738 = vset.pattern.permute.xlu0 0
  %1739 = vperm.xlu0 %1738, %v1589
  %v1740 = vpop.permute.xlu0 %1739
  %1743 = vset.pattern.permute.xlu0 0
  %1744 = vperm.xlu0 %1743, %v1590
  %v1745 = vpop.permute.xlu0 %1744
  %1748 = vset.pattern.permute.xlu0 0
  %1749 = vperm.xlu0 %1748, %v1591
  %v1750 = vpop.permute.xlu0 %1749
  %1753 = vset.pattern.permute.xlu0 0
  %1754 = vperm.xlu0 %1753, %v1592
  %v1755 = vpop.permute.xlu0 %1754
  %1758 = vset.pattern.permute.xlu0 0
  %1759 = vperm.xlu0 %1758, %v1593
  %v1760 = vpop.permute.xlu0 %1759
  %1763 = vset.pattern.permute.xlu0 0
  %1764 = vperm.xlu0 %1763, %v1594
  %v1765 = vpop.permute.xlu0 %1764
  %1768 = vset.pattern.permute.xlu0 0
  %1769 = vperm.xlu0 %1768, %v1595
  %v1770 = vpop.permute.xlu0 %1769
  %v1772 = vadd.f32 %v1676, %v1695
  %v1773 = vadd.f32 %v1677, %v1700
  %v1774 = vadd.f32 %v1678, %v1705
  %v1775 = vadd.f32 %v1679, %v1710
  %v1776 = vadd.f32 %v1680, %v1715
  %v1777 = vadd.f32 %v1681, %v1720
  %v1778 = vadd.f32 %v1682, %v1725
  %v1779 = vadd.f32 %v1683, %v1730
  %v1780 = vadd.f32 %v1684, %v1735
  %v1781 = vadd.f32 %v1685, %v1740
  %v1782 = vadd.f32 %v1686, %v1745
  %v1783 = vadd.f32 %v1687, %v1750
  %v1784 = vadd.f32 %v1688, %v1755
  %v1785 = vadd.f32 %v1689, %v1760
  %v1786 = vadd.f32 %v1690, %v1765
  %v1787 = vadd.f32 %v1691, %v1770
  %v1788 = vmul.f32 %v1772, 0.2
  %v1789 = vmul.f32 %v1773, 0.2
  %v1790 = vmul.f32 %v1774, 0.2
  %v1791 = vmul.f32 %v1775, 0.2
  %v1792 = vmul.f32 %v1776, 0.2
  %v1793 = vmul.f32 %v1777, 0.2
  %v1794 = vmul.f32 %v1778, 0.2
  %v1795 = vmul.f32 %v1779, 0.2
  %v1796 = vmul.f32 %v1780, 0.2
  %v1797 = vmul.f32 %v1781, 0.2
  %v1798 = vmul.f32 %v1782, 0.2
  %v1799 = vmul.f32 %v1783, 0.2
  %v1800 = vmul.f32 %v1784, 0.2
  %v1801 = vmul.f32 %v1785, 0.2
  %v1802 = vmul.f32 %v1786, 0.2
  %v1803 = vmul.f32 %v1787, 0.2
  %v1804 = vmax.f32 %v1772, %v1788
  %v1805 = vmax.f32 %v1773, %v1789
  %v1806 = vmax.f32 %v1774, %v1790
  %v1807 = vmax.f32 %v1775, %v1791
  %v1808 = vmax.f32 %v1776, %v1792
  %v1809 = vmax.f32 %v1777, %v1793
  %v1810 = vmax.f32 %v1778, %v1794
  %v1811 = vmax.f32 %v1779, %v1795
  %v1812 = vmax.f32 %v1780, %v1796
  %v1813 = vmax.f32 %v1781, %v1797
  %v1814 = vmax.f32 %v1782, %v1798
  %v1815 = vmax.f32 %v1783, %v1799
  %v1816 = vmax.f32 %v1784, %v1800
  %v1817 = vmax.f32 %v1785, %v1801
  %v1818 = vmax.f32 %v1786, %v1802
  %v1819 = vmax.f32 %v1787, %v1803
  %v1820 = vld [vmem:[%s5] sm:$0xff]
  %v1821 = vld [vmem:[%s5 + $0x8] sm:$0xff]
  %v1822 = vld [vmem:[%s5 + $0x10] sm:$0xff]
  %v1823 = vld [vmem:[%s5 + $0x18] sm:$0xff]
  %v1824 = vld [vmem:[%s5 + $0x20] sm:$0xff]
  %v1825 = vld [vmem:[%s5 + $0x28] sm:$0xff]
  %v1826 = vld [vmem:[%s5 + $0x30] sm:$0xff]
  %v1827 = vld [vmem:[%s5 + $0x38] sm:$0xff]
  %v1828 = vld [vmem:[%s5 + $0x40] sm:$0xff]
  %v1829 = vld [vmem:[%s5 + $0x48] sm:$0xff]
  %v1830 = vld [vmem:[%s5 + $0x50] sm:$0xff]
  %v1831 = vld [vmem:[%s5 + $0x58] sm:$0xff]
  %v1832 = vld [vmem:[%s5 + $0x60] sm:$0xff]
  %v1833 = vld [vmem:[%s5 + $0x68] sm:$0xff]
  %v1834 = vld [vmem:[%s5 + $0x70] sm:$0xff]
  %v1835 = vld [vmem:[%s5 + $0x78] sm:$0xff]
  %v1836 = vmul.f32 %v1804, %v1820
  %v1837 = vmul.f32 %v1805, %v1821
  %v1838 = vmul.f32 %v1806, %v1822
  %v1839 = vmul.f32 %v1807, %v1823
  %v1840 = vmul.f32 %v1808, %v1824
  %v1841 = vmul.f32 %v1809, %v1825
  %v1842 = vmul.f32 %v1810, %v1826
  %v1843 = vmul.f32 %v1811, %v1827
  %v1844 = vmul.f32 %v1812, %v1828
  %v1845 = vmul.f32 %v1813, %v1829
  %v1846 = vmul.f32 %v1814, %v1830
  %v1847 = vmul.f32 %v1815, %v1831
  %v1848 = vmul.f32 %v1816, %v1832
  %v1849 = vmul.f32 %v1817, %v1833
  %v1850 = vmul.f32 %v1818, %v1834
  %v1851 = vmul.f32 %v1819, %v1835
  %v1852 = vsel %vm1163, %v1836, 0.0
  %v1853 = vsel %vm1163, %v1837, 0.0
  %v1854 = vadd.f32 %v1852, %v1853
  %v1855 = vsel %vm1163, %v1838, 0.0
  %v1856 = vadd.f32 %v1854, %v1855
  %v1857 = vsel %vm1163, %v1839, 0.0
  %v1858 = vadd.f32 %v1856, %v1857
  %v1859 = vsel %vm1163, %v1840, 0.0
  %v1860 = vadd.f32 %v1858, %v1859
  %v1861 = vsel %vm1163, %v1841, 0.0
  %v1862 = vadd.f32 %v1860, %v1861
  %v1863 = vsel %vm1163, %v1842, 0.0
  %v1864 = vadd.f32 %v1862, %v1863
  %v1865 = vsel %vm1163, %v1843, 0.0
  %v1866 = vadd.f32 %v1864, %v1865
  %v1867 = vsel %vm1163, %v1844, 0.0
  %v1868 = vadd.f32 %v1866, %v1867
  %v1869 = vsel %vm1163, %v1845, 0.0
  %v1870 = vadd.f32 %v1868, %v1869
  %v1871 = vsel %vm1163, %v1846, 0.0
  %v1872 = vadd.f32 %v1870, %v1871
  %v1873 = vsel %vm1163, %v1847, 0.0
  %v1874 = vadd.f32 %v1872, %v1873
  %v1875 = vsel %vm1163, %v1848, 0.0
  %v1876 = vadd.f32 %v1874, %v1875
  %v1877 = vsel %vm1163, %v1849, 0.0
  %v1878 = vadd.f32 %v1876, %v1877
  %v1879 = vsel %vm1163, %v1850, 0.0
  %v1880 = vadd.f32 %v1878, %v1879
  %v1881 = vsel %vm1163, %v1851, 0.0
  %v1882 = vadd.f32 %v1880, %v1881
  %v1883 = vrot.slane %v1882, 4
  %v1884 = vadd.f32 %v1882, %v1883
  %v1885 = vrot.slane %v1884, 2
  %v1886 = vadd.f32 %v1884, %v1885
  %v1887 = vrot.slane %v1886, 1
  %v1888 = vadd.f32 %v1886, %v1887
  %vm1889 = vcmask 203776
  %v1890 = vsel %vm1889, %v1888, 0.0
  %1891 = vadd.xlane.f32.xlu0 %v1890
  %v1892 = vpop.xlane.xlu0 %1891
  %v1893 = vld [vmem:[#allocation2] sm:$0x1]
  %v1894 = vadd.f32 %v1892, %v1893
  %vm1895 = vcmask 0
  %1896 = vst.msk [vmem:[%s7] sm:$0x1] %vm1895, %v1894
  %1898 = vrot.lane.b32.xlu0 %v1888, 103
  %v1899 = vpop.permute.xlu0 %1898
  %v1901 = vsel %vm1889, %v1899, 0.0
  %1902 = vadd.xlane.f32.xlu0 %v1901
  %v1903 = vpop.xlane.xlu0 %1902
  %v1904 = vld [vmem:[#allocation2] sm:$0x1]
  %v1905 = vadd.f32 %v1903, %v1904
  %1906 = vst.msk [vmem:[%s7 + $0x1] sm:$0x1] %vm1895, %v1905
  // Predicated region
  $region30: #{critic_forward.9} parent=0 // pred_check
    _
  $region31: #{critic_forward.9} parent=0 // pred_check_branch
    %1908 = sbr.rel (0) target = $region33
  $region32: #{critic_forward.9} parent=0 // pred_region
    _
  $region33: #{critic_forward.9} parent=0 // pred_fallthru
    _
  // Predicated region
  $region34: #{critic_forward.9} parent=0 // pred_check
    _
  $region35: #{critic_forward.9} parent=0 // pred_check_branch
    %1910 = sbr.rel (0) target = $region37
  $region36: #{critic_forward.9} parent=0 // pred_region
    _
  $region37: #{critic_forward.9} parent=0 // pred_fallthru
    _

</llo_original>
